<compile_context>
chip_gen: v7x
topology: tpu7x:2x2x1
jax: 0.10.0
libtpu: 0.0.40
codegen_flags: <defaults>
</compile_context>

<pallas_src>
import functools

import jax
import jax.numpy as jnp
from jax import lax
from jax.experimental import pallas as pl
from jax.experimental.pallas import tpu as pltpu


C_PAD = 128   # per-tap channel block (one full 128-lane tile)
PAD_L = 8     # left/right spatial pad in the W (sublane) dim -> 8-aligned stores


# ---------------------------------------------------------------------------
# Fused Pallas kernel: conv1..conv3 (+BN+ReLU) + avg-pool + Linear, one image
# ---------------------------------------------------------------------------
def _dcgan_fused_kernel(x_ref, w_ref, s_ref, b_ref, lw_ref, lb_ref, o_ref,
                        col_ref, act_ref, *, H, W):
    """x_ref:   (1, H+2, PAD_L+W+PAD_L, C_PAD) zero-padded input image
       w_ref:   (3, 9*C_PAD, C_PAD) packed conv weights (zero rows/cols padded)
       s_ref:   (3, 1, C_PAD) folded BN scale (zeros in padded out-channels)
       b_ref:   (3, 1, C_PAD) folded BN bias  (zeros in padded out-channels)
       lw_ref:  (1, C_PAD) linear weight;  lb_ref: (1, 1) linear bias
       o_ref:   (1, 1, 1) logit
       col_ref: (H*W, 9*C_PAD) im2col scratch
       act_ref: (H+2, PAD_L+W+PAD_L, C_PAD) padded activation scratch
    """
    HW = H * W

    # Zero the padded activation scratch: the border ring must be zero for SAME
    # padding; the interior (all 128 lanes) is fully overwritten each layer.
    act_ref[...] = jnp.zeros_like(act_ref)

    y = None
    for li in range(3):
        # Build im2col: tap (dy,dx) -> 128-lane block k = dy*3+dx of col_ref.
        # All stores are full 128-lane blocks at 128-aligned lane offsets.
        for dy in range(3):
            for dx in range(3):
                k = dy * 3 + dx
                c0 = PAD_L - 1 + dx
                if li == 0:
                    tap = x_ref[0, dy:dy + H, c0:c0 + W, :]       # (H, W, C_PAD)
                else:
                    tap = act_ref[dy:dy + H, c0:c0 + W, :]        # (H, W, C_PAD)
                col_ref[:, k * C_PAD:(k + 1) * C_PAD] = tap.reshape(HW, C_PAD)

        # Single MXU matmul with K = 9*C_PAD; fused BN affine + ReLU epilogue.
        # Padded output channels have scale=bias=0 -> exact zeros after ReLU.
        y = jnp.dot(col_ref[...], w_ref[li], preferred_element_type=jnp.float32)
        y = jnp.maximum(y * s_ref[li] + b_ref[li], 0.0)           # (HW, C_PAD)

        if li < 2:
            # Full-width (128-lane) unmasked store of the interior; sublane
            # offset PAD_L is 8-aligned.  The zero ring stays untouched.
            act_ref[1:H + 1, PAD_L:PAD_L + W, :] = y.reshape(H, W, C_PAD)

    # Global average pool over HW + Linear(128 -> 1), fused epilogue.
    pooled = jnp.sum(y, axis=0, keepdims=True) * (1.0 / HW)       # (1, C_PAD)
    o_ref[0] = jnp.sum(pooled * lw_ref[...], axis=1, keepdims=True) + lb_ref[...]


# ---------------------------------------------------------------------------
# Wrapper: layout prep (pad input, pack weights) + pallas_call plumbing
# ---------------------------------------------------------------------------
def _pack_conv_weight(w_hwio):
    """(3,3,Cin,Cout) -> (9*C_PAD, C_PAD): tap-major, Cin/Cout zero-padded."""
    kh, kw, cin, cout = w_hwio.shape
    w = w_hwio.reshape(kh * kw, cin, cout)
    w = jnp.pad(w, ((0, 0), (0, C_PAD - cin), (0, C_PAD - cout)))
    return w.reshape(kh * kw * C_PAD, C_PAD)


def _pack_affine(v):
    """(1, Cout) -> (1, C_PAD), zeros in padded channels."""
    return jnp.pad(v, ((0, 0), (0, C_PAD - v.shape[-1])))


@jax.jit
def dcgan_discriminator_forward(x_nchw, params):
    x = jnp.transpose(x_nchw, (0, 2, 3, 1)).astype(jnp.float32)    # NCHW -> NHWC
    N, H, W, cin = x.shape
    w_buf = PAD_L + W + PAD_L
    # Pad: +1 spatial ring in H, PAD_L/PAD_L in W, channels up to C_PAD.
    xp = jnp.pad(x, ((0, 0), (1, 1), (PAD_L, PAD_L), (0, C_PAD - cin)))

    w_all = jnp.stack([_pack_conv_weight(w) for (w, _, _) in params["convs"]])
    s_all = jnp.stack([_pack_affine(s) for (_, s, _) in params["convs"]])
    b_all = jnp.stack([_pack_affine(b) for (_, _, b) in params["convs"]])
    lw, lb = params["lin_w"], params["lin_b"]

    kernel = functools.partial(_dcgan_fused_kernel, H=H, W=W)

    out = pl.pallas_call(
        kernel,
        out_shape=jax.ShapeDtypeStruct((N, 1, 1), jnp.float32),
        grid=(N,),
        in_specs=[
            pl.BlockSpec((1, H + 2, w_buf, C_PAD), lambda n: (n, 0, 0, 0)),
            pl.BlockSpec((3, 9 * C_PAD, C_PAD), lambda n: (0, 0, 0)),
            pl.BlockSpec((3, 1, C_PAD), lambda n: (0, 0, 0)),
            pl.BlockSpec((3, 1, C_PAD), lambda n: (0, 0, 0)),
            pl.BlockSpec((1, C_PAD), lambda n: (0, 0)),
            pl.BlockSpec((1, 1), lambda n: (0, 0)),
        ],
        out_specs=pl.BlockSpec((1, 1, 1), lambda n: (n, 0, 0)),
        scratch_shapes=[
            pltpu.VMEM((H * W, 9 * C_PAD), jnp.float32),           # im2col tile
            pltpu.VMEM((H + 2, w_buf, C_PAD), jnp.float32),        # padded activation
        ],
        compiler_params=pltpu.CompilerParams(dimension_semantics=("parallel",)),
    )(xp, w_all, s_all, b_all, lw, lb)
    return out.reshape(N, 1)


# ---------------------------------------------------------------------------
# Deterministic parameter initialization (synthetic, matches module shapes)
# ---------------------------------------------------------------------------
def init_params(key):
    keys = jax.random.split(key, 20)
    ki = 0
    convs = []
    cin = 3
    eps = 1e-5
    for cout in (32, 64, 128):
        w = 0.1 * jax.random.normal(keys[ki], (3, 3, cin, cout), jnp.float32); ki += 1
        cb = 0.05 * jax.random.normal(keys[ki], (cout,), jnp.float32); ki += 1
        gamma = 1.0 + 0.1 * jax.random.normal(keys[ki], (cout,), jnp.float32); ki += 1
        beta = 0.1 * jax.random.normal(keys[ki], (cout,), jnp.float32); ki += 1
        mean = 0.05 * jax.random.normal(keys[ki], (cout,), jnp.float32); ki += 1
        var = 1.0 + 0.5 * jax.random.uniform(keys[ki], (cout,), jnp.float32); ki += 1
        scale = gamma / jnp.sqrt(var + eps)
        bias = (cb - mean) * scale + beta
        convs.append((w, scale.reshape(1, cout), bias.reshape(1, cout)))
        cin = cout
    lin_w = 0.1 * jax.random.normal(keys[ki], (1, 128), jnp.float32); ki += 1
    lin_b = 0.1 * jax.random.normal(keys[ki], (1, 1), jnp.float32); ki += 1
    return {"convs": convs, "lin_w": lin_w, "lin_b": lin_b}


# ---------------------------------------------------------------------------
# Pure-JAX reference (for correctness check)
# ---------------------------------------------------------------------------
def reference_forward(x_nchw, params):
    x = jnp.transpose(x_nchw, (0, 2, 3, 1))
    for (w, scale, bias) in params["convs"]:
        y = lax.conv_general_dilated(
            x, w, window_strides=(1, 1), padding="SAME",
            dimension_numbers=("NHWC", "HWIO", "NHWC"))
        x = jnp.maximum(y * scale + bias, 0.0)
    pooled = jnp.mean(x, axis=(1, 2))                              # (N, 128)
    return pooled @ params["lin_w"].T + params["lin_b"].reshape(1,)


if __name__ == "__main__":
    key = jax.random.PRNGKey(0)
    pkey, xkey = jax.random.split(key)
    params = init_params(pkey)

    # Small shapes consistent with the module: batch=2, 3 channels, 16x16 spatial.
    x = jax.random.normal(xkey, (2, 3, 16, 16), jnp.float32)

    out = dcgan_discriminator_forward(x, params)
    out = jax.block_until_ready(out)

    ref = jax.block_until_ready(reference_forward(x, params))
    assert out.shape == (2, 1), out.shape
    assert jnp.allclose(out, ref, atol=1e-3, rtol=1e-3), (out, ref)

    print("KERNEL_OK")
</pallas_src>

<mosaic_0001>
module attributes {stable_mosaic.version = 11 : i64} {
  func.func @_dcgan_fused_kernel(%arg0: i32, %arg1: memref<1x18x32x128xf32, #tpu.memory_space<vmem>>, %arg2: memref<3x1152x128xf32, #tpu.memory_space<vmem>>, %arg3: memref<3x1x128xf32, #tpu.memory_space<vmem>>, %arg4: memref<3x1x128xf32, #tpu.memory_space<vmem>>, %arg5: memref<1x128xf32, #tpu.memory_space<vmem>>, %arg6: memref<1x1xf32, #tpu.memory_space<vmem>>, %arg7: memref<1x1x1xf32, #tpu.memory_space<vmem>>, %arg8: memref<256x1152xf32, #tpu.memory_space<vmem>>, %arg9: memref<18x32x128xf32, #tpu.memory_space<vmem>>) attributes {dimension_semantics = [#tpu.dimension_semantics<parallel>], iteration_bounds = array<i64: 2>, scalar_prefetch = 0 : i64, scratch_operands = 2 : i64, tpu.core_type = #tpu.core_type<tc>, window_params = [{transform_indices = @transform_0, window_bounds = array<i64: 1, 18, 32, 128>}, {pipeline_mode = #tpu.pipeline_mode<synchronous>, transform_indices = @transform_1, window_bounds = array<i64: 3, 1152, 128>}, {pipeline_mode = #tpu.pipeline_mode<synchronous>, transform_indices = @transform_2, window_bounds = array<i64: 3, 1, 128>}, {pipeline_mode = #tpu.pipeline_mode<synchronous>, transform_indices = @transform_3, window_bounds = array<i64: 3, 1, 128>}, {pipeline_mode = #tpu.pipeline_mode<synchronous>, transform_indices = @transform_4, window_bounds = array<i64: 1, 128>}, {pipeline_mode = #tpu.pipeline_mode<synchronous>, transform_indices = @transform_5, window_bounds = array<i64: 1, 1>}, {transform_indices = @transform_6, window_bounds = array<i64: 1, 1, 1>}]} {
    %cst = arith.constant 0.000000e+00 : f32
    %0 = vector.broadcast %cst : f32 to vector<18x32x128xf32>
    %c0 = arith.constant 0 : index
    %c0_0 = arith.constant 0 : index
    %c0_1 = arith.constant 0 : index
    %1 = vector.load %arg9[%c0, %c0_0, %c0_1] : memref<18x32x128xf32, #tpu.memory_space<vmem>>, vector<18x32x128xf32>
    tpu.vector_store %arg9[%c0, %c0_0, %c0_1], %0 {strides = array<i32>} : memref<18x32x128xf32, #tpu.memory_space<vmem>>, vector<18x32x128xf32>,
    %c0_2 = arith.constant 0 : index
    %c0_3 = arith.constant 0 : index
    %c7 = arith.constant 7 : index
    %c0_4 = arith.constant 0 : index
    %2 = vector.load %arg1[%c0_2, %c0_3, %c7, %c0_4] : memref<1x18x32x128xf32, #tpu.memory_space<vmem>>, vector<1x16x16x128xf32>
    %3 = vector.shape_cast %2 : vector<1x16x16x128xf32> to vector<16x16x128xf32>
    %4 = vector.shape_cast %3 : vector<16x16x128xf32> to vector<256x128xf32>
    %c0_5 = arith.constant 0 : index
    %c0_6 = arith.constant 0 : index
    %5 = vector.load %arg8[%c0_5, %c0_6] : memref<256x1152xf32, #tpu.memory_space<vmem>>, vector<256x128xf32>
    tpu.vector_store %arg8[%c0_5, %c0_6], %4 {strides = array<i32>} : memref<256x1152xf32, #tpu.memory_space<vmem>>, vector<256x128xf32>,
    %c0_7 = arith.constant 0 : index
    %c0_8 = arith.constant 0 : index
    %c8 = arith.constant 8 : index
    %c0_9 = arith.constant 0 : index
    %6 = vector.load %arg1[%c0_7, %c0_8, %c8, %c0_9] : memref<1x18x32x128xf32, #tpu.memory_space<vmem>>, vector<1x16x16x128xf32>
    %7 = vector.shape_cast %6 : vector<1x16x16x128xf32> to vector<16x16x128xf32>
    %8 = vector.shape_cast %7 : vector<16x16x128xf32> to vector<256x128xf32>
    %c0_10 = arith.constant 0 : index
    %c128 = arith.constant 128 : index
    %9 = vector.load %arg8[%c0_10, %c128] : memref<256x1152xf32, #tpu.memory_space<vmem>>, vector<256x128xf32>
    tpu.vector_store %arg8[%c0_10, %c128], %8 {strides = array<i32>} : memref<256x1152xf32, #tpu.memory_space<vmem>>, vector<256x128xf32>,
    %c0_11 = arith.constant 0 : index
    %c0_12 = arith.constant 0 : index
    %c9 = arith.constant 9 : index
    %c0_13 = arith.constant 0 : index
    %10 = vector.load %arg1[%c0_11, %c0_12, %c9, %c0_13] : memref<1x18x32x128xf32, #tpu.memory_space<vmem>>, vector<1x16x16x128xf32>
    %11 = vector.shape_cast %10 : vector<1x16x16x128xf32> to vector<16x16x128xf32>
    %12 = vector.shape_cast %11 : vector<16x16x128xf32> to vector<256x128xf32>
    %c0_14 = arith.constant 0 : index
    %c256 = arith.constant 256 : index
    %13 = vector.load %arg8[%c0_14, %c256] : memref<256x1152xf32, #tpu.memory_space<vmem>>, vector<256x128xf32>
    tpu.vector_store %arg8[%c0_14, %c256], %12 {strides = array<i32>} : memref<256x1152xf32, #tpu.memory_space<vmem>>, vector<256x128xf32>,
    %c0_15 = arith.constant 0 : index
    %c1 = arith.constant 1 : index
    %c7_16 = arith.constant 7 : index
    %c0_17 = arith.constant 0 : index
    %14 = vector.load %arg1[%c0_15, %c1, %c7_16, %c0_17] : memref<1x18x32x128xf32, #tpu.memory_space<vmem>>, vector<1x16x16x128xf32>
    %15 = vector.shape_cast %14 : vector<1x16x16x128xf32> to vector<16x16x128xf32>
    %16 = vector.shape_cast %15 : vector<16x16x128xf32> to vector<256x128xf32>
    %c0_18 = arith.constant 0 : index
    %c384 = arith.constant 384 : index
    %17 = vector.load %arg8[%c0_18, %c384] : memref<256x1152xf32, #tpu.memory_space<vmem>>, vector<256x128xf32>
    tpu.vector_store %arg8[%c0_18, %c384], %16 {strides = array<i32>} : memref<256x1152xf32, #tpu.memory_space<vmem>>, vector<256x128xf32>,
    %c0_19 = arith.constant 0 : index
    %c1_20 = arith.constant 1 : index
    %c8_21 = arith.constant 8 : index
    %c0_22 = arith.constant 0 : index
    %18 = vector.load %arg1[%c0_19, %c1_20, %c8_21, %c0_22] : memref<1x18x32x128xf32, #tpu.memory_space<vmem>>, vector<1x16x16x128xf32>
    %19 = vector.shape_cast %18 : vector<1x16x16x128xf32> to vector<16x16x128xf32>
    %20 = vector.shape_cast %19 : vector<16x16x128xf32> to vector<256x128xf32>
    %c0_23 = arith.constant 0 : index
    %c512 = arith.constant 512 : index
    %21 = vector.load %arg8[%c0_23, %c512] : memref<256x1152xf32, #tpu.memory_space<vmem>>, vector<256x128xf32>
    tpu.vector_store %arg8[%c0_23, %c512], %20 {strides = array<i32>} : memref<256x1152xf32, #tpu.memory_space<vmem>>, vector<256x128xf32>,
    %c0_24 = arith.constant 0 : index
    %c1_25 = arith.constant 1 : index
    %c9_26 = arith.constant 9 : index
    %c0_27 = arith.constant 0 : index
    %22 = vector.load %arg1[%c0_24, %c1_25, %c9_26, %c0_27] : memref<1x18x32x128xf32, #tpu.memory_space<vmem>>, vector<1x16x16x128xf32>
    %23 = vector.shape_cast %22 : vector<1x16x16x128xf32> to vector<16x16x128xf32>
    %24 = vector.shape_cast %23 : vector<16x16x128xf32> to vector<256x128xf32>
    %c0_28 = arith.constant 0 : index
    %c640 = arith.constant 640 : index
    %25 = vector.load %arg8[%c0_28, %c640] : memref<256x1152xf32, #tpu.memory_space<vmem>>, vector<256x128xf32>
    tpu.vector_store %arg8[%c0_28, %c640], %24 {strides = array<i32>} : memref<256x1152xf32, #tpu.memory_space<vmem>>, vector<256x128xf32>,
    %c0_29 = arith.constant 0 : index
    %c2 = arith.constant 2 : index
    %c7_30 = arith.constant 7 : index
    %c0_31 = arith.constant 0 : index
    %26 = vector.load %arg1[%c0_29, %c2, %c7_30, %c0_31] : memref<1x18x32x128xf32, #tpu.memory_space<vmem>>, vector<1x16x16x128xf32>
    %27 = vector.shape_cast %26 : vector<1x16x16x128xf32> to vector<16x16x128xf32>
    %28 = vector.shape_cast %27 : vector<16x16x128xf32> to vector<256x128xf32>
    %c0_32 = arith.constant 0 : index
    %c768 = arith.constant 768 : index
    %29 = vector.load %arg8[%c0_32, %c768] : memref<256x1152xf32, #tpu.memory_space<vmem>>, vector<256x128xf32>
    tpu.vector_store %arg8[%c0_32, %c768], %28 {strides = array<i32>} : memref<256x1152xf32, #tpu.memory_space<vmem>>, vector<256x128xf32>,
    %c0_33 = arith.constant 0 : index
    %c2_34 = arith.constant 2 : index
    %c8_35 = arith.constant 8 : index
    %c0_36 = arith.constant 0 : index
    %30 = vector.load %arg1[%c0_33, %c2_34, %c8_35, %c0_36] : memref<1x18x32x128xf32, #tpu.memory_space<vmem>>, vector<1x16x16x128xf32>
    %31 = vector.shape_cast %30 : vector<1x16x16x128xf32> to vector<16x16x128xf32>
    %32 = vector.shape_cast %31 : vector<16x16x128xf32> to vector<256x128xf32>
    %c0_37 = arith.constant 0 : index
    %c896 = arith.constant 896 : index
    %33 = vector.load %arg8[%c0_37, %c896] : memref<256x1152xf32, #tpu.memory_space<vmem>>, vector<256x128xf32>
    tpu.vector_store %arg8[%c0_37, %c896], %32 {strides = array<i32>} : memref<256x1152xf32, #tpu.memory_space<vmem>>, vector<256x128xf32>,
    %c0_38 = arith.constant 0 : index
    %c2_39 = arith.constant 2 : index
    %c9_40 = arith.constant 9 : index
    %c0_41 = arith.constant 0 : index
    %34 = vector.load %arg1[%c0_38, %c2_39, %c9_40, %c0_41] : memref<1x18x32x128xf32, #tpu.memory_space<vmem>>, vector<1x16x16x128xf32>
    %35 = vector.shape_cast %34 : vector<1x16x16x128xf32> to vector<16x16x128xf32>
    %36 = vector.shape_cast %35 : vector<16x16x128xf32> to vector<256x128xf32>
    %c0_42 = arith.constant 0 : index
    %c1024 = arith.constant 1024 : index
    %37 = vector.load %arg8[%c0_42, %c1024] : memref<256x1152xf32, #tpu.memory_space<vmem>>, vector<256x128xf32>
    tpu.vector_store %arg8[%c0_42, %c1024], %36 {strides = array<i32>} : memref<256x1152xf32, #tpu.memory_space<vmem>>, vector<256x128xf32>,
    %c0_43 = arith.constant 0 : index
    %c0_44 = arith.constant 0 : index
    %38 = vector.load %arg8[%c0_43, %c0_44] : memref<256x1152xf32, #tpu.memory_space<vmem>>, vector<256x1152xf32>
    %c0_45 = arith.constant 0 : index
    %c0_46 = arith.constant 0 : index
    %c0_47 = arith.constant 0 : index
    %39 = vector.load %arg2[%c0_45, %c0_46, %c0_47] : memref<3x1152x128xf32, #tpu.memory_space<vmem>>, vector<1x1152x128xf32>
    %40 = vector.shape_cast %39 : vector<1x1152x128xf32> to vector<1152x128xf32>
    %cst_48 = arith.constant dense<0.000000e+00> : vector<256x128xf32>
    %41 = tpu.matmul %38, %40, %cst_48 {dimension_numbers = #tpu.dot_dimension_numbers<[1], [0], [0], [1], [0, 0, 1, 1], [], []>} : vector<256x1152xf32>, vector<1152x128xf32>, vector<256x128xf32> -> vector<256x128xf32>
    %c0_49 = arith.constant 0 : index
    %c0_50 = arith.constant 0 : index
    %c0_51 = arith.constant 0 : index
    %42 = vector.load %arg3[%c0_49, %c0_50, %c0_51] : memref<3x1x128xf32, #tpu.memory_space<vmem>>, vector<1x1x128xf32>
    %43 = vector.shape_cast %42 : vector<1x1x128xf32> to vector<1x128xf32>
    %44 = vector.broadcast %43 : vector<1x128xf32> to vector<256x128xf32>
    %45 = arith.mulf %41, %44 : vector<256x128xf32>
    %c0_52 = arith.constant 0 : index
    %c0_53 = arith.constant 0 : index
    %c0_54 = arith.constant 0 : index
    %46 = vector.load %arg4[%c0_52, %c0_53, %c0_54] : memref<3x1x128xf32, #tpu.memory_space<vmem>>, vector<1x1x128xf32>
    %47 = vector.shape_cast %46 : vector<1x1x128xf32> to vector<1x128xf32>
    %48 = vector.broadcast %47 : vector<1x128xf32> to vector<256x128xf32>
    %49 = arith.addf %45, %48 : vector<256x128xf32>
    %cst_55 = arith.constant 0.000000e+00 : f32
    %50 = vector.broadcast %cst_55 : f32 to vector<256x128xf32>
    %51 = arith.maximumf %49, %50 : vector<256x128xf32>
    %52 = vector.shape_cast %51 : vector<256x128xf32> to vector<16x16x128xf32>
    %c1_56 = arith.constant 1 : index
    %c8_57 = arith.constant 8 : index
    %c0_58 = arith.constant 0 : index
    %53 = vector.load %arg9[%c1_56, %c8_57, %c0_58] : memref<18x32x128xf32, #tpu.memory_space<vmem>>, vector<16x16x128xf32>
    tpu.vector_store %arg9[%c1_56, %c8_57, %c0_58], %52 {strides = array<i32>} : memref<18x32x128xf32, #tpu.memory_space<vmem>>, vector<16x16x128xf32>,
    %c0_59 = arith.constant 0 : index
    %c7_60 = arith.constant 7 : index
    %c0_61 = arith.constant 0 : index
    %54 = vector.load %arg9[%c0_59, %c7_60, %c0_61] : memref<18x32x128xf32, #tpu.memory_space<vmem>>, vector<16x16x128xf32>
    %55 = vector.shape_cast %54 : vector<16x16x128xf32> to vector<256x128xf32>
    %c0_62 = arith.constant 0 : index
    %c0_63 = arith.constant 0 : index
    %56 = vector.load %arg8[%c0_62, %c0_63] : memref<256x1152xf32, #tpu.memory_space<vmem>>, vector<256x128xf32>
    tpu.vector_store %arg8[%c0_62, %c0_63], %55 {strides = array<i32>} : memref<256x1152xf32, #tpu.memory_space<vmem>>, vector<256x128xf32>,
    %c0_64 = arith.constant 0 : index
    %c8_65 = arith.constant 8 : index
    %c0_66 = arith.constant 0 : index
    %57 = vector.load %arg9[%c0_64, %c8_65, %c0_66] : memref<18x32x128xf32, #tpu.memory_space<vmem>>, vector<16x16x128xf32>
    %58 = vector.shape_cast %57 : vector<16x16x128xf32> to vector<256x128xf32>
    %c0_67 = arith.constant 0 : index
    %c128_68 = arith.constant 128 : index
    %59 = vector.load %arg8[%c0_67, %c128_68] : memref<256x1152xf32, #tpu.memory_space<vmem>>, vector<256x128xf32>
    tpu.vector_store %arg8[%c0_67, %c128_68], %58 {strides = array<i32>} : memref<256x1152xf32, #tpu.memory_space<vmem>>, vector<256x128xf32>,
    %c0_69 = arith.constant 0 : index
    %c9_70 = arith.constant 9 : index
    %c0_71 = arith.constant 0 : index
    %60 = vector.load %arg9[%c0_69, %c9_70, %c0_71] : memref<18x32x128xf32, #tpu.memory_space<vmem>>, vector<16x16x128xf32>
    %61 = vector.shape_cast %60 : vector<16x16x128xf32> to vector<256x128xf32>
    %c0_72 = arith.constant 0 : index
    %c256_73 = arith.constant 256 : index
    %62 = vector.load %arg8[%c0_72, %c256_73] : memref<256x1152xf32, #tpu.memory_space<vmem>>, vector<256x128xf32>
    tpu.vector_store %arg8[%c0_72, %c256_73], %61 {strides = array<i32>} : memref<256x1152xf32, #tpu.memory_space<vmem>>, vector<256x128xf32>,
    %c1_74 = arith.constant 1 : index
    %c7_75 = arith.constant 7 : index
    %c0_76 = arith.constant 0 : index
    %63 = vector.load %arg9[%c1_74, %c7_75, %c0_76] : memref<18x32x128xf32, #tpu.memory_space<vmem>>, vector<16x16x128xf32>
    %64 = vector.shape_cast %63 : vector<16x16x128xf32> to vector<256x128xf32>
    %c0_77 = arith.constant 0 : index
    %c384_78 = arith.constant 384 : index
    %65 = vector.load %arg8[%c0_77, %c384_78] : memref<256x1152xf32, #tpu.memory_space<vmem>>, vector<256x128xf32>
    tpu.vector_store %arg8[%c0_77, %c384_78], %64 {strides = array<i32>} : memref<256x1152xf32, #tpu.memory_space<vmem>>, vector<256x128xf32>,
    %c1_79 = arith.constant 1 : index
    %c8_80 = arith.constant 8 : index
    %c0_81 = arith.constant 0 : index
    %66 = vector.load %arg9[%c1_79, %c8_80, %c0_81] : memref<18x32x128xf32, #tpu.memory_space<vmem>>, vector<16x16x128xf32>
    %67 = vector.shape_cast %66 : vector<16x16x128xf32> to vector<256x128xf32>
    %c0_82 = arith.constant 0 : index
    %c512_83 = arith.constant 512 : index
    %68 = vector.load %arg8[%c0_82, %c512_83] : memref<256x1152xf32, #tpu.memory_space<vmem>>, vector<256x128xf32>
    tpu.vector_store %arg8[%c0_82, %c512_83], %67 {strides = array<i32>} : memref<256x1152xf32, #tpu.memory_space<vmem>>, vector<256x128xf32>,
    %c1_84 = arith.constant 1 : index
    %c9_85 = arith.constant 9 : index
    %c0_86 = arith.constant 0 : index
    %69 = vector.load %arg9[%c1_84, %c9_85, %c0_86] : memref<18x32x128xf32, #tpu.memory_space<vmem>>, vector<16x16x128xf32>
    %70 = vector.shape_cast %69 : vector<16x16x128xf32> to vector<256x128xf32>
    %c0_87 = arith.constant 0 : index
    %c640_88 = arith.constant 640 : index
    %71 = vector.load %arg8[%c0_87, %c640_88] : memref<256x1152xf32, #tpu.memory_space<vmem>>, vector<256x128xf32>
    tpu.vector_store %arg8[%c0_87, %c640_88], %70 {strides = array<i32>} : memref<256x1152xf32, #tpu.memory_space<vmem>>, vector<256x128xf32>,
    %c2_89 = arith.constant 2 : index
    %c7_90 = arith.constant 7 : index
    %c0_91 = arith.constant 0 : index
    %72 = vector.load %arg9[%c2_89, %c7_90, %c0_91] : memref<18x32x128xf32, #tpu.memory_space<vmem>>, vector<16x16x128xf32>
    %73 = vector.shape_cast %72 : vector<16x16x128xf32> to vector<256x128xf32>
    %c0_92 = arith.constant 0 : index
    %c768_93 = arith.constant 768 : index
    %74 = vector.load %arg8[%c0_92, %c768_93] : memref<256x1152xf32, #tpu.memory_space<vmem>>, vector<256x128xf32>
    tpu.vector_store %arg8[%c0_92, %c768_93], %73 {strides = array<i32>} : memref<256x1152xf32, #tpu.memory_space<vmem>>, vector<256x128xf32>,
    %c2_94 = arith.constant 2 : index
    %c8_95 = arith.constant 8 : index
    %c0_96 = arith.constant 0 : index
    %75 = vector.load %arg9[%c2_94, %c8_95, %c0_96] : memref<18x32x128xf32, #tpu.memory_space<vmem>>, vector<16x16x128xf32>
    %76 = vector.shape_cast %75 : vector<16x16x128xf32> to vector<256x128xf32>
    %c0_97 = arith.constant 0 : index
    %c896_98 = arith.constant 896 : index
    %77 = vector.load %arg8[%c0_97, %c896_98] : memref<256x1152xf32, #tpu.memory_space<vmem>>, vector<256x128xf32>
    tpu.vector_store %arg8[%c0_97, %c896_98], %76 {strides = array<i32>} : memref<256x1152xf32, #tpu.memory_space<vmem>>, vector<256x128xf32>,
    %c2_99 = arith.constant 2 : index
    %c9_100 = arith.constant 9 : index
    %c0_101 = arith.constant 0 : index
    %78 = vector.load %arg9[%c2_99, %c9_100, %c0_101] : memref<18x32x128xf32, #tpu.memory_space<vmem>>, vector<16x16x128xf32>
    %79 = vector.shape_cast %78 : vector<16x16x128xf32> to vector<256x128xf32>
    %c0_102 = arith.constant 0 : index
    %c1024_103 = arith.constant 1024 : index
    %80 = vector.load %arg8[%c0_102, %c1024_103] : memref<256x1152xf32, #tpu.memory_space<vmem>>, vector<256x128xf32>
    tpu.vector_store %arg8[%c0_102, %c1024_103], %79 {strides = array<i32>} : memref<256x1152xf32, #tpu.memory_space<vmem>>, vector<256x128xf32>,
    %c0_104 = arith.constant 0 : index
    %c0_105 = arith.constant 0 : index
    %81 = vector.load %arg8[%c0_104, %c0_105] : memref<256x1152xf32, #tpu.memory_space<vmem>>, vector<256x1152xf32>
    %c1_106 = arith.constant 1 : index
    %c0_107 = arith.constant 0 : index
    %c0_108 = arith.constant 0 : index
    %82 = vector.load %arg2[%c1_106, %c0_107, %c0_108] : memref<3x1152x128xf32, #tpu.memory_space<vmem>>, vector<1x1152x128xf32>
    %83 = vector.shape_cast %82 : vector<1x1152x128xf32> to vector<1152x128xf32>
    %cst_109 = arith.constant dense<0.000000e+00> : vector<256x128xf32>
    %84 = tpu.matmul %81, %83, %cst_109 {dimension_numbers = #tpu.dot_dimension_numbers<[1], [0], [0], [1], [0, 0, 1, 1], [], []>} : vector<256x1152xf32>, vector<1152x128xf32>, vector<256x128xf32> -> vector<256x128xf32>
    %c1_110 = arith.constant 1 : index
    %c0_111 = arith.constant 0 : index
    %c0_112 = arith.constant 0 : index
    %85 = vector.load %arg3[%c1_110, %c0_111, %c0_112] : memref<3x1x128xf32, #tpu.memory_space<vmem>>, vector<1x1x128xf32>
    %86 = vector.shape_cast %85 : vector<1x1x128xf32> to vector<1x128xf32>
    %87 = vector.broadcast %86 : vector<1x128xf32> to vector<256x128xf32>
    %88 = arith.mulf %84, %87 : vector<256x128xf32>
    %c1_113 = arith.constant 1 : index
    %c0_114 = arith.constant 0 : index
    %c0_115 = arith.constant 0 : index
    %89 = vector.load %arg4[%c1_113, %c0_114, %c0_115] : memref<3x1x128xf32, #tpu.memory_space<vmem>>, vector<1x1x128xf32>
    %90 = vector.shape_cast %89 : vector<1x1x128xf32> to vector<1x128xf32>
    %91 = vector.broadcast %90 : vector<1x128xf32> to vector<256x128xf32>
    %92 = arith.addf %88, %91 : vector<256x128xf32>
    %cst_116 = arith.constant 0.000000e+00 : f32
    %93 = vector.broadcast %cst_116 : f32 to vector<256x128xf32>
    %94 = arith.maximumf %92, %93 : vector<256x128xf32>
    %95 = vector.shape_cast %94 : vector<256x128xf32> to vector<16x16x128xf32>
    %c1_117 = arith.constant 1 : index
    %c8_118 = arith.constant 8 : index
    %c0_119 = arith.constant 0 : index
    %96 = vector.load %arg9[%c1_117, %c8_118, %c0_119] : memref<18x32x128xf32, #tpu.memory_space<vmem>>, vector<16x16x128xf32>
    tpu.vector_store %arg9[%c1_117, %c8_118, %c0_119], %95 {strides = array<i32>} : memref<18x32x128xf32, #tpu.memory_space<vmem>>, vector<16x16x128xf32>,
    %c0_120 = arith.constant 0 : index
    %c7_121 = arith.constant 7 : index
    %c0_122 = arith.constant 0 : index
    %97 = vector.load %arg9[%c0_120, %c7_121, %c0_122] : memref<18x32x128xf32, #tpu.memory_space<vmem>>, vector<16x16x128xf32>
    %98 = vector.shape_cast %97 : vector<16x16x128xf32> to vector<256x128xf32>
    %c0_123 = arith.constant 0 : index
    %c0_124 = arith.constant 0 : index
    %99 = vector.load %arg8[%c0_123, %c0_124] : memref<256x1152xf32, #tpu.memory_space<vmem>>, vector<256x128xf32>
    tpu.vector_store %arg8[%c0_123, %c0_124], %98 {strides = array<i32>} : memref<256x1152xf32, #tpu.memory_space<vmem>>, vector<256x128xf32>,
    %c0_125 = arith.constant 0 : index
    %c8_126 = arith.constant 8 : index
    %c0_127 = arith.constant 0 : index
    %100 = vector.load %arg9[%c0_125, %c8_126, %c0_127] : memref<18x32x128xf32, #tpu.memory_space<vmem>>, vector<16x16x128xf32>
    %101 = vector.shape_cast %100 : vector<16x16x128xf32> to vector<256x128xf32>
    %c0_128 = arith.constant 0 : index
    %c128_129 = arith.constant 128 : index
    %102 = vector.load %arg8[%c0_128, %c128_129] : memref<256x1152xf32, #tpu.memory_space<vmem>>, vector<256x128xf32>
    tpu.vector_store %arg8[%c0_128, %c128_129], %101 {strides = array<i32>} : memref<256x1152xf32, #tpu.memory_space<vmem>>, vector<256x128xf32>,
    %c0_130 = arith.constant 0 : index
    %c9_131 = arith.constant 9 : index
    %c0_132 = arith.constant 0 : index
    %103 = vector.load %arg9[%c0_130, %c9_131, %c0_132] : memref<18x32x128xf32, #tpu.memory_space<vmem>>, vector<16x16x128xf32>
    %104 = vector.shape_cast %103 : vector<16x16x128xf32> to vector<256x128xf32>
    %c0_133 = arith.constant 0 : index
    %c256_134 = arith.constant 256 : index
    %105 = vector.load %arg8[%c0_133, %c256_134] : memref<256x1152xf32, #tpu.memory_space<vmem>>, vector<256x128xf32>
    tpu.vector_store %arg8[%c0_133, %c256_134], %104 {strides = array<i32>} : memref<256x1152xf32, #tpu.memory_space<vmem>>, vector<256x128xf32>,
    %c1_135 = arith.constant 1 : index
    %c7_136 = arith.constant 7 : index
    %c0_137 = arith.constant 0 : index
    %106 = vector.load %arg9[%c1_135, %c7_136, %c0_137] : memref<18x32x128xf32, #tpu.memory_space<vmem>>, vector<16x16x128xf32>
    %107 = vector.shape_cast %106 : vector<16x16x128xf32> to vector<256x128xf32>
    %c0_138 = arith.constant 0 : index
    %c384_139 = arith.constant 384 : index
    %108 = vector.load %arg8[%c0_138, %c384_139] : memref<256x1152xf32, #tpu.memory_space<vmem>>, vector<256x128xf32>
    tpu.vector_store %arg8[%c0_138, %c384_139], %107 {strides = array<i32>} : memref<256x1152xf32, #tpu.memory_space<vmem>>, vector<256x128xf32>,
    %c1_140 = arith.constant 1 : index
    %c8_141 = arith.constant 8 : index
    %c0_142 = arith.constant 0 : index
    %109 = vector.load %arg9[%c1_140, %c8_141, %c0_142] : memref<18x32x128xf32, #tpu.memory_space<vmem>>, vector<16x16x128xf32>
    %110 = vector.shape_cast %109 : vector<16x16x128xf32> to vector<256x128xf32>
    %c0_143 = arith.constant 0 : index
    %c512_144 = arith.constant 512 : index
    %111 = vector.load %arg8[%c0_143, %c512_144] : memref<256x1152xf32, #tpu.memory_space<vmem>>, vector<256x128xf32>
    tpu.vector_store %arg8[%c0_143, %c512_144], %110 {strides = array<i32>} : memref<256x1152xf32, #tpu.memory_space<vmem>>, vector<256x128xf32>,
    %c1_145 = arith.constant 1 : index
    %c9_146 = arith.constant 9 : index
    %c0_147 = arith.constant 0 : index
    %112 = vector.load %arg9[%c1_145, %c9_146, %c0_147] : memref<18x32x128xf32, #tpu.memory_space<vmem>>, vector<16x16x128xf32>
    %113 = vector.shape_cast %112 : vector<16x16x128xf32> to vector<256x128xf32>
    %c0_148 = arith.constant 0 : index
    %c640_149 = arith.constant 640 : index
    %114 = vector.load %arg8[%c0_148, %c640_149] : memref<256x1152xf32, #tpu.memory_space<vmem>>, vector<256x128xf32>
    tpu.vector_store %arg8[%c0_148, %c640_149], %113 {strides = array<i32>} : memref<256x1152xf32, #tpu.memory_space<vmem>>, vector<256x128xf32>,
    %c2_150 = arith.constant 2 : index
    %c7_151 = arith.constant 7 : index
    %c0_152 = arith.constant 0 : index
    %115 = vector.load %arg9[%c2_150, %c7_151, %c0_152] : memref<18x32x128xf32, #tpu.memory_space<vmem>>, vector<16x16x128xf32>
    %116 = vector.shape_cast %115 : vector<16x16x128xf32> to vector<256x128xf32>
    %c0_153 = arith.constant 0 : index
    %c768_154 = arith.constant 768 : index
    %117 = vector.load %arg8[%c0_153, %c768_154] : memref<256x1152xf32, #tpu.memory_space<vmem>>, vector<256x128xf32>
    tpu.vector_store %arg8[%c0_153, %c768_154], %116 {strides = array<i32>} : memref<256x1152xf32, #tpu.memory_space<vmem>>, vector<256x128xf32>,
    %c2_155 = arith.constant 2 : index
    %c8_156 = arith.constant 8 : index
    %c0_157 = arith.constant 0 : index
    %118 = vector.load %arg9[%c2_155, %c8_156, %c0_157] : memref<18x32x128xf32, #tpu.memory_space<vmem>>, vector<16x16x128xf32>
    %119 = vector.shape_cast %118 : vector<16x16x128xf32> to vector<256x128xf32>
    %c0_158 = arith.constant 0 : index
    %c896_159 = arith.constant 896 : index
    %120 = vector.load %arg8[%c0_158, %c896_159] : memref<256x1152xf32, #tpu.memory_space<vmem>>, vector<256x128xf32>
    tpu.vector_store %arg8[%c0_158, %c896_159], %119 {strides = array<i32>} : memref<256x1152xf32, #tpu.memory_space<vmem>>, vector<256x128xf32>,
    %c2_160 = arith.constant 2 : index
    %c9_161 = arith.constant 9 : index
    %c0_162 = arith.constant 0 : index
    %121 = vector.load %arg9[%c2_160, %c9_161, %c0_162] : memref<18x32x128xf32, #tpu.memory_space<vmem>>, vector<16x16x128xf32>
    %122 = vector.shape_cast %121 : vector<16x16x128xf32> to vector<256x128xf32>
    %c0_163 = arith.constant 0 : index
    %c1024_164 = arith.constant 1024 : index
    %123 = vector.load %arg8[%c0_163, %c1024_164] : memref<256x1152xf32, #tpu.memory_space<vmem>>, vector<256x128xf32>
    tpu.vector_store %arg8[%c0_163, %c1024_164], %122 {strides = array<i32>} : memref<256x1152xf32, #tpu.memory_space<vmem>>, vector<256x128xf32>,
    %c0_165 = arith.constant 0 : index
    %c0_166 = arith.constant 0 : index
    %124 = vector.load %arg8[%c0_165, %c0_166] : memref<256x1152xf32, #tpu.memory_space<vmem>>, vector<256x1152xf32>
    %c2_167 = arith.constant 2 : index
    %c0_168 = arith.constant 0 : index
    %c0_169 = arith.constant 0 : index
    %125 = vector.load %arg2[%c2_167, %c0_168, %c0_169] : memref<3x1152x128xf32, #tpu.memory_space<vmem>>, vector<1x1152x128xf32>
    %126 = vector.shape_cast %125 : vector<1x1152x128xf32> to vector<1152x128xf32>
    %cst_170 = arith.constant dense<0.000000e+00> : vector<256x128xf32>
    %127 = tpu.matmul %124, %126, %cst_170 {dimension_numbers = #tpu.dot_dimension_numbers<[1], [0], [0], [1], [0, 0, 1, 1], [], []>} : vector<256x1152xf32>, vector<1152x128xf32>, vector<256x128xf32> -> vector<256x128xf32>
    %c2_171 = arith.constant 2 : index
    %c0_172 = arith.constant 0 : index
    %c0_173 = arith.constant 0 : index
    %128 = vector.load %arg3[%c2_171, %c0_172, %c0_173] : memref<3x1x128xf32, #tpu.memory_space<vmem>>, vector<1x1x128xf32>
    %129 = vector.shape_cast %128 : vector<1x1x128xf32> to vector<1x128xf32>
    %130 = vector.broadcast %129 : vector<1x128xf32> to vector<256x128xf32>
    %131 = arith.mulf %127, %130 : vector<256x128xf32>
    %c2_174 = arith.constant 2 : index
    %c0_175 = arith.constant 0 : index
    %c0_176 = arith.constant 0 : index
    %132 = vector.load %arg4[%c2_174, %c0_175, %c0_176] : memref<3x1x128xf32, #tpu.memory_space<vmem>>, vector<1x1x128xf32>
    %133 = vector.shape_cast %132 : vector<1x1x128xf32> to vector<1x128xf32>
    %134 = vector.broadcast %133 : vector<1x128xf32> to vector<256x128xf32>
    %135 = arith.addf %131, %134 : vector<256x128xf32>
    %cst_177 = arith.constant 0.000000e+00 : f32
    %136 = vector.broadcast %cst_177 : f32 to vector<256x128xf32>
    %137 = arith.maximumf %135, %136 : vector<256x128xf32>
    %cst_178 = arith.constant dense<0.000000e+00> : vector<128xf32>
    %138 = vector.multi_reduction <add>, %137, %cst_178 [0] : vector<256x128xf32> to vector<128xf32>
    %139 = vector.shape_cast %138 : vector<128xf32> to vector<1x128xf32>
    %cst_179 = arith.constant 3.906250e-03 : f32
    %140 = vector.broadcast %cst_179 : f32 to vector<1x128xf32>
    %141 = arith.mulf %139, %140 : vector<1x128xf32>
    %c0_180 = arith.constant 0 : index
    %c0_181 = arith.constant 0 : index
    %142 = vector.load %arg5[%c0_180, %c0_181] : memref<1x128xf32, #tpu.memory_space<vmem>>, vector<1x128xf32>
    %143 = arith.mulf %141, %142 : vector<1x128xf32>
    %cst_182 = arith.constant dense<0.000000e+00> : vector<1xf32>
    %144 = vector.multi_reduction <add>, %143, %cst_182 [1] : vector<1x128xf32> to vector<1xf32>
    %145 = vector.shape_cast %144 : vector<1xf32> to vector<1x1xf32>
    %c0_183 = arith.constant 0 : index
    %c0_184 = arith.constant 0 : index
    %146 = vector.load %arg6[%c0_183, %c0_184] : memref<1x1xf32, #tpu.memory_space<vmem>>, vector<1x1xf32>
    %147 = arith.addf %145, %146 : vector<1x1xf32>
    %c0_185 = arith.constant 0 : index
    %c0_186 = arith.constant 0 : index
    %c0_187 = arith.constant 0 : index
    %148 = vector.load %arg7[%c0_185, %c0_186, %c0_187] : memref<1x1x1xf32, #tpu.memory_space<vmem>>, vector<1x1x1xf32>
    %149 = vector.shape_cast %148 : vector<1x1x1xf32> to vector<1x1xf32>
    %150 = vector.shape_cast %147 : vector<1x1xf32> to vector<1x1x1xf32>
    tpu.vector_store %arg7[%c0_185, %c0_186, %c0_187], %150 {strides = array<i32>} : memref<1x1x1xf32, #tpu.memory_space<vmem>>, vector<1x1x1xf32>,
    return
  }
  func.func @transform_0(%arg0: i32) -> (i32, i32, i32, i32) {
    %c0_i32 = arith.constant 0 : i32
    %c0_i32_0 = arith.constant 0 : i32
    %c0_i32_1 = arith.constant 0 : i32
    %c0_i32_2 = arith.constant 0 : i32
    return %arg0, %c0_i32, %c0_i32_0, %c0_i32_1 : i32, i32, i32, i32
  }
  func.func @transform_1(%arg0: i32) -> (i32, i32, i32) {
    %c0_i32 = arith.constant 0 : i32
    %c0_i32_0 = arith.constant 0 : i32
    %c0_i32_1 = arith.constant 0 : i32
    %c0_i32_2 = arith.constant 0 : i32
    return %c0_i32, %c0_i32_0, %c0_i32_1 : i32, i32, i32
  }
  func.func @transform_2(%arg0: i32) -> (i32, i32, i32) {
    %c0_i32 = arith.constant 0 : i32
    %c0_i32_0 = arith.constant 0 : i32
    %c0_i32_1 = arith.constant 0 : i32
    %c0_i32_2 = arith.constant 0 : i32
    return %c0_i32, %c0_i32_0, %c0_i32_1 : i32, i32, i32
  }
  func.func @transform_3(%arg0: i32) -> (i32, i32, i32) {
    %c0_i32 = arith.constant 0 : i32
    %c0_i32_0 = arith.constant 0 : i32
    %c0_i32_1 = arith.constant 0 : i32
    %c0_i32_2 = arith.constant 0 : i32
    return %c0_i32, %c0_i32_0, %c0_i32_1 : i32, i32, i32
  }
  func.func @transform_4(%arg0: i32) -> (i32, i32) {
    %c0_i32 = arith.constant 0 : i32
    %c0_i32_0 = arith.constant 0 : i32
    %c0_i32_1 = arith.constant 0 : i32
    return %c0_i32, %c0_i32_0 : i32, i32
  }
  func.func @transform_5(%arg0: i32) -> (i32, i32) {
    %c0_i32 = arith.constant 0 : i32
    %c0_i32_0 = arith.constant 0 : i32
    %c0_i32_1 = arith.constant 0 : i32
    return %c0_i32, %c0_i32_0 : i32, i32
  }
  func.func @transform_6(%arg0: i32) -> (i32, i32, i32) {
    %c0_i32 = arith.constant 0 : i32
    %c0_i32_0 = arith.constant 0 : i32
    %c0_i32_1 = arith.constant 0 : i32
    return %arg0, %c0_i32, %c0_i32_0 : i32, i32, i32
  }
}

</mosaic_0001>

<llo_original>
// kernel: dcgan_discriminator_forward.1
$region0: #{dcgan_discriminator_forward.1}
  #allocation0 [shape = 'u32[]', space=smem, size = 0x4, offset = 0x4, fixed_abs, tag = 'smem constant byte address 0x4 - core index']
  #allocation1 [shape = 'u32[144,128]{1,0:T(1,128)}', space=vmem, size = 0x12000, scoped, tag = 'internal scratch']
  #allocation2 [shape = 'f32[256,1152]{1,0:T(8,128)}', space=vmem, size = 0x120000, scoped, tag = 'scratch operand']
  #allocation3 [shape = 'f32[18,32,128]{2,1,0:T(8,128)}', space=vmem, size = 0x48000, scoped, tag = 'scratch operand']
  #allocation4 [shape = 'f32[1,1]{1,0:T(1,128)S(1)}', space=vmem, size = 0x200, scoped, tag = 'scoped memory for dcgan_discriminator_forward.1']
  %s0 = inlined_call_operand.vmem [shape: f32[2,18,32,128], index: 0, kind: input, shape index: {}]
  %s1 = inlined_call_operand.vmem [shape: f32[3,1152,128], index: 1, kind: input, shape index: {}]
  %s2 = inlined_call_operand.vmem [shape: f32[3,1,128], index: 2, kind: input, shape index: {}]
  %s3 = inlined_call_operand.vmem [shape: f32[3,1,128], index: 3, kind: input, shape index: {}]
  %s4 = inlined_call_operand.vmem [shape: f32[1,128], index: 4, kind: input, shape index: {}]
  %s5 = inlined_call_operand.<no memory space> [shape: f32[1,1], index: 5, kind: input, shape index: {}]
  %s6 = inlined_call_operand.vmem [shape: f32[2,1,1], index: 6, kind: output, shape index: {}]
  %s7 = sld [smem:[#allocation0]]
  $region57: #{dcgan_discriminator_forward.1} parent=0
    _
  %s9 = ssub.s32 1, %s7
  %s10 = scalar_select 0, %s9, %s7
  %v11 = vstv %s5
  %12 = vst [vmem:[#allocation4] sm:$0x1] %v11
  loop: start=0, step=1, limit=4
  $region2: #{dcgan_discriminator_forward.1} parent=0 // loop_pre_header
    _
  $region3: #{dcgan_discriminator_forward.1} parent=0 // loop_header
    %s14 = sphi 0, %s18
    %p15 = scmp.ge.s32.totalorder %s14, 4
    %s24 = sphi 0, %s26
    %s27 = sphi 0, %s24
    %s28 = sphi 0, %s27
    %s44 = sphi 0, %s28
    %s48 = sphi 0, %s48
    %s50 = sphi 0, %s48
    %s51 = sphi 0, %s50
    %s65 = sphi 0, %s51
    %s69 = sphi 0, %s69
    %s71 = sphi 0, %s69
    %s72 = sphi 0, %s71
    %s86 = sphi 0, %s72
    %s90 = sphi 0, %s90
    %s92 = sphi 0, %s90
    %s93 = sphi 0, %s92
    %s107 = sphi 0, %s93
    %s111 = sphi 0, %s111
    %s113 = sphi 0, %s111
    %s114 = sphi 0, %s113
    %s128 = sphi 0, %s114
    %s132 = sphi 0, %s132
    %s134 = sphi 0, %s132
    %s135 = sphi 0, %s134
    %s149 = sphi 0, %s135
    %s155 = sphi 0, %s157
    %s158 = sphi 0, %s155
    %s159 = sphi 0, %s158
    %s175 = sphi 0, %s159
  $region4: #{dcgan_discriminator_forward.1} parent=0 // loop_header_branch
    %17 = sbr.rel (%p15) target = $region8
  $region5: #{dcgan_discriminator_forward.1} parent=0 // loop_body
    %s19 = ssub.s32 %s14, 1
    %s20 = ssub.s32 %s14, 2
    %s21 = sadd.s32 %s14, 1
    %s22 = ssub.s32 %s14, %s21
    %p23 = scmp.eq.s32.totalorder %s22, 0
    %s25 = sadd.s32 %s24, 1
    %s26 = scalar_select %p23, %s24, %s25
    %p29 = pneg %p23
    %p30 = scmp.eq.s32.totalorder %s14, 1
    %p31 = por %p29, %p30
    %p32 = scmp.ne.s32.totalorder %s24, %s27
    %p33 = scmp.eq.s32.totalorder %s14, 0
    %p34 = por %p32, %p33
    %p35 = scmp.ne.s32.totalorder %s24, %s27
    %p36 = scmp.eq.s32.totalorder %s19, 1
    %p37 = por %p35, %p36
    %p38 = scmp.ne.s32.totalorder %s27, %s28
    %p39 = scmp.eq.s32.totalorder %s19, 0
    %p40 = por %p38, %p39
    %p41 = scmp.ne.s32.totalorder %s27, %s28
    %p42 = scmp.eq.s32.totalorder %s20, 1
    %p43 = por %p41, %p42
    %p45 = scmp.ne.s32.totalorder %s28, %s44
    %p46 = scmp.eq.s32.totalorder %s20, 0
    %p47 = por %p45, %p46
    %s49 = sadd.s32 %s48, 1
    %p52 = scmp.eq.s32.totalorder %s14, 1
    %p53 = scmp.ne.s32.totalorder %s48, %s50
    %p54 = scmp.eq.s32.totalorder %s14, 0
    %p55 = por %p53, %p54
    %p56 = scmp.ne.s32.totalorder %s48, %s50
    %p57 = scmp.eq.s32.totalorder %s19, 1
    %p58 = por %p56, %p57
    %p59 = scmp.ne.s32.totalorder %s50, %s51
    %p60 = scmp.eq.s32.totalorder %s19, 0
    %p61 = por %p59, %p60
    %p62 = scmp.ne.s32.totalorder %s50, %s51
    %p63 = scmp.eq.s32.totalorder %s20, 1
    %p64 = por %p62, %p63
    %p66 = scmp.ne.s32.totalorder %s51, %s65
    %p67 = scmp.eq.s32.totalorder %s20, 0
    %p68 = por %p66, %p67
    %s70 = sadd.s32 %s69, 1
    %p73 = scmp.eq.s32.totalorder %s14, 1
    %p74 = scmp.ne.s32.totalorder %s69, %s71
    %p75 = scmp.eq.s32.totalorder %s14, 0
    %p76 = por %p74, %p75
    %p77 = scmp.ne.s32.totalorder %s69, %s71
    %p78 = scmp.eq.s32.totalorder %s19, 1
    %p79 = por %p77, %p78
    %p80 = scmp.ne.s32.totalorder %s71, %s72
    %p81 = scmp.eq.s32.totalorder %s19, 0
    %p82 = por %p80, %p81
    %p83 = scmp.ne.s32.totalorder %s71, %s72
    %p84 = scmp.eq.s32.totalorder %s20, 1
    %p85 = por %p83, %p84
    %p87 = scmp.ne.s32.totalorder %s72, %s86
    %p88 = scmp.eq.s32.totalorder %s20, 0
    %p89 = por %p87, %p88
    %s91 = sadd.s32 %s90, 1
    %p94 = scmp.eq.s32.totalorder %s14, 1
    %p95 = scmp.ne.s32.totalorder %s90, %s92
    %p96 = scmp.eq.s32.totalorder %s14, 0
    %p97 = por %p95, %p96
    %p98 = scmp.ne.s32.totalorder %s90, %s92
    %p99 = scmp.eq.s32.totalorder %s19, 1
    %p100 = por %p98, %p99
    %p101 = scmp.ne.s32.totalorder %s92, %s93
    %p102 = scmp.eq.s32.totalorder %s19, 0
    %p103 = por %p101, %p102
    %p104 = scmp.ne.s32.totalorder %s92, %s93
    %p105 = scmp.eq.s32.totalorder %s20, 1
    %p106 = por %p104, %p105
    %p108 = scmp.ne.s32.totalorder %s93, %s107
    %p109 = scmp.eq.s32.totalorder %s20, 0
    %p110 = por %p108, %p109
    %s112 = sadd.s32 %s111, 1
    %p115 = scmp.eq.s32.totalorder %s14, 1
    %p116 = scmp.ne.s32.totalorder %s111, %s113
    %p117 = scmp.eq.s32.totalorder %s14, 0
    %p118 = por %p116, %p117
    %p119 = scmp.ne.s32.totalorder %s111, %s113
    %p120 = scmp.eq.s32.totalorder %s19, 1
    %p121 = por %p119, %p120
    %p122 = scmp.ne.s32.totalorder %s113, %s114
    %p123 = scmp.eq.s32.totalorder %s19, 0
    %p124 = por %p122, %p123
    %p125 = scmp.ne.s32.totalorder %s113, %s114
    %p126 = scmp.eq.s32.totalorder %s20, 1
    %p127 = por %p125, %p126
    %p129 = scmp.ne.s32.totalorder %s114, %s128
    %p130 = scmp.eq.s32.totalorder %s20, 0
    %p131 = por %p129, %p130
    %s133 = sadd.s32 %s132, 1
    %p136 = scmp.eq.s32.totalorder %s14, 1
    %p137 = scmp.ne.s32.totalorder %s132, %s134
    %p138 = scmp.eq.s32.totalorder %s14, 0
    %p139 = por %p137, %p138
    %p140 = scmp.ne.s32.totalorder %s132, %s134
    %p141 = scmp.eq.s32.totalorder %s19, 1
    %p142 = por %p140, %p141
    %p143 = scmp.ne.s32.totalorder %s134, %s135
    %p144 = scmp.eq.s32.totalorder %s19, 0
    %p145 = por %p143, %p144
    %p146 = scmp.ne.s32.totalorder %s134, %s135
    %p147 = scmp.eq.s32.totalorder %s20, 1
    %p148 = por %p146, %p147
    %p150 = scmp.ne.s32.totalorder %s135, %s149
    %p151 = scmp.eq.s32.totalorder %s20, 0
    %p152 = por %p150, %p151
    %s153 = ssub.s32 %s14, %s21
    %p154 = scmp.eq.s32.totalorder %s153, 0
    %s156 = sadd.s32 %s155, 1
    %s157 = scalar_select %p154, %s155, %s156
    %p160 = pneg %p154
    %p161 = scmp.eq.s32.totalorder %s14, 1
    %p162 = por %p160, %p161
    %p163 = scmp.ne.s32.totalorder %s155, %s158
    %p164 = scmp.eq.s32.totalorder %s14, 0
    %p165 = por %p163, %p164
    %p166 = scmp.ne.s32.totalorder %s155, %s158
    %p167 = scmp.eq.s32.totalorder %s19, 1
    %p168 = por %p166, %p167
    %p169 = scmp.ne.s32.totalorder %s158, %s159
    %p170 = scmp.eq.s32.totalorder %s19, 0
    %p171 = por %p169, %p170
    %p172 = scmp.ne.s32.totalorder %s158, %s159
    %p173 = scmp.eq.s32.totalorder %s20, 1
    %p174 = por %p172, %p173
    %p176 = scmp.ne.s32.totalorder %s159, %s175
    %p177 = scmp.eq.s32.totalorder %s20, 0
    %p178 = por %p176, %p177
    %p179 = scmp.le.s32.totalorder 1, %s14
    %p180 = scmp.lt.s32.totalorder %s14, 3
    %p181 = pnand %p179, %p180
    %p182 = pneg %p181
    // Predicated region
    $region9: #{dcgan_discriminator_forward.1} parent=5 // pred_check
      _
    $region10: #{dcgan_discriminator_forward.1} parent=5 // pred_check_branch
      %184 = sbr.rel (%p181) target = $region12
    $region11: #{dcgan_discriminator_forward.1} parent=5 // pred_region
      %s185 = ssub.s32 %s14, 1
      // Predicated region
      $region13: #{dcgan_discriminator_forward.1} parent=11 // pred_check
        %p186 = pneg %p61
      $region14: #{dcgan_discriminator_forward.1} parent=11 // pred_check_branch
        %188 = sbr.rel (%p186) target = $region16
      $region15: #{dcgan_discriminator_forward.1} parent=11 // pred_region
        _
      $region16: #{dcgan_discriminator_forward.1} parent=11 // pred_fallthru
        _
      // Predicated region
      $region17: #{dcgan_discriminator_forward.1} parent=11 // pred_check
        %p189 = pneg %p82
      $region18: #{dcgan_discriminator_forward.1} parent=11 // pred_check_branch
        %191 = sbr.rel (%p189) target = $region20
      $region19: #{dcgan_discriminator_forward.1} parent=11 // pred_region
        _
      $region20: #{dcgan_discriminator_forward.1} parent=11 // pred_fallthru
        _
      // Predicated region
      $region21: #{dcgan_discriminator_forward.1} parent=11 // pred_check
        %p192 = pneg %p103
      $region22: #{dcgan_discriminator_forward.1} parent=11 // pred_check_branch
        %194 = sbr.rel (%p192) target = $region24
      $region23: #{dcgan_discriminator_forward.1} parent=11 // pred_region
        _
      $region24: #{dcgan_discriminator_forward.1} parent=11 // pred_fallthru
        _
      // Predicated region
      $region25: #{dcgan_discriminator_forward.1} parent=11 // pred_check
        %p195 = pneg %p124
      $region26: #{dcgan_discriminator_forward.1} parent=11 // pred_check_branch
        %197 = sbr.rel (%p195) target = $region28
      $region27: #{dcgan_discriminator_forward.1} parent=11 // pred_region
        _
      $region28: #{dcgan_discriminator_forward.1} parent=11 // pred_fallthru
        _
      // Predicated region
      $region29: #{dcgan_discriminator_forward.1} parent=11 // pred_check
        %p198 = pneg %p145
      $region30: #{dcgan_discriminator_forward.1} parent=11 // pred_check_branch
        %200 = sbr.rel (%p198) target = $region32
      $region31: #{dcgan_discriminator_forward.1} parent=11 // pred_region
        _
      $region32: #{dcgan_discriminator_forward.1} parent=11 // pred_fallthru
        _
    $region12: #{dcgan_discriminator_forward.1} parent=5 // pred_fallthru
      _
    %p201 = scmp.lt.s32.totalorder %s14, 2
    // Predicated region
    $region33: #{dcgan_discriminator_forward.1} parent=5 // pred_check
      %p202 = pneg %p201
    $region34: #{dcgan_discriminator_forward.1} parent=5 // pred_check_branch
      %204 = sbr.rel (%p202) target = $region36
    $region35: #{dcgan_discriminator_forward.1} parent=5 // pred_region
      // Predicated region
      $region37: #{dcgan_discriminator_forward.1} parent=35 // pred_check
        %p205 = pneg %p34
      $region38: #{dcgan_discriminator_forward.1} parent=35 // pred_check_branch
        %207 = sbr.rel (%p205) target = $region40
      $region39: #{dcgan_discriminator_forward.1} parent=35 // pred_region
        %p208 = scmp.lt.s32.totalorder %s14, 1
        %s209 = scalar_select %p208, %s14, 1
        %s210 = smul.addr %s209, 72
        %s211 = smul.addr %s210, 8
        %s212 = scalar_lea.vmem %s0, %s211
      $region40: #{dcgan_discriminator_forward.1} parent=35 // pred_fallthru
        _
    $region36: #{dcgan_discriminator_forward.1} parent=5 // pred_fallthru
      _
    %p213 = scmp.le.s32.totalorder 1, %s14
    %p214 = scmp.lt.s32.totalorder %s14, 3
    %p215 = pnand %p213, %p214
    %p216 = pneg %p215
    // Predicated region
    $region41: #{dcgan_discriminator_forward.1} parent=5 // pred_check
      _
    $region42: #{dcgan_discriminator_forward.1} parent=5 // pred_check_branch
      %218 = sbr.rel (%p215) target = $region44
    $region43: #{dcgan_discriminator_forward.1} parent=5 // pred_region
      %s219 = ssub.s32 %s14, 1
      %p220 = scmp.lt.s32.totalorder %s19, 1
      %s221 = scalar_select %p220, %s19, 1
      %s222 = smul.addr %s221, 72
      %s223 = smul.addr %s222, 8
      %s224 = scalar_lea.vmem %s0, %s223
      %p225 = pneg %p40
      %p226 = pneg %p37
      %p227 = pneg %p61
      %p228 = pneg %p58
      %p229 = pneg %p82
      %p230 = pneg %p79
      %p231 = pneg %p103
      %p232 = pneg %p100
      %p233 = pneg %p124
      %p234 = pneg %p121
      %p235 = pneg %p145
      %p236 = pneg %p142
      %p237 = pneg %p171
      %p238 = pneg %p168
      %p239 = scmp.lt.s32.totalorder %s19, 1
      %s240 = scalar_select %p239, %s19, 1
      %s241 = scalar_lea.vmem %s6, %s240
      %p242 = scmp.lt.s32.totalorder %s19, 1
      %s243 = scalar_select %p242, %s19, 1
      %s244 = smul.addr %s243, 72
      %s245 = smul.addr %s244, 8
      %s246 = scalar_lea.vmem %s0, %s245
      %p247 = scmp.lt.s32.totalorder %s19, 1
      %s248 = scalar_select %p247, %s19, 1
      %s249 = scalar_lea.vmem %s6, %s248
      %250 = vst [vmem:[#allocation3] sm:$0xff] 0.0
      %251 = vst [vmem:[#allocation3 + $0x8] sm:$0xff] 0.0
      %252 = vst [vmem:[#allocation3 + $0x10] sm:$0xff] 0.0
      %253 = vst [vmem:[#allocation3 + $0x18] sm:$0xff] 0.0
      %254 = vst [vmem:[#allocation3 + $0x20] sm:$0xff] 0.0
      %255 = vst [vmem:[#allocation3 + $0x28] sm:$0xff] 0.0
      %256 = vst [vmem:[#allocation3 + $0x30] sm:$0xff] 0.0
      %257 = vst [vmem:[#allocation3 + $0x38] sm:$0xff] 0.0
      %258 = vst [vmem:[#allocation3 + $0x40] sm:$0xff] 0.0
      %259 = vst [vmem:[#allocation3 + $0x48] sm:$0xff] 0.0
      %260 = vst [vmem:[#allocation3 + $0x50] sm:$0xff] 0.0
      %261 = vst [vmem:[#allocation3 + $0x58] sm:$0xff] 0.0
      %262 = vst [vmem:[#allocation3 + $0x60] sm:$0xff] 0.0
      %263 = vst [vmem:[#allocation3 + $0x68] sm:$0xff] 0.0
      %264 = vst [vmem:[#allocation3 + $0x70] sm:$0xff] 0.0
      %265 = vst [vmem:[#allocation3 + $0x78] sm:$0xff] 0.0
      %266 = vst [vmem:[#allocation3 + $0x80] sm:$0xff] 0.0
      %267 = vst [vmem:[#allocation3 + $0x88] sm:$0xff] 0.0
      %268 = vst [vmem:[#allocation3 + $0x90] sm:$0xff] 0.0
      %269 = vst [vmem:[#allocation3 + $0x98] sm:$0xff] 0.0
      %270 = vst [vmem:[#allocation3 + $0xa0] sm:$0xff] 0.0
      %271 = vst [vmem:[#allocation3 + $0xa8] sm:$0xff] 0.0
      %272 = vst [vmem:[#allocation3 + $0xb0] sm:$0xff] 0.0
      %273 = vst [vmem:[#allocation3 + $0xb8] sm:$0xff] 0.0
      %274 = vst [vmem:[#allocation3 + $0xc0] sm:$0xff] 0.0
      %275 = vst [vmem:[#allocation3 + $0xc8] sm:$0xff] 0.0
      %276 = vst [vmem:[#allocation3 + $0xd0] sm:$0xff] 0.0
      %277 = vst [vmem:[#allocation3 + $0xd8] sm:$0xff] 0.0
      %278 = vst [vmem:[#allocation3 + $0xe0] sm:$0xff] 0.0
      %279 = vst [vmem:[#allocation3 + $0xe8] sm:$0xff] 0.0
      %280 = vst [vmem:[#allocation3 + $0xf0] sm:$0xff] 0.0
      %281 = vst [vmem:[#allocation3 + $0xf8] sm:$0xff] 0.0
      %282 = vst [vmem:[#allocation3 + $0x100] sm:$0xff] 0.0
      %283 = vst [vmem:[#allocation3 + $0x108] sm:$0xff] 0.0
      %284 = vst [vmem:[#allocation3 + $0x110] sm:$0xff] 0.0
      %285 = vst [vmem:[#allocation3 + $0x118] sm:$0xff] 0.0
      %286 = vst [vmem:[#allocation3 + $0x120] sm:$0xff] 0.0
      %287 = vst [vmem:[#allocation3 + $0x128] sm:$0xff] 0.0
      %288 = vst [vmem:[#allocation3 + $0x130] sm:$0xff] 0.0
      %289 = vst [vmem:[#allocation3 + $0x138] sm:$0xff] 0.0
      %290 = vst [vmem:[#allocation3 + $0x140] sm:$0xff] 0.0
      %291 = vst [vmem:[#allocation3 + $0x148] sm:$0xff] 0.0
      %292 = vst [vmem:[#allocation3 + $0x150] sm:$0xff] 0.0
      %293 = vst [vmem:[#allocation3 + $0x158] sm:$0xff] 0.0
      %294 = vst [vmem:[#allocation3 + $0x160] sm:$0xff] 0.0
      %295 = vst [vmem:[#allocation3 + $0x168] sm:$0xff] 0.0
      %296 = vst [vmem:[#allocation3 + $0x170] sm:$0xff] 0.0
      %297 = vst [vmem:[#allocation3 + $0x178] sm:$0xff] 0.0
      %298 = vst [vmem:[#allocation3 + $0x180] sm:$0xff] 0.0
      %299 = vst [vmem:[#allocation3 + $0x188] sm:$0xff] 0.0
      %300 = vst [vmem:[#allocation3 + $0x190] sm:$0xff] 0.0
      %301 = vst [vmem:[#allocation3 + $0x198] sm:$0xff] 0.0
      %302 = vst [vmem:[#allocation3 + $0x1a0] sm:$0xff] 0.0
      %303 = vst [vmem:[#allocation3 + $0x1a8] sm:$0xff] 0.0
      %304 = vst [vmem:[#allocation3 + $0x1b0] sm:$0xff] 0.0
      %305 = vst [vmem:[#allocation3 + $0x1b8] sm:$0xff] 0.0
      %306 = vst [vmem:[#allocation3 + $0x1c0] sm:$0xff] 0.0
      %307 = vst [vmem:[#allocation3 + $0x1c8] sm:$0xff] 0.0
      %308 = vst [vmem:[#allocation3 + $0x1d0] sm:$0xff] 0.0
      %309 = vst [vmem:[#allocation3 + $0x1d8] sm:$0xff] 0.0
      %310 = vst [vmem:[#allocation3 + $0x1e0] sm:$0xff] 0.0
      %311 = vst [vmem:[#allocation3 + $0x1e8] sm:$0xff] 0.0
      %312 = vst [vmem:[#allocation3 + $0x1f0] sm:$0xff] 0.0
      %313 = vst [vmem:[#allocation3 + $0x1f8] sm:$0xff] 0.0
      %314 = vst [vmem:[#allocation3 + $0x200] sm:$0xff] 0.0
      %315 = vst [vmem:[#allocation3 + $0x208] sm:$0xff] 0.0
      %316 = vst [vmem:[#allocation3 + $0x210] sm:$0xff] 0.0
      %317 = vst [vmem:[#allocation3 + $0x218] sm:$0xff] 0.0
      %318 = vst [vmem:[#allocation3 + $0x220] sm:$0xff] 0.0
      %319 = vst [vmem:[#allocation3 + $0x228] sm:$0xff] 0.0
      %320 = vst [vmem:[#allocation3 + $0x230] sm:$0xff] 0.0
      %321 = vst [vmem:[#allocation3 + $0x238] sm:$0xff] 0.0
      %v322 = vld [vmem:[%s246 + $0x7] sm:$0xff]
      %v323 = vld [vmem:[%s246 + $0xf] sm:$0xff]
      %v324 = vld [vmem:[%s246 + $0x27] sm:$0xff]
      %v325 = vld [vmem:[%s246 + $0x2f] sm:$0xff]
      %v326 = vld [vmem:[%s246 + $0x47] sm:$0xff]
      %v327 = vld [vmem:[%s246 + $0x4f] sm:$0xff]
      %v328 = vld [vmem:[%s246 + $0x67] sm:$0xff]
      %v329 = vld [vmem:[%s246 + $0x6f] sm:$0xff]
      %v330 = vld [vmem:[%s246 + $0x87] sm:$0xff]
      %v331 = vld [vmem:[%s246 + $0x8f] sm:$0xff]
      %v332 = vld [vmem:[%s246 + $0xa7] sm:$0xff]
      %v333 = vld [vmem:[%s246 + $0xaf] sm:$0xff]
      %v334 = vld [vmem:[%s246 + $0xc7] sm:$0xff]
      %v335 = vld [vmem:[%s246 + $0xcf] sm:$0xff]
      %v336 = vld [vmem:[%s246 + $0xe7] sm:$0xff]
      %v337 = vld [vmem:[%s246 + $0xef] sm:$0xff]
      %v338 = vld [vmem:[%s246 + $0x107] sm:$0xff]
      %v339 = vld [vmem:[%s246 + $0x10f] sm:$0xff]
      %v340 = vld [vmem:[%s246 + $0x127] sm:$0xff]
      %v341 = vld [vmem:[%s246 + $0x12f] sm:$0xff]
      %v342 = vld [vmem:[%s246 + $0x147] sm:$0xff]
      %v343 = vld [vmem:[%s246 + $0x14f] sm:$0xff]
      %v344 = vld [vmem:[%s246 + $0x167] sm:$0xff]
      %v345 = vld [vmem:[%s246 + $0x16f] sm:$0xff]
      %v346 = vld [vmem:[%s246 + $0x187] sm:$0xff]
      %v347 = vld [vmem:[%s246 + $0x18f] sm:$0xff]
      %v348 = vld [vmem:[%s246 + $0x1a7] sm:$0xff]
      %v349 = vld [vmem:[%s246 + $0x1af] sm:$0xff]
      %v350 = vld [vmem:[%s246 + $0x1c7] sm:$0xff]
      %v351 = vld [vmem:[%s246 + $0x1cf] sm:$0xff]
      %v352 = vld [vmem:[%s246 + $0x1e7] sm:$0xff]
      %v353 = vld [vmem:[%s246 + $0x1ef] sm:$0xff]
      %354 = vst [vmem:[#allocation2] sm:$0xff] %v322
      %355 = vst [vmem:[#allocation2 + $0x48] sm:$0xff] %v323
      %356 = vst [vmem:[#allocation2 + $0x90] sm:$0xff] %v324
      %357 = vst [vmem:[#allocation2 + $0xd8] sm:$0xff] %v325
      %358 = vst [vmem:[#allocation2 + $0x120] sm:$0xff] %v326
      %359 = vst [vmem:[#allocation2 + $0x168] sm:$0xff] %v327
      %360 = vst [vmem:[#allocation2 + $0x1b0] sm:$0xff] %v328
      %361 = vst [vmem:[#allocation2 + $0x1f8] sm:$0xff] %v329
      %362 = vst [vmem:[#allocation2 + $0x240] sm:$0xff] %v330
      %363 = vst [vmem:[#allocation2 + $0x288] sm:$0xff] %v331
      %364 = vst [vmem:[#allocation2 + $0x2d0] sm:$0xff] %v332
      %365 = vst [vmem:[#allocation2 + $0x318] sm:$0xff] %v333
      %366 = vst [vmem:[#allocation2 + $0x360] sm:$0xff] %v334
      %367 = vst [vmem:[#allocation2 + $0x3a8] sm:$0xff] %v335
      %368 = vst [vmem:[#allocation2 + $0x3f0] sm:$0xff] %v336
      %369 = vst [vmem:[#allocation2 + $0x438] sm:$0xff] %v337
      %370 = vst [vmem:[#allocation2 + $0x480] sm:$0xff] %v338
      %371 = vst [vmem:[#allocation2 + $0x4c8] sm:$0xff] %v339
      %372 = vst [vmem:[#allocation2 + $0x510] sm:$0xff] %v340
      %373 = vst [vmem:[#allocation2 + $0x558] sm:$0xff] %v341
      %374 = vst [vmem:[#allocation2 + $0x5a0] sm:$0xff] %v342
      %375 = vst [vmem:[#allocation2 + $0x5e8] sm:$0xff] %v343
      %376 = vst [vmem:[#allocation2 + $0x630] sm:$0xff] %v344
      %377 = vst [vmem:[#allocation2 + $0x678] sm:$0xff] %v345
      %378 = vst [vmem:[#allocation2 + $0x6c0] sm:$0xff] %v346
      %379 = vst [vmem:[#allocation2 + $0x708] sm:$0xff] %v347
      %380 = vst [vmem:[#allocation2 + $0x750] sm:$0xff] %v348
      %381 = vst [vmem:[#allocation2 + $0x798] sm:$0xff] %v349
      %382 = vst [vmem:[#allocation2 + $0x7e0] sm:$0xff] %v350
      %383 = vst [vmem:[#allocation2 + $0x828] sm:$0xff] %v351
      %384 = vst [vmem:[#allocation2 + $0x870] sm:$0xff] %v352
      %385 = vst [vmem:[#allocation2 + $0x8b8] sm:$0xff] %v353
      %v386 = vld [vmem:[%s246 + $0x8] sm:$0xff]
      %v387 = vld [vmem:[%s246 + $0x10] sm:$0xff]
      %v388 = vld [vmem:[%s246 + $0x28] sm:$0xff]
      %v389 = vld [vmem:[%s246 + $0x30] sm:$0xff]
      %v390 = vld [vmem:[%s246 + $0x48] sm:$0xff]
      %v391 = vld [vmem:[%s246 + $0x50] sm:$0xff]
      %v392 = vld [vmem:[%s246 + $0x68] sm:$0xff]
      %v393 = vld [vmem:[%s246 + $0x70] sm:$0xff]
      %v394 = vld [vmem:[%s246 + $0x88] sm:$0xff]
      %v395 = vld [vmem:[%s246 + $0x90] sm:$0xff]
      %v396 = vld [vmem:[%s246 + $0xa8] sm:$0xff]
      %v397 = vld [vmem:[%s246 + $0xb0] sm:$0xff]
      %v398 = vld [vmem:[%s246 + $0xc8] sm:$0xff]
      %v399 = vld [vmem:[%s246 + $0xd0] sm:$0xff]
      %v400 = vld [vmem:[%s246 + $0xe8] sm:$0xff]
      %v401 = vld [vmem:[%s246 + $0xf0] sm:$0xff]
      %v402 = vld [vmem:[%s246 + $0x108] sm:$0xff]
      %v403 = vld [vmem:[%s246 + $0x110] sm:$0xff]
      %v404 = vld [vmem:[%s246 + $0x128] sm:$0xff]
      %v405 = vld [vmem:[%s246 + $0x130] sm:$0xff]
      %v406 = vld [vmem:[%s246 + $0x148] sm:$0xff]
      %v407 = vld [vmem:[%s246 + $0x150] sm:$0xff]
      %v408 = vld [vmem:[%s246 + $0x168] sm:$0xff]
      %v409 = vld [vmem:[%s246 + $0x170] sm:$0xff]
      %v410 = vld [vmem:[%s246 + $0x188] sm:$0xff]
      %v411 = vld [vmem:[%s246 + $0x190] sm:$0xff]
      %v412 = vld [vmem:[%s246 + $0x1a8] sm:$0xff]
      %v413 = vld [vmem:[%s246 + $0x1b0] sm:$0xff]
      %v414 = vld [vmem:[%s246 + $0x1c8] sm:$0xff]
      %v415 = vld [vmem:[%s246 + $0x1d0] sm:$0xff]
      %v416 = vld [vmem:[%s246 + $0x1e8] sm:$0xff]
      %v417 = vld [vmem:[%s246 + $0x1f0] sm:$0xff]
      %418 = vst [vmem:[#allocation2 + $0x8] sm:$0xff] %v386
      %419 = vst [vmem:[#allocation2 + $0x50] sm:$0xff] %v387
      %420 = vst [vmem:[#allocation2 + $0x98] sm:$0xff] %v388
      %421 = vst [vmem:[#allocation2 + $0xe0] sm:$0xff] %v389
      %422 = vst [vmem:[#allocation2 + $0x128] sm:$0xff] %v390
      %423 = vst [vmem:[#allocation2 + $0x170] sm:$0xff] %v391
      %424 = vst [vmem:[#allocation2 + $0x1b8] sm:$0xff] %v392
      %425 = vst [vmem:[#allocation2 + $0x200] sm:$0xff] %v393
      %426 = vst [vmem:[#allocation2 + $0x248] sm:$0xff] %v394
      %427 = vst [vmem:[#allocation2 + $0x290] sm:$0xff] %v395
      %428 = vst [vmem:[#allocation2 + $0x2d8] sm:$0xff] %v396
      %429 = vst [vmem:[#allocation2 + $0x320] sm:$0xff] %v397
      %430 = vst [vmem:[#allocation2 + $0x368] sm:$0xff] %v398
      %431 = vst [vmem:[#allocation2 + $0x3b0] sm:$0xff] %v399
      %432 = vst [vmem:[#allocation2 + $0x3f8] sm:$0xff] %v400
      %433 = vst [vmem:[#allocation2 + $0x440] sm:$0xff] %v401
      %434 = vst [vmem:[#allocation2 + $0x488] sm:$0xff] %v402
      %435 = vst [vmem:[#allocation2 + $0x4d0] sm:$0xff] %v403
      %436 = vst [vmem:[#allocation2 + $0x518] sm:$0xff] %v404
      %437 = vst [vmem:[#allocation2 + $0x560] sm:$0xff] %v405
      %438 = vst [vmem:[#allocation2 + $0x5a8] sm:$0xff] %v406
      %439 = vst [vmem:[#allocation2 + $0x5f0] sm:$0xff] %v407
      %440 = vst [vmem:[#allocation2 + $0x638] sm:$0xff] %v408
      %441 = vst [vmem:[#allocation2 + $0x680] sm:$0xff] %v409
      %442 = vst [vmem:[#allocation2 + $0x6c8] sm:$0xff] %v410
      %443 = vst [vmem:[#allocation2 + $0x710] sm:$0xff] %v411
      %444 = vst [vmem:[#allocation2 + $0x758] sm:$0xff] %v412
      %445 = vst [vmem:[#allocation2 + $0x7a0] sm:$0xff] %v413
      %446 = vst [vmem:[#allocation2 + $0x7e8] sm:$0xff] %v414
      %447 = vst [vmem:[#allocation2 + $0x830] sm:$0xff] %v415
      %448 = vst [vmem:[#allocation2 + $0x878] sm:$0xff] %v416
      %449 = vst [vmem:[#allocation2 + $0x8c0] sm:$0xff] %v417
      %v450 = vld [vmem:[%s246 + $0x9] sm:$0xff]
      %v451 = vld [vmem:[%s246 + $0x11] sm:$0xff]
      %v452 = vld [vmem:[%s246 + $0x29] sm:$0xff]
      %v453 = vld [vmem:[%s246 + $0x31] sm:$0xff]
      %v454 = vld [vmem:[%s246 + $0x49] sm:$0xff]
      %v455 = vld [vmem:[%s246 + $0x51] sm:$0xff]
      %v456 = vld [vmem:[%s246 + $0x69] sm:$0xff]
      %v457 = vld [vmem:[%s246 + $0x71] sm:$0xff]
      %v458 = vld [vmem:[%s246 + $0x89] sm:$0xff]
      %v459 = vld [vmem:[%s246 + $0x91] sm:$0xff]
      %v460 = vld [vmem:[%s246 + $0xa9] sm:$0xff]
      %v461 = vld [vmem:[%s246 + $0xb1] sm:$0xff]
      %v462 = vld [vmem:[%s246 + $0xc9] sm:$0xff]
      %v463 = vld [vmem:[%s246 + $0xd1] sm:$0xff]
      %v464 = vld [vmem:[%s246 + $0xe9] sm:$0xff]
      %v465 = vld [vmem:[%s246 + $0xf1] sm:$0xff]
      %v466 = vld [vmem:[%s246 + $0x109] sm:$0xff]
      %v467 = vld [vmem:[%s246 + $0x111] sm:$0xff]
      %v468 = vld [vmem:[%s246 + $0x129] sm:$0xff]
      %v469 = vld [vmem:[%s246 + $0x131] sm:$0xff]
      %v470 = vld [vmem:[%s246 + $0x149] sm:$0xff]
      %v471 = vld [vmem:[%s246 + $0x151] sm:$0xff]
      %v472 = vld [vmem:[%s246 + $0x169] sm:$0xff]
      %v473 = vld [vmem:[%s246 + $0x171] sm:$0xff]
      %v474 = vld [vmem:[%s246 + $0x189] sm:$0xff]
      %v475 = vld [vmem:[%s246 + $0x191] sm:$0xff]
      %v476 = vld [vmem:[%s246 + $0x1a9] sm:$0xff]
      %v477 = vld [vmem:[%s246 + $0x1b1] sm:$0xff]
      %v478 = vld [vmem:[%s246 + $0x1c9] sm:$0xff]
      %v479 = vld [vmem:[%s246 + $0x1d1] sm:$0xff]
      %v480 = vld [vmem:[%s246 + $0x1e9] sm:$0xff]
      %v481 = vld [vmem:[%s246 + $0x1f1] sm:$0xff]
      %482 = vst [vmem:[#allocation2 + $0x10] sm:$0xff] %v450
      %483 = vst [vmem:[#allocation2 + $0x58] sm:$0xff] %v451
      %484 = vst [vmem:[#allocation2 + $0xa0] sm:$0xff] %v452
      %485 = vst [vmem:[#allocation2 + $0xe8] sm:$0xff] %v453
      %486 = vst [vmem:[#allocation2 + $0x130] sm:$0xff] %v454
      %487 = vst [vmem:[#allocation2 + $0x178] sm:$0xff] %v455
      %488 = vst [vmem:[#allocation2 + $0x1c0] sm:$0xff] %v456
      %489 = vst [vmem:[#allocation2 + $0x208] sm:$0xff] %v457
      %490 = vst [vmem:[#allocation2 + $0x250] sm:$0xff] %v458
      %491 = vst [vmem:[#allocation2 + $0x298] sm:$0xff] %v459
      %492 = vst [vmem:[#allocation2 + $0x2e0] sm:$0xff] %v460
      %493 = vst [vmem:[#allocation2 + $0x328] sm:$0xff] %v461
      %494 = vst [vmem:[#allocation2 + $0x370] sm:$0xff] %v462
      %495 = vst [vmem:[#allocation2 + $0x3b8] sm:$0xff] %v463
      %496 = vst [vmem:[#allocation2 + $0x400] sm:$0xff] %v464
      %497 = vst [vmem:[#allocation2 + $0x448] sm:$0xff] %v465
      %498 = vst [vmem:[#allocation2 + $0x490] sm:$0xff] %v466
      %499 = vst [vmem:[#allocation2 + $0x4d8] sm:$0xff] %v467
      %500 = vst [vmem:[#allocation2 + $0x520] sm:$0xff] %v468
      %501 = vst [vmem:[#allocation2 + $0x568] sm:$0xff] %v469
      %502 = vst [vmem:[#allocation2 + $0x5b0] sm:$0xff] %v470
      %503 = vst [vmem:[#allocation2 + $0x5f8] sm:$0xff] %v471
      %504 = vst [vmem:[#allocation2 + $0x640] sm:$0xff] %v472
      %505 = vst [vmem:[#allocation2 + $0x688] sm:$0xff] %v473
      %506 = vst [vmem:[#allocation2 + $0x6d0] sm:$0xff] %v474
      %507 = vst [vmem:[#allocation2 + $0x718] sm:$0xff] %v475
      %508 = vst [vmem:[#allocation2 + $0x760] sm:$0xff] %v476
      %509 = vst [vmem:[#allocation2 + $0x7a8] sm:$0xff] %v477
      %510 = vst [vmem:[#allocation2 + $0x7f0] sm:$0xff] %v478
      %511 = vst [vmem:[#allocation2 + $0x838] sm:$0xff] %v479
      %512 = vst [vmem:[#allocation2 + $0x880] sm:$0xff] %v480
      %513 = vst [vmem:[#allocation2 + $0x8c8] sm:$0xff] %v481
      %s514 = scalar_lea.vmem %s246, 32
      %v515 = vld [vmem:[%s514 + $0x7] sm:$0xff]
      %v516 = vld [vmem:[%s514 + $0xf] sm:$0xff]
      %v517 = vld [vmem:[%s514 + $0x27] sm:$0xff]
      %v518 = vld [vmem:[%s514 + $0x2f] sm:$0xff]
      %v519 = vld [vmem:[%s514 + $0x47] sm:$0xff]
      %v520 = vld [vmem:[%s514 + $0x4f] sm:$0xff]
      %v521 = vld [vmem:[%s514 + $0x67] sm:$0xff]
      %v522 = vld [vmem:[%s514 + $0x6f] sm:$0xff]
      %v523 = vld [vmem:[%s514 + $0x87] sm:$0xff]
      %v524 = vld [vmem:[%s514 + $0x8f] sm:$0xff]
      %v525 = vld [vmem:[%s514 + $0xa7] sm:$0xff]
      %v526 = vld [vmem:[%s514 + $0xaf] sm:$0xff]
      %v527 = vld [vmem:[%s514 + $0xc7] sm:$0xff]
      %v528 = vld [vmem:[%s514 + $0xcf] sm:$0xff]
      %v529 = vld [vmem:[%s514 + $0xe7] sm:$0xff]
      %v530 = vld [vmem:[%s514 + $0xef] sm:$0xff]
      %v531 = vld [vmem:[%s514 + $0x107] sm:$0xff]
      %v532 = vld [vmem:[%s514 + $0x10f] sm:$0xff]
      %v533 = vld [vmem:[%s514 + $0x127] sm:$0xff]
      %v534 = vld [vmem:[%s514 + $0x12f] sm:$0xff]
      %v535 = vld [vmem:[%s514 + $0x147] sm:$0xff]
      %v536 = vld [vmem:[%s514 + $0x14f] sm:$0xff]
      %v537 = vld [vmem:[%s514 + $0x167] sm:$0xff]
      %v538 = vld [vmem:[%s514 + $0x16f] sm:$0xff]
      %v539 = vld [vmem:[%s514 + $0x187] sm:$0xff]
      %v540 = vld [vmem:[%s514 + $0x18f] sm:$0xff]
      %v541 = vld [vmem:[%s514 + $0x1a7] sm:$0xff]
      %v542 = vld [vmem:[%s514 + $0x1af] sm:$0xff]
      %v543 = vld [vmem:[%s514 + $0x1c7] sm:$0xff]
      %v544 = vld [vmem:[%s514 + $0x1cf] sm:$0xff]
      %v545 = vld [vmem:[%s514 + $0x1e7] sm:$0xff]
      %v546 = vld [vmem:[%s514 + $0x1ef] sm:$0xff]
      %547 = vst [vmem:[#allocation2 + $0x18] sm:$0xff] %v515
      %548 = vst [vmem:[#allocation2 + $0x60] sm:$0xff] %v516
      %549 = vst [vmem:[#allocation2 + $0xa8] sm:$0xff] %v517
      %550 = vst [vmem:[#allocation2 + $0xf0] sm:$0xff] %v518
      %551 = vst [vmem:[#allocation2 + $0x138] sm:$0xff] %v519
      %552 = vst [vmem:[#allocation2 + $0x180] sm:$0xff] %v520
      %553 = vst [vmem:[#allocation2 + $0x1c8] sm:$0xff] %v521
      %554 = vst [vmem:[#allocation2 + $0x210] sm:$0xff] %v522
      %555 = vst [vmem:[#allocation2 + $0x258] sm:$0xff] %v523
      %556 = vst [vmem:[#allocation2 + $0x2a0] sm:$0xff] %v524
      %557 = vst [vmem:[#allocation2 + $0x2e8] sm:$0xff] %v525
      %558 = vst [vmem:[#allocation2 + $0x330] sm:$0xff] %v526
      %559 = vst [vmem:[#allocation2 + $0x378] sm:$0xff] %v527
      %560 = vst [vmem:[#allocation2 + $0x3c0] sm:$0xff] %v528
      %561 = vst [vmem:[#allocation2 + $0x408] sm:$0xff] %v529
      %562 = vst [vmem:[#allocation2 + $0x450] sm:$0xff] %v530
      %563 = vst [vmem:[#allocation2 + $0x498] sm:$0xff] %v531
      %564 = vst [vmem:[#allocation2 + $0x4e0] sm:$0xff] %v532
      %565 = vst [vmem:[#allocation2 + $0x528] sm:$0xff] %v533
      %566 = vst [vmem:[#allocation2 + $0x570] sm:$0xff] %v534
      %567 = vst [vmem:[#allocation2 + $0x5b8] sm:$0xff] %v535
      %568 = vst [vmem:[#allocation2 + $0x600] sm:$0xff] %v536
      %569 = vst [vmem:[#allocation2 + $0x648] sm:$0xff] %v537
      %570 = vst [vmem:[#allocation2 + $0x690] sm:$0xff] %v538
      %571 = vst [vmem:[#allocation2 + $0x6d8] sm:$0xff] %v539
      %572 = vst [vmem:[#allocation2 + $0x720] sm:$0xff] %v540
      %573 = vst [vmem:[#allocation2 + $0x768] sm:$0xff] %v541
      %574 = vst [vmem:[#allocation2 + $0x7b0] sm:$0xff] %v542
      %575 = vst [vmem:[#allocation2 + $0x7f8] sm:$0xff] %v543
      %576 = vst [vmem:[#allocation2 + $0x840] sm:$0xff] %v544
      %577 = vst [vmem:[#allocation2 + $0x888] sm:$0xff] %v545
      %578 = vst [vmem:[#allocation2 + $0x8d0] sm:$0xff] %v546
      %v579 = vld [vmem:[%s514 + $0x8] sm:$0xff]
      %v580 = vld [vmem:[%s514 + $0x10] sm:$0xff]
      %v581 = vld [vmem:[%s514 + $0x28] sm:$0xff]
      %v582 = vld [vmem:[%s514 + $0x30] sm:$0xff]
      %v583 = vld [vmem:[%s514 + $0x48] sm:$0xff]
      %v584 = vld [vmem:[%s514 + $0x50] sm:$0xff]
      %v585 = vld [vmem:[%s514 + $0x68] sm:$0xff]
      %v586 = vld [vmem:[%s514 + $0x70] sm:$0xff]
      %v587 = vld [vmem:[%s514 + $0x88] sm:$0xff]
      %v588 = vld [vmem:[%s514 + $0x90] sm:$0xff]
      %v589 = vld [vmem:[%s514 + $0xa8] sm:$0xff]
      %v590 = vld [vmem:[%s514 + $0xb0] sm:$0xff]
      %v591 = vld [vmem:[%s514 + $0xc8] sm:$0xff]
      %v592 = vld [vmem:[%s514 + $0xd0] sm:$0xff]
      %v593 = vld [vmem:[%s514 + $0xe8] sm:$0xff]
      %v594 = vld [vmem:[%s514 + $0xf0] sm:$0xff]
      %v595 = vld [vmem:[%s514 + $0x108] sm:$0xff]
      %v596 = vld [vmem:[%s514 + $0x110] sm:$0xff]
      %v597 = vld [vmem:[%s514 + $0x128] sm:$0xff]
      %v598 = vld [vmem:[%s514 + $0x130] sm:$0xff]
      %v599 = vld [vmem:[%s514 + $0x148] sm:$0xff]
      %v600 = vld [vmem:[%s514 + $0x150] sm:$0xff]
      %v601 = vld [vmem:[%s514 + $0x168] sm:$0xff]
      %v602 = vld [vmem:[%s514 + $0x170] sm:$0xff]
      %v603 = vld [vmem:[%s514 + $0x188] sm:$0xff]
      %v604 = vld [vmem:[%s514 + $0x190] sm:$0xff]
      %v605 = vld [vmem:[%s514 + $0x1a8] sm:$0xff]
      %v606 = vld [vmem:[%s514 + $0x1b0] sm:$0xff]
      %v607 = vld [vmem:[%s514 + $0x1c8] sm:$0xff]
      %v608 = vld [vmem:[%s514 + $0x1d0] sm:$0xff]
      %v609 = vld [vmem:[%s514 + $0x1e8] sm:$0xff]
      %v610 = vld [vmem:[%s514 + $0x1f0] sm:$0xff]
      %611 = vst [vmem:[#allocation2 + $0x20] sm:$0xff] %v579
      %612 = vst [vmem:[#allocation2 + $0x68] sm:$0xff] %v580
      %613 = vst [vmem:[#allocation2 + $0xb0] sm:$0xff] %v581
      %614 = vst [vmem:[#allocation2 + $0xf8] sm:$0xff] %v582
      %615 = vst [vmem:[#allocation2 + $0x140] sm:$0xff] %v583
      %616 = vst [vmem:[#allocation2 + $0x188] sm:$0xff] %v584
      %617 = vst [vmem:[#allocation2 + $0x1d0] sm:$0xff] %v585
      %618 = vst [vmem:[#allocation2 + $0x218] sm:$0xff] %v586
      %619 = vst [vmem:[#allocation2 + $0x260] sm:$0xff] %v587
      %620 = vst [vmem:[#allocation2 + $0x2a8] sm:$0xff] %v588
      %621 = vst [vmem:[#allocation2 + $0x2f0] sm:$0xff] %v589
      %622 = vst [vmem:[#allocation2 + $0x338] sm:$0xff] %v590
      %623 = vst [vmem:[#allocation2 + $0x380] sm:$0xff] %v591
      %624 = vst [vmem:[#allocation2 + $0x3c8] sm:$0xff] %v592
      %625 = vst [vmem:[#allocation2 + $0x410] sm:$0xff] %v593
      %626 = vst [vmem:[#allocation2 + $0x458] sm:$0xff] %v594
      %627 = vst [vmem:[#allocation2 + $0x4a0] sm:$0xff] %v595
      %628 = vst [vmem:[#allocation2 + $0x4e8] sm:$0xff] %v596
      %629 = vst [vmem:[#allocation2 + $0x530] sm:$0xff] %v597
      %630 = vst [vmem:[#allocation2 + $0x578] sm:$0xff] %v598
      %631 = vst [vmem:[#allocation2 + $0x5c0] sm:$0xff] %v599
      %632 = vst [vmem:[#allocation2 + $0x608] sm:$0xff] %v600
      %633 = vst [vmem:[#allocation2 + $0x650] sm:$0xff] %v601
      %634 = vst [vmem:[#allocation2 + $0x698] sm:$0xff] %v602
      %635 = vst [vmem:[#allocation2 + $0x6e0] sm:$0xff] %v603
      %636 = vst [vmem:[#allocation2 + $0x728] sm:$0xff] %v604
      %637 = vst [vmem:[#allocation2 + $0x770] sm:$0xff] %v605
      %638 = vst [vmem:[#allocation2 + $0x7b8] sm:$0xff] %v606
      %639 = vst [vmem:[#allocation2 + $0x800] sm:$0xff] %v607
      %640 = vst [vmem:[#allocation2 + $0x848] sm:$0xff] %v608
      %641 = vst [vmem:[#allocation2 + $0x890] sm:$0xff] %v609
      %642 = vst [vmem:[#allocation2 + $0x8d8] sm:$0xff] %v610
      %v643 = vld [vmem:[%s514 + $0x9] sm:$0xff]
      %v644 = vld [vmem:[%s514 + $0x11] sm:$0xff]
      %v645 = vld [vmem:[%s514 + $0x29] sm:$0xff]
      %v646 = vld [vmem:[%s514 + $0x31] sm:$0xff]
      %v647 = vld [vmem:[%s514 + $0x49] sm:$0xff]
      %v648 = vld [vmem:[%s514 + $0x51] sm:$0xff]
      %v649 = vld [vmem:[%s514 + $0x69] sm:$0xff]
      %v650 = vld [vmem:[%s514 + $0x71] sm:$0xff]
      %v651 = vld [vmem:[%s514 + $0x89] sm:$0xff]
      %v652 = vld [vmem:[%s514 + $0x91] sm:$0xff]
      %v653 = vld [vmem:[%s514 + $0xa9] sm:$0xff]
      %v654 = vld [vmem:[%s514 + $0xb1] sm:$0xff]
      %v655 = vld [vmem:[%s514 + $0xc9] sm:$0xff]
      %v656 = vld [vmem:[%s514 + $0xd1] sm:$0xff]
      %v657 = vld [vmem:[%s514 + $0xe9] sm:$0xff]
      %v658 = vld [vmem:[%s514 + $0xf1] sm:$0xff]
      %v659 = vld [vmem:[%s514 + $0x109] sm:$0xff]
      %v660 = vld [vmem:[%s514 + $0x111] sm:$0xff]
      %v661 = vld [vmem:[%s514 + $0x129] sm:$0xff]
      %v662 = vld [vmem:[%s514 + $0x131] sm:$0xff]
      %v663 = vld [vmem:[%s514 + $0x149] sm:$0xff]
      %v664 = vld [vmem:[%s514 + $0x151] sm:$0xff]
      %v665 = vld [vmem:[%s514 + $0x169] sm:$0xff]
      %v666 = vld [vmem:[%s514 + $0x171] sm:$0xff]
      %v667 = vld [vmem:[%s514 + $0x189] sm:$0xff]
      %v668 = vld [vmem:[%s514 + $0x191] sm:$0xff]
      %v669 = vld [vmem:[%s514 + $0x1a9] sm:$0xff]
      %v670 = vld [vmem:[%s514 + $0x1b1] sm:$0xff]
      %v671 = vld [vmem:[%s514 + $0x1c9] sm:$0xff]
      %v672 = vld [vmem:[%s514 + $0x1d1] sm:$0xff]
      %v673 = vld [vmem:[%s514 + $0x1e9] sm:$0xff]
      %v674 = vld [vmem:[%s514 + $0x1f1] sm:$0xff]
      %675 = vst [vmem:[#allocation2 + $0x28] sm:$0xff] %v643
      %676 = vst [vmem:[#allocation2 + $0x70] sm:$0xff] %v644
      %677 = vst [vmem:[#allocation2 + $0xb8] sm:$0xff] %v645
      %678 = vst [vmem:[#allocation2 + $0x100] sm:$0xff] %v646
      %679 = vst [vmem:[#allocation2 + $0x148] sm:$0xff] %v647
      %680 = vst [vmem:[#allocation2 + $0x190] sm:$0xff] %v648
      %681 = vst [vmem:[#allocation2 + $0x1d8] sm:$0xff] %v649
      %682 = vst [vmem:[#allocation2 + $0x220] sm:$0xff] %v650
      %683 = vst [vmem:[#allocation2 + $0x268] sm:$0xff] %v651
      %684 = vst [vmem:[#allocation2 + $0x2b0] sm:$0xff] %v652
      %685 = vst [vmem:[#allocation2 + $0x2f8] sm:$0xff] %v653
      %686 = vst [vmem:[#allocation2 + $0x340] sm:$0xff] %v654
      %687 = vst [vmem:[#allocation2 + $0x388] sm:$0xff] %v655
      %688 = vst [vmem:[#allocation2 + $0x3d0] sm:$0xff] %v656
      %689 = vst [vmem:[#allocation2 + $0x418] sm:$0xff] %v657
      %690 = vst [vmem:[#allocation2 + $0x460] sm:$0xff] %v658
      %691 = vst [vmem:[#allocation2 + $0x4a8] sm:$0xff] %v659
      %692 = vst [vmem:[#allocation2 + $0x4f0] sm:$0xff] %v660
      %693 = vst [vmem:[#allocation2 + $0x538] sm:$0xff] %v661
      %694 = vst [vmem:[#allocation2 + $0x580] sm:$0xff] %v662
      %695 = vst [vmem:[#allocation2 + $0x5c8] sm:$0xff] %v663
      %696 = vst [vmem:[#allocation2 + $0x610] sm:$0xff] %v664
      %697 = vst [vmem:[#allocation2 + $0x658] sm:$0xff] %v665
      %698 = vst [vmem:[#allocation2 + $0x6a0] sm:$0xff] %v666
      %699 = vst [vmem:[#allocation2 + $0x6e8] sm:$0xff] %v667
      %700 = vst [vmem:[#allocation2 + $0x730] sm:$0xff] %v668
      %701 = vst [vmem:[#allocation2 + $0x778] sm:$0xff] %v669
      %702 = vst [vmem:[#allocation2 + $0x7c0] sm:$0xff] %v670
      %703 = vst [vmem:[#allocation2 + $0x808] sm:$0xff] %v671
      %704 = vst [vmem:[#allocation2 + $0x850] sm:$0xff] %v672
      %705 = vst [vmem:[#allocation2 + $0x898] sm:$0xff] %v673
      %706 = vst [vmem:[#allocation2 + $0x8e0] sm:$0xff] %v674
      %s707 = scalar_lea.vmem %s246, 64
      %v708 = vld [vmem:[%s707 + $0x7] sm:$0xff]
      %v709 = vld [vmem:[%s707 + $0xf] sm:$0xff]
      %v710 = vld [vmem:[%s707 + $0x27] sm:$0xff]
      %v711 = vld [vmem:[%s707 + $0x2f] sm:$0xff]
      %v712 = vld [vmem:[%s707 + $0x47] sm:$0xff]
      %v713 = vld [vmem:[%s707 + $0x4f] sm:$0xff]
      %v714 = vld [vmem:[%s707 + $0x67] sm:$0xff]
      %v715 = vld [vmem:[%s707 + $0x6f] sm:$0xff]
      %v716 = vld [vmem:[%s707 + $0x87] sm:$0xff]
      %v717 = vld [vmem:[%s707 + $0x8f] sm:$0xff]
      %v718 = vld [vmem:[%s707 + $0xa7] sm:$0xff]
      %v719 = vld [vmem:[%s707 + $0xaf] sm:$0xff]
      %v720 = vld [vmem:[%s707 + $0xc7] sm:$0xff]
      %v721 = vld [vmem:[%s707 + $0xcf] sm:$0xff]
      %v722 = vld [vmem:[%s707 + $0xe7] sm:$0xff]
      %v723 = vld [vmem:[%s707 + $0xef] sm:$0xff]
      %v724 = vld [vmem:[%s707 + $0x107] sm:$0xff]
      %v725 = vld [vmem:[%s707 + $0x10f] sm:$0xff]
      %v726 = vld [vmem:[%s707 + $0x127] sm:$0xff]
      %v727 = vld [vmem:[%s707 + $0x12f] sm:$0xff]
      %v728 = vld [vmem:[%s707 + $0x147] sm:$0xff]
      %v729 = vld [vmem:[%s707 + $0x14f] sm:$0xff]
      %v730 = vld [vmem:[%s707 + $0x167] sm:$0xff]
      %v731 = vld [vmem:[%s707 + $0x16f] sm:$0xff]
      %v732 = vld [vmem:[%s707 + $0x187] sm:$0xff]
      %v733 = vld [vmem:[%s707 + $0x18f] sm:$0xff]
      %v734 = vld [vmem:[%s707 + $0x1a7] sm:$0xff]
      %v735 = vld [vmem:[%s707 + $0x1af] sm:$0xff]
      %v736 = vld [vmem:[%s707 + $0x1c7] sm:$0xff]
      %v737 = vld [vmem:[%s707 + $0x1cf] sm:$0xff]
      %v738 = vld [vmem:[%s707 + $0x1e7] sm:$0xff]
      %v739 = vld [vmem:[%s707 + $0x1ef] sm:$0xff]
      %740 = vst [vmem:[#allocation2 + $0x30] sm:$0xff] %v708
      %741 = vst [vmem:[#allocation2 + $0x78] sm:$0xff] %v709
      %742 = vst [vmem:[#allocation2 + $0xc0] sm:$0xff] %v710
      %743 = vst [vmem:[#allocation2 + $0x108] sm:$0xff] %v711
      %744 = vst [vmem:[#allocation2 + $0x150] sm:$0xff] %v712
      %745 = vst [vmem:[#allocation2 + $0x198] sm:$0xff] %v713
      %746 = vst [vmem:[#allocation2 + $0x1e0] sm:$0xff] %v714
      %747 = vst [vmem:[#allocation2 + $0x228] sm:$0xff] %v715
      %748 = vst [vmem:[#allocation2 + $0x270] sm:$0xff] %v716
      %749 = vst [vmem:[#allocation2 + $0x2b8] sm:$0xff] %v717
      %750 = vst [vmem:[#allocation2 + $0x300] sm:$0xff] %v718
      %751 = vst [vmem:[#allocation2 + $0x348] sm:$0xff] %v719
      %752 = vst [vmem:[#allocation2 + $0x390] sm:$0xff] %v720
      %753 = vst [vmem:[#allocation2 + $0x3d8] sm:$0xff] %v721
      %754 = vst [vmem:[#allocation2 + $0x420] sm:$0xff] %v722
      %755 = vst [vmem:[#allocation2 + $0x468] sm:$0xff] %v723
      %756 = vst [vmem:[#allocation2 + $0x4b0] sm:$0xff] %v724
      %757 = vst [vmem:[#allocation2 + $0x4f8] sm:$0xff] %v725
      %758 = vst [vmem:[#allocation2 + $0x540] sm:$0xff] %v726
      %759 = vst [vmem:[#allocation2 + $0x588] sm:$0xff] %v727
      %760 = vst [vmem:[#allocation2 + $0x5d0] sm:$0xff] %v728
      %761 = vst [vmem:[#allocation2 + $0x618] sm:$0xff] %v729
      %762 = vst [vmem:[#allocation2 + $0x660] sm:$0xff] %v730
      %763 = vst [vmem:[#allocation2 + $0x6a8] sm:$0xff] %v731
      %764 = vst [vmem:[#allocation2 + $0x6f0] sm:$0xff] %v732
      %765 = vst [vmem:[#allocation2 + $0x738] sm:$0xff] %v733
      %766 = vst [vmem:[#allocation2 + $0x780] sm:$0xff] %v734
      %767 = vst [vmem:[#allocation2 + $0x7c8] sm:$0xff] %v735
      %768 = vst [vmem:[#allocation2 + $0x810] sm:$0xff] %v736
      %769 = vst [vmem:[#allocation2 + $0x858] sm:$0xff] %v737
      %770 = vst [vmem:[#allocation2 + $0x8a0] sm:$0xff] %v738
      %771 = vst [vmem:[#allocation2 + $0x8e8] sm:$0xff] %v739
      %v772 = vld [vmem:[%s707 + $0x8] sm:$0xff]
      %v773 = vld [vmem:[%s707 + $0x10] sm:$0xff]
      %v774 = vld [vmem:[%s707 + $0x28] sm:$0xff]
      %v775 = vld [vmem:[%s707 + $0x30] sm:$0xff]
      %v776 = vld [vmem:[%s707 + $0x48] sm:$0xff]
      %v777 = vld [vmem:[%s707 + $0x50] sm:$0xff]
      %v778 = vld [vmem:[%s707 + $0x68] sm:$0xff]
      %v779 = vld [vmem:[%s707 + $0x70] sm:$0xff]
      %v780 = vld [vmem:[%s707 + $0x88] sm:$0xff]
      %v781 = vld [vmem:[%s707 + $0x90] sm:$0xff]
      %v782 = vld [vmem:[%s707 + $0xa8] sm:$0xff]
      %v783 = vld [vmem:[%s707 + $0xb0] sm:$0xff]
      %v784 = vld [vmem:[%s707 + $0xc8] sm:$0xff]
      %v785 = vld [vmem:[%s707 + $0xd0] sm:$0xff]
      %v786 = vld [vmem:[%s707 + $0xe8] sm:$0xff]
      %v787 = vld [vmem:[%s707 + $0xf0] sm:$0xff]
      %v788 = vld [vmem:[%s707 + $0x108] sm:$0xff]
      %v789 = vld [vmem:[%s707 + $0x110] sm:$0xff]
      %v790 = vld [vmem:[%s707 + $0x128] sm:$0xff]
      %v791 = vld [vmem:[%s707 + $0x130] sm:$0xff]
      %v792 = vld [vmem:[%s707 + $0x148] sm:$0xff]
      %v793 = vld [vmem:[%s707 + $0x150] sm:$0xff]
      %v794 = vld [vmem:[%s707 + $0x168] sm:$0xff]
      %v795 = vld [vmem:[%s707 + $0x170] sm:$0xff]
      %v796 = vld [vmem:[%s707 + $0x188] sm:$0xff]
      %v797 = vld [vmem:[%s707 + $0x190] sm:$0xff]
      %v798 = vld [vmem:[%s707 + $0x1a8] sm:$0xff]
      %v799 = vld [vmem:[%s707 + $0x1b0] sm:$0xff]
      %v800 = vld [vmem:[%s707 + $0x1c8] sm:$0xff]
      %v801 = vld [vmem:[%s707 + $0x1d0] sm:$0xff]
      %v802 = vld [vmem:[%s707 + $0x1e8] sm:$0xff]
      %v803 = vld [vmem:[%s707 + $0x1f0] sm:$0xff]
      %804 = vst [vmem:[#allocation2 + $0x38] sm:$0xff] %v772
      %805 = vst [vmem:[#allocation2 + $0x80] sm:$0xff] %v773
      %806 = vst [vmem:[#allocation2 + $0xc8] sm:$0xff] %v774
      %807 = vst [vmem:[#allocation2 + $0x110] sm:$0xff] %v775
      %808 = vst [vmem:[#allocation2 + $0x158] sm:$0xff] %v776
      %809 = vst [vmem:[#allocation2 + $0x1a0] sm:$0xff] %v777
      %810 = vst [vmem:[#allocation2 + $0x1e8] sm:$0xff] %v778
      %811 = vst [vmem:[#allocation2 + $0x230] sm:$0xff] %v779
      %812 = vst [vmem:[#allocation2 + $0x278] sm:$0xff] %v780
      %813 = vst [vmem:[#allocation2 + $0x2c0] sm:$0xff] %v781
      %814 = vst [vmem:[#allocation2 + $0x308] sm:$0xff] %v782
      %815 = vst [vmem:[#allocation2 + $0x350] sm:$0xff] %v783
      %816 = vst [vmem:[#allocation2 + $0x398] sm:$0xff] %v784
      %817 = vst [vmem:[#allocation2 + $0x3e0] sm:$0xff] %v785
      %818 = vst [vmem:[#allocation2 + $0x428] sm:$0xff] %v786
      %819 = vst [vmem:[#allocation2 + $0x470] sm:$0xff] %v787
      %820 = vst [vmem:[#allocation2 + $0x4b8] sm:$0xff] %v788
      %821 = vst [vmem:[#allocation2 + $0x500] sm:$0xff] %v789
      %822 = vst [vmem:[#allocation2 + $0x548] sm:$0xff] %v790
      %823 = vst [vmem:[#allocation2 + $0x590] sm:$0xff] %v791
      %824 = vst [vmem:[#allocation2 + $0x5d8] sm:$0xff] %v792
      %825 = vst [vmem:[#allocation2 + $0x620] sm:$0xff] %v793
      %826 = vst [vmem:[#allocation2 + $0x668] sm:$0xff] %v794
      %827 = vst [vmem:[#allocation2 + $0x6b0] sm:$0xff] %v795
      %828 = vst [vmem:[#allocation2 + $0x6f8] sm:$0xff] %v796
      %829 = vst [vmem:[#allocation2 + $0x740] sm:$0xff] %v797
      %830 = vst [vmem:[#allocation2 + $0x788] sm:$0xff] %v798
      %831 = vst [vmem:[#allocation2 + $0x7d0] sm:$0xff] %v799
      %832 = vst [vmem:[#allocation2 + $0x818] sm:$0xff] %v800
      %833 = vst [vmem:[#allocation2 + $0x860] sm:$0xff] %v801
      %834 = vst [vmem:[#allocation2 + $0x8a8] sm:$0xff] %v802
      %835 = vst [vmem:[#allocation2 + $0x8f0] sm:$0xff] %v803
      %v836 = vld [vmem:[%s707 + $0x9] sm:$0xff]
      %v837 = vld [vmem:[%s707 + $0x11] sm:$0xff]
      %v838 = vld [vmem:[%s707 + $0x29] sm:$0xff]
      %v839 = vld [vmem:[%s707 + $0x31] sm:$0xff]
      %v840 = vld [vmem:[%s707 + $0x49] sm:$0xff]
      %v841 = vld [vmem:[%s707 + $0x51] sm:$0xff]
      %v842 = vld [vmem:[%s707 + $0x69] sm:$0xff]
      %v843 = vld [vmem:[%s707 + $0x71] sm:$0xff]
      %v844 = vld [vmem:[%s707 + $0x89] sm:$0xff]
      %v845 = vld [vmem:[%s707 + $0x91] sm:$0xff]
      %v846 = vld [vmem:[%s707 + $0xa9] sm:$0xff]
      %v847 = vld [vmem:[%s707 + $0xb1] sm:$0xff]
      %v848 = vld [vmem:[%s707 + $0xc9] sm:$0xff]
      %v849 = vld [vmem:[%s707 + $0xd1] sm:$0xff]
      %v850 = vld [vmem:[%s707 + $0xe9] sm:$0xff]
      %v851 = vld [vmem:[%s707 + $0xf1] sm:$0xff]
      %v852 = vld [vmem:[%s707 + $0x109] sm:$0xff]
      %v853 = vld [vmem:[%s707 + $0x111] sm:$0xff]
      %v854 = vld [vmem:[%s707 + $0x129] sm:$0xff]
      %v855 = vld [vmem:[%s707 + $0x131] sm:$0xff]
      %v856 = vld [vmem:[%s707 + $0x149] sm:$0xff]
      %v857 = vld [vmem:[%s707 + $0x151] sm:$0xff]
      %v858 = vld [vmem:[%s707 + $0x169] sm:$0xff]
      %v859 = vld [vmem:[%s707 + $0x171] sm:$0xff]
      %v860 = vld [vmem:[%s707 + $0x189] sm:$0xff]
      %v861 = vld [vmem:[%s707 + $0x191] sm:$0xff]
      %v862 = vld [vmem:[%s707 + $0x1a9] sm:$0xff]
      %v863 = vld [vmem:[%s707 + $0x1b1] sm:$0xff]
      %v864 = vld [vmem:[%s707 + $0x1c9] sm:$0xff]
      %v865 = vld [vmem:[%s707 + $0x1d1] sm:$0xff]
      %v866 = vld [vmem:[%s707 + $0x1e9] sm:$0xff]
      %v867 = vld [vmem:[%s707 + $0x1f1] sm:$0xff]
      %868 = vst [vmem:[#allocation2 + $0x40] sm:$0xff] %v836
      %869 = vst [vmem:[#allocation2 + $0x88] sm:$0xff] %v837
      %870 = vst [vmem:[#allocation2 + $0xd0] sm:$0xff] %v838
      %871 = vst [vmem:[#allocation2 + $0x118] sm:$0xff] %v839
      %872 = vst [vmem:[#allocation2 + $0x160] sm:$0xff] %v840
      %873 = vst [vmem:[#allocation2 + $0x1a8] sm:$0xff] %v841
      %874 = vst [vmem:[#allocation2 + $0x1f0] sm:$0xff] %v842
      %875 = vst [vmem:[#allocation2 + $0x238] sm:$0xff] %v843
      %876 = vst [vmem:[#allocation2 + $0x280] sm:$0xff] %v844
      %877 = vst [vmem:[#allocation2 + $0x2c8] sm:$0xff] %v845
      %878 = vst [vmem:[#allocation2 + $0x310] sm:$0xff] %v846
      %879 = vst [vmem:[#allocation2 + $0x358] sm:$0xff] %v847
      %880 = vst [vmem:[#allocation2 + $0x3a0] sm:$0xff] %v848
      %881 = vst [vmem:[#allocation2 + $0x3e8] sm:$0xff] %v849
      %882 = vst [vmem:[#allocation2 + $0x430] sm:$0xff] %v850
      %883 = vst [vmem:[#allocation2 + $0x478] sm:$0xff] %v851
      %884 = vst [vmem:[#allocation2 + $0x4c0] sm:$0xff] %v852
      %885 = vst [vmem:[#allocation2 + $0x508] sm:$0xff] %v853
      %886 = vst [vmem:[#allocation2 + $0x550] sm:$0xff] %v854
      %887 = vst [vmem:[#allocation2 + $0x598] sm:$0xff] %v855
      %888 = vst [vmem:[#allocation2 + $0x5e0] sm:$0xff] %v856
      %889 = vst [vmem:[#allocation2 + $0x628] sm:$0xff] %v857
      %890 = vst [vmem:[#allocation2 + $0x670] sm:$0xff] %v858
      %891 = vst [vmem:[#allocation2 + $0x6b8] sm:$0xff] %v859
      %892 = vst [vmem:[#allocation2 + $0x700] sm:$0xff] %v860
      %893 = vst [vmem:[#allocation2 + $0x748] sm:$0xff] %v861
      %894 = vst [vmem:[#allocation2 + $0x790] sm:$0xff] %v862
      %895 = vst [vmem:[#allocation2 + $0x7d8] sm:$0xff] %v863
      %896 = vst [vmem:[#allocation2 + $0x820] sm:$0xff] %v864
      %897 = vst [vmem:[#allocation2 + $0x868] sm:$0xff] %v865
      %898 = vst [vmem:[#allocation2 + $0x8b0] sm:$0xff] %v866
      %899 = vst [vmem:[#allocation2 + $0x8f8] sm:$0xff] %v867
      %v900 = vld [vmem:[#allocation2] sm:$0xff]
      %v901 = vld [vmem:[#allocation2 + $0x8] sm:$0xff]
      %v902 = vld [vmem:[#allocation2 + $0x10] sm:$0xff]
      %v903 = vld [vmem:[#allocation2 + $0x18] sm:$0xff]
      %v904 = vld [vmem:[#allocation2 + $0x20] sm:$0xff]
      %v905 = vld [vmem:[#allocation2 + $0x28] sm:$0xff]
      %v906 = vld [vmem:[#allocation2 + $0x30] sm:$0xff]
      %v907 = vld [vmem:[#allocation2 + $0x38] sm:$0xff]
      %v908 = vld [vmem:[#allocation2 + $0x40] sm:$0xff]
      %v909 = vld [vmem:[#allocation2 + $0x48] sm:$0xff]
      %v910 = vld [vmem:[#allocation2 + $0x50] sm:$0xff]
      %v911 = vld [vmem:[#allocation2 + $0x58] sm:$0xff]
      %v912 = vld [vmem:[#allocation2 + $0x60] sm:$0xff]
      %v913 = vld [vmem:[#allocation2 + $0x68] sm:$0xff]
      %v914 = vld [vmem:[#allocation2 + $0x70] sm:$0xff]
      %v915 = vld [vmem:[#allocation2 + $0x78] sm:$0xff]
      %v916 = vld [vmem:[#allocation2 + $0x80] sm:$0xff]
      %v917 = vld [vmem:[#allocation2 + $0x88] sm:$0xff]
      %v918 = vld [vmem:[#allocation2 + $0x90] sm:$0xff]
      %v919 = vld [vmem:[#allocation2 + $0x98] sm:$0xff]
      %v920 = vld [vmem:[#allocation2 + $0xa0] sm:$0xff]
      %v921 = vld [vmem:[#allocation2 + $0xa8] sm:$0xff]
      %v922 = vld [vmem:[#allocation2 + $0xb0] sm:$0xff]
      %v923 = vld [vmem:[#allocation2 + $0xb8] sm:$0xff]
      %v924 = vld [vmem:[#allocation2 + $0xc0] sm:$0xff]
      %v925 = vld [vmem:[#allocation2 + $0xc8] sm:$0xff]
      %v926 = vld [vmem:[#allocation2 + $0xd0] sm:$0xff]
      %v927 = vld [vmem:[#allocation2 + $0xd8] sm:$0xff]
      %v928 = vld [vmem:[#allocation2 + $0xe0] sm:$0xff]
      %v929 = vld [vmem:[#allocation2 + $0xe8] sm:$0xff]
      %v930 = vld [vmem:[#allocation2 + $0xf0] sm:$0xff]
      %v931 = vld [vmem:[#allocation2 + $0xf8] sm:$0xff]
      %v932 = vld [vmem:[#allocation2 + $0x100] sm:$0xff]
      %v933 = vld [vmem:[#allocation2 + $0x108] sm:$0xff]
      %v934 = vld [vmem:[#allocation2 + $0x110] sm:$0xff]
      %v935 = vld [vmem:[#allocation2 + $0x118] sm:$0xff]
      %v936 = vld [vmem:[#allocation2 + $0x120] sm:$0xff]
      %v937 = vld [vmem:[#allocation2 + $0x128] sm:$0xff]
      %v938 = vld [vmem:[#allocation2 + $0x130] sm:$0xff]
      %v939 = vld [vmem:[#allocation2 + $0x138] sm:$0xff]
      %v940 = vld [vmem:[#allocation2 + $0x140] sm:$0xff]
      %v941 = vld [vmem:[#allocation2 + $0x148] sm:$0xff]
      %v942 = vld [vmem:[#allocation2 + $0x150] sm:$0xff]
      %v943 = vld [vmem:[#allocation2 + $0x158] sm:$0xff]
      %v944 = vld [vmem:[#allocation2 + $0x160] sm:$0xff]
      %v945 = vld [vmem:[#allocation2 + $0x168] sm:$0xff]
      %v946 = vld [vmem:[#allocation2 + $0x170] sm:$0xff]
      %v947 = vld [vmem:[#allocation2 + $0x178] sm:$0xff]
      %v948 = vld [vmem:[#allocation2 + $0x180] sm:$0xff]
      %v949 = vld [vmem:[#allocation2 + $0x188] sm:$0xff]
      %v950 = vld [vmem:[#allocation2 + $0x190] sm:$0xff]
      %v951 = vld [vmem:[#allocation2 + $0x198] sm:$0xff]
      %v952 = vld [vmem:[#allocation2 + $0x1a0] sm:$0xff]
      %v953 = vld [vmem:[#allocation2 + $0x1a8] sm:$0xff]
      %v954 = vld [vmem:[#allocation2 + $0x1b0] sm:$0xff]
      %v955 = vld [vmem:[#allocation2 + $0x1b8] sm:$0xff]
      %v956 = vld [vmem:[#allocation2 + $0x1c0] sm:$0xff]
      %v957 = vld [vmem:[#allocation2 + $0x1c8] sm:$0xff]
      %v958 = vld [vmem:[#allocation2 + $0x1d0] sm:$0xff]
      %v959 = vld [vmem:[#allocation2 + $0x1d8] sm:$0xff]
      %v960 = vld [vmem:[#allocation2 + $0x1e0] sm:$0xff]
      %v961 = vld [vmem:[#allocation2 + $0x1e8] sm:$0xff]
      %v962 = vld [vmem:[#allocation2 + $0x1f0] sm:$0xff]
      %v963 = vld [vmem:[#allocation2 + $0x1f8] sm:$0xff]
      %v964 = vld [vmem:[#allocation2 + $0x200] sm:$0xff]
      %v965 = vld [vmem:[#allocation2 + $0x208] sm:$0xff]
      %v966 = vld [vmem:[#allocation2 + $0x210] sm:$0xff]
      %v967 = vld [vmem:[#allocation2 + $0x218] sm:$0xff]
      %v968 = vld [vmem:[#allocation2 + $0x220] sm:$0xff]
      %v969 = vld [vmem:[#allocation2 + $0x228] sm:$0xff]
      %v970 = vld [vmem:[#allocation2 + $0x230] sm:$0xff]
      %v971 = vld [vmem:[#allocation2 + $0x238] sm:$0xff]
      %v972 = vld [vmem:[#allocation2 + $0x240] sm:$0xff]
      %v973 = vld [vmem:[#allocation2 + $0x248] sm:$0xff]
      %v974 = vld [vmem:[#allocation2 + $0x250] sm:$0xff]
      %v975 = vld [vmem:[#allocation2 + $0x258] sm:$0xff]
      %v976 = vld [vmem:[#allocation2 + $0x260] sm:$0xff]
      %v977 = vld [vmem:[#allocation2 + $0x268] sm:$0xff]
      %v978 = vld [vmem:[#allocation2 + $0x270] sm:$0xff]
      %v979 = vld [vmem:[#allocation2 + $0x278] sm:$0xff]
      %v980 = vld [vmem:[#allocation2 + $0x280] sm:$0xff]
      %v981 = vld [vmem:[#allocation2 + $0x288] sm:$0xff]
      %v982 = vld [vmem:[#allocation2 + $0x290] sm:$0xff]
      %v983 = vld [vmem:[#allocation2 + $0x298] sm:$0xff]
      %v984 = vld [vmem:[#allocation2 + $0x2a0] sm:$0xff]
      %v985 = vld [vmem:[#allocation2 + $0x2a8] sm:$0xff]
      %v986 = vld [vmem:[#allocation2 + $0x2b0] sm:$0xff]
      %v987 = vld [vmem:[#allocation2 + $0x2b8] sm:$0xff]
      %v988 = vld [vmem:[#allocation2 + $0x2c0] sm:$0xff]
      %v989 = vld [vmem:[#allocation2 + $0x2c8] sm:$0xff]
      %v990 = vld [vmem:[#allocation2 + $0x2d0] sm:$0xff]
      %v991 = vld [vmem:[#allocation2 + $0x2d8] sm:$0xff]
      %v992 = vld [vmem:[#allocation2 + $0x2e0] sm:$0xff]
      %v993 = vld [vmem:[#allocation2 + $0x2e8] sm:$0xff]
      %v994 = vld [vmem:[#allocation2 + $0x2f0] sm:$0xff]
      %v995 = vld [vmem:[#allocation2 + $0x2f8] sm:$0xff]
      %v996 = vld [vmem:[#allocation2 + $0x300] sm:$0xff]
      %v997 = vld [vmem:[#allocation2 + $0x308] sm:$0xff]
      %v998 = vld [vmem:[#allocation2 + $0x310] sm:$0xff]
      %v999 = vld [vmem:[#allocation2 + $0x318] sm:$0xff]
      %v1000 = vld [vmem:[#allocation2 + $0x320] sm:$0xff]
      %v1001 = vld [vmem:[#allocation2 + $0x328] sm:$0xff]
      %v1002 = vld [vmem:[#allocation2 + $0x330] sm:$0xff]
      %v1003 = vld [vmem:[#allocation2 + $0x338] sm:$0xff]
      %v1004 = vld [vmem:[#allocation2 + $0x340] sm:$0xff]
      %v1005 = vld [vmem:[#allocation2 + $0x348] sm:$0xff]
      %v1006 = vld [vmem:[#allocation2 + $0x350] sm:$0xff]
      %v1007 = vld [vmem:[#allocation2 + $0x358] sm:$0xff]
      %v1008 = vld [vmem:[#allocation2 + $0x360] sm:$0xff]
      %v1009 = vld [vmem:[#allocation2 + $0x368] sm:$0xff]
      %v1010 = vld [vmem:[#allocation2 + $0x370] sm:$0xff]
      %v1011 = vld [vmem:[#allocation2 + $0x378] sm:$0xff]
      %v1012 = vld [vmem:[#allocation2 + $0x380] sm:$0xff]
      %v1013 = vld [vmem:[#allocation2 + $0x388] sm:$0xff]
      %v1014 = vld [vmem:[#allocation2 + $0x390] sm:$0xff]
      %v1015 = vld [vmem:[#allocation2 + $0x398] sm:$0xff]
      %v1016 = vld [vmem:[#allocation2 + $0x3a0] sm:$0xff]
      %v1017 = vld [vmem:[#allocation2 + $0x3a8] sm:$0xff]
      %v1018 = vld [vmem:[#allocation2 + $0x3b0] sm:$0xff]
      %v1019 = vld [vmem:[#allocation2 + $0x3b8] sm:$0xff]
      %v1020 = vld [vmem:[#allocation2 + $0x3c0] sm:$0xff]
      %v1021 = vld [vmem:[#allocation2 + $0x3c8] sm:$0xff]
      %v1022 = vld [vmem:[#allocation2 + $0x3d0] sm:$0xff]
      %v1023 = vld [vmem:[#allocation2 + $0x3d8] sm:$0xff]
      %v1024 = vld [vmem:[#allocation2 + $0x3e0] sm:$0xff]
      %v1025 = vld [vmem:[#allocation2 + $0x3e8] sm:$0xff]
      %v1026 = vld [vmem:[#allocation2 + $0x3f0] sm:$0xff]
      %v1027 = vld [vmem:[#allocation2 + $0x3f8] sm:$0xff]
      %v1028 = vld [vmem:[#allocation2 + $0x400] sm:$0xff]
      %v1029 = vld [vmem:[#allocation2 + $0x408] sm:$0xff]
      %v1030 = vld [vmem:[#allocation2 + $0x410] sm:$0xff]
      %v1031 = vld [vmem:[#allocation2 + $0x418] sm:$0xff]
      %v1032 = vld [vmem:[#allocation2 + $0x420] sm:$0xff]
      %v1033 = vld [vmem:[#allocation2 + $0x428] sm:$0xff]
      %v1034 = vld [vmem:[#allocation2 + $0x430] sm:$0xff]
      %v1035 = vld [vmem:[#allocation2 + $0x438] sm:$0xff]
      %v1036 = vld [vmem:[#allocation2 + $0x440] sm:$0xff]
      %v1037 = vld [vmem:[#allocation2 + $0x448] sm:$0xff]
      %v1038 = vld [vmem:[#allocation2 + $0x450] sm:$0xff]
      %v1039 = vld [vmem:[#allocation2 + $0x458] sm:$0xff]
      %v1040 = vld [vmem:[#allocation2 + $0x460] sm:$0xff]
      %v1041 = vld [vmem:[#allocation2 + $0x468] sm:$0xff]
      %v1042 = vld [vmem:[#allocation2 + $0x470] sm:$0xff]
      %v1043 = vld [vmem:[#allocation2 + $0x478] sm:$0xff]
      %v1044 = vld [vmem:[#allocation2 + $0x480] sm:$0xff]
      %v1045 = vld [vmem:[#allocation2 + $0x488] sm:$0xff]
      %v1046 = vld [vmem:[#allocation2 + $0x490] sm:$0xff]
      %v1047 = vld [vmem:[#allocation2 + $0x498] sm:$0xff]
      %v1048 = vld [vmem:[#allocation2 + $0x4a0] sm:$0xff]
      %v1049 = vld [vmem:[#allocation2 + $0x4a8] sm:$0xff]
      %v1050 = vld [vmem:[#allocation2 + $0x4b0] sm:$0xff]
      %v1051 = vld [vmem:[#allocation2 + $0x4b8] sm:$0xff]
      %v1052 = vld [vmem:[#allocation2 + $0x4c0] sm:$0xff]
      %v1053 = vld [vmem:[#allocation2 + $0x4c8] sm:$0xff]
      %v1054 = vld [vmem:[#allocation2 + $0x4d0] sm:$0xff]
      %v1055 = vld [vmem:[#allocation2 + $0x4d8] sm:$0xff]
      %v1056 = vld [vmem:[#allocation2 + $0x4e0] sm:$0xff]
      %v1057 = vld [vmem:[#allocation2 + $0x4e8] sm:$0xff]
      %v1058 = vld [vmem:[#allocation2 + $0x4f0] sm:$0xff]
      %v1059 = vld [vmem:[#allocation2 + $0x4f8] sm:$0xff]
      %v1060 = vld [vmem:[#allocation2 + $0x500] sm:$0xff]
      %v1061 = vld [vmem:[#allocation2 + $0x508] sm:$0xff]
      %v1062 = vld [vmem:[#allocation2 + $0x510] sm:$0xff]
      %v1063 = vld [vmem:[#allocation2 + $0x518] sm:$0xff]
      %v1064 = vld [vmem:[#allocation2 + $0x520] sm:$0xff]
      %v1065 = vld [vmem:[#allocation2 + $0x528] sm:$0xff]
      %v1066 = vld [vmem:[#allocation2 + $0x530] sm:$0xff]
      %v1067 = vld [vmem:[#allocation2 + $0x538] sm:$0xff]
      %v1068 = vld [vmem:[#allocation2 + $0x540] sm:$0xff]
      %v1069 = vld [vmem:[#allocation2 + $0x548] sm:$0xff]
      %v1070 = vld [vmem:[#allocation2 + $0x550] sm:$0xff]
      %v1071 = vld [vmem:[#allocation2 + $0x558] sm:$0xff]
      %v1072 = vld [vmem:[#allocation2 + $0x560] sm:$0xff]
      %v1073 = vld [vmem:[#allocation2 + $0x568] sm:$0xff]
      %v1074 = vld [vmem:[#allocation2 + $0x570] sm:$0xff]
      %v1075 = vld [vmem:[#allocation2 + $0x578] sm:$0xff]
      %v1076 = vld [vmem:[#allocation2 + $0x580] sm:$0xff]
      %v1077 = vld [vmem:[#allocation2 + $0x588] sm:$0xff]
      %v1078 = vld [vmem:[#allocation2 + $0x590] sm:$0xff]
      %v1079 = vld [vmem:[#allocation2 + $0x598] sm:$0xff]
      %v1080 = vld [vmem:[#allocation2 + $0x5a0] sm:$0xff]
      %v1081 = vld [vmem:[#allocation2 + $0x5a8] sm:$0xff]
      %v1082 = vld [vmem:[#allocation2 + $0x5b0] sm:$0xff]
      %v1083 = vld [vmem:[#allocation2 + $0x5b8] sm:$0xff]
      %v1084 = vld [vmem:[#allocation2 + $0x5c0] sm:$0xff]
      %v1085 = vld [vmem:[#allocation2 + $0x5c8] sm:$0xff]
      %v1086 = vld [vmem:[#allocation2 + $0x5d0] sm:$0xff]
      %v1087 = vld [vmem:[#allocation2 + $0x5d8] sm:$0xff]
      %v1088 = vld [vmem:[#allocation2 + $0x5e0] sm:$0xff]
      %v1089 = vld [vmem:[#allocation2 + $0x5e8] sm:$0xff]
      %v1090 = vld [vmem:[#allocation2 + $0x5f0] sm:$0xff]
      %v1091 = vld [vmem:[#allocation2 + $0x5f8] sm:$0xff]
      %v1092 = vld [vmem:[#allocation2 + $0x600] sm:$0xff]
      %v1093 = vld [vmem:[#allocation2 + $0x608] sm:$0xff]
      %v1094 = vld [vmem:[#allocation2 + $0x610] sm:$0xff]
      %v1095 = vld [vmem:[#allocation2 + $0x618] sm:$0xff]
      %v1096 = vld [vmem:[#allocation2 + $0x620] sm:$0xff]
      %v1097 = vld [vmem:[#allocation2 + $0x628] sm:$0xff]
      %v1098 = vld [vmem:[#allocation2 + $0x630] sm:$0xff]
      %v1099 = vld [vmem:[#allocation2 + $0x638] sm:$0xff]
      %v1100 = vld [vmem:[#allocation2 + $0x640] sm:$0xff]
      %v1101 = vld [vmem:[#allocation2 + $0x648] sm:$0xff]
      %v1102 = vld [vmem:[#allocation2 + $0x650] sm:$0xff]
      %v1103 = vld [vmem:[#allocation2 + $0x658] sm:$0xff]
      %v1104 = vld [vmem:[#allocation2 + $0x660] sm:$0xff]
      %v1105 = vld [vmem:[#allocation2 + $0x668] sm:$0xff]
      %v1106 = vld [vmem:[#allocation2 + $0x670] sm:$0xff]
      %v1107 = vld [vmem:[#allocation2 + $0x678] sm:$0xff]
      %v1108 = vld [vmem:[#allocation2 + $0x680] sm:$0xff]
      %v1109 = vld [vmem:[#allocation2 + $0x688] sm:$0xff]
      %v1110 = vld [vmem:[#allocation2 + $0x690] sm:$0xff]
      %v1111 = vld [vmem:[#allocation2 + $0x698] sm:$0xff]
      %v1112 = vld [vmem:[#allocation2 + $0x6a0] sm:$0xff]
      %v1113 = vld [vmem:[#allocation2 + $0x6a8] sm:$0xff]
      %v1114 = vld [vmem:[#allocation2 + $0x6b0] sm:$0xff]
      %v1115 = vld [vmem:[#allocation2 + $0x6b8] sm:$0xff]
      %v1116 = vld [vmem:[#allocation2 + $0x6c0] sm:$0xff]
      %v1117 = vld [vmem:[#allocation2 + $0x6c8] sm:$0xff]
      %v1118 = vld [vmem:[#allocation2 + $0x6d0] sm:$0xff]
      %v1119 = vld [vmem:[#allocation2 + $0x6d8] sm:$0xff]
      %v1120 = vld [vmem:[#allocation2 + $0x6e0] sm:$0xff]
      %v1121 = vld [vmem:[#allocation2 + $0x6e8] sm:$0xff]
      %v1122 = vld [vmem:[#allocation2 + $0x6f0] sm:$0xff]
      %v1123 = vld [vmem:[#allocation2 + $0x6f8] sm:$0xff]
      %v1124 = vld [vmem:[#allocation2 + $0x700] sm:$0xff]
      %v1125 = vld [vmem:[#allocation2 + $0x708] sm:$0xff]
      %v1126 = vld [vmem:[#allocation2 + $0x710] sm:$0xff]
      %v1127 = vld [vmem:[#allocation2 + $0x718] sm:$0xff]
      %v1128 = vld [vmem:[#allocation2 + $0x720] sm:$0xff]
      %v1129 = vld [vmem:[#allocation2 + $0x728] sm:$0xff]
      %v1130 = vld [vmem:[#allocation2 + $0x730] sm:$0xff]
      %v1131 = vld [vmem:[#allocation2 + $0x738] sm:$0xff]
      %v1132 = vld [vmem:[#allocation2 + $0x740] sm:$0xff]
      %v1133 = vld [vmem:[#allocation2 + $0x748] sm:$0xff]
      %v1134 = vld [vmem:[#allocation2 + $0x750] sm:$0xff]
      %v1135 = vld [vmem:[#allocation2 + $0x758] sm:$0xff]
      %v1136 = vld [vmem:[#allocation2 + $0x760] sm:$0xff]
      %v1137 = vld [vmem:[#allocation2 + $0x768] sm:$0xff]
      %v1138 = vld [vmem:[#allocation2 + $0x770] sm:$0xff]
      %v1139 = vld [vmem:[#allocation2 + $0x778] sm:$0xff]
      %v1140 = vld [vmem:[#allocation2 + $0x780] sm:$0xff]
      %v1141 = vld [vmem:[#allocation2 + $0x788] sm:$0xff]
      %v1142 = vld [vmem:[#allocation2 + $0x790] sm:$0xff]
      %v1143 = vld [vmem:[#allocation2 + $0x798] sm:$0xff]
      %v1144 = vld [vmem:[#allocation2 + $0x7a0] sm:$0xff]
      %v1145 = vld [vmem:[#allocation2 + $0x7a8] sm:$0xff]
      %v1146 = vld [vmem:[#allocation2 + $0x7b0] sm:$0xff]
      %v1147 = vld [vmem:[#allocation2 + $0x7b8] sm:$0xff]
      %v1148 = vld [vmem:[#allocation2 + $0x7c0] sm:$0xff]
      %v1149 = vld [vmem:[#allocation2 + $0x7c8] sm:$0xff]
      %v1150 = vld [vmem:[#allocation2 + $0x7d0] sm:$0xff]
      %v1151 = vld [vmem:[#allocation2 + $0x7d8] sm:$0xff]
      %v1152 = vld [vmem:[#allocation2 + $0x7e0] sm:$0xff]
      %v1153 = vld [vmem:[#allocation2 + $0x7e8] sm:$0xff]
      %v1154 = vld [vmem:[#allocation2 + $0x7f0] sm:$0xff]
      %v1155 = vld [vmem:[#allocation2 + $0x7f8] sm:$0xff]
      %v1156 = vld [vmem:[#allocation2 + $0x800] sm:$0xff]
      %v1157 = vld [vmem:[#allocation2 + $0x808] sm:$0xff]
      %v1158 = vld [vmem:[#allocation2 + $0x810] sm:$0xff]
      %v1159 = vld [vmem:[#allocation2 + $0x818] sm:$0xff]
      %v1160 = vld [vmem:[#allocation2 + $0x820] sm:$0xff]
      %v1161 = vld [vmem:[#allocation2 + $0x828] sm:$0xff]
      %v1162 = vld [vmem:[#allocation2 + $0x830] sm:$0xff]
      %v1163 = vld [vmem:[#allocation2 + $0x838] sm:$0xff]
      %v1164 = vld [vmem:[#allocation2 + $0x840] sm:$0xff]
      %v1165 = vld [vmem:[#allocation2 + $0x848] sm:$0xff]
      %v1166 = vld [vmem:[#allocation2 + $0x850] sm:$0xff]
      %v1167 = vld [vmem:[#allocation2 + $0x858] sm:$0xff]
      %v1168 = vld [vmem:[#allocation2 + $0x860] sm:$0xff]
      %v1169 = vld [vmem:[#allocation2 + $0x868] sm:$0xff]
      %v1170 = vld [vmem:[#allocation2 + $0x870] sm:$0xff]
      %v1171 = vld [vmem:[#allocation2 + $0x878] sm:$0xff]
      %v1172 = vld [vmem:[#allocation2 + $0x880] sm:$0xff]
      %v1173 = vld [vmem:[#allocation2 + $0x888] sm:$0xff]
      %v1174 = vld [vmem:[#allocation2 + $0x890] sm:$0xff]
      %v1175 = vld [vmem:[#allocation2 + $0x898] sm:$0xff]
      %v1176 = vld [vmem:[#allocation2 + $0x8a0] sm:$0xff]
      %v1177 = vld [vmem:[#allocation2 + $0x8a8] sm:$0xff]
      %v1178 = vld [vmem:[#allocation2 + $0x8b0] sm:$0xff]
      %v1179 = vld [vmem:[#allocation2 + $0x8b8] sm:$0xff]
      %v1180 = vld [vmem:[#allocation2 + $0x8c0] sm:$0xff]
      %v1181 = vld [vmem:[#allocation2 + $0x8c8] sm:$0xff]
      %v1182 = vld [vmem:[#allocation2 + $0x8d0] sm:$0xff]
      %v1183 = vld [vmem:[#allocation2 + $0x8d8] sm:$0xff]
      %v1184 = vld [vmem:[#allocation2 + $0x8e0] sm:$0xff]
      %v1185 = vld [vmem:[#allocation2 + $0x8e8] sm:$0xff]
      %v1186 = vld [vmem:[#allocation2 + $0x8f0] sm:$0xff]
      %v1187 = vld [vmem:[#allocation2 + $0x8f8] sm:$0xff]
      %v1188 = vld [vmem:[%s1] sm:$0xff]
      %v1189 = vld [vmem:[%s1 + $0x8] sm:$0xff]
      %v1190 = vld [vmem:[%s1 + $0x10] sm:$0xff]
      %v1191 = vld [vmem:[%s1 + $0x18] sm:$0xff]
      %v1192 = vld [vmem:[%s1 + $0x20] sm:$0xff]
      %v1193 = vld [vmem:[%s1 + $0x28] sm:$0xff]
      %v1194 = vld [vmem:[%s1 + $0x30] sm:$0xff]
      %v1195 = vld [vmem:[%s1 + $0x38] sm:$0xff]
      %v1196 = vld [vmem:[%s1 + $0x40] sm:$0xff]
      %v1197 = vld [vmem:[%s1 + $0x48] sm:$0xff]
      %v1198 = vld [vmem:[%s1 + $0x50] sm:$0xff]
      %v1199 = vld [vmem:[%s1 + $0x58] sm:$0xff]
      %v1200 = vld [vmem:[%s1 + $0x60] sm:$0xff]
      %v1201 = vld [vmem:[%s1 + $0x68] sm:$0xff]
      %v1202 = vld [vmem:[%s1 + $0x70] sm:$0xff]
      %v1203 = vld [vmem:[%s1 + $0x78] sm:$0xff]
      %v1204 = vld [vmem:[%s1 + $0x80] sm:$0xff]
      %v1205 = vld [vmem:[%s1 + $0x88] sm:$0xff]
      %v1206 = vld [vmem:[%s1 + $0x90] sm:$0xff]
      %v1207 = vld [vmem:[%s1 + $0x98] sm:$0xff]
      %v1208 = vld [vmem:[%s1 + $0xa0] sm:$0xff]
      %v1209 = vld [vmem:[%s1 + $0xa8] sm:$0xff]
      %v1210 = vld [vmem:[%s1 + $0xb0] sm:$0xff]
      %v1211 = vld [vmem:[%s1 + $0xb8] sm:$0xff]
      %v1212 = vld [vmem:[%s1 + $0xc0] sm:$0xff]
      %v1213 = vld [vmem:[%s1 + $0xc8] sm:$0xff]
      %v1214 = vld [vmem:[%s1 + $0xd0] sm:$0xff]
      %v1215 = vld [vmem:[%s1 + $0xd8] sm:$0xff]
      %v1216 = vld [vmem:[%s1 + $0xe0] sm:$0xff]
      %v1217 = vld [vmem:[%s1 + $0xe8] sm:$0xff]
      %v1218 = vld [vmem:[%s1 + $0xf0] sm:$0xff]
      %v1219 = vld [vmem:[%s1 + $0xf8] sm:$0xff]
      %v1220 = vld [vmem:[%s1 + $0x100] sm:$0xff]
      %v1221 = vld [vmem:[%s1 + $0x108] sm:$0xff]
      %v1222 = vld [vmem:[%s1 + $0x110] sm:$0xff]
      %v1223 = vld [vmem:[%s1 + $0x118] sm:$0xff]
      %v1224 = vld [vmem:[%s1 + $0x120] sm:$0xff]
      %v1225 = vld [vmem:[%s1 + $0x128] sm:$0xff]
      %v1226 = vld [vmem:[%s1 + $0x130] sm:$0xff]
      %v1227 = vld [vmem:[%s1 + $0x138] sm:$0xff]
      %v1228 = vld [vmem:[%s1 + $0x140] sm:$0xff]
      %v1229 = vld [vmem:[%s1 + $0x148] sm:$0xff]
      %v1230 = vld [vmem:[%s1 + $0x150] sm:$0xff]
      %v1231 = vld [vmem:[%s1 + $0x158] sm:$0xff]
      %v1232 = vld [vmem:[%s1 + $0x160] sm:$0xff]
      %v1233 = vld [vmem:[%s1 + $0x168] sm:$0xff]
      %v1234 = vld [vmem:[%s1 + $0x170] sm:$0xff]
      %v1235 = vld [vmem:[%s1 + $0x178] sm:$0xff]
      %v1236 = vld [vmem:[%s1 + $0x180] sm:$0xff]
      %v1237 = vld [vmem:[%s1 + $0x188] sm:$0xff]
      %v1238 = vld [vmem:[%s1 + $0x190] sm:$0xff]
      %v1239 = vld [vmem:[%s1 + $0x198] sm:$0xff]
      %v1240 = vld [vmem:[%s1 + $0x1a0] sm:$0xff]
      %v1241 = vld [vmem:[%s1 + $0x1a8] sm:$0xff]
      %v1242 = vld [vmem:[%s1 + $0x1b0] sm:$0xff]
      %v1243 = vld [vmem:[%s1 + $0x1b8] sm:$0xff]
      %v1244 = vld [vmem:[%s1 + $0x1c0] sm:$0xff]
      %v1245 = vld [vmem:[%s1 + $0x1c8] sm:$0xff]
      %v1246 = vld [vmem:[%s1 + $0x1d0] sm:$0xff]
      %v1247 = vld [vmem:[%s1 + $0x1d8] sm:$0xff]
      %v1248 = vld [vmem:[%s1 + $0x1e0] sm:$0xff]
      %v1249 = vld [vmem:[%s1 + $0x1e8] sm:$0xff]
      %v1250 = vld [vmem:[%s1 + $0x1f0] sm:$0xff]
      %v1251 = vld [vmem:[%s1 + $0x1f8] sm:$0xff]
      %v1252 = vld [vmem:[%s1 + $0x200] sm:$0xff]
      %v1253 = vld [vmem:[%s1 + $0x208] sm:$0xff]
      %v1254 = vld [vmem:[%s1 + $0x210] sm:$0xff]
      %v1255 = vld [vmem:[%s1 + $0x218] sm:$0xff]
      %v1256 = vld [vmem:[%s1 + $0x220] sm:$0xff]
      %v1257 = vld [vmem:[%s1 + $0x228] sm:$0xff]
      %v1258 = vld [vmem:[%s1 + $0x230] sm:$0xff]
      %v1259 = vld [vmem:[%s1 + $0x238] sm:$0xff]
      %v1260 = vld [vmem:[%s1 + $0x240] sm:$0xff]
      %v1261 = vld [vmem:[%s1 + $0x248] sm:$0xff]
      %v1262 = vld [vmem:[%s1 + $0x250] sm:$0xff]
      %v1263 = vld [vmem:[%s1 + $0x258] sm:$0xff]
      %v1264 = vld [vmem:[%s1 + $0x260] sm:$0xff]
      %v1265 = vld [vmem:[%s1 + $0x268] sm:$0xff]
      %v1266 = vld [vmem:[%s1 + $0x270] sm:$0xff]
      %v1267 = vld [vmem:[%s1 + $0x278] sm:$0xff]
      %v1268 = vld [vmem:[%s1 + $0x280] sm:$0xff]
      %v1269 = vld [vmem:[%s1 + $0x288] sm:$0xff]
      %v1270 = vld [vmem:[%s1 + $0x290] sm:$0xff]
      %v1271 = vld [vmem:[%s1 + $0x298] sm:$0xff]
      %v1272 = vld [vmem:[%s1 + $0x2a0] sm:$0xff]
      %v1273 = vld [vmem:[%s1 + $0x2a8] sm:$0xff]
      %v1274 = vld [vmem:[%s1 + $0x2b0] sm:$0xff]
      %v1275 = vld [vmem:[%s1 + $0x2b8] sm:$0xff]
      %v1276 = vld [vmem:[%s1 + $0x2c0] sm:$0xff]
      %v1277 = vld [vmem:[%s1 + $0x2c8] sm:$0xff]
      %v1278 = vld [vmem:[%s1 + $0x2d0] sm:$0xff]
      %v1279 = vld [vmem:[%s1 + $0x2d8] sm:$0xff]
      %v1280 = vld [vmem:[%s1 + $0x2e0] sm:$0xff]
      %v1281 = vld [vmem:[%s1 + $0x2e8] sm:$0xff]
      %v1282 = vld [vmem:[%s1 + $0x2f0] sm:$0xff]
      %v1283 = vld [vmem:[%s1 + $0x2f8] sm:$0xff]
      %v1284 = vld [vmem:[%s1 + $0x300] sm:$0xff]
      %v1285 = vld [vmem:[%s1 + $0x308] sm:$0xff]
      %v1286 = vld [vmem:[%s1 + $0x310] sm:$0xff]
      %v1287 = vld [vmem:[%s1 + $0x318] sm:$0xff]
      %v1288 = vld [vmem:[%s1 + $0x320] sm:$0xff]
      %v1289 = vld [vmem:[%s1 + $0x328] sm:$0xff]
      %v1290 = vld [vmem:[%s1 + $0x330] sm:$0xff]
      %v1291 = vld [vmem:[%s1 + $0x338] sm:$0xff]
      %v1292 = vld [vmem:[%s1 + $0x340] sm:$0xff]
      %v1293 = vld [vmem:[%s1 + $0x348] sm:$0xff]
      %v1294 = vld [vmem:[%s1 + $0x350] sm:$0xff]
      %v1295 = vld [vmem:[%s1 + $0x358] sm:$0xff]
      %v1296 = vld [vmem:[%s1 + $0x360] sm:$0xff]
      %v1297 = vld [vmem:[%s1 + $0x368] sm:$0xff]
      %v1298 = vld [vmem:[%s1 + $0x370] sm:$0xff]
      %v1299 = vld [vmem:[%s1 + $0x378] sm:$0xff]
      %v1300 = vld [vmem:[%s1 + $0x380] sm:$0xff]
      %v1301 = vld [vmem:[%s1 + $0x388] sm:$0xff]
      %v1302 = vld [vmem:[%s1 + $0x390] sm:$0xff]
      %v1303 = vld [vmem:[%s1 + $0x398] sm:$0xff]
      %v1304 = vld [vmem:[%s1 + $0x3a0] sm:$0xff]
      %v1305 = vld [vmem:[%s1 + $0x3a8] sm:$0xff]
      %v1306 = vld [vmem:[%s1 + $0x3b0] sm:$0xff]
      %v1307 = vld [vmem:[%s1 + $0x3b8] sm:$0xff]
      %v1308 = vld [vmem:[%s1 + $0x3c0] sm:$0xff]
      %v1309 = vld [vmem:[%s1 + $0x3c8] sm:$0xff]
      %v1310 = vld [vmem:[%s1 + $0x3d0] sm:$0xff]
      %v1311 = vld [vmem:[%s1 + $0x3d8] sm:$0xff]
      %v1312 = vld [vmem:[%s1 + $0x3e0] sm:$0xff]
      %v1313 = vld [vmem:[%s1 + $0x3e8] sm:$0xff]
      %v1314 = vld [vmem:[%s1 + $0x3f0] sm:$0xff]
      %v1315 = vld [vmem:[%s1 + $0x3f8] sm:$0xff]
      %v1316 = vld [vmem:[%s1 + $0x400] sm:$0xff]
      %v1317 = vld [vmem:[%s1 + $0x408] sm:$0xff]
      %v1318 = vld [vmem:[%s1 + $0x410] sm:$0xff]
      %v1319 = vld [vmem:[%s1 + $0x418] sm:$0xff]
      %v1320 = vld [vmem:[%s1 + $0x420] sm:$0xff]
      %v1321 = vld [vmem:[%s1 + $0x428] sm:$0xff]
      %v1322 = vld [vmem:[%s1 + $0x430] sm:$0xff]
      %v1323 = vld [vmem:[%s1 + $0x438] sm:$0xff]
      %v1324 = vld [vmem:[%s1 + $0x440] sm:$0xff]
      %v1325 = vld [vmem:[%s1 + $0x448] sm:$0xff]
      %v1326 = vld [vmem:[%s1 + $0x450] sm:$0xff]
      %v1327 = vld [vmem:[%s1 + $0x458] sm:$0xff]
      %v1328 = vld [vmem:[%s1 + $0x460] sm:$0xff]
      %v1329 = vld [vmem:[%s1 + $0x468] sm:$0xff]
      %v1330 = vld [vmem:[%s1 + $0x470] sm:$0xff]
      %v1331 = vld [vmem:[%s1 + $0x478] sm:$0xff]
      %1332 = vmatprep.subr.mxu0 0.0
      %1333 = vmatpush1.msra.mxu0 %v1188
      %1334 = vmatprep.subr.mxu0 0.0
      %1335 = vmatpush1.msra.mxu0 %v1189
      %1336 = vmatprep.subr.mxu0 0.0
      %1337 = vmatpush1.msra.mxu0 %v1190
      %1338 = vmatprep.subr.mxu0 0.0
      %1339 = vmatpush1.msra.mxu0 %v1191
      %1340 = vmatprep.subr.mxu0 0.0
      %1341 = vmatpush1.msra.mxu0 %v1192
      %1342 = vmatprep.subr.mxu0 0.0
      %1343 = vmatpush1.msra.mxu0 %v1193
      %1344 = vmatprep.subr.mxu0 0.0
      %1345 = vmatpush1.msra.mxu0 %v1194
      %1346 = vmatprep.subr.mxu0 0.0
      %1347 = vmatpush1.msra.mxu0 %v1195
      %1348 = vmatprep.subr.mxu0 0.0
      %1349 = vmatpush1.msra.mxu0 %v1196
      %1350 = vmatprep.subr.mxu0 0.0
      %1351 = vmatpush1.msra.mxu0 %v1197
      %1352 = vmatprep.subr.mxu0 0.0
      %1353 = vmatpush1.msra.mxu0 %v1198
      %1354 = vmatprep.subr.mxu0 0.0
      %1355 = vmatpush1.msra.mxu0 %v1199
      %1356 = vmatprep.subr.mxu0 0.0
      %1357 = vmatpush1.msra.mxu0 %v1200
      %1358 = vmatprep.subr.mxu0 0.0
      %1359 = vmatpush1.msra.mxu0 %v1201
      %1360 = vmatprep.subr.mxu0 0.0
      %1361 = vmatpush1.msra.mxu0 %v1202
      %1362 = vmatprep.subr.mxu0 0.0
      %1363 = vmatpush1.msra.mxu0 %v1203
      %1364 = vmatprep.subr.mxu0 0.0
      %1365 = vmatpush1.msra.mxu0 %v1204
      %1366 = vmatprep.subr.mxu0 0.0
      %1367 = vmatpush1.msra.mxu0 %v1205
      %1368 = vmatprep.subr.mxu0 0.0
      %1369 = vmatpush1.msra.mxu0 %v1206
      %1370 = vmatprep.subr.mxu0 0.0
      %1371 = vmatpush1.msra.mxu0 %v1207
      %1372 = vmatprep.subr.mxu0 0.0
      %1373 = vmatpush1.msra.mxu0 %v1208
      %1374 = vmatprep.subr.mxu0 0.0
      %1375 = vmatpush1.msra.mxu0 %v1209
      %1376 = vmatprep.subr.mxu0 0.0
      %1377 = vmatpush1.msra.mxu0 %v1210
      %1378 = vmatprep.subr.mxu0 0.0
      %1379 = vmatpush1.msra.mxu0 %v1211
      %1380 = vmatprep.subr.mxu0 0.0
      %1381 = vmatpush1.msra.mxu0 %v1212
      %1382 = vmatprep.subr.mxu0 0.0
      %1383 = vmatpush1.msra.mxu0 %v1213
      %1384 = vmatprep.subr.mxu0 0.0
      %1385 = vmatpush1.msra.mxu0 %v1214
      %1386 = vmatprep.subr.mxu0 0.0
      %1387 = vmatpush1.msra.mxu0 %v1215
      %1388 = vmatprep.subr.mxu0 0.0
      %1389 = vmatpush1.msra.mxu0 %v1216
      %1390 = vmatprep.subr.mxu0 0.0
      %1391 = vmatpush1.msra.mxu0 %v1217
      %1392 = vmatprep.subr.mxu0 0.0
      %1393 = vmatpush1.msra.mxu0 %v1218
      %1394 = vmatprep.subr.mxu0 0.0
      %1395 = vmatpush1.msra.mxu0 %v1219
      %1396 = vmatprep.mubr.f32.mxu0 %v901
      %1397 = vmatmul.mubr.f32.gmra.mrb[0].mxu0 %v900
      %v1398 = vpop.f32.mrb[0].mxu0
      %v1399 = vadd.f32 0.0, %v1398
      %v1400 = vpop.f32.mrb[0].mxu0
      %1401 = vmatprep.mubr.f32.mxu0 %v910
      %1402 = vmatmul.mubr.f32.gmra.mrb[0].mxu0 %v909
      %v1403 = vpop.f32.mrb[0].mxu0
      %v1404 = vadd.f32 0.0, %v1403
      %v1405 = vpop.f32.mrb[0].mxu0
      %1406 = vmatprep.mubr.f32.mxu0 %v919
      %1407 = vmatmul.mubr.f32.gmra.mrb[0].mxu0 %v918
      %v1408 = vpop.f32.mrb[0].mxu0
      %v1409 = vadd.f32 0.0, %v1408
      %v1410 = vpop.f32.mrb[0].mxu0
      %1411 = vmatprep.mubr.f32.mxu0 %v928
      %1412 = vmatmul.mubr.f32.gmra.mrb[0].mxu0 %v927
      %v1413 = vpop.f32.mrb[0].mxu0
      %v1414 = vadd.f32 0.0, %v1413
      %v1415 = vpop.f32.mrb[0].mxu0
      %1416 = vmatprep.mubr.f32.mxu0 %v937
      %1417 = vmatmul.mubr.f32.gmra.mrb[0].mxu0 %v936
      %v1418 = vpop.f32.mrb[0].mxu0
      %v1419 = vadd.f32 0.0, %v1418
      %v1420 = vpop.f32.mrb[0].mxu0
      %1421 = vmatprep.mubr.f32.mxu0 %v946
      %1422 = vmatmul.mubr.f32.gmra.mrb[0].mxu0 %v945
      %v1423 = vpop.f32.mrb[0].mxu0
      %v1424 = vadd.f32 0.0, %v1423
      %v1425 = vpop.f32.mrb[0].mxu0
      %1426 = vmatprep.mubr.f32.mxu0 %v955
      %1427 = vmatmul.mubr.f32.gmra.mrb[0].mxu0 %v954
      %v1428 = vpop.f32.mrb[0].mxu0
      %v1429 = vadd.f32 0.0, %v1428
      %v1430 = vpop.f32.mrb[0].mxu0
      %1431 = vmatprep.mubr.f32.mxu0 %v964
      %1432 = vmatmul.mubr.f32.gmra.mrb[0].mxu0 %v963
      %v1433 = vpop.f32.mrb[0].mxu0
      %v1434 = vadd.f32 0.0, %v1433
      %v1435 = vpop.f32.mrb[0].mxu0
      %1436 = vmatprep.mubr.f32.mxu0 %v973
      %1437 = vmatmul.mubr.f32.gmra.mrb[0].mxu0 %v972
      %v1438 = vpop.f32.mrb[0].mxu0
      %v1439 = vadd.f32 0.0, %v1438
      %v1440 = vpop.f32.mrb[0].mxu0
      %1441 = vmatprep.mubr.f32.mxu0 %v982
      %1442 = vmatmul.mubr.f32.gmra.mrb[0].mxu0 %v981
      %v1443 = vpop.f32.mrb[0].mxu0
      %v1444 = vadd.f32 0.0, %v1443
      %v1445 = vpop.f32.mrb[0].mxu0
      %1446 = vmatprep.mubr.f32.mxu0 %v991
      %1447 = vmatmul.mubr.f32.gmra.mrb[0].mxu0 %v990
      %v1448 = vpop.f32.mrb[0].mxu0
      %v1449 = vadd.f32 0.0, %v1448
      %v1450 = vpop.f32.mrb[0].mxu0
      %1451 = vmatprep.mubr.f32.mxu0 %v1000
      %1452 = vmatmul.mubr.f32.gmra.mrb[0].mxu0 %v999
      %v1453 = vpop.f32.mrb[0].mxu0
      %v1454 = vadd.f32 0.0, %v1453
      %v1455 = vpop.f32.mrb[0].mxu0
      %1456 = vmatprep.mubr.f32.mxu0 %v1009
      %1457 = vmatmul.mubr.f32.gmra.mrb[0].mxu0 %v1008
      %v1458 = vpop.f32.mrb[0].mxu0
      %v1459 = vadd.f32 0.0, %v1458
      %v1460 = vpop.f32.mrb[0].mxu0
      %1461 = vmatprep.mubr.f32.mxu0 %v1018
      %1462 = vmatmul.mubr.f32.gmra.mrb[0].mxu0 %v1017
      %v1463 = vpop.f32.mrb[0].mxu0
      %v1464 = vadd.f32 0.0, %v1463
      %v1465 = vpop.f32.mrb[0].mxu0
      %1466 = vmatprep.mubr.f32.mxu0 %v1027
      %1467 = vmatmul.mubr.f32.gmra.mrb[0].mxu0 %v1026
      %v1468 = vpop.f32.mrb[0].mxu0
      %v1469 = vadd.f32 0.0, %v1468
      %v1470 = vpop.f32.mrb[0].mxu0
      %1471 = vmatprep.mubr.f32.mxu0 %v1036
      %1472 = vmatmul.mubr.f32.gmra.mrb[0].mxu0 %v1035
      %v1473 = vpop.f32.mrb[0].mxu0
      %v1474 = vadd.f32 0.0, %v1473
      %v1475 = vpop.f32.mrb[0].mxu0
      %1476 = vmatprep.mubr.f32.mxu0 %v1045
      %1477 = vmatmul.mubr.f32.gmra.mrb[0].mxu0 %v1044
      %v1478 = vpop.f32.mrb[0].mxu0
      %v1479 = vadd.f32 0.0, %v1478
      %v1480 = vpop.f32.mrb[0].mxu0
      %1481 = vmatprep.mubr.f32.mxu0 %v1054
      %1482 = vmatmul.mubr.f32.gmra.mrb[0].mxu0 %v1053
      %v1483 = vpop.f32.mrb[0].mxu0
      %v1484 = vadd.f32 0.0, %v1483
      %v1485 = vpop.f32.mrb[0].mxu0
      %1486 = vmatprep.mubr.f32.mxu0 %v1063
      %1487 = vmatmul.mubr.f32.gmra.mrb[0].mxu0 %v1062
      %v1488 = vpop.f32.mrb[0].mxu0
      %v1489 = vadd.f32 0.0, %v1488
      %v1490 = vpop.f32.mrb[0].mxu0
      %1491 = vmatprep.mubr.f32.mxu0 %v1072
      %1492 = vmatmul.mubr.f32.gmra.mrb[0].mxu0 %v1071
      %v1493 = vpop.f32.mrb[0].mxu0
      %v1494 = vadd.f32 0.0, %v1493
      %v1495 = vpop.f32.mrb[0].mxu0
      %1496 = vmatprep.mubr.f32.mxu0 %v1081
      %1497 = vmatmul.mubr.f32.gmra.mrb[0].mxu0 %v1080
      %v1498 = vpop.f32.mrb[0].mxu0
      %v1499 = vadd.f32 0.0, %v1498
      %v1500 = vpop.f32.mrb[0].mxu0
      %1501 = vmatprep.mubr.f32.mxu0 %v1090
      %1502 = vmatmul.mubr.f32.gmra.mrb[0].mxu0 %v1089
      %v1503 = vpop.f32.mrb[0].mxu0
      %v1504 = vadd.f32 0.0, %v1503
      %v1505 = vpop.f32.mrb[0].mxu0
      %1506 = vmatprep.mubr.f32.mxu0 %v1099
      %1507 = vmatmul.mubr.f32.gmra.mrb[0].mxu0 %v1098
      %v1508 = vpop.f32.mrb[0].mxu0
      %v1509 = vadd.f32 0.0, %v1508
      %v1510 = vpop.f32.mrb[0].mxu0
      %1511 = vmatprep.mubr.f32.mxu0 %v1108
      %1512 = vmatmul.mubr.f32.gmra.mrb[0].mxu0 %v1107
      %v1513 = vpop.f32.mrb[0].mxu0
      %v1514 = vadd.f32 0.0, %v1513
      %v1515 = vpop.f32.mrb[0].mxu0
      %1516 = vmatprep.mubr.f32.mxu0 %v1117
      %1517 = vmatmul.mubr.f32.gmra.mrb[0].mxu0 %v1116
      %v1518 = vpop.f32.mrb[0].mxu0
      %v1519 = vadd.f32 0.0, %v1518
      %v1520 = vpop.f32.mrb[0].mxu0
      %1521 = vmatprep.mubr.f32.mxu0 %v1126
      %1522 = vmatmul.mubr.f32.gmra.mrb[0].mxu0 %v1125
      %v1523 = vpop.f32.mrb[0].mxu0
      %v1524 = vadd.f32 0.0, %v1523
      %v1525 = vpop.f32.mrb[0].mxu0
      %1526 = vmatprep.mubr.f32.mxu0 %v1135
      %1527 = vmatmul.mubr.f32.gmra.mrb[0].mxu0 %v1134
      %v1528 = vpop.f32.mrb[0].mxu0
      %v1529 = vadd.f32 0.0, %v1528
      %v1530 = vpop.f32.mrb[0].mxu0
      %1531 = vmatprep.mubr.f32.mxu0 %v1144
      %1532 = vmatmul.mubr.f32.gmra.mrb[0].mxu0 %v1143
      %v1533 = vpop.f32.mrb[0].mxu0
      %v1534 = vadd.f32 0.0, %v1533
      %v1535 = vpop.f32.mrb[0].mxu0
      %1536 = vmatprep.mubr.f32.mxu0 %v1153
      %1537 = vmatmul.mubr.f32.gmra.mrb[0].mxu0 %v1152
      %v1538 = vpop.f32.mrb[0].mxu0
      %v1539 = vadd.f32 0.0, %v1538
      %v1540 = vpop.f32.mrb[0].mxu0
      %1541 = vmatprep.mubr.f32.mxu0 %v1162
      %1542 = vmatmul.mubr.f32.gmra.mrb[0].mxu0 %v1161
      %v1543 = vpop.f32.mrb[0].mxu0
      %v1544 = vadd.f32 0.0, %v1543
      %v1545 = vpop.f32.mrb[0].mxu0
      %1546 = vmatprep.mubr.f32.mxu0 %v1171
      %1547 = vmatmul.mubr.f32.gmra.mrb[0].mxu0 %v1170
      %v1548 = vpop.f32.mrb[0].mxu0
      %v1549 = vadd.f32 0.0, %v1548
      %v1550 = vpop.f32.mrb[0].mxu0
      %1551 = vmatprep.mubr.f32.mxu0 %v1180
      %1552 = vmatmul.mubr.f32.gmra.mrb[0].mxu0 %v1179
      %v1553 = vpop.f32.mrb[0].mxu0
      %v1554 = vadd.f32 0.0, %v1553
      %v1555 = vpop.f32.mrb[0].mxu0
      %1556 = vdwg.mxu0
      %1557 = vmatprep.subr.mxu0 0.0
      %1558 = vmatpush1.msra.mxu0 %v1220
      %1559 = vmatprep.subr.mxu0 0.0
      %1560 = vmatpush1.msra.mxu0 %v1221
      %1561 = vmatprep.subr.mxu0 0.0
      %1562 = vmatpush1.msra.mxu0 %v1222
      %1563 = vmatprep.subr.mxu0 0.0
      %1564 = vmatpush1.msra.mxu0 %v1223
      %1565 = vmatprep.subr.mxu0 0.0
      %1566 = vmatpush1.msra.mxu0 %v1224
      %1567 = vmatprep.subr.mxu0 0.0
      %1568 = vmatpush1.msra.mxu0 %v1225
      %1569 = vmatprep.subr.mxu0 0.0
      %1570 = vmatpush1.msra.mxu0 %v1226
      %1571 = vmatprep.subr.mxu0 0.0
      %1572 = vmatpush1.msra.mxu0 %v1227
      %1573 = vmatprep.subr.mxu0 0.0
      %1574 = vmatpush1.msra.mxu0 %v1228
      %1575 = vmatprep.subr.mxu0 0.0
      %1576 = vmatpush1.msra.mxu0 %v1229
      %1577 = vmatprep.subr.mxu0 0.0
      %1578 = vmatpush1.msra.mxu0 %v1230
      %1579 = vmatprep.subr.mxu0 0.0
      %1580 = vmatpush1.msra.mxu0 %v1231
      %1581 = vmatprep.subr.mxu0 0.0
      %1582 = vmatpush1.msra.mxu0 %v1232
      %1583 = vmatprep.subr.mxu0 0.0
      %1584 = vmatpush1.msra.mxu0 %v1233
      %1585 = vmatprep.subr.mxu0 0.0
      %1586 = vmatpush1.msra.mxu0 %v1234
      %1587 = vmatprep.subr.mxu0 0.0
      %1588 = vmatpush1.msra.mxu0 %v1235
      %1589 = vmatprep.subr.mxu0 0.0
      %1590 = vmatpush1.msra.mxu0 %v1236
      %1591 = vmatprep.subr.mxu0 0.0
      %1592 = vmatpush1.msra.mxu0 %v1237
      %1593 = vmatprep.subr.mxu0 0.0
      %1594 = vmatpush1.msra.mxu0 %v1238
      %1595 = vmatprep.subr.mxu0 0.0
      %1596 = vmatpush1.msra.mxu0 %v1239
      %1597 = vmatprep.subr.mxu0 0.0
      %1598 = vmatpush1.msra.mxu0 %v1240
      %1599 = vmatprep.subr.mxu0 0.0
      %1600 = vmatpush1.msra.mxu0 %v1241
      %1601 = vmatprep.subr.mxu0 0.0
      %1602 = vmatpush1.msra.mxu0 %v1242
      %1603 = vmatprep.subr.mxu0 0.0
      %1604 = vmatpush1.msra.mxu0 %v1243
      %1605 = vmatprep.subr.mxu0 0.0
      %1606 = vmatpush1.msra.mxu0 %v1244
      %1607 = vmatprep.subr.mxu0 0.0
      %1608 = vmatpush1.msra.mxu0 %v1245
      %1609 = vmatprep.subr.mxu0 0.0
      %1610 = vmatpush1.msra.mxu0 %v1246
      %1611 = vmatprep.subr.mxu0 0.0
      %1612 = vmatpush1.msra.mxu0 %v1247
      %1613 = vmatprep.subr.mxu0 0.0
      %1614 = vmatpush1.msra.mxu0 %v1248
      %1615 = vmatprep.subr.mxu0 0.0
      %1616 = vmatpush1.msra.mxu0 %v1249
      %1617 = vmatprep.subr.mxu0 0.0
      %1618 = vmatpush1.msra.mxu0 %v1250
      %1619 = vmatprep.subr.mxu0 0.0
      %1620 = vmatpush1.msra.mxu0 %v1251
      %1621 = vmatprep.mubr.f32.mxu0 %v903
      %1622 = vmatmul.mubr.f32.gmra.mrb[0].mxu0 %v902
      %v1623 = vpop.f32.mrb[0].mxu0
      %v1624 = vadd.f32 %v1399, %v1623
      %v1625 = vpop.f32.mrb[0].mxu0
      %1626 = vmatprep.mubr.f32.mxu0 %v912
      %1627 = vmatmul.mubr.f32.gmra.mrb[0].mxu0 %v911
      %v1628 = vpop.f32.mrb[0].mxu0
      %v1629 = vadd.f32 %v1404, %v1628
      %v1630 = vpop.f32.mrb[0].mxu0
      %1631 = vmatprep.mubr.f32.mxu0 %v921
      %1632 = vmatmul.mubr.f32.gmra.mrb[0].mxu0 %v920
      %v1633 = vpop.f32.mrb[0].mxu0
      %v1634 = vadd.f32 %v1409, %v1633
      %v1635 = vpop.f32.mrb[0].mxu0
      %1636 = vmatprep.mubr.f32.mxu0 %v930
      %1637 = vmatmul.mubr.f32.gmra.mrb[0].mxu0 %v929
      %v1638 = vpop.f32.mrb[0].mxu0
      %v1639 = vadd.f32 %v1414, %v1638
      %v1640 = vpop.f32.mrb[0].mxu0
      %1641 = vmatprep.mubr.f32.mxu0 %v939
      %1642 = vmatmul.mubr.f32.gmra.mrb[0].mxu0 %v938
      %v1643 = vpop.f32.mrb[0].mxu0
      %v1644 = vadd.f32 %v1419, %v1643
      %v1645 = vpop.f32.mrb[0].mxu0
      %1646 = vmatprep.mubr.f32.mxu0 %v948
      %1647 = vmatmul.mubr.f32.gmra.mrb[0].mxu0 %v947
      %v1648 = vpop.f32.mrb[0].mxu0
      %v1649 = vadd.f32 %v1424, %v1648
      %v1650 = vpop.f32.mrb[0].mxu0
      %1651 = vmatprep.mubr.f32.mxu0 %v957
      %1652 = vmatmul.mubr.f32.gmra.mrb[0].mxu0 %v956
      %v1653 = vpop.f32.mrb[0].mxu0
      %v1654 = vadd.f32 %v1429, %v1653
      %v1655 = vpop.f32.mrb[0].mxu0
      %1656 = vmatprep.mubr.f32.mxu0 %v966
      %1657 = vmatmul.mubr.f32.gmra.mrb[0].mxu0 %v965
      %v1658 = vpop.f32.mrb[0].mxu0
      %v1659 = vadd.f32 %v1434, %v1658
      %v1660 = vpop.f32.mrb[0].mxu0
      %1661 = vmatprep.mubr.f32.mxu0 %v975
      %1662 = vmatmul.mubr.f32.gmra.mrb[0].mxu0 %v974
      %v1663 = vpop.f32.mrb[0].mxu0
      %v1664 = vadd.f32 %v1439, %v1663
      %v1665 = vpop.f32.mrb[0].mxu0
      %1666 = vmatprep.mubr.f32.mxu0 %v984
      %1667 = vmatmul.mubr.f32.gmra.mrb[0].mxu0 %v983
      %v1668 = vpop.f32.mrb[0].mxu0
      %v1669 = vadd.f32 %v1444, %v1668
      %v1670 = vpop.f32.mrb[0].mxu0
      %1671 = vmatprep.mubr.f32.mxu0 %v993
      %1672 = vmatmul.mubr.f32.gmra.mrb[0].mxu0 %v992
      %v1673 = vpop.f32.mrb[0].mxu0
      %v1674 = vadd.f32 %v1449, %v1673
      %v1675 = vpop.f32.mrb[0].mxu0
      %1676 = vmatprep.mubr.f32.mxu0 %v1002
      %1677 = vmatmul.mubr.f32.gmra.mrb[0].mxu0 %v1001
      %v1678 = vpop.f32.mrb[0].mxu0
      %v1679 = vadd.f32 %v1454, %v1678
      %v1680 = vpop.f32.mrb[0].mxu0
      %1681 = vmatprep.mubr.f32.mxu0 %v1011
      %1682 = vmatmul.mubr.f32.gmra.mrb[0].mxu0 %v1010
      %v1683 = vpop.f32.mrb[0].mxu0
      %v1684 = vadd.f32 %v1459, %v1683
      %v1685 = vpop.f32.mrb[0].mxu0
      %1686 = vmatprep.mubr.f32.mxu0 %v1020
      %1687 = vmatmul.mubr.f32.gmra.mrb[0].mxu0 %v1019
      %v1688 = vpop.f32.mrb[0].mxu0
      %v1689 = vadd.f32 %v1464, %v1688
      %v1690 = vpop.f32.mrb[0].mxu0
      %1691 = vmatprep.mubr.f32.mxu0 %v1029
      %1692 = vmatmul.mubr.f32.gmra.mrb[0].mxu0 %v1028
      %v1693 = vpop.f32.mrb[0].mxu0
      %v1694 = vadd.f32 %v1469, %v1693
      %v1695 = vpop.f32.mrb[0].mxu0
      %1696 = vmatprep.mubr.f32.mxu0 %v1038
      %1697 = vmatmul.mubr.f32.gmra.mrb[0].mxu0 %v1037
      %v1698 = vpop.f32.mrb[0].mxu0
      %v1699 = vadd.f32 %v1474, %v1698
      %v1700 = vpop.f32.mrb[0].mxu0
      %1701 = vmatprep.mubr.f32.mxu0 %v1047
      %1702 = vmatmul.mubr.f32.gmra.mrb[0].mxu0 %v1046
      %v1703 = vpop.f32.mrb[0].mxu0
      %v1704 = vadd.f32 %v1479, %v1703
      %v1705 = vpop.f32.mrb[0].mxu0
      %1706 = vmatprep.mubr.f32.mxu0 %v1056
      %1707 = vmatmul.mubr.f32.gmra.mrb[0].mxu0 %v1055
      %v1708 = vpop.f32.mrb[0].mxu0
      %v1709 = vadd.f32 %v1484, %v1708
      %v1710 = vpop.f32.mrb[0].mxu0
      %1711 = vmatprep.mubr.f32.mxu0 %v1065
      %1712 = vmatmul.mubr.f32.gmra.mrb[0].mxu0 %v1064
      %v1713 = vpop.f32.mrb[0].mxu0
      %v1714 = vadd.f32 %v1489, %v1713
      %v1715 = vpop.f32.mrb[0].mxu0
      %1716 = vmatprep.mubr.f32.mxu0 %v1074
      %1717 = vmatmul.mubr.f32.gmra.mrb[0].mxu0 %v1073
      %v1718 = vpop.f32.mrb[0].mxu0
      %v1719 = vadd.f32 %v1494, %v1718
      %v1720 = vpop.f32.mrb[0].mxu0
      %1721 = vmatprep.mubr.f32.mxu0 %v1083
      %1722 = vmatmul.mubr.f32.gmra.mrb[0].mxu0 %v1082
      %v1723 = vpop.f32.mrb[0].mxu0
      %v1724 = vadd.f32 %v1499, %v1723
      %v1725 = vpop.f32.mrb[0].mxu0
      %1726 = vmatprep.mubr.f32.mxu0 %v1092
      %1727 = vmatmul.mubr.f32.gmra.mrb[0].mxu0 %v1091
      %v1728 = vpop.f32.mrb[0].mxu0
      %v1729 = vadd.f32 %v1504, %v1728
      %v1730 = vpop.f32.mrb[0].mxu0
      %1731 = vmatprep.mubr.f32.mxu0 %v1101
      %1732 = vmatmul.mubr.f32.gmra.mrb[0].mxu0 %v1100
      %v1733 = vpop.f32.mrb[0].mxu0
      %v1734 = vadd.f32 %v1509, %v1733
      %v1735 = vpop.f32.mrb[0].mxu0
      %1736 = vmatprep.mubr.f32.mxu0 %v1110
      %1737 = vmatmul.mubr.f32.gmra.mrb[0].mxu0 %v1109
      %v1738 = vpop.f32.mrb[0].mxu0
      %v1739 = vadd.f32 %v1514, %v1738
      %v1740 = vpop.f32.mrb[0].mxu0
      %1741 = vmatprep.mubr.f32.mxu0 %v1119
      %1742 = vmatmul.mubr.f32.gmra.mrb[0].mxu0 %v1118
      %v1743 = vpop.f32.mrb[0].mxu0
      %v1744 = vadd.f32 %v1519, %v1743
      %v1745 = vpop.f32.mrb[0].mxu0
      %1746 = vmatprep.mubr.f32.mxu0 %v1128
      %1747 = vmatmul.mubr.f32.gmra.mrb[0].mxu0 %v1127
      %v1748 = vpop.f32.mrb[0].mxu0
      %v1749 = vadd.f32 %v1524, %v1748
      %v1750 = vpop.f32.mrb[0].mxu0
      %1751 = vmatprep.mubr.f32.mxu0 %v1137
      %1752 = vmatmul.mubr.f32.gmra.mrb[0].mxu0 %v1136
      %v1753 = vpop.f32.mrb[0].mxu0
      %v1754 = vadd.f32 %v1529, %v1753
      %v1755 = vpop.f32.mrb[0].mxu0
      %1756 = vmatprep.mubr.f32.mxu0 %v1146
      %1757 = vmatmul.mubr.f32.gmra.mrb[0].mxu0 %v1145
      %v1758 = vpop.f32.mrb[0].mxu0
      %v1759 = vadd.f32 %v1534, %v1758
      %v1760 = vpop.f32.mrb[0].mxu0
      %1761 = vmatprep.mubr.f32.mxu0 %v1155
      %1762 = vmatmul.mubr.f32.gmra.mrb[0].mxu0 %v1154
      %v1763 = vpop.f32.mrb[0].mxu0
      %v1764 = vadd.f32 %v1539, %v1763
      %v1765 = vpop.f32.mrb[0].mxu0
      %1766 = vmatprep.mubr.f32.mxu0 %v1164
      %1767 = vmatmul.mubr.f32.gmra.mrb[0].mxu0 %v1163
      %v1768 = vpop.f32.mrb[0].mxu0
      %v1769 = vadd.f32 %v1544, %v1768
      %v1770 = vpop.f32.mrb[0].mxu0
      %1771 = vmatprep.mubr.f32.mxu0 %v1173
      %1772 = vmatmul.mubr.f32.gmra.mrb[0].mxu0 %v1172
      %v1773 = vpop.f32.mrb[0].mxu0
      %v1774 = vadd.f32 %v1549, %v1773
      %v1775 = vpop.f32.mrb[0].mxu0
      %1776 = vmatprep.mubr.f32.mxu0 %v1182
      %1777 = vmatmul.mubr.f32.gmra.mrb[0].mxu0 %v1181
      %v1778 = vpop.f32.mrb[0].mxu0
      %v1779 = vadd.f32 %v1554, %v1778
      %v1780 = vpop.f32.mrb[0].mxu0
      %1781 = vdwg.mxu0
      %1782 = vmatprep.subr.mxu0 0.0
      %1783 = vmatpush1.msra.mxu0 %v1252
      %1784 = vmatprep.subr.mxu0 0.0
      %1785 = vmatpush1.msra.mxu0 %v1253
      %1786 = vmatprep.subr.mxu0 0.0
      %1787 = vmatpush1.msra.mxu0 %v1254
      %1788 = vmatprep.subr.mxu0 0.0
      %1789 = vmatpush1.msra.mxu0 %v1255
      %1790 = vmatprep.subr.mxu0 0.0
      %1791 = vmatpush1.msra.mxu0 %v1256
      %1792 = vmatprep.subr.mxu0 0.0
      %1793 = vmatpush1.msra.mxu0 %v1257
      %1794 = vmatprep.subr.mxu0 0.0
      %1795 = vmatpush1.msra.mxu0 %v1258
      %1796 = vmatprep.subr.mxu0 0.0
      %1797 = vmatpush1.msra.mxu0 %v1259
      %1798 = vmatprep.subr.mxu0 0.0
      %1799 = vmatpush1.msra.mxu0 %v1260
      %1800 = vmatprep.subr.mxu0 0.0
      %1801 = vmatpush1.msra.mxu0 %v1261
      %1802 = vmatprep.subr.mxu0 0.0
      %1803 = vmatpush1.msra.mxu0 %v1262
      %1804 = vmatprep.subr.mxu0 0.0
      %1805 = vmatpush1.msra.mxu0 %v1263
      %1806 = vmatprep.subr.mxu0 0.0
      %1807 = vmatpush1.msra.mxu0 %v1264
      %1808 = vmatprep.subr.mxu0 0.0
      %1809 = vmatpush1.msra.mxu0 %v1265
      %1810 = vmatprep.subr.mxu0 0.0
      %1811 = vmatpush1.msra.mxu0 %v1266
      %1812 = vmatprep.subr.mxu0 0.0
      %1813 = vmatpush1.msra.mxu0 %v1267
      %1814 = vmatprep.subr.mxu0 0.0
      %1815 = vmatpush1.msra.mxu0 %v1268
      %1816 = vmatprep.subr.mxu0 0.0
      %1817 = vmatpush1.msra.mxu0 %v1269
      %1818 = vmatprep.subr.mxu0 0.0
      %1819 = vmatpush1.msra.mxu0 %v1270
      %1820 = vmatprep.subr.mxu0 0.0
      %1821 = vmatpush1.msra.mxu0 %v1271
      %1822 = vmatprep.subr.mxu0 0.0
      %1823 = vmatpush1.msra.mxu0 %v1272
      %1824 = vmatprep.subr.mxu0 0.0
      %1825 = vmatpush1.msra.mxu0 %v1273
      %1826 = vmatprep.subr.mxu0 0.0
      %1827 = vmatpush1.msra.mxu0 %v1274
      %1828 = vmatprep.subr.mxu0 0.0
      %1829 = vmatpush1.msra.mxu0 %v1275
      %1830 = vmatprep.subr.mxu0 0.0
      %1831 = vmatpush1.msra.mxu0 %v1276
      %1832 = vmatprep.subr.mxu0 0.0
      %1833 = vmatpush1.msra.mxu0 %v1277
      %1834 = vmatprep.subr.mxu0 0.0
      %1835 = vmatpush1.msra.mxu0 %v1278
      %1836 = vmatprep.subr.mxu0 0.0
      %1837 = vmatpush1.msra.mxu0 %v1279
      %1838 = vmatprep.subr.mxu0 0.0
      %1839 = vmatpush1.msra.mxu0 %v1280
      %1840 = vmatprep.subr.mxu0 0.0
      %1841 = vmatpush1.msra.mxu0 %v1281
      %1842 = vmatprep.subr.mxu0 0.0
      %1843 = vmatpush1.msra.mxu0 %v1282
      %1844 = vmatprep.subr.mxu0 0.0
      %1845 = vmatpush1.msra.mxu0 %v1283
      %1846 = vmatprep.mubr.f32.mxu0 %v905
      %1847 = vmatmul.mubr.f32.gmra.mrb[0].mxu0 %v904
      %v1848 = vpop.f32.mrb[0].mxu0
      %v1849 = vadd.f32 %v1624, %v1848
      %v1850 = vpop.f32.mrb[0].mxu0
      %1851 = vmatprep.mubr.f32.mxu0 %v914
      %1852 = vmatmul.mubr.f32.gmra.mrb[0].mxu0 %v913
      %v1853 = vpop.f32.mrb[0].mxu0
      %v1854 = vadd.f32 %v1629, %v1853
      %v1855 = vpop.f32.mrb[0].mxu0
      %1856 = vmatprep.mubr.f32.mxu0 %v923
      %1857 = vmatmul.mubr.f32.gmra.mrb[0].mxu0 %v922
      %v1858 = vpop.f32.mrb[0].mxu0
      %v1859 = vadd.f32 %v1634, %v1858
      %v1860 = vpop.f32.mrb[0].mxu0
      %1861 = vmatprep.mubr.f32.mxu0 %v932
      %1862 = vmatmul.mubr.f32.gmra.mrb[0].mxu0 %v931
      %v1863 = vpop.f32.mrb[0].mxu0
      %v1864 = vadd.f32 %v1639, %v1863
      %v1865 = vpop.f32.mrb[0].mxu0
      %1866 = vmatprep.mubr.f32.mxu0 %v941
      %1867 = vmatmul.mubr.f32.gmra.mrb[0].mxu0 %v940
      %v1868 = vpop.f32.mrb[0].mxu0
      %v1869 = vadd.f32 %v1644, %v1868
      %v1870 = vpop.f32.mrb[0].mxu0
      %1871 = vmatprep.mubr.f32.mxu0 %v950
      %1872 = vmatmul.mubr.f32.gmra.mrb[0].mxu0 %v949
      %v1873 = vpop.f32.mrb[0].mxu0
      %v1874 = vadd.f32 %v1649, %v1873
      %v1875 = vpop.f32.mrb[0].mxu0
      %1876 = vmatprep.mubr.f32.mxu0 %v959
      %1877 = vmatmul.mubr.f32.gmra.mrb[0].mxu0 %v958
      %v1878 = vpop.f32.mrb[0].mxu0
      %v1879 = vadd.f32 %v1654, %v1878
      %v1880 = vpop.f32.mrb[0].mxu0
      %1881 = vmatprep.mubr.f32.mxu0 %v968
      %1882 = vmatmul.mubr.f32.gmra.mrb[0].mxu0 %v967
      %v1883 = vpop.f32.mrb[0].mxu0
      %v1884 = vadd.f32 %v1659, %v1883
      %v1885 = vpop.f32.mrb[0].mxu0
      %1886 = vmatprep.mubr.f32.mxu0 %v977
      %1887 = vmatmul.mubr.f32.gmra.mrb[0].mxu0 %v976
      %v1888 = vpop.f32.mrb[0].mxu0
      %v1889 = vadd.f32 %v1664, %v1888
      %v1890 = vpop.f32.mrb[0].mxu0
      %1891 = vmatprep.mubr.f32.mxu0 %v986
      %1892 = vmatmul.mubr.f32.gmra.mrb[0].mxu0 %v985
      %v1893 = vpop.f32.mrb[0].mxu0
      %v1894 = vadd.f32 %v1669, %v1893
      %v1895 = vpop.f32.mrb[0].mxu0
      %1896 = vmatprep.mubr.f32.mxu0 %v995
      %1897 = vmatmul.mubr.f32.gmra.mrb[0].mxu0 %v994
      %v1898 = vpop.f32.mrb[0].mxu0
      %v1899 = vadd.f32 %v1674, %v1898
      %v1900 = vpop.f32.mrb[0].mxu0
      %1901 = vmatprep.mubr.f32.mxu0 %v1004
      %1902 = vmatmul.mubr.f32.gmra.mrb[0].mxu0 %v1003
      %v1903 = vpop.f32.mrb[0].mxu0
      %v1904 = vadd.f32 %v1679, %v1903
      %v1905 = vpop.f32.mrb[0].mxu0
      %1906 = vmatprep.mubr.f32.mxu0 %v1013
      %1907 = vmatmul.mubr.f32.gmra.mrb[0].mxu0 %v1012
      %v1908 = vpop.f32.mrb[0].mxu0
      %v1909 = vadd.f32 %v1684, %v1908
      %v1910 = vpop.f32.mrb[0].mxu0
      %1911 = vmatprep.mubr.f32.mxu0 %v1022
      %1912 = vmatmul.mubr.f32.gmra.mrb[0].mxu0 %v1021
      %v1913 = vpop.f32.mrb[0].mxu0
      %v1914 = vadd.f32 %v1689, %v1913
      %v1915 = vpop.f32.mrb[0].mxu0
      %1916 = vmatprep.mubr.f32.mxu0 %v1031
      %1917 = vmatmul.mubr.f32.gmra.mrb[0].mxu0 %v1030
      %v1918 = vpop.f32.mrb[0].mxu0
      %v1919 = vadd.f32 %v1694, %v1918
      %v1920 = vpop.f32.mrb[0].mxu0
      %1921 = vmatprep.mubr.f32.mxu0 %v1040
      %1922 = vmatmul.mubr.f32.gmra.mrb[0].mxu0 %v1039
      %v1923 = vpop.f32.mrb[0].mxu0
      %v1924 = vadd.f32 %v1699, %v1923
      %v1925 = vpop.f32.mrb[0].mxu0
      %1926 = vmatprep.mubr.f32.mxu0 %v1049
      %1927 = vmatmul.mubr.f32.gmra.mrb[0].mxu0 %v1048
      %v1928 = vpop.f32.mrb[0].mxu0
      %v1929 = vadd.f32 %v1704, %v1928
      %v1930 = vpop.f32.mrb[0].mxu0
      %1931 = vmatprep.mubr.f32.mxu0 %v1058
      %1932 = vmatmul.mubr.f32.gmra.mrb[0].mxu0 %v1057
      %v1933 = vpop.f32.mrb[0].mxu0
      %v1934 = vadd.f32 %v1709, %v1933
      %v1935 = vpop.f32.mrb[0].mxu0
      %1936 = vmatprep.mubr.f32.mxu0 %v1067
      %1937 = vmatmul.mubr.f32.gmra.mrb[0].mxu0 %v1066
      %v1938 = vpop.f32.mrb[0].mxu0
      %v1939 = vadd.f32 %v1714, %v1938
      %v1940 = vpop.f32.mrb[0].mxu0
      %1941 = vmatprep.mubr.f32.mxu0 %v1076
      %1942 = vmatmul.mubr.f32.gmra.mrb[0].mxu0 %v1075
      %v1943 = vpop.f32.mrb[0].mxu0
      %v1944 = vadd.f32 %v1719, %v1943
      %v1945 = vpop.f32.mrb[0].mxu0
      %1946 = vmatprep.mubr.f32.mxu0 %v1085
      %1947 = vmatmul.mubr.f32.gmra.mrb[0].mxu0 %v1084
      %v1948 = vpop.f32.mrb[0].mxu0
      %v1949 = vadd.f32 %v1724, %v1948
      %v1950 = vpop.f32.mrb[0].mxu0
      %1951 = vmatprep.mubr.f32.mxu0 %v1094
      %1952 = vmatmul.mubr.f32.gmra.mrb[0].mxu0 %v1093
      %v1953 = vpop.f32.mrb[0].mxu0
      %v1954 = vadd.f32 %v1729, %v1953
      %v1955 = vpop.f32.mrb[0].mxu0
      %1956 = vmatprep.mubr.f32.mxu0 %v1103
      %1957 = vmatmul.mubr.f32.gmra.mrb[0].mxu0 %v1102
      %v1958 = vpop.f32.mrb[0].mxu0
      %v1959 = vadd.f32 %v1734, %v1958
      %v1960 = vpop.f32.mrb[0].mxu0
      %1961 = vmatprep.mubr.f32.mxu0 %v1112
      %1962 = vmatmul.mubr.f32.gmra.mrb[0].mxu0 %v1111
      %v1963 = vpop.f32.mrb[0].mxu0
      %v1964 = vadd.f32 %v1739, %v1963
      %v1965 = vpop.f32.mrb[0].mxu0
      %1966 = vmatprep.mubr.f32.mxu0 %v1121
      %1967 = vmatmul.mubr.f32.gmra.mrb[0].mxu0 %v1120
      %v1968 = vpop.f32.mrb[0].mxu0
      %v1969 = vadd.f32 %v1744, %v1968
      %v1970 = vpop.f32.mrb[0].mxu0
      %1971 = vmatprep.mubr.f32.mxu0 %v1130
      %1972 = vmatmul.mubr.f32.gmra.mrb[0].mxu0 %v1129
      %v1973 = vpop.f32.mrb[0].mxu0
      %v1974 = vadd.f32 %v1749, %v1973
      %v1975 = vpop.f32.mrb[0].mxu0
      %1976 = vmatprep.mubr.f32.mxu0 %v1139
      %1977 = vmatmul.mubr.f32.gmra.mrb[0].mxu0 %v1138
      %v1978 = vpop.f32.mrb[0].mxu0
      %v1979 = vadd.f32 %v1754, %v1978
      %v1980 = vpop.f32.mrb[0].mxu0
      %1981 = vmatprep.mubr.f32.mxu0 %v1148
      %1982 = vmatmul.mubr.f32.gmra.mrb[0].mxu0 %v1147
      %v1983 = vpop.f32.mrb[0].mxu0
      %v1984 = vadd.f32 %v1759, %v1983
      %v1985 = vpop.f32.mrb[0].mxu0
      %1986 = vmatprep.mubr.f32.mxu0 %v1157
      %1987 = vmatmul.mubr.f32.gmra.mrb[0].mxu0 %v1156
      %v1988 = vpop.f32.mrb[0].mxu0
      %v1989 = vadd.f32 %v1764, %v1988
      %v1990 = vpop.f32.mrb[0].mxu0
      %1991 = vmatprep.mubr.f32.mxu0 %v1166
      %1992 = vmatmul.mubr.f32.gmra.mrb[0].mxu0 %v1165
      %v1993 = vpop.f32.mrb[0].mxu0
      %v1994 = vadd.f32 %v1769, %v1993
      %v1995 = vpop.f32.mrb[0].mxu0
      %1996 = vmatprep.mubr.f32.mxu0 %v1175
      %1997 = vmatmul.mubr.f32.gmra.mrb[0].mxu0 %v1174
      %v1998 = vpop.f32.mrb[0].mxu0
      %v1999 = vadd.f32 %v1774, %v1998
      %v2000 = vpop.f32.mrb[0].mxu0
      %2001 = vmatprep.mubr.f32.mxu0 %v1184
      %2002 = vmatmul.mubr.f32.gmra.mrb[0].mxu0 %v1183
      %v2003 = vpop.f32.mrb[0].mxu0
      %v2004 = vadd.f32 %v1779, %v2003
      %v2005 = vpop.f32.mrb[0].mxu0
      %2006 = vdwg.mxu0
      %2007 = vmatprep.subr.mxu0 0.0
      %2008 = vmatpush1.msra.mxu0 %v1284
      %2009 = vmatprep.subr.mxu0 0.0
      %2010 = vmatpush1.msra.mxu0 %v1285
      %2011 = vmatprep.subr.mxu0 0.0
      %2012 = vmatpush1.msra.mxu0 %v1286
      %2013 = vmatprep.subr.mxu0 0.0
      %2014 = vmatpush1.msra.mxu0 %v1287
      %2015 = vmatprep.subr.mxu0 0.0
      %2016 = vmatpush1.msra.mxu0 %v1288
      %2017 = vmatprep.subr.mxu0 0.0
      %2018 = vmatpush1.msra.mxu0 %v1289
      %2019 = vmatprep.subr.mxu0 0.0
      %2020 = vmatpush1.msra.mxu0 %v1290
      %2021 = vmatprep.subr.mxu0 0.0
      %2022 = vmatpush1.msra.mxu0 %v1291
      %2023 = vmatprep.subr.mxu0 0.0
      %2024 = vmatpush1.msra.mxu0 %v1292
      %2025 = vmatprep.subr.mxu0 0.0
      %2026 = vmatpush1.msra.mxu0 %v1293
      %2027 = vmatprep.subr.mxu0 0.0
      %2028 = vmatpush1.msra.mxu0 %v1294
      %2029 = vmatprep.subr.mxu0 0.0
      %2030 = vmatpush1.msra.mxu0 %v1295
      %2031 = vmatprep.subr.mxu0 0.0
      %2032 = vmatpush1.msra.mxu0 %v1296
      %2033 = vmatprep.subr.mxu0 0.0
      %2034 = vmatpush1.msra.mxu0 %v1297
      %2035 = vmatprep.subr.mxu0 0.0
      %2036 = vmatpush1.msra.mxu0 %v1298
      %2037 = vmatprep.subr.mxu0 0.0
      %2038 = vmatpush1.msra.mxu0 %v1299
      %2039 = vmatprep.subr.mxu0 0.0
      %2040 = vmatpush1.msra.mxu0 %v1300
      %2041 = vmatprep.subr.mxu0 0.0
      %2042 = vmatpush1.msra.mxu0 %v1301
      %2043 = vmatprep.subr.mxu0 0.0
      %2044 = vmatpush1.msra.mxu0 %v1302
      %2045 = vmatprep.subr.mxu0 0.0
      %2046 = vmatpush1.msra.mxu0 %v1303
      %2047 = vmatprep.subr.mxu0 0.0
      %2048 = vmatpush1.msra.mxu0 %v1304
      %2049 = vmatprep.subr.mxu0 0.0
      %2050 = vmatpush1.msra.mxu0 %v1305
      %2051 = vmatprep.subr.mxu0 0.0
      %2052 = vmatpush1.msra.mxu0 %v1306
      %2053 = vmatprep.subr.mxu0 0.0
      %2054 = vmatpush1.msra.mxu0 %v1307
      %2055 = vmatprep.subr.mxu0 0.0
      %2056 = vmatpush1.msra.mxu0 %v1308
      %2057 = vmatprep.subr.mxu0 0.0
      %2058 = vmatpush1.msra.mxu0 %v1309
      %2059 = vmatprep.subr.mxu0 0.0
      %2060 = vmatpush1.msra.mxu0 %v1310
      %2061 = vmatprep.subr.mxu0 0.0
      %2062 = vmatpush1.msra.mxu0 %v1311
      %2063 = vmatprep.subr.mxu0 0.0
      %2064 = vmatpush1.msra.mxu0 %v1312
      %2065 = vmatprep.subr.mxu0 0.0
      %2066 = vmatpush1.msra.mxu0 %v1313
      %2067 = vmatprep.subr.mxu0 0.0
      %2068 = vmatpush1.msra.mxu0 %v1314
      %2069 = vmatprep.subr.mxu0 0.0
      %2070 = vmatpush1.msra.mxu0 %v1315
      %2071 = vmatprep.mubr.f32.mxu0 %v907
      %2072 = vmatmul.mubr.f32.gmra.mrb[0].mxu0 %v906
      %v2073 = vpop.f32.mrb[0].mxu0
      %v2074 = vadd.f32 %v1849, %v2073
      %v2075 = vpop.f32.mrb[0].mxu0
      %2076 = vmatprep.mubr.f32.mxu0 %v916
      %2077 = vmatmul.mubr.f32.gmra.mrb[0].mxu0 %v915
      %v2078 = vpop.f32.mrb[0].mxu0
      %v2079 = vadd.f32 %v1854, %v2078
      %v2080 = vpop.f32.mrb[0].mxu0
      %2081 = vmatprep.mubr.f32.mxu0 %v925
      %2082 = vmatmul.mubr.f32.gmra.mrb[0].mxu0 %v924
      %v2083 = vpop.f32.mrb[0].mxu0
      %v2084 = vadd.f32 %v1859, %v2083
      %v2085 = vpop.f32.mrb[0].mxu0
      %2086 = vmatprep.mubr.f32.mxu0 %v934
      %2087 = vmatmul.mubr.f32.gmra.mrb[0].mxu0 %v933
      %v2088 = vpop.f32.mrb[0].mxu0
      %v2089 = vadd.f32 %v1864, %v2088
      %v2090 = vpop.f32.mrb[0].mxu0
      %2091 = vmatprep.mubr.f32.mxu0 %v943
      %2092 = vmatmul.mubr.f32.gmra.mrb[0].mxu0 %v942
      %v2093 = vpop.f32.mrb[0].mxu0
      %v2094 = vadd.f32 %v1869, %v2093
      %v2095 = vpop.f32.mrb[0].mxu0
      %2096 = vmatprep.mubr.f32.mxu0 %v952
      %2097 = vmatmul.mubr.f32.gmra.mrb[0].mxu0 %v951
      %v2098 = vpop.f32.mrb[0].mxu0
      %v2099 = vadd.f32 %v1874, %v2098
      %v2100 = vpop.f32.mrb[0].mxu0
      %2101 = vmatprep.mubr.f32.mxu0 %v961
      %2102 = vmatmul.mubr.f32.gmra.mrb[0].mxu0 %v960
      %v2103 = vpop.f32.mrb[0].mxu0
      %v2104 = vadd.f32 %v1879, %v2103
      %v2105 = vpop.f32.mrb[0].mxu0
      %2106 = vmatprep.mubr.f32.mxu0 %v970
      %2107 = vmatmul.mubr.f32.gmra.mrb[0].mxu0 %v969
      %v2108 = vpop.f32.mrb[0].mxu0
      %v2109 = vadd.f32 %v1884, %v2108
      %v2110 = vpop.f32.mrb[0].mxu0
      %2111 = vmatprep.mubr.f32.mxu0 %v979
      %2112 = vmatmul.mubr.f32.gmra.mrb[0].mxu0 %v978
      %v2113 = vpop.f32.mrb[0].mxu0
      %v2114 = vadd.f32 %v1889, %v2113
      %v2115 = vpop.f32.mrb[0].mxu0
      %2116 = vmatprep.mubr.f32.mxu0 %v988
      %2117 = vmatmul.mubr.f32.gmra.mrb[0].mxu0 %v987
      %v2118 = vpop.f32.mrb[0].mxu0
      %v2119 = vadd.f32 %v1894, %v2118
      %v2120 = vpop.f32.mrb[0].mxu0
      %2121 = vmatprep.mubr.f32.mxu0 %v997
      %2122 = vmatmul.mubr.f32.gmra.mrb[0].mxu0 %v996
      %v2123 = vpop.f32.mrb[0].mxu0
      %v2124 = vadd.f32 %v1899, %v2123
      %v2125 = vpop.f32.mrb[0].mxu0
      %2126 = vmatprep.mubr.f32.mxu0 %v1006
      %2127 = vmatmul.mubr.f32.gmra.mrb[0].mxu0 %v1005
      %v2128 = vpop.f32.mrb[0].mxu0
      %v2129 = vadd.f32 %v1904, %v2128
      %v2130 = vpop.f32.mrb[0].mxu0
      %2131 = vmatprep.mubr.f32.mxu0 %v1015
      %2132 = vmatmul.mubr.f32.gmra.mrb[0].mxu0 %v1014
      %v2133 = vpop.f32.mrb[0].mxu0
      %v2134 = vadd.f32 %v1909, %v2133
      %v2135 = vpop.f32.mrb[0].mxu0
      %2136 = vmatprep.mubr.f32.mxu0 %v1024
      %2137 = vmatmul.mubr.f32.gmra.mrb[0].mxu0 %v1023
      %v2138 = vpop.f32.mrb[0].mxu0
      %v2139 = vadd.f32 %v1914, %v2138
      %v2140 = vpop.f32.mrb[0].mxu0
      %2141 = vmatprep.mubr.f32.mxu0 %v1033
      %2142 = vmatmul.mubr.f32.gmra.mrb[0].mxu0 %v1032
      %v2143 = vpop.f32.mrb[0].mxu0
      %v2144 = vadd.f32 %v1919, %v2143
      %v2145 = vpop.f32.mrb[0].mxu0
      %2146 = vmatprep.mubr.f32.mxu0 %v1042
      %2147 = vmatmul.mubr.f32.gmra.mrb[0].mxu0 %v1041
      %v2148 = vpop.f32.mrb[0].mxu0
      %v2149 = vadd.f32 %v1924, %v2148
      %v2150 = vpop.f32.mrb[0].mxu0
      %2151 = vmatprep.mubr.f32.mxu0 %v1051
      %2152 = vmatmul.mubr.f32.gmra.mrb[0].mxu0 %v1050
      %v2153 = vpop.f32.mrb[0].mxu0
      %v2154 = vadd.f32 %v1929, %v2153
      %v2155 = vpop.f32.mrb[0].mxu0
      %2156 = vmatprep.mubr.f32.mxu0 %v1060
      %2157 = vmatmul.mubr.f32.gmra.mrb[0].mxu0 %v1059
      %v2158 = vpop.f32.mrb[0].mxu0
      %v2159 = vadd.f32 %v1934, %v2158
      %v2160 = vpop.f32.mrb[0].mxu0
      %2161 = vmatprep.mubr.f32.mxu0 %v1069
      %2162 = vmatmul.mubr.f32.gmra.mrb[0].mxu0 %v1068
      %v2163 = vpop.f32.mrb[0].mxu0
      %v2164 = vadd.f32 %v1939, %v2163
      %v2165 = vpop.f32.mrb[0].mxu0
      %2166 = vmatprep.mubr.f32.mxu0 %v1078
      %2167 = vmatmul.mubr.f32.gmra.mrb[0].mxu0 %v1077
      %v2168 = vpop.f32.mrb[0].mxu0
      %v2169 = vadd.f32 %v1944, %v2168
      %v2170 = vpop.f32.mrb[0].mxu0
      %2171 = vmatprep.mubr.f32.mxu0 %v1087
      %2172 = vmatmul.mubr.f32.gmra.mrb[0].mxu0 %v1086
      %v2173 = vpop.f32.mrb[0].mxu0
      %v2174 = vadd.f32 %v1949, %v2173
      %v2175 = vpop.f32.mrb[0].mxu0
      %2176 = vmatprep.mubr.f32.mxu0 %v1096
      %2177 = vmatmul.mubr.f32.gmra.mrb[0].mxu0 %v1095
      %v2178 = vpop.f32.mrb[0].mxu0
      %v2179 = vadd.f32 %v1954, %v2178
      %v2180 = vpop.f32.mrb[0].mxu0
      %2181 = vmatprep.mubr.f32.mxu0 %v1105
      %2182 = vmatmul.mubr.f32.gmra.mrb[0].mxu0 %v1104
      %v2183 = vpop.f32.mrb[0].mxu0
      %v2184 = vadd.f32 %v1959, %v2183
      %v2185 = vpop.f32.mrb[0].mxu0
      %2186 = vmatprep.mubr.f32.mxu0 %v1114
      %2187 = vmatmul.mubr.f32.gmra.mrb[0].mxu0 %v1113
      %v2188 = vpop.f32.mrb[0].mxu0
      %v2189 = vadd.f32 %v1964, %v2188
      %v2190 = vpop.f32.mrb[0].mxu0
      %2191 = vmatprep.mubr.f32.mxu0 %v1123
      %2192 = vmatmul.mubr.f32.gmra.mrb[0].mxu0 %v1122
      %v2193 = vpop.f32.mrb[0].mxu0
      %v2194 = vadd.f32 %v1969, %v2193
      %v2195 = vpop.f32.mrb[0].mxu0
      %2196 = vmatprep.mubr.f32.mxu0 %v1132
      %2197 = vmatmul.mubr.f32.gmra.mrb[0].mxu0 %v1131
      %v2198 = vpop.f32.mrb[0].mxu0
      %v2199 = vadd.f32 %v1974, %v2198
      %v2200 = vpop.f32.mrb[0].mxu0
      %2201 = vmatprep.mubr.f32.mxu0 %v1141
      %2202 = vmatmul.mubr.f32.gmra.mrb[0].mxu0 %v1140
      %v2203 = vpop.f32.mrb[0].mxu0
      %v2204 = vadd.f32 %v1979, %v2203
      %v2205 = vpop.f32.mrb[0].mxu0
      %2206 = vmatprep.mubr.f32.mxu0 %v1150
      %2207 = vmatmul.mubr.f32.gmra.mrb[0].mxu0 %v1149
      %v2208 = vpop.f32.mrb[0].mxu0
      %v2209 = vadd.f32 %v1984, %v2208
      %v2210 = vpop.f32.mrb[0].mxu0
      %2211 = vmatprep.mubr.f32.mxu0 %v1159
      %2212 = vmatmul.mubr.f32.gmra.mrb[0].mxu0 %v1158
      %v2213 = vpop.f32.mrb[0].mxu0
      %v2214 = vadd.f32 %v1989, %v2213
      %v2215 = vpop.f32.mrb[0].mxu0
      %2216 = vmatprep.mubr.f32.mxu0 %v1168
      %2217 = vmatmul.mubr.f32.gmra.mrb[0].mxu0 %v1167
      %v2218 = vpop.f32.mrb[0].mxu0
      %v2219 = vadd.f32 %v1994, %v2218
      %v2220 = vpop.f32.mrb[0].mxu0
      %2221 = vmatprep.mubr.f32.mxu0 %v1177
      %2222 = vmatmul.mubr.f32.gmra.mrb[0].mxu0 %v1176
      %v2223 = vpop.f32.mrb[0].mxu0
      %v2224 = vadd.f32 %v1999, %v2223
      %v2225 = vpop.f32.mrb[0].mxu0
      %2226 = vmatprep.mubr.f32.mxu0 %v1186
      %2227 = vmatmul.mubr.f32.gmra.mrb[0].mxu0 %v1185
      %v2228 = vpop.f32.mrb[0].mxu0
      %v2229 = vadd.f32 %v2004, %v2228
      %v2230 = vpop.f32.mrb[0].mxu0
      %2231 = vdwg.mxu0
      %2232 = vmatprep.subr.mxu0 0.0
      %2233 = vmatpush1.msra.mxu0 %v1316
      %2234 = vmatprep.subr.mxu0 0.0
      %2235 = vmatpush1.msra.mxu0 %v1317
      %2236 = vmatprep.subr.mxu0 0.0
      %2237 = vmatpush1.msra.mxu0 %v1318
      %2238 = vmatprep.subr.mxu0 0.0
      %2239 = vmatpush1.msra.mxu0 %v1319
      %2240 = vmatprep.subr.mxu0 0.0
      %2241 = vmatpush1.msra.mxu0 %v1320
      %2242 = vmatprep.subr.mxu0 0.0
      %2243 = vmatpush1.msra.mxu0 %v1321
      %2244 = vmatprep.subr.mxu0 0.0
      %2245 = vmatpush1.msra.mxu0 %v1322
      %2246 = vmatprep.subr.mxu0 0.0
      %2247 = vmatpush1.msra.mxu0 %v1323
      %2248 = vmatprep.subr.mxu0 0.0
      %2249 = vmatpush1.msra.mxu0 %v1324
      %2250 = vmatprep.subr.mxu0 0.0
      %2251 = vmatpush1.msra.mxu0 %v1325
      %2252 = vmatprep.subr.mxu0 0.0
      %2253 = vmatpush1.msra.mxu0 %v1326
      %2254 = vmatprep.subr.mxu0 0.0
      %2255 = vmatpush1.msra.mxu0 %v1327
      %2256 = vmatprep.subr.mxu0 0.0
      %2257 = vmatpush1.msra.mxu0 %v1328
      %2258 = vmatprep.subr.mxu0 0.0
      %2259 = vmatpush1.msra.mxu0 %v1329
      %2260 = vmatprep.subr.mxu0 0.0
      %2261 = vmatpush1.msra.mxu0 %v1330
      %2262 = vmatprep.subr.mxu0 0.0
      %2263 = vmatpush1.msra.mxu0 %v1331
      %2264 = vmatprep.subr.mxu0 0.0
      %2265 = vmatpush1.msra.mxu0 0.0
      %2266 = vmatprep.subr.mxu0 0.0
      %2267 = vmatpush1.msra.mxu0 0.0
      %2268 = vmatprep.subr.mxu0 0.0
      %2269 = vmatpush1.msra.mxu0 0.0
      %2270 = vmatprep.subr.mxu0 0.0
      %2271 = vmatpush1.msra.mxu0 0.0
      %2272 = vmatprep.subr.mxu0 0.0
      %2273 = vmatpush1.msra.mxu0 0.0
      %2274 = vmatprep.subr.mxu0 0.0
      %2275 = vmatpush1.msra.mxu0 0.0
      %2276 = vmatprep.subr.mxu0 0.0
      %2277 = vmatpush1.msra.mxu0 0.0
      %2278 = vmatprep.subr.mxu0 0.0
      %2279 = vmatpush1.msra.mxu0 0.0
      %2280 = vmatprep.subr.mxu0 0.0
      %2281 = vmatpush1.msra.mxu0 0.0
      %2282 = vmatprep.subr.mxu0 0.0
      %2283 = vmatpush1.msra.mxu0 0.0
      %2284 = vmatprep.subr.mxu0 0.0
      %2285 = vmatpush1.msra.mxu0 0.0
      %2286 = vmatprep.subr.mxu0 0.0
      %2287 = vmatpush1.msra.mxu0 0.0
      %2288 = vmatprep.subr.mxu0 0.0
      %2289 = vmatpush1.msra.mxu0 0.0
      %2290 = vmatprep.subr.mxu0 0.0
      %2291 = vmatpush1.msra.mxu0 0.0
      %2292 = vmatprep.subr.mxu0 0.0
      %2293 = vmatpush1.msra.mxu0 0.0
      %2294 = vmatprep.subr.mxu0 0.0
      %2295 = vmatpush1.msra.mxu0 0.0
      %2296 = vmatprep.mubr.f32.mxu0 0.0
      %2297 = vmatmul.mubr.f32.gmra.mrb[0].mxu0 %v908
      %v2298 = vpop.f32.mrb[0].mxu0
      %v2299 = vadd.f32 %v2074, %v2298
      %v2300 = vpop.f32.mrb[0].mxu0
      %2301 = vmatprep.mubr.f32.mxu0 0.0
      %2302 = vmatmul.mubr.f32.gmra.mrb[0].mxu0 %v917
      %v2303 = vpop.f32.mrb[0].mxu0
      %v2304 = vadd.f32 %v2079, %v2303
      %v2305 = vpop.f32.mrb[0].mxu0
      %2306 = vmatprep.mubr.f32.mxu0 0.0
      %2307 = vmatmul.mubr.f32.gmra.mrb[0].mxu0 %v926
      %v2308 = vpop.f32.mrb[0].mxu0
      %v2309 = vadd.f32 %v2084, %v2308
      %v2310 = vpop.f32.mrb[0].mxu0
      %2311 = vmatprep.mubr.f32.mxu0 0.0
      %2312 = vmatmul.mubr.f32.gmra.mrb[0].mxu0 %v935
      %v2313 = vpop.f32.mrb[0].mxu0
      %v2314 = vadd.f32 %v2089, %v2313
      %v2315 = vpop.f32.mrb[0].mxu0
      %2316 = vmatprep.mubr.f32.mxu0 0.0
      %2317 = vmatmul.mubr.f32.gmra.mrb[0].mxu0 %v944
      %v2318 = vpop.f32.mrb[0].mxu0
      %v2319 = vadd.f32 %v2094, %v2318
      %v2320 = vpop.f32.mrb[0].mxu0
      %2321 = vmatprep.mubr.f32.mxu0 0.0
      %2322 = vmatmul.mubr.f32.gmra.mrb[0].mxu0 %v953
      %v2323 = vpop.f32.mrb[0].mxu0
      %v2324 = vadd.f32 %v2099, %v2323
      %v2325 = vpop.f32.mrb[0].mxu0
      %2326 = vmatprep.mubr.f32.mxu0 0.0
      %2327 = vmatmul.mubr.f32.gmra.mrb[0].mxu0 %v962
      %v2328 = vpop.f32.mrb[0].mxu0
      %v2329 = vadd.f32 %v2104, %v2328
      %v2330 = vpop.f32.mrb[0].mxu0
      %2331 = vmatprep.mubr.f32.mxu0 0.0
      %2332 = vmatmul.mubr.f32.gmra.mrb[0].mxu0 %v971
      %v2333 = vpop.f32.mrb[0].mxu0
      %v2334 = vadd.f32 %v2109, %v2333
      %v2335 = vpop.f32.mrb[0].mxu0
      %2336 = vmatprep.mubr.f32.mxu0 0.0
      %2337 = vmatmul.mubr.f32.gmra.mrb[0].mxu0 %v980
      %v2338 = vpop.f32.mrb[0].mxu0
      %v2339 = vadd.f32 %v2114, %v2338
      %v2340 = vpop.f32.mrb[0].mxu0
      %2341 = vmatprep.mubr.f32.mxu0 0.0
      %2342 = vmatmul.mubr.f32.gmra.mrb[0].mxu0 %v989
      %v2343 = vpop.f32.mrb[0].mxu0
      %v2344 = vadd.f32 %v2119, %v2343
      %v2345 = vpop.f32.mrb[0].mxu0
      %2346 = vmatprep.mubr.f32.mxu0 0.0
      %2347 = vmatmul.mubr.f32.gmra.mrb[0].mxu0 %v998
      %v2348 = vpop.f32.mrb[0].mxu0
      %v2349 = vadd.f32 %v2124, %v2348
      %v2350 = vpop.f32.mrb[0].mxu0
      %2351 = vmatprep.mubr.f32.mxu0 0.0
      %2352 = vmatmul.mubr.f32.gmra.mrb[0].mxu0 %v1007
      %v2353 = vpop.f32.mrb[0].mxu0
      %v2354 = vadd.f32 %v2129, %v2353
      %v2355 = vpop.f32.mrb[0].mxu0
      %2356 = vmatprep.mubr.f32.mxu0 0.0
      %2357 = vmatmul.mubr.f32.gmra.mrb[0].mxu0 %v1016
      %v2358 = vpop.f32.mrb[0].mxu0
      %v2359 = vadd.f32 %v2134, %v2358
      %v2360 = vpop.f32.mrb[0].mxu0
      %2361 = vmatprep.mubr.f32.mxu0 0.0
      %2362 = vmatmul.mubr.f32.gmra.mrb[0].mxu0 %v1025
      %v2363 = vpop.f32.mrb[0].mxu0
      %v2364 = vadd.f32 %v2139, %v2363
      %v2365 = vpop.f32.mrb[0].mxu0
      %2366 = vmatprep.mubr.f32.mxu0 0.0
      %2367 = vmatmul.mubr.f32.gmra.mrb[0].mxu0 %v1034
      %v2368 = vpop.f32.mrb[0].mxu0
      %v2369 = vadd.f32 %v2144, %v2368
      %v2370 = vpop.f32.mrb[0].mxu0
      %2371 = vmatprep.mubr.f32.mxu0 0.0
      %2372 = vmatmul.mubr.f32.gmra.mrb[0].mxu0 %v1043
      %v2373 = vpop.f32.mrb[0].mxu0
      %v2374 = vadd.f32 %v2149, %v2373
      %v2375 = vpop.f32.mrb[0].mxu0
      %2376 = vmatprep.mubr.f32.mxu0 0.0
      %2377 = vmatmul.mubr.f32.gmra.mrb[0].mxu0 %v1052
      %v2378 = vpop.f32.mrb[0].mxu0
      %v2379 = vadd.f32 %v2154, %v2378
      %v2380 = vpop.f32.mrb[0].mxu0
      %2381 = vmatprep.mubr.f32.mxu0 0.0
      %2382 = vmatmul.mubr.f32.gmra.mrb[0].mxu0 %v1061
      %v2383 = vpop.f32.mrb[0].mxu0
      %v2384 = vadd.f32 %v2159, %v2383
      %v2385 = vpop.f32.mrb[0].mxu0
      %2386 = vmatprep.mubr.f32.mxu0 0.0
      %2387 = vmatmul.mubr.f32.gmra.mrb[0].mxu0 %v1070
      %v2388 = vpop.f32.mrb[0].mxu0
      %v2389 = vadd.f32 %v2164, %v2388
      %v2390 = vpop.f32.mrb[0].mxu0
      %2391 = vmatprep.mubr.f32.mxu0 0.0
      %2392 = vmatmul.mubr.f32.gmra.mrb[0].mxu0 %v1079
      %v2393 = vpop.f32.mrb[0].mxu0
      %v2394 = vadd.f32 %v2169, %v2393
      %v2395 = vpop.f32.mrb[0].mxu0
      %2396 = vmatprep.mubr.f32.mxu0 0.0
      %2397 = vmatmul.mubr.f32.gmra.mrb[0].mxu0 %v1088
      %v2398 = vpop.f32.mrb[0].mxu0
      %v2399 = vadd.f32 %v2174, %v2398
      %v2400 = vpop.f32.mrb[0].mxu0
      %2401 = vmatprep.mubr.f32.mxu0 0.0
      %2402 = vmatmul.mubr.f32.gmra.mrb[0].mxu0 %v1097
      %v2403 = vpop.f32.mrb[0].mxu0
      %v2404 = vadd.f32 %v2179, %v2403
      %v2405 = vpop.f32.mrb[0].mxu0
      %2406 = vmatprep.mubr.f32.mxu0 0.0
      %2407 = vmatmul.mubr.f32.gmra.mrb[0].mxu0 %v1106
      %v2408 = vpop.f32.mrb[0].mxu0
      %v2409 = vadd.f32 %v2184, %v2408
      %v2410 = vpop.f32.mrb[0].mxu0
      %2411 = vmatprep.mubr.f32.mxu0 0.0
      %2412 = vmatmul.mubr.f32.gmra.mrb[0].mxu0 %v1115
      %v2413 = vpop.f32.mrb[0].mxu0
      %v2414 = vadd.f32 %v2189, %v2413
      %v2415 = vpop.f32.mrb[0].mxu0
      %2416 = vmatprep.mubr.f32.mxu0 0.0
      %2417 = vmatmul.mubr.f32.gmra.mrb[0].mxu0 %v1124
      %v2418 = vpop.f32.mrb[0].mxu0
      %v2419 = vadd.f32 %v2194, %v2418
      %v2420 = vpop.f32.mrb[0].mxu0
      %2421 = vmatprep.mubr.f32.mxu0 0.0
      %2422 = vmatmul.mubr.f32.gmra.mrb[0].mxu0 %v1133
      %v2423 = vpop.f32.mrb[0].mxu0
      %v2424 = vadd.f32 %v2199, %v2423
      %v2425 = vpop.f32.mrb[0].mxu0
      %2426 = vmatprep.mubr.f32.mxu0 0.0
      %2427 = vmatmul.mubr.f32.gmra.mrb[0].mxu0 %v1142
      %v2428 = vpop.f32.mrb[0].mxu0
      %v2429 = vadd.f32 %v2204, %v2428
      %v2430 = vpop.f32.mrb[0].mxu0
      %2431 = vmatprep.mubr.f32.mxu0 0.0
      %2432 = vmatmul.mubr.f32.gmra.mrb[0].mxu0 %v1151
      %v2433 = vpop.f32.mrb[0].mxu0
      %v2434 = vadd.f32 %v2209, %v2433
      %v2435 = vpop.f32.mrb[0].mxu0
      %2436 = vmatprep.mubr.f32.mxu0 0.0
      %2437 = vmatmul.mubr.f32.gmra.mrb[0].mxu0 %v1160
      %v2438 = vpop.f32.mrb[0].mxu0
      %v2439 = vadd.f32 %v2214, %v2438
      %v2440 = vpop.f32.mrb[0].mxu0
      %2441 = vmatprep.mubr.f32.mxu0 0.0
      %2442 = vmatmul.mubr.f32.gmra.mrb[0].mxu0 %v1169
      %v2443 = vpop.f32.mrb[0].mxu0
      %v2444 = vadd.f32 %v2219, %v2443
      %v2445 = vpop.f32.mrb[0].mxu0
      %2446 = vmatprep.mubr.f32.mxu0 0.0
      %2447 = vmatmul.mubr.f32.gmra.mrb[0].mxu0 %v1178
      %v2448 = vpop.f32.mrb[0].mxu0
      %v2449 = vadd.f32 %v2224, %v2448
      %v2450 = vpop.f32.mrb[0].mxu0
      %2451 = vmatprep.mubr.f32.mxu0 0.0
      %2452 = vmatmul.mubr.f32.gmra.mrb[0].mxu0 %v1187
      %v2453 = vpop.f32.mrb[0].mxu0
      %v2454 = vadd.f32 %v2229, %v2453
      %v2455 = vpop.f32.mrb[0].mxu0
      %2456 = vdwg.mxu0
      %v2457 = vld [vmem:[%s2] sm:$0x1]
      %v2459 = vlaneseq
      %v2460 = vshrl.u32 %v2459, 7
      %v2461 = vsub.s32 0, %v2460
      %v2462 = vrot.slane %v2457, %v2461
      %v2464 = vmul.f32 %v2299, %v2462
      %v2465 = vmul.f32 %v2304, %v2462
      %v2466 = vmul.f32 %v2309, %v2462
      %v2467 = vmul.f32 %v2314, %v2462
      %v2468 = vmul.f32 %v2319, %v2462
      %v2469 = vmul.f32 %v2324, %v2462
      %v2470 = vmul.f32 %v2329, %v2462
      %v2471 = vmul.f32 %v2334, %v2462
      %v2472 = vmul.f32 %v2339, %v2462
      %v2473 = vmul.f32 %v2344, %v2462
      %v2474 = vmul.f32 %v2349, %v2462
      %v2475 = vmul.f32 %v2354, %v2462
      %v2476 = vmul.f32 %v2359, %v2462
      %v2477 = vmul.f32 %v2364, %v2462
      %v2478 = vmul.f32 %v2369, %v2462
      %v2479 = vmul.f32 %v2374, %v2462
      %v2480 = vmul.f32 %v2379, %v2462
      %v2481 = vmul.f32 %v2384, %v2462
      %v2482 = vmul.f32 %v2389, %v2462
      %v2483 = vmul.f32 %v2394, %v2462
      %v2484 = vmul.f32 %v2399, %v2462
      %v2485 = vmul.f32 %v2404, %v2462
      %v2486 = vmul.f32 %v2409, %v2462
      %v2487 = vmul.f32 %v2414, %v2462
      %v2488 = vmul.f32 %v2419, %v2462
      %v2489 = vmul.f32 %v2424, %v2462
      %v2490 = vmul.f32 %v2429, %v2462
      %v2491 = vmul.f32 %v2434, %v2462
      %v2492 = vmul.f32 %v2439, %v2462
      %v2493 = vmul.f32 %v2444, %v2462
      %v2494 = vmul.f32 %v2449, %v2462
      %v2495 = vmul.f32 %v2454, %v2462
      %v2496 = vld [vmem:[%s3] sm:$0x1]
      %v2498 = vlaneseq
      %v2499 = vshrl.u32 %v2498, 7
      %v2500 = vsub.s32 0, %v2499
      %v2501 = vrot.slane %v2496, %v2500
      %v2503 = vadd.f32 %v2464, %v2501
      %v2504 = vadd.f32 %v2465, %v2501
      %v2505 = vadd.f32 %v2466, %v2501
      %v2506 = vadd.f32 %v2467, %v2501
      %v2507 = vadd.f32 %v2468, %v2501
      %v2508 = vadd.f32 %v2469, %v2501
      %v2509 = vadd.f32 %v2470, %v2501
      %v2510 = vadd.f32 %v2471, %v2501
      %v2511 = vadd.f32 %v2472, %v2501
      %v2512 = vadd.f32 %v2473, %v2501
      %v2513 = vadd.f32 %v2474, %v2501
      %v2514 = vadd.f32 %v2475, %v2501
      %v2515 = vadd.f32 %v2476, %v2501
      %v2516 = vadd.f32 %v2477, %v2501
      %v2517 = vadd.f32 %v2478, %v2501
      %v2518 = vadd.f32 %v2479, %v2501
      %v2519 = vadd.f32 %v2480, %v2501
      %v2520 = vadd.f32 %v2481, %v2501
      %v2521 = vadd.f32 %v2482, %v2501
      %v2522 = vadd.f32 %v2483, %v2501
      %v2523 = vadd.f32 %v2484, %v2501
      %v2524 = vadd.f32 %v2485, %v2501
      %v2525 = vadd.f32 %v2486, %v2501
      %v2526 = vadd.f32 %v2487, %v2501
      %v2527 = vadd.f32 %v2488, %v2501
      %v2528 = vadd.f32 %v2489, %v2501
      %v2529 = vadd.f32 %v2490, %v2501
      %v2530 = vadd.f32 %v2491, %v2501
      %v2531 = vadd.f32 %v2492, %v2501
      %v2532 = vadd.f32 %v2493, %v2501
      %v2533 = vadd.f32 %v2494, %v2501
      %v2534 = vadd.f32 %v2495, %v2501
      %v2535 = vmax.f32 %v2503, 0.0
      %v2536 = vmax.f32 %v2504, 0.0
      %v2537 = vmax.f32 %v2505, 0.0
      %v2538 = vmax.f32 %v2506, 0.0
      %v2539 = vmax.f32 %v2507, 0.0
      %v2540 = vmax.f32 %v2508, 0.0
      %v2541 = vmax.f32 %v2509, 0.0
      %v2542 = vmax.f32 %v2510, 0.0
      %v2543 = vmax.f32 %v2511, 0.0
      %v2544 = vmax.f32 %v2512, 0.0
      %v2545 = vmax.f32 %v2513, 0.0
      %v2546 = vmax.f32 %v2514, 0.0
      %v2547 = vmax.f32 %v2515, 0.0
      %v2548 = vmax.f32 %v2516, 0.0
      %v2549 = vmax.f32 %v2517, 0.0
      %v2550 = vmax.f32 %v2518, 0.0
      %v2551 = vmax.f32 %v2519, 0.0
      %v2552 = vmax.f32 %v2520, 0.0
      %v2553 = vmax.f32 %v2521, 0.0
      %v2554 = vmax.f32 %v2522, 0.0
      %v2555 = vmax.f32 %v2523, 0.0
      %v2556 = vmax.f32 %v2524, 0.0
      %v2557 = vmax.f32 %v2525, 0.0
      %v2558 = vmax.f32 %v2526, 0.0
      %v2559 = vmax.f32 %v2527, 0.0
      %v2560 = vmax.f32 %v2528, 0.0
      %v2561 = vmax.f32 %v2529, 0.0
      %v2562 = vmax.f32 %v2530, 0.0
      %v2563 = vmax.f32 %v2531, 0.0
      %v2564 = vmax.f32 %v2532, 0.0
      %v2565 = vmax.f32 %v2533, 0.0
      %v2566 = vmax.f32 %v2534, 0.0
      %s2567 = scalar_lea.vmem [#allocation3], 32
      %2568 = vst [vmem:[%s2567 + $0x8] sm:$0xff] %v2535
      %2569 = vst [vmem:[%s2567 + $0x10] sm:$0xff] %v2536
      %2570 = vst [vmem:[%s2567 + $0x28] sm:$0xff] %v2537
      %2571 = vst [vmem:[%s2567 + $0x30] sm:$0xff] %v2538
      %2572 = vst [vmem:[%s2567 + $0x48] sm:$0xff] %v2539
      %2573 = vst [vmem:[%s2567 + $0x50] sm:$0xff] %v2540
      %2574 = vst [vmem:[%s2567 + $0x68] sm:$0xff] %v2541
      %2575 = vst [vmem:[%s2567 + $0x70] sm:$0xff] %v2542
      %2576 = vst [vmem:[%s2567 + $0x88] sm:$0xff] %v2543
      %2577 = vst [vmem:[%s2567 + $0x90] sm:$0xff] %v2544
      %2578 = vst [vmem:[%s2567 + $0xa8] sm:$0xff] %v2545
      %2579 = vst [vmem:[%s2567 + $0xb0] sm:$0xff] %v2546
      %2580 = vst [vmem:[%s2567 + $0xc8] sm:$0xff] %v2547
      %2581 = vst [vmem:[%s2567 + $0xd0] sm:$0xff] %v2548
      %2582 = vst [vmem:[%s2567 + $0xe8] sm:$0xff] %v2549
      %2583 = vst [vmem:[%s2567 + $0xf0] sm:$0xff] %v2550
      %2584 = vst [vmem:[%s2567 + $0x108] sm:$0xff] %v2551
      %2585 = vst [vmem:[%s2567 + $0x110] sm:$0xff] %v2552
      %2586 = vst [vmem:[%s2567 + $0x128] sm:$0xff] %v2553
      %2587 = vst [vmem:[%s2567 + $0x130] sm:$0xff] %v2554
      %2588 = vst [vmem:[%s2567 + $0x148] sm:$0xff] %v2555
      %2589 = vst [vmem:[%s2567 + $0x150] sm:$0xff] %v2556
      %2590 = vst [vmem:[%s2567 + $0x168] sm:$0xff] %v2557
      %2591 = vst [vmem:[%s2567 + $0x170] sm:$0xff] %v2558
      %2592 = vst [vmem:[%s2567 + $0x188] sm:$0xff] %v2559
      %2593 = vst [vmem:[%s2567 + $0x190] sm:$0xff] %v2560
      %2594 = vst [vmem:[%s2567 + $0x1a8] sm:$0xff] %v2561
      %2595 = vst [vmem:[%s2567 + $0x1b0] sm:$0xff] %v2562
      %2596 = vst [vmem:[%s2567 + $0x1c8] sm:$0xff] %v2563
      %2597 = vst [vmem:[%s2567 + $0x1d0] sm:$0xff] %v2564
      %2598 = vst [vmem:[%s2567 + $0x1e8] sm:$0xff] %v2565
      %2599 = vst [vmem:[%s2567 + $0x1f0] sm:$0xff] %v2566
      %v2600 = vld [vmem:[#allocation3 + $0x7] sm:$0xff]
      %v2601 = vld [vmem:[#allocation3 + $0xf] sm:$0xff]
      %v2602 = vld [vmem:[#allocation3 + $0x27] sm:$0xff]
      %v2603 = vld [vmem:[#allocation3 + $0x2f] sm:$0xff]
      %v2604 = vld [vmem:[#allocation3 + $0x47] sm:$0xff]
      %v2605 = vld [vmem:[#allocation3 + $0x4f] sm:$0xff]
      %v2606 = vld [vmem:[#allocation3 + $0x67] sm:$0xff]
      %v2607 = vld [vmem:[#allocation3 + $0x6f] sm:$0xff]
      %v2608 = vld [vmem:[#allocation3 + $0x87] sm:$0xff]
      %v2609 = vld [vmem:[#allocation3 + $0x8f] sm:$0xff]
      %v2610 = vld [vmem:[#allocation3 + $0xa7] sm:$0xff]
      %v2611 = vld [vmem:[#allocation3 + $0xaf] sm:$0xff]
      %v2612 = vld [vmem:[#allocation3 + $0xc7] sm:$0xff]
      %v2613 = vld [vmem:[#allocation3 + $0xcf] sm:$0xff]
      %v2614 = vld [vmem:[#allocation3 + $0xe7] sm:$0xff]
      %v2615 = vld [vmem:[#allocation3 + $0xef] sm:$0xff]
      %v2616 = vld [vmem:[#allocation3 + $0x107] sm:$0xff]
      %v2617 = vld [vmem:[#allocation3 + $0x10f] sm:$0xff]
      %v2618 = vld [vmem:[#allocation3 + $0x127] sm:$0xff]
      %v2619 = vld [vmem:[#allocation3 + $0x12f] sm:$0xff]
      %v2620 = vld [vmem:[#allocation3 + $0x147] sm:$0xff]
      %v2621 = vld [vmem:[#allocation3 + $0x14f] sm:$0xff]
      %v2622 = vld [vmem:[#allocation3 + $0x167] sm:$0xff]
      %v2623 = vld [vmem:[#allocation3 + $0x16f] sm:$0xff]
      %v2624 = vld [vmem:[#allocation3 + $0x187] sm:$0xff]
      %v2625 = vld [vmem:[#allocation3 + $0x18f] sm:$0xff]
      %v2626 = vld [vmem:[#allocation3 + $0x1a7] sm:$0xff]
      %v2627 = vld [vmem:[#allocation3 + $0x1af] sm:$0xff]
      %v2628 = vld [vmem:[#allocation3 + $0x1c7] sm:$0xff]
      %v2629 = vld [vmem:[#allocation3 + $0x1cf] sm:$0xff]
      %v2630 = vld [vmem:[#allocation3 + $0x1e7] sm:$0xff]
      %v2631 = vld [vmem:[#allocation3 + $0x1ef] sm:$0xff]
      %2632 = vst [vmem:[#allocation2] sm:$0xff] %v2600
      %2633 = vst [vmem:[#allocation2 + $0x48] sm:$0xff] %v2601
      %2634 = vst [vmem:[#allocation2 + $0x90] sm:$0xff] %v2602
      %2635 = vst [vmem:[#allocation2 + $0xd8] sm:$0xff] %v2603
      %2636 = vst [vmem:[#allocation2 + $0x120] sm:$0xff] %v2604
      %2637 = vst [vmem:[#allocation2 + $0x168] sm:$0xff] %v2605
      %2638 = vst [vmem:[#allocation2 + $0x1b0] sm:$0xff] %v2606
      %2639 = vst [vmem:[#allocation2 + $0x1f8] sm:$0xff] %v2607
      %2640 = vst [vmem:[#allocation2 + $0x240] sm:$0xff] %v2608
      %2641 = vst [vmem:[#allocation2 + $0x288] sm:$0xff] %v2609
      %2642 = vst [vmem:[#allocation2 + $0x2d0] sm:$0xff] %v2610
      %2643 = vst [vmem:[#allocation2 + $0x318] sm:$0xff] %v2611
      %2644 = vst [vmem:[#allocation2 + $0x360] sm:$0xff] %v2612
      %2645 = vst [vmem:[#allocation2 + $0x3a8] sm:$0xff] %v2613
      %2646 = vst [vmem:[#allocation2 + $0x3f0] sm:$0xff] %v2614
      %2647 = vst [vmem:[#allocation2 + $0x438] sm:$0xff] %v2615
      %2648 = vst [vmem:[#allocation2 + $0x480] sm:$0xff] %v2616
      %2649 = vst [vmem:[#allocation2 + $0x4c8] sm:$0xff] %v2617
      %2650 = vst [vmem:[#allocation2 + $0x510] sm:$0xff] %v2618
      %2651 = vst [vmem:[#allocation2 + $0x558] sm:$0xff] %v2619
      %2652 = vst [vmem:[#allocation2 + $0x5a0] sm:$0xff] %v2620
      %2653 = vst [vmem:[#allocation2 + $0x5e8] sm:$0xff] %v2621
      %2654 = vst [vmem:[#allocation2 + $0x630] sm:$0xff] %v2622
      %2655 = vst [vmem:[#allocation2 + $0x678] sm:$0xff] %v2623
      %2656 = vst [vmem:[#allocation2 + $0x6c0] sm:$0xff] %v2624
      %2657 = vst [vmem:[#allocation2 + $0x708] sm:$0xff] %v2625
      %2658 = vst [vmem:[#allocation2 + $0x750] sm:$0xff] %v2626
      %2659 = vst [vmem:[#allocation2 + $0x798] sm:$0xff] %v2627
      %2660 = vst [vmem:[#allocation2 + $0x7e0] sm:$0xff] %v2628
      %2661 = vst [vmem:[#allocation2 + $0x828] sm:$0xff] %v2629
      %2662 = vst [vmem:[#allocation2 + $0x870] sm:$0xff] %v2630
      %2663 = vst [vmem:[#allocation2 + $0x8b8] sm:$0xff] %v2631
      %v2664 = vld [vmem:[#allocation3 + $0x8] sm:$0xff]
      %v2665 = vld [vmem:[#allocation3 + $0x10] sm:$0xff]
      %v2666 = vld [vmem:[#allocation3 + $0x28] sm:$0xff]
      %v2667 = vld [vmem:[#allocation3 + $0x30] sm:$0xff]
      %v2668 = vld [vmem:[#allocation3 + $0x48] sm:$0xff]
      %v2669 = vld [vmem:[#allocation3 + $0x50] sm:$0xff]
      %v2670 = vld [vmem:[#allocation3 + $0x68] sm:$0xff]
      %v2671 = vld [vmem:[#allocation3 + $0x70] sm:$0xff]
      %v2672 = vld [vmem:[#allocation3 + $0x88] sm:$0xff]
      %v2673 = vld [vmem:[#allocation3 + $0x90] sm:$0xff]
      %v2674 = vld [vmem:[#allocation3 + $0xa8] sm:$0xff]
      %v2675 = vld [vmem:[#allocation3 + $0xb0] sm:$0xff]
      %v2676 = vld [vmem:[#allocation3 + $0xc8] sm:$0xff]
      %v2677 = vld [vmem:[#allocation3 + $0xd0] sm:$0xff]
      %v2678 = vld [vmem:[#allocation3 + $0xe8] sm:$0xff]
      %v2679 = vld [vmem:[#allocation3 + $0xf0] sm:$0xff]
      %v2680 = vld [vmem:[#allocation3 + $0x108] sm:$0xff]
      %v2681 = vld [vmem:[#allocation3 + $0x110] sm:$0xff]
      %v2682 = vld [vmem:[#allocation3 + $0x128] sm:$0xff]
      %v2683 = vld [vmem:[#allocation3 + $0x130] sm:$0xff]
      %v2684 = vld [vmem:[#allocation3 + $0x148] sm:$0xff]
      %v2685 = vld [vmem:[#allocation3 + $0x150] sm:$0xff]
      %v2686 = vld [vmem:[#allocation3 + $0x168] sm:$0xff]
      %v2687 = vld [vmem:[#allocation3 + $0x170] sm:$0xff]
      %v2688 = vld [vmem:[#allocation3 + $0x188] sm:$0xff]
      %v2689 = vld [vmem:[#allocation3 + $0x190] sm:$0xff]
      %v2690 = vld [vmem:[#allocation3 + $0x1a8] sm:$0xff]
      %v2691 = vld [vmem:[#allocation3 + $0x1b0] sm:$0xff]
      %v2692 = vld [vmem:[#allocation3 + $0x1c8] sm:$0xff]
      %v2693 = vld [vmem:[#allocation3 + $0x1d0] sm:$0xff]
      %v2694 = vld [vmem:[#allocation3 + $0x1e8] sm:$0xff]
      %v2695 = vld [vmem:[#allocation3 + $0x1f0] sm:$0xff]
      %2696 = vst [vmem:[#allocation2 + $0x8] sm:$0xff] %v2664
      %2697 = vst [vmem:[#allocation2 + $0x50] sm:$0xff] %v2665
      %2698 = vst [vmem:[#allocation2 + $0x98] sm:$0xff] %v2666
      %2699 = vst [vmem:[#allocation2 + $0xe0] sm:$0xff] %v2667
      %2700 = vst [vmem:[#allocation2 + $0x128] sm:$0xff] %v2668
      %2701 = vst [vmem:[#allocation2 + $0x170] sm:$0xff] %v2669
      %2702 = vst [vmem:[#allocation2 + $0x1b8] sm:$0xff] %v2670
      %2703 = vst [vmem:[#allocation2 + $0x200] sm:$0xff] %v2671
      %2704 = vst [vmem:[#allocation2 + $0x248] sm:$0xff] %v2672
      %2705 = vst [vmem:[#allocation2 + $0x290] sm:$0xff] %v2673
      %2706 = vst [vmem:[#allocation2 + $0x2d8] sm:$0xff] %v2674
      %2707 = vst [vmem:[#allocation2 + $0x320] sm:$0xff] %v2675
      %2708 = vst [vmem:[#allocation2 + $0x368] sm:$0xff] %v2676
      %2709 = vst [vmem:[#allocation2 + $0x3b0] sm:$0xff] %v2677
      %2710 = vst [vmem:[#allocation2 + $0x3f8] sm:$0xff] %v2678
      %2711 = vst [vmem:[#allocation2 + $0x440] sm:$0xff] %v2679
      %2712 = vst [vmem:[#allocation2 + $0x488] sm:$0xff] %v2680
      %2713 = vst [vmem:[#allocation2 + $0x4d0] sm:$0xff] %v2681
      %2714 = vst [vmem:[#allocation2 + $0x518] sm:$0xff] %v2682
      %2715 = vst [vmem:[#allocation2 + $0x560] sm:$0xff] %v2683
      %2716 = vst [vmem:[#allocation2 + $0x5a8] sm:$0xff] %v2684
      %2717 = vst [vmem:[#allocation2 + $0x5f0] sm:$0xff] %v2685
      %2718 = vst [vmem:[#allocation2 + $0x638] sm:$0xff] %v2686
      %2719 = vst [vmem:[#allocation2 + $0x680] sm:$0xff] %v2687
      %2720 = vst [vmem:[#allocation2 + $0x6c8] sm:$0xff] %v2688
      %2721 = vst [vmem:[#allocation2 + $0x710] sm:$0xff] %v2689
      %2722 = vst [vmem:[#allocation2 + $0x758] sm:$0xff] %v2690
      %2723 = vst [vmem:[#allocation2 + $0x7a0] sm:$0xff] %v2691
      %2724 = vst [vmem:[#allocation2 + $0x7e8] sm:$0xff] %v2692
      %2725 = vst [vmem:[#allocation2 + $0x830] sm:$0xff] %v2693
      %2726 = vst [vmem:[#allocation2 + $0x878] sm:$0xff] %v2694
      %2727 = vst [vmem:[#allocation2 + $0x8c0] sm:$0xff] %v2695
      %v2728 = vld [vmem:[#allocation3 + $0x9] sm:$0xff]
      %v2729 = vld [vmem:[#allocation3 + $0x11] sm:$0xff]
      %v2730 = vld [vmem:[#allocation3 + $0x29] sm:$0xff]
      %v2731 = vld [vmem:[#allocation3 + $0x31] sm:$0xff]
      %v2732 = vld [vmem:[#allocation3 + $0x49] sm:$0xff]
      %v2733 = vld [vmem:[#allocation3 + $0x51] sm:$0xff]
      %v2734 = vld [vmem:[#allocation3 + $0x69] sm:$0xff]
      %v2735 = vld [vmem:[#allocation3 + $0x71] sm:$0xff]
      %v2736 = vld [vmem:[#allocation3 + $0x89] sm:$0xff]
      %v2737 = vld [vmem:[#allocation3 + $0x91] sm:$0xff]
      %v2738 = vld [vmem:[#allocation3 + $0xa9] sm:$0xff]
      %v2739 = vld [vmem:[#allocation3 + $0xb1] sm:$0xff]
      %v2740 = vld [vmem:[#allocation3 + $0xc9] sm:$0xff]
      %v2741 = vld [vmem:[#allocation3 + $0xd1] sm:$0xff]
      %v2742 = vld [vmem:[#allocation3 + $0xe9] sm:$0xff]
      %v2743 = vld [vmem:[#allocation3 + $0xf1] sm:$0xff]
      %v2744 = vld [vmem:[#allocation3 + $0x109] sm:$0xff]
      %v2745 = vld [vmem:[#allocation3 + $0x111] sm:$0xff]
      %v2746 = vld [vmem:[#allocation3 + $0x129] sm:$0xff]
      %v2747 = vld [vmem:[#allocation3 + $0x131] sm:$0xff]
      %v2748 = vld [vmem:[#allocation3 + $0x149] sm:$0xff]
      %v2749 = vld [vmem:[#allocation3 + $0x151] sm:$0xff]
      %v2750 = vld [vmem:[#allocation3 + $0x169] sm:$0xff]
      %v2751 = vld [vmem:[#allocation3 + $0x171] sm:$0xff]
      %v2752 = vld [vmem:[#allocation3 + $0x189] sm:$0xff]
      %v2753 = vld [vmem:[#allocation3 + $0x191] sm:$0xff]
      %v2754 = vld [vmem:[#allocation3 + $0x1a9] sm:$0xff]
      %v2755 = vld [vmem:[#allocation3 + $0x1b1] sm:$0xff]
      %v2756 = vld [vmem:[#allocation3 + $0x1c9] sm:$0xff]
      %v2757 = vld [vmem:[#allocation3 + $0x1d1] sm:$0xff]
      %v2758 = vld [vmem:[#allocation3 + $0x1e9] sm:$0xff]
      %v2759 = vld [vmem:[#allocation3 + $0x1f1] sm:$0xff]
      %2760 = vst [vmem:[#allocation2 + $0x10] sm:$0xff] %v2728
      %2761 = vst [vmem:[#allocation2 + $0x58] sm:$0xff] %v2729
      %2762 = vst [vmem:[#allocation2 + $0xa0] sm:$0xff] %v2730
      %2763 = vst [vmem:[#allocation2 + $0xe8] sm:$0xff] %v2731
      %2764 = vst [vmem:[#allocation2 + $0x130] sm:$0xff] %v2732
      %2765 = vst [vmem:[#allocation2 + $0x178] sm:$0xff] %v2733
      %2766 = vst [vmem:[#allocation2 + $0x1c0] sm:$0xff] %v2734
      %2767 = vst [vmem:[#allocation2 + $0x208] sm:$0xff] %v2735
      %2768 = vst [vmem:[#allocation2 + $0x250] sm:$0xff] %v2736
      %2769 = vst [vmem:[#allocation2 + $0x298] sm:$0xff] %v2737
      %2770 = vst [vmem:[#allocation2 + $0x2e0] sm:$0xff] %v2738
      %2771 = vst [vmem:[#allocation2 + $0x328] sm:$0xff] %v2739
      %2772 = vst [vmem:[#allocation2 + $0x370] sm:$0xff] %v2740
      %2773 = vst [vmem:[#allocation2 + $0x3b8] sm:$0xff] %v2741
      %2774 = vst [vmem:[#allocation2 + $0x400] sm:$0xff] %v2742
      %2775 = vst [vmem:[#allocation2 + $0x448] sm:$0xff] %v2743
      %2776 = vst [vmem:[#allocation2 + $0x490] sm:$0xff] %v2744
      %2777 = vst [vmem:[#allocation2 + $0x4d8] sm:$0xff] %v2745
      %2778 = vst [vmem:[#allocation2 + $0x520] sm:$0xff] %v2746
      %2779 = vst [vmem:[#allocation2 + $0x568] sm:$0xff] %v2747
      %2780 = vst [vmem:[#allocation2 + $0x5b0] sm:$0xff] %v2748
      %2781 = vst [vmem:[#allocation2 + $0x5f8] sm:$0xff] %v2749
      %2782 = vst [vmem:[#allocation2 + $0x640] sm:$0xff] %v2750
      %2783 = vst [vmem:[#allocation2 + $0x688] sm:$0xff] %v2751
      %2784 = vst [vmem:[#allocation2 + $0x6d0] sm:$0xff] %v2752
      %2785 = vst [vmem:[#allocation2 + $0x718] sm:$0xff] %v2753
      %2786 = vst [vmem:[#allocation2 + $0x760] sm:$0xff] %v2754
      %2787 = vst [vmem:[#allocation2 + $0x7a8] sm:$0xff] %v2755
      %2788 = vst [vmem:[#allocation2 + $0x7f0] sm:$0xff] %v2756
      %2789 = vst [vmem:[#allocation2 + $0x838] sm:$0xff] %v2757
      %2790 = vst [vmem:[#allocation2 + $0x880] sm:$0xff] %v2758
      %2791 = vst [vmem:[#allocation2 + $0x8c8] sm:$0xff] %v2759
      %v2792 = vld [vmem:[%s2567 + $0x7] sm:$0xff]
      %v2793 = vld [vmem:[%s2567 + $0xf] sm:$0xff]
      %v2794 = vld [vmem:[%s2567 + $0x27] sm:$0xff]
      %v2795 = vld [vmem:[%s2567 + $0x2f] sm:$0xff]
      %v2796 = vld [vmem:[%s2567 + $0x47] sm:$0xff]
      %v2797 = vld [vmem:[%s2567 + $0x4f] sm:$0xff]
      %v2798 = vld [vmem:[%s2567 + $0x67] sm:$0xff]
      %v2799 = vld [vmem:[%s2567 + $0x6f] sm:$0xff]
      %v2800 = vld [vmem:[%s2567 + $0x87] sm:$0xff]
      %v2801 = vld [vmem:[%s2567 + $0x8f] sm:$0xff]
      %v2802 = vld [vmem:[%s2567 + $0xa7] sm:$0xff]
      %v2803 = vld [vmem:[%s2567 + $0xaf] sm:$0xff]
      %v2804 = vld [vmem:[%s2567 + $0xc7] sm:$0xff]
      %v2805 = vld [vmem:[%s2567 + $0xcf] sm:$0xff]
      %v2806 = vld [vmem:[%s2567 + $0xe7] sm:$0xff]
      %v2807 = vld [vmem:[%s2567 + $0xef] sm:$0xff]
      %v2808 = vld [vmem:[%s2567 + $0x107] sm:$0xff]
      %v2809 = vld [vmem:[%s2567 + $0x10f] sm:$0xff]
      %v2810 = vld [vmem:[%s2567 + $0x127] sm:$0xff]
      %v2811 = vld [vmem:[%s2567 + $0x12f] sm:$0xff]
      %v2812 = vld [vmem:[%s2567 + $0x147] sm:$0xff]
      %v2813 = vld [vmem:[%s2567 + $0x14f] sm:$0xff]
      %v2814 = vld [vmem:[%s2567 + $0x167] sm:$0xff]
      %v2815 = vld [vmem:[%s2567 + $0x16f] sm:$0xff]
      %v2816 = vld [vmem:[%s2567 + $0x187] sm:$0xff]
      %v2817 = vld [vmem:[%s2567 + $0x18f] sm:$0xff]
      %v2818 = vld [vmem:[%s2567 + $0x1a7] sm:$0xff]
      %v2819 = vld [vmem:[%s2567 + $0x1af] sm:$0xff]
      %v2820 = vld [vmem:[%s2567 + $0x1c7] sm:$0xff]
      %v2821 = vld [vmem:[%s2567 + $0x1cf] sm:$0xff]
      %v2822 = vld [vmem:[%s2567 + $0x1e7] sm:$0xff]
      %v2823 = vld [vmem:[%s2567 + $0x1ef] sm:$0xff]
      %2824 = vst [vmem:[#allocation2 + $0x18] sm:$0xff] %v2792
      %2825 = vst [vmem:[#allocation2 + $0x60] sm:$0xff] %v2793
      %2826 = vst [vmem:[#allocation2 + $0xa8] sm:$0xff] %v2794
      %2827 = vst [vmem:[#allocation2 + $0xf0] sm:$0xff] %v2795
      %2828 = vst [vmem:[#allocation2 + $0x138] sm:$0xff] %v2796
      %2829 = vst [vmem:[#allocation2 + $0x180] sm:$0xff] %v2797
      %2830 = vst [vmem:[#allocation2 + $0x1c8] sm:$0xff] %v2798
      %2831 = vst [vmem:[#allocation2 + $0x210] sm:$0xff] %v2799
      %2832 = vst [vmem:[#allocation2 + $0x258] sm:$0xff] %v2800
      %2833 = vst [vmem:[#allocation2 + $0x2a0] sm:$0xff] %v2801
      %2834 = vst [vmem:[#allocation2 + $0x2e8] sm:$0xff] %v2802
      %2835 = vst [vmem:[#allocation2 + $0x330] sm:$0xff] %v2803
      %2836 = vst [vmem:[#allocation2 + $0x378] sm:$0xff] %v2804
      %2837 = vst [vmem:[#allocation2 + $0x3c0] sm:$0xff] %v2805
      %2838 = vst [vmem:[#allocation2 + $0x408] sm:$0xff] %v2806
      %2839 = vst [vmem:[#allocation2 + $0x450] sm:$0xff] %v2807
      %2840 = vst [vmem:[#allocation2 + $0x498] sm:$0xff] %v2808
      %2841 = vst [vmem:[#allocation2 + $0x4e0] sm:$0xff] %v2809
      %2842 = vst [vmem:[#allocation2 + $0x528] sm:$0xff] %v2810
      %2843 = vst [vmem:[#allocation2 + $0x570] sm:$0xff] %v2811
      %2844 = vst [vmem:[#allocation2 + $0x5b8] sm:$0xff] %v2812
      %2845 = vst [vmem:[#allocation2 + $0x600] sm:$0xff] %v2813
      %2846 = vst [vmem:[#allocation2 + $0x648] sm:$0xff] %v2814
      %2847 = vst [vmem:[#allocation2 + $0x690] sm:$0xff] %v2815
      %2848 = vst [vmem:[#allocation2 + $0x6d8] sm:$0xff] %v2816
      %2849 = vst [vmem:[#allocation2 + $0x720] sm:$0xff] %v2817
      %2850 = vst [vmem:[#allocation2 + $0x768] sm:$0xff] %v2818
      %2851 = vst [vmem:[#allocation2 + $0x7b0] sm:$0xff] %v2819
      %2852 = vst [vmem:[#allocation2 + $0x7f8] sm:$0xff] %v2820
      %2853 = vst [vmem:[#allocation2 + $0x840] sm:$0xff] %v2821
      %2854 = vst [vmem:[#allocation2 + $0x888] sm:$0xff] %v2822
      %2855 = vst [vmem:[#allocation2 + $0x8d0] sm:$0xff] %v2823
      %v2856 = vld [vmem:[%s2567 + $0x8] sm:$0xff]
      %v2857 = vld [vmem:[%s2567 + $0x10] sm:$0xff]
      %v2858 = vld [vmem:[%s2567 + $0x28] sm:$0xff]
      %v2859 = vld [vmem:[%s2567 + $0x30] sm:$0xff]
      %v2860 = vld [vmem:[%s2567 + $0x48] sm:$0xff]
      %v2861 = vld [vmem:[%s2567 + $0x50] sm:$0xff]
      %v2862 = vld [vmem:[%s2567 + $0x68] sm:$0xff]
      %v2863 = vld [vmem:[%s2567 + $0x70] sm:$0xff]
      %v2864 = vld [vmem:[%s2567 + $0x88] sm:$0xff]
      %v2865 = vld [vmem:[%s2567 + $0x90] sm:$0xff]
      %v2866 = vld [vmem:[%s2567 + $0xa8] sm:$0xff]
      %v2867 = vld [vmem:[%s2567 + $0xb0] sm:$0xff]
      %v2868 = vld [vmem:[%s2567 + $0xc8] sm:$0xff]
      %v2869 = vld [vmem:[%s2567 + $0xd0] sm:$0xff]
      %v2870 = vld [vmem:[%s2567 + $0xe8] sm:$0xff]
      %v2871 = vld [vmem:[%s2567 + $0xf0] sm:$0xff]
      %v2872 = vld [vmem:[%s2567 + $0x108] sm:$0xff]
      %v2873 = vld [vmem:[%s2567 + $0x110] sm:$0xff]
      %v2874 = vld [vmem:[%s2567 + $0x128] sm:$0xff]
      %v2875 = vld [vmem:[%s2567 + $0x130] sm:$0xff]
      %v2876 = vld [vmem:[%s2567 + $0x148] sm:$0xff]
      %v2877 = vld [vmem:[%s2567 + $0x150] sm:$0xff]
      %v2878 = vld [vmem:[%s2567 + $0x168] sm:$0xff]
      %v2879 = vld [vmem:[%s2567 + $0x170] sm:$0xff]
      %v2880 = vld [vmem:[%s2567 + $0x188] sm:$0xff]
      %v2881 = vld [vmem:[%s2567 + $0x190] sm:$0xff]
      %v2882 = vld [vmem:[%s2567 + $0x1a8] sm:$0xff]
      %v2883 = vld [vmem:[%s2567 + $0x1b0] sm:$0xff]
      %v2884 = vld [vmem:[%s2567 + $0x1c8] sm:$0xff]
      %v2885 = vld [vmem:[%s2567 + $0x1d0] sm:$0xff]
      %v2886 = vld [vmem:[%s2567 + $0x1e8] sm:$0xff]
      %v2887 = vld [vmem:[%s2567 + $0x1f0] sm:$0xff]
      %2888 = vst [vmem:[#allocation2 + $0x20] sm:$0xff] %v2856
      %2889 = vst [vmem:[#allocation2 + $0x68] sm:$0xff] %v2857
      %2890 = vst [vmem:[#allocation2 + $0xb0] sm:$0xff] %v2858
      %2891 = vst [vmem:[#allocation2 + $0xf8] sm:$0xff] %v2859
      %2892 = vst [vmem:[#allocation2 + $0x140] sm:$0xff] %v2860
      %2893 = vst [vmem:[#allocation2 + $0x188] sm:$0xff] %v2861
      %2894 = vst [vmem:[#allocation2 + $0x1d0] sm:$0xff] %v2862
      %2895 = vst [vmem:[#allocation2 + $0x218] sm:$0xff] %v2863
      %2896 = vst [vmem:[#allocation2 + $0x260] sm:$0xff] %v2864
      %2897 = vst [vmem:[#allocation2 + $0x2a8] sm:$0xff] %v2865
      %2898 = vst [vmem:[#allocation2 + $0x2f0] sm:$0xff] %v2866
      %2899 = vst [vmem:[#allocation2 + $0x338] sm:$0xff] %v2867
      %2900 = vst [vmem:[#allocation2 + $0x380] sm:$0xff] %v2868
      %2901 = vst [vmem:[#allocation2 + $0x3c8] sm:$0xff] %v2869
      %2902 = vst [vmem:[#allocation2 + $0x410] sm:$0xff] %v2870
      %2903 = vst [vmem:[#allocation2 + $0x458] sm:$0xff] %v2871
      %2904 = vst [vmem:[#allocation2 + $0x4a0] sm:$0xff] %v2872
      %2905 = vst [vmem:[#allocation2 + $0x4e8] sm:$0xff] %v2873
      %2906 = vst [vmem:[#allocation2 + $0x530] sm:$0xff] %v2874
      %2907 = vst [vmem:[#allocation2 + $0x578] sm:$0xff] %v2875
      %2908 = vst [vmem:[#allocation2 + $0x5c0] sm:$0xff] %v2876
      %2909 = vst [vmem:[#allocation2 + $0x608] sm:$0xff] %v2877
      %2910 = vst [vmem:[#allocation2 + $0x650] sm:$0xff] %v2878
      %2911 = vst [vmem:[#allocation2 + $0x698] sm:$0xff] %v2879
      %2912 = vst [vmem:[#allocation2 + $0x6e0] sm:$0xff] %v2880
      %2913 = vst [vmem:[#allocation2 + $0x728] sm:$0xff] %v2881
      %2914 = vst [vmem:[#allocation2 + $0x770] sm:$0xff] %v2882
      %2915 = vst [vmem:[#allocation2 + $0x7b8] sm:$0xff] %v2883
      %2916 = vst [vmem:[#allocation2 + $0x800] sm:$0xff] %v2884
      %2917 = vst [vmem:[#allocation2 + $0x848] sm:$0xff] %v2885
      %2918 = vst [vmem:[#allocation2 + $0x890] sm:$0xff] %v2886
      %2919 = vst [vmem:[#allocation2 + $0x8d8] sm:$0xff] %v2887
      %v2920 = vld [vmem:[%s2567 + $0x9] sm:$0xff]
      %v2921 = vld [vmem:[%s2567 + $0x11] sm:$0xff]
      %v2922 = vld [vmem:[%s2567 + $0x29] sm:$0xff]
      %v2923 = vld [vmem:[%s2567 + $0x31] sm:$0xff]
      %v2924 = vld [vmem:[%s2567 + $0x49] sm:$0xff]
      %v2925 = vld [vmem:[%s2567 + $0x51] sm:$0xff]
      %v2926 = vld [vmem:[%s2567 + $0x69] sm:$0xff]
      %v2927 = vld [vmem:[%s2567 + $0x71] sm:$0xff]
      %v2928 = vld [vmem:[%s2567 + $0x89] sm:$0xff]
      %v2929 = vld [vmem:[%s2567 + $0x91] sm:$0xff]
      %v2930 = vld [vmem:[%s2567 + $0xa9] sm:$0xff]
      %v2931 = vld [vmem:[%s2567 + $0xb1] sm:$0xff]
      %v2932 = vld [vmem:[%s2567 + $0xc9] sm:$0xff]
      %v2933 = vld [vmem:[%s2567 + $0xd1] sm:$0xff]
      %v2934 = vld [vmem:[%s2567 + $0xe9] sm:$0xff]
      %v2935 = vld [vmem:[%s2567 + $0xf1] sm:$0xff]
      %v2936 = vld [vmem:[%s2567 + $0x109] sm:$0xff]
      %v2937 = vld [vmem:[%s2567 + $0x111] sm:$0xff]
      %v2938 = vld [vmem:[%s2567 + $0x129] sm:$0xff]
      %v2939 = vld [vmem:[%s2567 + $0x131] sm:$0xff]
      %v2940 = vld [vmem:[%s2567 + $0x149] sm:$0xff]
      %v2941 = vld [vmem:[%s2567 + $0x151] sm:$0xff]
      %v2942 = vld [vmem:[%s2567 + $0x169] sm:$0xff]
      %v2943 = vld [vmem:[%s2567 + $0x171] sm:$0xff]
      %v2944 = vld [vmem:[%s2567 + $0x189] sm:$0xff]
      %v2945 = vld [vmem:[%s2567 + $0x191] sm:$0xff]
      %v2946 = vld [vmem:[%s2567 + $0x1a9] sm:$0xff]
      %v2947 = vld [vmem:[%s2567 + $0x1b1] sm:$0xff]
      %v2948 = vld [vmem:[%s2567 + $0x1c9] sm:$0xff]
      %v2949 = vld [vmem:[%s2567 + $0x1d1] sm:$0xff]
      %v2950 = vld [vmem:[%s2567 + $0x1e9] sm:$0xff]
      %v2951 = vld [vmem:[%s2567 + $0x1f1] sm:$0xff]
      %2952 = vst [vmem:[#allocation2 + $0x28] sm:$0xff] %v2920
      %2953 = vst [vmem:[#allocation2 + $0x70] sm:$0xff] %v2921
      %2954 = vst [vmem:[#allocation2 + $0xb8] sm:$0xff] %v2922
      %2955 = vst [vmem:[#allocation2 + $0x100] sm:$0xff] %v2923
      %2956 = vst [vmem:[#allocation2 + $0x148] sm:$0xff] %v2924
      %2957 = vst [vmem:[#allocation2 + $0x190] sm:$0xff] %v2925
      %2958 = vst [vmem:[#allocation2 + $0x1d8] sm:$0xff] %v2926
      %2959 = vst [vmem:[#allocation2 + $0x220] sm:$0xff] %v2927
      %2960 = vst [vmem:[#allocation2 + $0x268] sm:$0xff] %v2928
      %2961 = vst [vmem:[#allocation2 + $0x2b0] sm:$0xff] %v2929
      %2962 = vst [vmem:[#allocation2 + $0x2f8] sm:$0xff] %v2930
      %2963 = vst [vmem:[#allocation2 + $0x340] sm:$0xff] %v2931
      %2964 = vst [vmem:[#allocation2 + $0x388] sm:$0xff] %v2932
      %2965 = vst [vmem:[#allocation2 + $0x3d0] sm:$0xff] %v2933
      %2966 = vst [vmem:[#allocation2 + $0x418] sm:$0xff] %v2934
      %2967 = vst [vmem:[#allocation2 + $0x460] sm:$0xff] %v2935
      %2968 = vst [vmem:[#allocation2 + $0x4a8] sm:$0xff] %v2936
      %2969 = vst [vmem:[#allocation2 + $0x4f0] sm:$0xff] %v2937
      %2970 = vst [vmem:[#allocation2 + $0x538] sm:$0xff] %v2938
      %2971 = vst [vmem:[#allocation2 + $0x580] sm:$0xff] %v2939
      %2972 = vst [vmem:[#allocation2 + $0x5c8] sm:$0xff] %v2940
      %2973 = vst [vmem:[#allocation2 + $0x610] sm:$0xff] %v2941
      %2974 = vst [vmem:[#allocation2 + $0x658] sm:$0xff] %v2942
      %2975 = vst [vmem:[#allocation2 + $0x6a0] sm:$0xff] %v2943
      %2976 = vst [vmem:[#allocation2 + $0x6e8] sm:$0xff] %v2944
      %2977 = vst [vmem:[#allocation2 + $0x730] sm:$0xff] %v2945
      %2978 = vst [vmem:[#allocation2 + $0x778] sm:$0xff] %v2946
      %2979 = vst [vmem:[#allocation2 + $0x7c0] sm:$0xff] %v2947
      %2980 = vst [vmem:[#allocation2 + $0x808] sm:$0xff] %v2948
      %2981 = vst [vmem:[#allocation2 + $0x850] sm:$0xff] %v2949
      %2982 = vst [vmem:[#allocation2 + $0x898] sm:$0xff] %v2950
      %2983 = vst [vmem:[#allocation2 + $0x8e0] sm:$0xff] %v2951
      %s2984 = scalar_lea.vmem [#allocation3], 64
      %v2985 = vld [vmem:[%s2984 + $0x7] sm:$0xff]
      %v2986 = vld [vmem:[%s2984 + $0xf] sm:$0xff]
      %v2987 = vld [vmem:[%s2984 + $0x27] sm:$0xff]
      %v2988 = vld [vmem:[%s2984 + $0x2f] sm:$0xff]
      %v2989 = vld [vmem:[%s2984 + $0x47] sm:$0xff]
      %v2990 = vld [vmem:[%s2984 + $0x4f] sm:$0xff]
      %v2991 = vld [vmem:[%s2984 + $0x67] sm:$0xff]
      %v2992 = vld [vmem:[%s2984 + $0x6f] sm:$0xff]
      %v2993 = vld [vmem:[%s2984 + $0x87] sm:$0xff]
      %v2994 = vld [vmem:[%s2984 + $0x8f] sm:$0xff]
      %v2995 = vld [vmem:[%s2984 + $0xa7] sm:$0xff]
      %v2996 = vld [vmem:[%s2984 + $0xaf] sm:$0xff]
      %v2997 = vld [vmem:[%s2984 + $0xc7] sm:$0xff]
      %v2998 = vld [vmem:[%s2984 + $0xcf] sm:$0xff]
      %v2999 = vld [vmem:[%s2984 + $0xe7] sm:$0xff]
      %v3000 = vld [vmem:[%s2984 + $0xef] sm:$0xff]
      %v3001 = vld [vmem:[%s2984 + $0x107] sm:$0xff]
      %v3002 = vld [vmem:[%s2984 + $0x10f] sm:$0xff]
      %v3003 = vld [vmem:[%s2984 + $0x127] sm:$0xff]
      %v3004 = vld [vmem:[%s2984 + $0x12f] sm:$0xff]
      %v3005 = vld [vmem:[%s2984 + $0x147] sm:$0xff]
      %v3006 = vld [vmem:[%s2984 + $0x14f] sm:$0xff]
      %v3007 = vld [vmem:[%s2984 + $0x167] sm:$0xff]
      %v3008 = vld [vmem:[%s2984 + $0x16f] sm:$0xff]
      %v3009 = vld [vmem:[%s2984 + $0x187] sm:$0xff]
      %v3010 = vld [vmem:[%s2984 + $0x18f] sm:$0xff]
      %v3011 = vld [vmem:[%s2984 + $0x1a7] sm:$0xff]
      %v3012 = vld [vmem:[%s2984 + $0x1af] sm:$0xff]
      %v3013 = vld [vmem:[%s2984 + $0x1c7] sm:$0xff]
      %v3014 = vld [vmem:[%s2984 + $0x1cf] sm:$0xff]
      %v3015 = vld [vmem:[%s2984 + $0x1e7] sm:$0xff]
      %v3016 = vld [vmem:[%s2984 + $0x1ef] sm:$0xff]
      %3017 = vst [vmem:[#allocation2 + $0x30] sm:$0xff] %v2985
      %3018 = vst [vmem:[#allocation2 + $0x78] sm:$0xff] %v2986
      %3019 = vst [vmem:[#allocation2 + $0xc0] sm:$0xff] %v2987
      %3020 = vst [vmem:[#allocation2 + $0x108] sm:$0xff] %v2988
      %3021 = vst [vmem:[#allocation2 + $0x150] sm:$0xff] %v2989
      %3022 = vst [vmem:[#allocation2 + $0x198] sm:$0xff] %v2990
      %3023 = vst [vmem:[#allocation2 + $0x1e0] sm:$0xff] %v2991
      %3024 = vst [vmem:[#allocation2 + $0x228] sm:$0xff] %v2992
      %3025 = vst [vmem:[#allocation2 + $0x270] sm:$0xff] %v2993
      %3026 = vst [vmem:[#allocation2 + $0x2b8] sm:$0xff] %v2994
      %3027 = vst [vmem:[#allocation2 + $0x300] sm:$0xff] %v2995
      %3028 = vst [vmem:[#allocation2 + $0x348] sm:$0xff] %v2996
      %3029 = vst [vmem:[#allocation2 + $0x390] sm:$0xff] %v2997
      %3030 = vst [vmem:[#allocation2 + $0x3d8] sm:$0xff] %v2998
      %3031 = vst [vmem:[#allocation2 + $0x420] sm:$0xff] %v2999
      %3032 = vst [vmem:[#allocation2 + $0x468] sm:$0xff] %v3000
      %3033 = vst [vmem:[#allocation2 + $0x4b0] sm:$0xff] %v3001
      %3034 = vst [vmem:[#allocation2 + $0x4f8] sm:$0xff] %v3002
      %3035 = vst [vmem:[#allocation2 + $0x540] sm:$0xff] %v3003
      %3036 = vst [vmem:[#allocation2 + $0x588] sm:$0xff] %v3004
      %3037 = vst [vmem:[#allocation2 + $0x5d0] sm:$0xff] %v3005
      %3038 = vst [vmem:[#allocation2 + $0x618] sm:$0xff] %v3006
      %3039 = vst [vmem:[#allocation2 + $0x660] sm:$0xff] %v3007
      %3040 = vst [vmem:[#allocation2 + $0x6a8] sm:$0xff] %v3008
      %3041 = vst [vmem:[#allocation2 + $0x6f0] sm:$0xff] %v3009
      %3042 = vst [vmem:[#allocation2 + $0x738] sm:$0xff] %v3010
      %3043 = vst [vmem:[#allocation2 + $0x780] sm:$0xff] %v3011
      %3044 = vst [vmem:[#allocation2 + $0x7c8] sm:$0xff] %v3012
      %3045 = vst [vmem:[#allocation2 + $0x810] sm:$0xff] %v3013
      %3046 = vst [vmem:[#allocation2 + $0x858] sm:$0xff] %v3014
      %3047 = vst [vmem:[#allocation2 + $0x8a0] sm:$0xff] %v3015
      %3048 = vst [vmem:[#allocation2 + $0x8e8] sm:$0xff] %v3016
      %v3049 = vld [vmem:[%s2984 + $0x8] sm:$0xff]
      %v3050 = vld [vmem:[%s2984 + $0x10] sm:$0xff]
      %v3051 = vld [vmem:[%s2984 + $0x28] sm:$0xff]
      %v3052 = vld [vmem:[%s2984 + $0x30] sm:$0xff]
      %v3053 = vld [vmem:[%s2984 + $0x48] sm:$0xff]
      %v3054 = vld [vmem:[%s2984 + $0x50] sm:$0xff]
      %v3055 = vld [vmem:[%s2984 + $0x68] sm:$0xff]
      %v3056 = vld [vmem:[%s2984 + $0x70] sm:$0xff]
      %v3057 = vld [vmem:[%s2984 + $0x88] sm:$0xff]
      %v3058 = vld [vmem:[%s2984 + $0x90] sm:$0xff]
      %v3059 = vld [vmem:[%s2984 + $0xa8] sm:$0xff]
      %v3060 = vld [vmem:[%s2984 + $0xb0] sm:$0xff]
      %v3061 = vld [vmem:[%s2984 + $0xc8] sm:$0xff]
      %v3062 = vld [vmem:[%s2984 + $0xd0] sm:$0xff]
      %v3063 = vld [vmem:[%s2984 + $0xe8] sm:$0xff]
      %v3064 = vld [vmem:[%s2984 + $0xf0] sm:$0xff]
      %v3065 = vld [vmem:[%s2984 + $0x108] sm:$0xff]
      %v3066 = vld [vmem:[%s2984 + $0x110] sm:$0xff]
      %v3067 = vld [vmem:[%s2984 + $0x128] sm:$0xff]
      %v3068 = vld [vmem:[%s2984 + $0x130] sm:$0xff]
      %v3069 = vld [vmem:[%s2984 + $0x148] sm:$0xff]
      %v3070 = vld [vmem:[%s2984 + $0x150] sm:$0xff]
      %v3071 = vld [vmem:[%s2984 + $0x168] sm:$0xff]
      %v3072 = vld [vmem:[%s2984 + $0x170] sm:$0xff]
      %v3073 = vld [vmem:[%s2984 + $0x188] sm:$0xff]
      %v3074 = vld [vmem:[%s2984 + $0x190] sm:$0xff]
      %v3075 = vld [vmem:[%s2984 + $0x1a8] sm:$0xff]
      %v3076 = vld [vmem:[%s2984 + $0x1b0] sm:$0xff]
      %v3077 = vld [vmem:[%s2984 + $0x1c8] sm:$0xff]
      %v3078 = vld [vmem:[%s2984 + $0x1d0] sm:$0xff]
      %v3079 = vld [vmem:[%s2984 + $0x1e8] sm:$0xff]
      %v3080 = vld [vmem:[%s2984 + $0x1f0] sm:$0xff]
      %3081 = vst [vmem:[#allocation2 + $0x38] sm:$0xff] %v3049
      %3082 = vst [vmem:[#allocation2 + $0x80] sm:$0xff] %v3050
      %3083 = vst [vmem:[#allocation2 + $0xc8] sm:$0xff] %v3051
      %3084 = vst [vmem:[#allocation2 + $0x110] sm:$0xff] %v3052
      %3085 = vst [vmem:[#allocation2 + $0x158] sm:$0xff] %v3053
      %3086 = vst [vmem:[#allocation2 + $0x1a0] sm:$0xff] %v3054
      %3087 = vst [vmem:[#allocation2 + $0x1e8] sm:$0xff] %v3055
      %3088 = vst [vmem:[#allocation2 + $0x230] sm:$0xff] %v3056
      %3089 = vst [vmem:[#allocation2 + $0x278] sm:$0xff] %v3057
      %3090 = vst [vmem:[#allocation2 + $0x2c0] sm:$0xff] %v3058
      %3091 = vst [vmem:[#allocation2 + $0x308] sm:$0xff] %v3059
      %3092 = vst [vmem:[#allocation2 + $0x350] sm:$0xff] %v3060
      %3093 = vst [vmem:[#allocation2 + $0x398] sm:$0xff] %v3061
      %3094 = vst [vmem:[#allocation2 + $0x3e0] sm:$0xff] %v3062
      %3095 = vst [vmem:[#allocation2 + $0x428] sm:$0xff] %v3063
      %3096 = vst [vmem:[#allocation2 + $0x470] sm:$0xff] %v3064
      %3097 = vst [vmem:[#allocation2 + $0x4b8] sm:$0xff] %v3065
      %3098 = vst [vmem:[#allocation2 + $0x500] sm:$0xff] %v3066
      %3099 = vst [vmem:[#allocation2 + $0x548] sm:$0xff] %v3067
      %3100 = vst [vmem:[#allocation2 + $0x590] sm:$0xff] %v3068
      %3101 = vst [vmem:[#allocation2 + $0x5d8] sm:$0xff] %v3069
      %3102 = vst [vmem:[#allocation2 + $0x620] sm:$0xff] %v3070
      %3103 = vst [vmem:[#allocation2 + $0x668] sm:$0xff] %v3071
      %3104 = vst [vmem:[#allocation2 + $0x6b0] sm:$0xff] %v3072
      %3105 = vst [vmem:[#allocation2 + $0x6f8] sm:$0xff] %v3073
      %3106 = vst [vmem:[#allocation2 + $0x740] sm:$0xff] %v3074
      %3107 = vst [vmem:[#allocation2 + $0x788] sm:$0xff] %v3075
      %3108 = vst [vmem:[#allocation2 + $0x7d0] sm:$0xff] %v3076
      %3109 = vst [vmem:[#allocation2 + $0x818] sm:$0xff] %v3077
      %3110 = vst [vmem:[#allocation2 + $0x860] sm:$0xff] %v3078
      %3111 = vst [vmem:[#allocation2 + $0x8a8] sm:$0xff] %v3079
      %3112 = vst [vmem:[#allocation2 + $0x8f0] sm:$0xff] %v3080
      %v3113 = vld [vmem:[%s2984 + $0x9] sm:$0xff]
      %v3114 = vld [vmem:[%s2984 + $0x11] sm:$0xff]
      %v3115 = vld [vmem:[%s2984 + $0x29] sm:$0xff]
      %v3116 = vld [vmem:[%s2984 + $0x31] sm:$0xff]
      %v3117 = vld [vmem:[%s2984 + $0x49] sm:$0xff]
      %v3118 = vld [vmem:[%s2984 + $0x51] sm:$0xff]
      %v3119 = vld [vmem:[%s2984 + $0x69] sm:$0xff]
      %v3120 = vld [vmem:[%s2984 + $0x71] sm:$0xff]
      %v3121 = vld [vmem:[%s2984 + $0x89] sm:$0xff]
      %v3122 = vld [vmem:[%s2984 + $0x91] sm:$0xff]
      %v3123 = vld [vmem:[%s2984 + $0xa9] sm:$0xff]
      %v3124 = vld [vmem:[%s2984 + $0xb1] sm:$0xff]
      %v3125 = vld [vmem:[%s2984 + $0xc9] sm:$0xff]
      %v3126 = vld [vmem:[%s2984 + $0xd1] sm:$0xff]
      %v3127 = vld [vmem:[%s2984 + $0xe9] sm:$0xff]
      %v3128 = vld [vmem:[%s2984 + $0xf1] sm:$0xff]
      %v3129 = vld [vmem:[%s2984 + $0x109] sm:$0xff]
      %v3130 = vld [vmem:[%s2984 + $0x111] sm:$0xff]
      %v3131 = vld [vmem:[%s2984 + $0x129] sm:$0xff]
      %v3132 = vld [vmem:[%s2984 + $0x131] sm:$0xff]
      %v3133 = vld [vmem:[%s2984 + $0x149] sm:$0xff]
      %v3134 = vld [vmem:[%s2984 + $0x151] sm:$0xff]
      %v3135 = vld [vmem:[%s2984 + $0x169] sm:$0xff]
      %v3136 = vld [vmem:[%s2984 + $0x171] sm:$0xff]
      %v3137 = vld [vmem:[%s2984 + $0x189] sm:$0xff]
      %v3138 = vld [vmem:[%s2984 + $0x191] sm:$0xff]
      %v3139 = vld [vmem:[%s2984 + $0x1a9] sm:$0xff]
      %v3140 = vld [vmem:[%s2984 + $0x1b1] sm:$0xff]
      %v3141 = vld [vmem:[%s2984 + $0x1c9] sm:$0xff]
      %v3142 = vld [vmem:[%s2984 + $0x1d1] sm:$0xff]
      %v3143 = vld [vmem:[%s2984 + $0x1e9] sm:$0xff]
      %v3144 = vld [vmem:[%s2984 + $0x1f1] sm:$0xff]
      %3145 = vst [vmem:[#allocation2 + $0x40] sm:$0xff] %v3113
      %3146 = vst [vmem:[#allocation2 + $0x88] sm:$0xff] %v3114
      %3147 = vst [vmem:[#allocation2 + $0xd0] sm:$0xff] %v3115
      %3148 = vst [vmem:[#allocation2 + $0x118] sm:$0xff] %v3116
      %3149 = vst [vmem:[#allocation2 + $0x160] sm:$0xff] %v3117
      %3150 = vst [vmem:[#allocation2 + $0x1a8] sm:$0xff] %v3118
      %3151 = vst [vmem:[#allocation2 + $0x1f0] sm:$0xff] %v3119
      %3152 = vst [vmem:[#allocation2 + $0x238] sm:$0xff] %v3120
      %3153 = vst [vmem:[#allocation2 + $0x280] sm:$0xff] %v3121
      %3154 = vst [vmem:[#allocation2 + $0x2c8] sm:$0xff] %v3122
      %3155 = vst [vmem:[#allocation2 + $0x310] sm:$0xff] %v3123
      %3156 = vst [vmem:[#allocation2 + $0x358] sm:$0xff] %v3124
      %3157 = vst [vmem:[#allocation2 + $0x3a0] sm:$0xff] %v3125
      %3158 = vst [vmem:[#allocation2 + $0x3e8] sm:$0xff] %v3126
      %3159 = vst [vmem:[#allocation2 + $0x430] sm:$0xff] %v3127
      %3160 = vst [vmem:[#allocation2 + $0x478] sm:$0xff] %v3128
      %3161 = vst [vmem:[#allocation2 + $0x4c0] sm:$0xff] %v3129
      %3162 = vst [vmem:[#allocation2 + $0x508] sm:$0xff] %v3130
      %3163 = vst [vmem:[#allocation2 + $0x550] sm:$0xff] %v3131
      %3164 = vst [vmem:[#allocation2 + $0x598] sm:$0xff] %v3132
      %3165 = vst [vmem:[#allocation2 + $0x5e0] sm:$0xff] %v3133
      %3166 = vst [vmem:[#allocation2 + $0x628] sm:$0xff] %v3134
      %3167 = vst [vmem:[#allocation2 + $0x670] sm:$0xff] %v3135
      %3168 = vst [vmem:[#allocation2 + $0x6b8] sm:$0xff] %v3136
      %3169 = vst [vmem:[#allocation2 + $0x700] sm:$0xff] %v3137
      %3170 = vst [vmem:[#allocation2 + $0x748] sm:$0xff] %v3138
      %3171 = vst [vmem:[#allocation2 + $0x790] sm:$0xff] %v3139
      %3172 = vst [vmem:[#allocation2 + $0x7d8] sm:$0xff] %v3140
      %3173 = vst [vmem:[#allocation2 + $0x820] sm:$0xff] %v3141
      %3174 = vst [vmem:[#allocation2 + $0x868] sm:$0xff] %v3142
      %3175 = vst [vmem:[#allocation2 + $0x8b0] sm:$0xff] %v3143
      %3176 = vst [vmem:[#allocation2 + $0x8f8] sm:$0xff] %v3144
      %v3177 = vld [vmem:[#allocation2] sm:$0xff]
      %v3178 = vld [vmem:[#allocation2 + $0x8] sm:$0xff]
      %v3179 = vld [vmem:[#allocation2 + $0x10] sm:$0xff]
      %v3180 = vld [vmem:[#allocation2 + $0x18] sm:$0xff]
      %v3181 = vld [vmem:[#allocation2 + $0x20] sm:$0xff]
      %v3182 = vld [vmem:[#allocation2 + $0x28] sm:$0xff]
      %v3183 = vld [vmem:[#allocation2 + $0x30] sm:$0xff]
      %v3184 = vld [vmem:[#allocation2 + $0x38] sm:$0xff]
      %v3185 = vld [vmem:[#allocation2 + $0x40] sm:$0xff]
      %v3186 = vld [vmem:[#allocation2 + $0x48] sm:$0xff]
      %v3187 = vld [vmem:[#allocation2 + $0x50] sm:$0xff]
      %v3188 = vld [vmem:[#allocation2 + $0x58] sm:$0xff]
      %v3189 = vld [vmem:[#allocation2 + $0x60] sm:$0xff]
      %v3190 = vld [vmem:[#allocation2 + $0x68] sm:$0xff]
      %v3191 = vld [vmem:[#allocation2 + $0x70] sm:$0xff]
      %v3192 = vld [vmem:[#allocation2 + $0x78] sm:$0xff]
      %v3193 = vld [vmem:[#allocation2 + $0x80] sm:$0xff]
      %v3194 = vld [vmem:[#allocation2 + $0x88] sm:$0xff]
      %v3195 = vld [vmem:[#allocation2 + $0x90] sm:$0xff]
      %v3196 = vld [vmem:[#allocation2 + $0x98] sm:$0xff]
      %v3197 = vld [vmem:[#allocation2 + $0xa0] sm:$0xff]
      %v3198 = vld [vmem:[#allocation2 + $0xa8] sm:$0xff]
      %v3199 = vld [vmem:[#allocation2 + $0xb0] sm:$0xff]
      %v3200 = vld [vmem:[#allocation2 + $0xb8] sm:$0xff]
      %v3201 = vld [vmem:[#allocation2 + $0xc0] sm:$0xff]
      %v3202 = vld [vmem:[#allocation2 + $0xc8] sm:$0xff]
      %v3203 = vld [vmem:[#allocation2 + $0xd0] sm:$0xff]
      %v3204 = vld [vmem:[#allocation2 + $0xd8] sm:$0xff]
      %v3205 = vld [vmem:[#allocation2 + $0xe0] sm:$0xff]
      %v3206 = vld [vmem:[#allocation2 + $0xe8] sm:$0xff]
      %v3207 = vld [vmem:[#allocation2 + $0xf0] sm:$0xff]
      %v3208 = vld [vmem:[#allocation2 + $0xf8] sm:$0xff]
      %v3209 = vld [vmem:[#allocation2 + $0x100] sm:$0xff]
      %v3210 = vld [vmem:[#allocation2 + $0x108] sm:$0xff]
      %v3211 = vld [vmem:[#allocation2 + $0x110] sm:$0xff]
      %v3212 = vld [vmem:[#allocation2 + $0x118] sm:$0xff]
      %v3213 = vld [vmem:[#allocation2 + $0x120] sm:$0xff]
      %v3214 = vld [vmem:[#allocation2 + $0x128] sm:$0xff]
      %v3215 = vld [vmem:[#allocation2 + $0x130] sm:$0xff]
      %v3216 = vld [vmem:[#allocation2 + $0x138] sm:$0xff]
      %v3217 = vld [vmem:[#allocation2 + $0x140] sm:$0xff]
      %v3218 = vld [vmem:[#allocation2 + $0x148] sm:$0xff]
      %v3219 = vld [vmem:[#allocation2 + $0x150] sm:$0xff]
      %v3220 = vld [vmem:[#allocation2 + $0x158] sm:$0xff]
      %v3221 = vld [vmem:[#allocation2 + $0x160] sm:$0xff]
      %v3222 = vld [vmem:[#allocation2 + $0x168] sm:$0xff]
      %v3223 = vld [vmem:[#allocation2 + $0x170] sm:$0xff]
      %v3224 = vld [vmem:[#allocation2 + $0x178] sm:$0xff]
      %v3225 = vld [vmem:[#allocation2 + $0x180] sm:$0xff]
      %v3226 = vld [vmem:[#allocation2 + $0x188] sm:$0xff]
      %v3227 = vld [vmem:[#allocation2 + $0x190] sm:$0xff]
      %v3228 = vld [vmem:[#allocation2 + $0x198] sm:$0xff]
      %v3229 = vld [vmem:[#allocation2 + $0x1a0] sm:$0xff]
      %v3230 = vld [vmem:[#allocation2 + $0x1a8] sm:$0xff]
      %v3231 = vld [vmem:[#allocation2 + $0x1b0] sm:$0xff]
      %v3232 = vld [vmem:[#allocation2 + $0x1b8] sm:$0xff]
      %v3233 = vld [vmem:[#allocation2 + $0x1c0] sm:$0xff]
      %v3234 = vld [vmem:[#allocation2 + $0x1c8] sm:$0xff]
      %v3235 = vld [vmem:[#allocation2 + $0x1d0] sm:$0xff]
      %v3236 = vld [vmem:[#allocation2 + $0x1d8] sm:$0xff]
      %v3237 = vld [vmem:[#allocation2 + $0x1e0] sm:$0xff]
      %v3238 = vld [vmem:[#allocation2 + $0x1e8] sm:$0xff]
      %v3239 = vld [vmem:[#allocation2 + $0x1f0] sm:$0xff]
      %v3240 = vld [vmem:[#allocation2 + $0x1f8] sm:$0xff]
      %v3241 = vld [vmem:[#allocation2 + $0x200] sm:$0xff]
      %v3242 = vld [vmem:[#allocation2 + $0x208] sm:$0xff]
      %v3243 = vld [vmem:[#allocation2 + $0x210] sm:$0xff]
      %v3244 = vld [vmem:[#allocation2 + $0x218] sm:$0xff]
      %v3245 = vld [vmem:[#allocation2 + $0x220] sm:$0xff]
      %v3246 = vld [vmem:[#allocation2 + $0x228] sm:$0xff]
      %v3247 = vld [vmem:[#allocation2 + $0x230] sm:$0xff]
      %v3248 = vld [vmem:[#allocation2 + $0x238] sm:$0xff]
      %v3249 = vld [vmem:[#allocation2 + $0x240] sm:$0xff]
      %v3250 = vld [vmem:[#allocation2 + $0x248] sm:$0xff]
      %v3251 = vld [vmem:[#allocation2 + $0x250] sm:$0xff]
      %v3252 = vld [vmem:[#allocation2 + $0x258] sm:$0xff]
      %v3253 = vld [vmem:[#allocation2 + $0x260] sm:$0xff]
      %v3254 = vld [vmem:[#allocation2 + $0x268] sm:$0xff]
      %v3255 = vld [vmem:[#allocation2 + $0x270] sm:$0xff]
      %v3256 = vld [vmem:[#allocation2 + $0x278] sm:$0xff]
      %v3257 = vld [vmem:[#allocation2 + $0x280] sm:$0xff]
      %v3258 = vld [vmem:[#allocation2 + $0x288] sm:$0xff]
      %v3259 = vld [vmem:[#allocation2 + $0x290] sm:$0xff]
      %v3260 = vld [vmem:[#allocation2 + $0x298] sm:$0xff]
      %v3261 = vld [vmem:[#allocation2 + $0x2a0] sm:$0xff]
      %v3262 = vld [vmem:[#allocation2 + $0x2a8] sm:$0xff]
      %v3263 = vld [vmem:[#allocation2 + $0x2b0] sm:$0xff]
      %v3264 = vld [vmem:[#allocation2 + $0x2b8] sm:$0xff]
      %v3265 = vld [vmem:[#allocation2 + $0x2c0] sm:$0xff]
      %v3266 = vld [vmem:[#allocation2 + $0x2c8] sm:$0xff]
      %v3267 = vld [vmem:[#allocation2 + $0x2d0] sm:$0xff]
      %v3268 = vld [vmem:[#allocation2 + $0x2d8] sm:$0xff]
      %v3269 = vld [vmem:[#allocation2 + $0x2e0] sm:$0xff]
      %v3270 = vld [vmem:[#allocation2 + $0x2e8] sm:$0xff]
      %v3271 = vld [vmem:[#allocation2 + $0x2f0] sm:$0xff]
      %v3272 = vld [vmem:[#allocation2 + $0x2f8] sm:$0xff]
      %v3273 = vld [vmem:[#allocation2 + $0x300] sm:$0xff]
      %v3274 = vld [vmem:[#allocation2 + $0x308] sm:$0xff]
      %v3275 = vld [vmem:[#allocation2 + $0x310] sm:$0xff]
      %v3276 = vld [vmem:[#allocation2 + $0x318] sm:$0xff]
      %v3277 = vld [vmem:[#allocation2 + $0x320] sm:$0xff]
      %v3278 = vld [vmem:[#allocation2 + $0x328] sm:$0xff]
      %v3279 = vld [vmem:[#allocation2 + $0x330] sm:$0xff]
      %v3280 = vld [vmem:[#allocation2 + $0x338] sm:$0xff]
      %v3281 = vld [vmem:[#allocation2 + $0x340] sm:$0xff]
      %v3282 = vld [vmem:[#allocation2 + $0x348] sm:$0xff]
      %v3283 = vld [vmem:[#allocation2 + $0x350] sm:$0xff]
      %v3284 = vld [vmem:[#allocation2 + $0x358] sm:$0xff]
      %v3285 = vld [vmem:[#allocation2 + $0x360] sm:$0xff]
      %v3286 = vld [vmem:[#allocation2 + $0x368] sm:$0xff]
      %v3287 = vld [vmem:[#allocation2 + $0x370] sm:$0xff]
      %v3288 = vld [vmem:[#allocation2 + $0x378] sm:$0xff]
      %v3289 = vld [vmem:[#allocation2 + $0x380] sm:$0xff]
      %v3290 = vld [vmem:[#allocation2 + $0x388] sm:$0xff]
      %v3291 = vld [vmem:[#allocation2 + $0x390] sm:$0xff]
      %v3292 = vld [vmem:[#allocation2 + $0x398] sm:$0xff]
      %v3293 = vld [vmem:[#allocation2 + $0x3a0] sm:$0xff]
      %v3294 = vld [vmem:[#allocation2 + $0x3a8] sm:$0xff]
      %v3295 = vld [vmem:[#allocation2 + $0x3b0] sm:$0xff]
      %v3296 = vld [vmem:[#allocation2 + $0x3b8] sm:$0xff]
      %v3297 = vld [vmem:[#allocation2 + $0x3c0] sm:$0xff]
      %v3298 = vld [vmem:[#allocation2 + $0x3c8] sm:$0xff]
      %v3299 = vld [vmem:[#allocation2 + $0x3d0] sm:$0xff]
      %v3300 = vld [vmem:[#allocation2 + $0x3d8] sm:$0xff]
      %v3301 = vld [vmem:[#allocation2 + $0x3e0] sm:$0xff]
      %v3302 = vld [vmem:[#allocation2 + $0x3e8] sm:$0xff]
      %v3303 = vld [vmem:[#allocation2 + $0x3f0] sm:$0xff]
      %v3304 = vld [vmem:[#allocation2 + $0x3f8] sm:$0xff]
      %v3305 = vld [vmem:[#allocation2 + $0x400] sm:$0xff]
      %v3306 = vld [vmem:[#allocation2 + $0x408] sm:$0xff]
      %v3307 = vld [vmem:[#allocation2 + $0x410] sm:$0xff]
      %v3308 = vld [vmem:[#allocation2 + $0x418] sm:$0xff]
      %v3309 = vld [vmem:[#allocation2 + $0x420] sm:$0xff]
      %v3310 = vld [vmem:[#allocation2 + $0x428] sm:$0xff]
      %v3311 = vld [vmem:[#allocation2 + $0x430] sm:$0xff]
      %v3312 = vld [vmem:[#allocation2 + $0x438] sm:$0xff]
      %v3313 = vld [vmem:[#allocation2 + $0x440] sm:$0xff]
      %v3314 = vld [vmem:[#allocation2 + $0x448] sm:$0xff]
      %v3315 = vld [vmem:[#allocation2 + $0x450] sm:$0xff]
      %v3316 = vld [vmem:[#allocation2 + $0x458] sm:$0xff]
      %v3317 = vld [vmem:[#allocation2 + $0x460] sm:$0xff]
      %v3318 = vld [vmem:[#allocation2 + $0x468] sm:$0xff]
      %v3319 = vld [vmem:[#allocation2 + $0x470] sm:$0xff]
      %v3320 = vld [vmem:[#allocation2 + $0x478] sm:$0xff]
      %v3321 = vld [vmem:[#allocation2 + $0x480] sm:$0xff]
      %v3322 = vld [vmem:[#allocation2 + $0x488] sm:$0xff]
      %v3323 = vld [vmem:[#allocation2 + $0x490] sm:$0xff]
      %v3324 = vld [vmem:[#allocation2 + $0x498] sm:$0xff]
      %v3325 = vld [vmem:[#allocation2 + $0x4a0] sm:$0xff]
      %v3326 = vld [vmem:[#allocation2 + $0x4a8] sm:$0xff]
      %v3327 = vld [vmem:[#allocation2 + $0x4b0] sm:$0xff]
      %v3328 = vld [vmem:[#allocation2 + $0x4b8] sm:$0xff]
      %v3329 = vld [vmem:[#allocation2 + $0x4c0] sm:$0xff]
      %v3330 = vld [vmem:[#allocation2 + $0x4c8] sm:$0xff]
      %v3331 = vld [vmem:[#allocation2 + $0x4d0] sm:$0xff]
      %v3332 = vld [vmem:[#allocation2 + $0x4d8] sm:$0xff]
      %v3333 = vld [vmem:[#allocation2 + $0x4e0] sm:$0xff]
      %v3334 = vld [vmem:[#allocation2 + $0x4e8] sm:$0xff]
      %v3335 = vld [vmem:[#allocation2 + $0x4f0] sm:$0xff]
      %v3336 = vld [vmem:[#allocation2 + $0x4f8] sm:$0xff]
      %v3337 = vld [vmem:[#allocation2 + $0x500] sm:$0xff]
      %v3338 = vld [vmem:[#allocation2 + $0x508] sm:$0xff]
      %v3339 = vld [vmem:[#allocation2 + $0x510] sm:$0xff]
      %v3340 = vld [vmem:[#allocation2 + $0x518] sm:$0xff]
      %v3341 = vld [vmem:[#allocation2 + $0x520] sm:$0xff]
      %v3342 = vld [vmem:[#allocation2 + $0x528] sm:$0xff]
      %v3343 = vld [vmem:[#allocation2 + $0x530] sm:$0xff]
      %v3344 = vld [vmem:[#allocation2 + $0x538] sm:$0xff]
      %v3345 = vld [vmem:[#allocation2 + $0x540] sm:$0xff]
      %v3346 = vld [vmem:[#allocation2 + $0x548] sm:$0xff]
      %v3347 = vld [vmem:[#allocation2 + $0x550] sm:$0xff]
      %v3348 = vld [vmem:[#allocation2 + $0x558] sm:$0xff]
      %v3349 = vld [vmem:[#allocation2 + $0x560] sm:$0xff]
      %v3350 = vld [vmem:[#allocation2 + $0x568] sm:$0xff]
      %v3351 = vld [vmem:[#allocation2 + $0x570] sm:$0xff]
      %v3352 = vld [vmem:[#allocation2 + $0x578] sm:$0xff]
      %v3353 = vld [vmem:[#allocation2 + $0x580] sm:$0xff]
      %v3354 = vld [vmem:[#allocation2 + $0x588] sm:$0xff]
      %v3355 = vld [vmem:[#allocation2 + $0x590] sm:$0xff]
      %v3356 = vld [vmem:[#allocation2 + $0x598] sm:$0xff]
      %v3357 = vld [vmem:[#allocation2 + $0x5a0] sm:$0xff]
      %v3358 = vld [vmem:[#allocation2 + $0x5a8] sm:$0xff]
      %v3359 = vld [vmem:[#allocation2 + $0x5b0] sm:$0xff]
      %v3360 = vld [vmem:[#allocation2 + $0x5b8] sm:$0xff]
      %v3361 = vld [vmem:[#allocation2 + $0x5c0] sm:$0xff]
      %v3362 = vld [vmem:[#allocation2 + $0x5c8] sm:$0xff]
      %v3363 = vld [vmem:[#allocation2 + $0x5d0] sm:$0xff]
      %v3364 = vld [vmem:[#allocation2 + $0x5d8] sm:$0xff]
      %v3365 = vld [vmem:[#allocation2 + $0x5e0] sm:$0xff]
      %v3366 = vld [vmem:[#allocation2 + $0x5e8] sm:$0xff]
      %v3367 = vld [vmem:[#allocation2 + $0x5f0] sm:$0xff]
      %v3368 = vld [vmem:[#allocation2 + $0x5f8] sm:$0xff]
      %v3369 = vld [vmem:[#allocation2 + $0x600] sm:$0xff]
      %v3370 = vld [vmem:[#allocation2 + $0x608] sm:$0xff]
      %v3371 = vld [vmem:[#allocation2 + $0x610] sm:$0xff]
      %v3372 = vld [vmem:[#allocation2 + $0x618] sm:$0xff]
      %v3373 = vld [vmem:[#allocation2 + $0x620] sm:$0xff]
      %v3374 = vld [vmem:[#allocation2 + $0x628] sm:$0xff]
      %v3375 = vld [vmem:[#allocation2 + $0x630] sm:$0xff]
      %v3376 = vld [vmem:[#allocation2 + $0x638] sm:$0xff]
      %v3377 = vld [vmem:[#allocation2 + $0x640] sm:$0xff]
      %v3378 = vld [vmem:[#allocation2 + $0x648] sm:$0xff]
      %v3379 = vld [vmem:[#allocation2 + $0x650] sm:$0xff]
      %v3380 = vld [vmem:[#allocation2 + $0x658] sm:$0xff]
      %v3381 = vld [vmem:[#allocation2 + $0x660] sm:$0xff]
      %v3382 = vld [vmem:[#allocation2 + $0x668] sm:$0xff]
      %v3383 = vld [vmem:[#allocation2 + $0x670] sm:$0xff]
      %v3384 = vld [vmem:[#allocation2 + $0x678] sm:$0xff]
      %v3385 = vld [vmem:[#allocation2 + $0x680] sm:$0xff]
      %v3386 = vld [vmem:[#allocation2 + $0x688] sm:$0xff]
      %v3387 = vld [vmem:[#allocation2 + $0x690] sm:$0xff]
      %v3388 = vld [vmem:[#allocation2 + $0x698] sm:$0xff]
      %v3389 = vld [vmem:[#allocation2 + $0x6a0] sm:$0xff]
      %v3390 = vld [vmem:[#allocation2 + $0x6a8] sm:$0xff]
      %v3391 = vld [vmem:[#allocation2 + $0x6b0] sm:$0xff]
      %v3392 = vld [vmem:[#allocation2 + $0x6b8] sm:$0xff]
      %v3393 = vld [vmem:[#allocation2 + $0x6c0] sm:$0xff]
      %v3394 = vld [vmem:[#allocation2 + $0x6c8] sm:$0xff]
      %v3395 = vld [vmem:[#allocation2 + $0x6d0] sm:$0xff]
      %v3396 = vld [vmem:[#allocation2 + $0x6d8] sm:$0xff]
      %v3397 = vld [vmem:[#allocation2 + $0x6e0] sm:$0xff]
      %v3398 = vld [vmem:[#allocation2 + $0x6e8] sm:$0xff]
      %v3399 = vld [vmem:[#allocation2 + $0x6f0] sm:$0xff]
      %v3400 = vld [vmem:[#allocation2 + $0x6f8] sm:$0xff]
      %v3401 = vld [vmem:[#allocation2 + $0x700] sm:$0xff]
      %v3402 = vld [vmem:[#allocation2 + $0x708] sm:$0xff]
      %v3403 = vld [vmem:[#allocation2 + $0x710] sm:$0xff]
      %v3404 = vld [vmem:[#allocation2 + $0x718] sm:$0xff]
      %v3405 = vld [vmem:[#allocation2 + $0x720] sm:$0xff]
      %v3406 = vld [vmem:[#allocation2 + $0x728] sm:$0xff]
      %v3407 = vld [vmem:[#allocation2 + $0x730] sm:$0xff]
      %v3408 = vld [vmem:[#allocation2 + $0x738] sm:$0xff]
      %v3409 = vld [vmem:[#allocation2 + $0x740] sm:$0xff]
      %v3410 = vld [vmem:[#allocation2 + $0x748] sm:$0xff]
      %v3411 = vld [vmem:[#allocation2 + $0x750] sm:$0xff]
      %v3412 = vld [vmem:[#allocation2 + $0x758] sm:$0xff]
      %v3413 = vld [vmem:[#allocation2 + $0x760] sm:$0xff]
      %v3414 = vld [vmem:[#allocation2 + $0x768] sm:$0xff]
      %v3415 = vld [vmem:[#allocation2 + $0x770] sm:$0xff]
      %v3416 = vld [vmem:[#allocation2 + $0x778] sm:$0xff]
      %v3417 = vld [vmem:[#allocation2 + $0x780] sm:$0xff]
      %v3418 = vld [vmem:[#allocation2 + $0x788] sm:$0xff]
      %v3419 = vld [vmem:[#allocation2 + $0x790] sm:$0xff]
      %v3420 = vld [vmem:[#allocation2 + $0x798] sm:$0xff]
      %v3421 = vld [vmem:[#allocation2 + $0x7a0] sm:$0xff]
      %v3422 = vld [vmem:[#allocation2 + $0x7a8] sm:$0xff]
      %v3423 = vld [vmem:[#allocation2 + $0x7b0] sm:$0xff]
      %v3424 = vld [vmem:[#allocation2 + $0x7b8] sm:$0xff]
      %v3425 = vld [vmem:[#allocation2 + $0x7c0] sm:$0xff]
      %v3426 = vld [vmem:[#allocation2 + $0x7c8] sm:$0xff]
      %v3427 = vld [vmem:[#allocation2 + $0x7d0] sm:$0xff]
      %v3428 = vld [vmem:[#allocation2 + $0x7d8] sm:$0xff]
      %v3429 = vld [vmem:[#allocation2 + $0x7e0] sm:$0xff]
      %v3430 = vld [vmem:[#allocation2 + $0x7e8] sm:$0xff]
      %v3431 = vld [vmem:[#allocation2 + $0x7f0] sm:$0xff]
      %v3432 = vld [vmem:[#allocation2 + $0x7f8] sm:$0xff]
      %v3433 = vld [vmem:[#allocation2 + $0x800] sm:$0xff]
      %v3434 = vld [vmem:[#allocation2 + $0x808] sm:$0xff]
      %v3435 = vld [vmem:[#allocation2 + $0x810] sm:$0xff]
      %v3436 = vld [vmem:[#allocation2 + $0x818] sm:$0xff]
      %v3437 = vld [vmem:[#allocation2 + $0x820] sm:$0xff]
      %v3438 = vld [vmem:[#allocation2 + $0x828] sm:$0xff]
      %v3439 = vld [vmem:[#allocation2 + $0x830] sm:$0xff]
      %v3440 = vld [vmem:[#allocation2 + $0x838] sm:$0xff]
      %v3441 = vld [vmem:[#allocation2 + $0x840] sm:$0xff]
      %v3442 = vld [vmem:[#allocation2 + $0x848] sm:$0xff]
      %v3443 = vld [vmem:[#allocation2 + $0x850] sm:$0xff]
      %v3444 = vld [vmem:[#allocation2 + $0x858] sm:$0xff]
      %v3445 = vld [vmem:[#allocation2 + $0x860] sm:$0xff]
      %v3446 = vld [vmem:[#allocation2 + $0x868] sm:$0xff]
      %v3447 = vld [vmem:[#allocation2 + $0x870] sm:$0xff]
      %v3448 = vld [vmem:[#allocation2 + $0x878] sm:$0xff]
      %v3449 = vld [vmem:[#allocation2 + $0x880] sm:$0xff]
      %v3450 = vld [vmem:[#allocation2 + $0x888] sm:$0xff]
      %v3451 = vld [vmem:[#allocation2 + $0x890] sm:$0xff]
      %v3452 = vld [vmem:[#allocation2 + $0x898] sm:$0xff]
      %v3453 = vld [vmem:[#allocation2 + $0x8a0] sm:$0xff]
      %v3454 = vld [vmem:[#allocation2 + $0x8a8] sm:$0xff]
      %v3455 = vld [vmem:[#allocation2 + $0x8b0] sm:$0xff]
      %v3456 = vld [vmem:[#allocation2 + $0x8b8] sm:$0xff]
      %v3457 = vld [vmem:[#allocation2 + $0x8c0] sm:$0xff]
      %v3458 = vld [vmem:[#allocation2 + $0x8c8] sm:$0xff]
      %v3459 = vld [vmem:[#allocation2 + $0x8d0] sm:$0xff]
      %v3460 = vld [vmem:[#allocation2 + $0x8d8] sm:$0xff]
      %v3461 = vld [vmem:[#allocation2 + $0x8e0] sm:$0xff]
      %v3462 = vld [vmem:[#allocation2 + $0x8e8] sm:$0xff]
      %v3463 = vld [vmem:[#allocation2 + $0x8f0] sm:$0xff]
      %v3464 = vld [vmem:[#allocation2 + $0x8f8] sm:$0xff]
      %s3465 = scalar_lea.vmem %s1, 1152
      %v3466 = vld [vmem:[%s3465] sm:$0xff]
      %v3467 = vld [vmem:[%s3465 + $0x8] sm:$0xff]
      %v3468 = vld [vmem:[%s3465 + $0x10] sm:$0xff]
      %v3469 = vld [vmem:[%s3465 + $0x18] sm:$0xff]
      %v3470 = vld [vmem:[%s3465 + $0x20] sm:$0xff]
      %v3471 = vld [vmem:[%s3465 + $0x28] sm:$0xff]
      %v3472 = vld [vmem:[%s3465 + $0x30] sm:$0xff]
      %v3473 = vld [vmem:[%s3465 + $0x38] sm:$0xff]
      %v3474 = vld [vmem:[%s3465 + $0x40] sm:$0xff]
      %v3475 = vld [vmem:[%s3465 + $0x48] sm:$0xff]
      %v3476 = vld [vmem:[%s3465 + $0x50] sm:$0xff]
      %v3477 = vld [vmem:[%s3465 + $0x58] sm:$0xff]
      %v3478 = vld [vmem:[%s3465 + $0x60] sm:$0xff]
      %v3479 = vld [vmem:[%s3465 + $0x68] sm:$0xff]
      %v3480 = vld [vmem:[%s3465 + $0x70] sm:$0xff]
      %v3481 = vld [vmem:[%s3465 + $0x78] sm:$0xff]
      %v3482 = vld [vmem:[%s3465 + $0x80] sm:$0xff]
      %v3483 = vld [vmem:[%s3465 + $0x88] sm:$0xff]
      %v3484 = vld [vmem:[%s3465 + $0x90] sm:$0xff]
      %v3485 = vld [vmem:[%s3465 + $0x98] sm:$0xff]
      %v3486 = vld [vmem:[%s3465 + $0xa0] sm:$0xff]
      %v3487 = vld [vmem:[%s3465 + $0xa8] sm:$0xff]
      %v3488 = vld [vmem:[%s3465 + $0xb0] sm:$0xff]
      %v3489 = vld [vmem:[%s3465 + $0xb8] sm:$0xff]
      %v3490 = vld [vmem:[%s3465 + $0xc0] sm:$0xff]
      %v3491 = vld [vmem:[%s3465 + $0xc8] sm:$0xff]
      %v3492 = vld [vmem:[%s3465 + $0xd0] sm:$0xff]
      %v3493 = vld [vmem:[%s3465 + $0xd8] sm:$0xff]
      %v3494 = vld [vmem:[%s3465 + $0xe0] sm:$0xff]
      %v3495 = vld [vmem:[%s3465 + $0xe8] sm:$0xff]
      %v3496 = vld [vmem:[%s3465 + $0xf0] sm:$0xff]
      %v3497 = vld [vmem:[%s3465 + $0xf8] sm:$0xff]
      %v3498 = vld [vmem:[%s3465 + $0x100] sm:$0xff]
      %v3499 = vld [vmem:[%s3465 + $0x108] sm:$0xff]
      %v3500 = vld [vmem:[%s3465 + $0x110] sm:$0xff]
      %v3501 = vld [vmem:[%s3465 + $0x118] sm:$0xff]
      %v3502 = vld [vmem:[%s3465 + $0x120] sm:$0xff]
      %v3503 = vld [vmem:[%s3465 + $0x128] sm:$0xff]
      %v3504 = vld [vmem:[%s3465 + $0x130] sm:$0xff]
      %v3505 = vld [vmem:[%s3465 + $0x138] sm:$0xff]
      %v3506 = vld [vmem:[%s3465 + $0x140] sm:$0xff]
      %v3507 = vld [vmem:[%s3465 + $0x148] sm:$0xff]
      %v3508 = vld [vmem:[%s3465 + $0x150] sm:$0xff]
      %v3509 = vld [vmem:[%s3465 + $0x158] sm:$0xff]
      %v3510 = vld [vmem:[%s3465 + $0x160] sm:$0xff]
      %v3511 = vld [vmem:[%s3465 + $0x168] sm:$0xff]
      %v3512 = vld [vmem:[%s3465 + $0x170] sm:$0xff]
      %v3513 = vld [vmem:[%s3465 + $0x178] sm:$0xff]
      %v3514 = vld [vmem:[%s3465 + $0x180] sm:$0xff]
      %v3515 = vld [vmem:[%s3465 + $0x188] sm:$0xff]
      %v3516 = vld [vmem:[%s3465 + $0x190] sm:$0xff]
      %v3517 = vld [vmem:[%s3465 + $0x198] sm:$0xff]
      %v3518 = vld [vmem:[%s3465 + $0x1a0] sm:$0xff]
      %v3519 = vld [vmem:[%s3465 + $0x1a8] sm:$0xff]
      %v3520 = vld [vmem:[%s3465 + $0x1b0] sm:$0xff]
      %v3521 = vld [vmem:[%s3465 + $0x1b8] sm:$0xff]
      %v3522 = vld [vmem:[%s3465 + $0x1c0] sm:$0xff]
      %v3523 = vld [vmem:[%s3465 + $0x1c8] sm:$0xff]
      %v3524 = vld [vmem:[%s3465 + $0x1d0] sm:$0xff]
      %v3525 = vld [vmem:[%s3465 + $0x1d8] sm:$0xff]
      %v3526 = vld [vmem:[%s3465 + $0x1e0] sm:$0xff]
      %v3527 = vld [vmem:[%s3465 + $0x1e8] sm:$0xff]
      %v3528 = vld [vmem:[%s3465 + $0x1f0] sm:$0xff]
      %v3529 = vld [vmem:[%s3465 + $0x1f8] sm:$0xff]
      %v3530 = vld [vmem:[%s3465 + $0x200] sm:$0xff]
      %v3531 = vld [vmem:[%s3465 + $0x208] sm:$0xff]
      %v3532 = vld [vmem:[%s3465 + $0x210] sm:$0xff]
      %v3533 = vld [vmem:[%s3465 + $0x218] sm:$0xff]
      %v3534 = vld [vmem:[%s3465 + $0x220] sm:$0xff]
      %v3535 = vld [vmem:[%s3465 + $0x228] sm:$0xff]
      %v3536 = vld [vmem:[%s3465 + $0x230] sm:$0xff]
      %v3537 = vld [vmem:[%s3465 + $0x238] sm:$0xff]
      %v3538 = vld [vmem:[%s3465 + $0x240] sm:$0xff]
      %v3539 = vld [vmem:[%s3465 + $0x248] sm:$0xff]
      %v3540 = vld [vmem:[%s3465 + $0x250] sm:$0xff]
      %v3541 = vld [vmem:[%s3465 + $0x258] sm:$0xff]
      %v3542 = vld [vmem:[%s3465 + $0x260] sm:$0xff]
      %v3543 = vld [vmem:[%s3465 + $0x268] sm:$0xff]
      %v3544 = vld [vmem:[%s3465 + $0x270] sm:$0xff]
      %v3545 = vld [vmem:[%s3465 + $0x278] sm:$0xff]
      %v3546 = vld [vmem:[%s3465 + $0x280] sm:$0xff]
      %v3547 = vld [vmem:[%s3465 + $0x288] sm:$0xff]
      %v3548 = vld [vmem:[%s3465 + $0x290] sm:$0xff]
      %v3549 = vld [vmem:[%s3465 + $0x298] sm:$0xff]
      %v3550 = vld [vmem:[%s3465 + $0x2a0] sm:$0xff]
      %v3551 = vld [vmem:[%s3465 + $0x2a8] sm:$0xff]
      %v3552 = vld [vmem:[%s3465 + $0x2b0] sm:$0xff]
      %v3553 = vld [vmem:[%s3465 + $0x2b8] sm:$0xff]
      %v3554 = vld [vmem:[%s3465 + $0x2c0] sm:$0xff]
      %v3555 = vld [vmem:[%s3465 + $0x2c8] sm:$0xff]
      %v3556 = vld [vmem:[%s3465 + $0x2d0] sm:$0xff]
      %v3557 = vld [vmem:[%s3465 + $0x2d8] sm:$0xff]
      %v3558 = vld [vmem:[%s3465 + $0x2e0] sm:$0xff]
      %v3559 = vld [vmem:[%s3465 + $0x2e8] sm:$0xff]
      %v3560 = vld [vmem:[%s3465 + $0x2f0] sm:$0xff]
      %v3561 = vld [vmem:[%s3465 + $0x2f8] sm:$0xff]
      %v3562 = vld [vmem:[%s3465 + $0x300] sm:$0xff]
      %v3563 = vld [vmem:[%s3465 + $0x308] sm:$0xff]
      %v3564 = vld [vmem:[%s3465 + $0x310] sm:$0xff]
      %v3565 = vld [vmem:[%s3465 + $0x318] sm:$0xff]
      %v3566 = vld [vmem:[%s3465 + $0x320] sm:$0xff]
      %v3567 = vld [vmem:[%s3465 + $0x328] sm:$0xff]
      %v3568 = vld [vmem:[%s3465 + $0x330] sm:$0xff]
      %v3569 = vld [vmem:[%s3465 + $0x338] sm:$0xff]
      %v3570 = vld [vmem:[%s3465 + $0x340] sm:$0xff]
      %v3571 = vld [vmem:[%s3465 + $0x348] sm:$0xff]
      %v3572 = vld [vmem:[%s3465 + $0x350] sm:$0xff]
      %v3573 = vld [vmem:[%s3465 + $0x358] sm:$0xff]
      %v3574 = vld [vmem:[%s3465 + $0x360] sm:$0xff]
      %v3575 = vld [vmem:[%s3465 + $0x368] sm:$0xff]
      %v3576 = vld [vmem:[%s3465 + $0x370] sm:$0xff]
      %v3577 = vld [vmem:[%s3465 + $0x378] sm:$0xff]
      %v3578 = vld [vmem:[%s3465 + $0x380] sm:$0xff]
      %v3579 = vld [vmem:[%s3465 + $0x388] sm:$0xff]
      %v3580 = vld [vmem:[%s3465 + $0x390] sm:$0xff]
      %v3581 = vld [vmem:[%s3465 + $0x398] sm:$0xff]
      %v3582 = vld [vmem:[%s3465 + $0x3a0] sm:$0xff]
      %v3583 = vld [vmem:[%s3465 + $0x3a8] sm:$0xff]
      %v3584 = vld [vmem:[%s3465 + $0x3b0] sm:$0xff]
      %v3585 = vld [vmem:[%s3465 + $0x3b8] sm:$0xff]
      %v3586 = vld [vmem:[%s3465 + $0x3c0] sm:$0xff]
      %v3587 = vld [vmem:[%s3465 + $0x3c8] sm:$0xff]
      %v3588 = vld [vmem:[%s3465 + $0x3d0] sm:$0xff]
      %v3589 = vld [vmem:[%s3465 + $0x3d8] sm:$0xff]
      %v3590 = vld [vmem:[%s3465 + $0x3e0] sm:$0xff]
      %v3591 = vld [vmem:[%s3465 + $0x3e8] sm:$0xff]
      %v3592 = vld [vmem:[%s3465 + $0x3f0] sm:$0xff]
      %v3593 = vld [vmem:[%s3465 + $0x3f8] sm:$0xff]
      %v3594 = vld [vmem:[%s3465 + $0x400] sm:$0xff]
      %v3595 = vld [vmem:[%s3465 + $0x408] sm:$0xff]
      %v3596 = vld [vmem:[%s3465 + $0x410] sm:$0xff]
      %v3597 = vld [vmem:[%s3465 + $0x418] sm:$0xff]
      %v3598 = vld [vmem:[%s3465 + $0x420] sm:$0xff]
      %v3599 = vld [vmem:[%s3465 + $0x428] sm:$0xff]
      %v3600 = vld [vmem:[%s3465 + $0x430] sm:$0xff]
      %v3601 = vld [vmem:[%s3465 + $0x438] sm:$0xff]
      %v3602 = vld [vmem:[%s3465 + $0x440] sm:$0xff]
      %v3603 = vld [vmem:[%s3465 + $0x448] sm:$0xff]
      %v3604 = vld [vmem:[%s3465 + $0x450] sm:$0xff]
      %v3605 = vld [vmem:[%s3465 + $0x458] sm:$0xff]
      %v3606 = vld [vmem:[%s3465 + $0x460] sm:$0xff]
      %v3607 = vld [vmem:[%s3465 + $0x468] sm:$0xff]
      %v3608 = vld [vmem:[%s3465 + $0x470] sm:$0xff]
      %v3609 = vld [vmem:[%s3465 + $0x478] sm:$0xff]
      %3610 = vmatprep.subr.mxu0 0.0
      %3611 = vmatpush1.msra.mxu0 %v3466
      %3612 = vmatprep.subr.mxu0 0.0
      %3613 = vmatpush1.msra.mxu0 %v3467
      %3614 = vmatprep.subr.mxu0 0.0
      %3615 = vmatpush1.msra.mxu0 %v3468
      %3616 = vmatprep.subr.mxu0 0.0
      %3617 = vmatpush1.msra.mxu0 %v3469
      %3618 = vmatprep.subr.mxu0 0.0
      %3619 = vmatpush1.msra.mxu0 %v3470
      %3620 = vmatprep.subr.mxu0 0.0
      %3621 = vmatpush1.msra.mxu0 %v3471
      %3622 = vmatprep.subr.mxu0 0.0
      %3623 = vmatpush1.msra.mxu0 %v3472
      %3624 = vmatprep.subr.mxu0 0.0
      %3625 = vmatpush1.msra.mxu0 %v3473
      %3626 = vmatprep.subr.mxu0 0.0
      %3627 = vmatpush1.msra.mxu0 %v3474
      %3628 = vmatprep.subr.mxu0 0.0
      %3629 = vmatpush1.msra.mxu0 %v3475
      %3630 = vmatprep.subr.mxu0 0.0
      %3631 = vmatpush1.msra.mxu0 %v3476
      %3632 = vmatprep.subr.mxu0 0.0
      %3633 = vmatpush1.msra.mxu0 %v3477
      %3634 = vmatprep.subr.mxu0 0.0
      %3635 = vmatpush1.msra.mxu0 %v3478
      %3636 = vmatprep.subr.mxu0 0.0
      %3637 = vmatpush1.msra.mxu0 %v3479
      %3638 = vmatprep.subr.mxu0 0.0
      %3639 = vmatpush1.msra.mxu0 %v3480
      %3640 = vmatprep.subr.mxu0 0.0
      %3641 = vmatpush1.msra.mxu0 %v3481
      %3642 = vmatprep.subr.mxu0 0.0
      %3643 = vmatpush1.msra.mxu0 %v3482
      %3644 = vmatprep.subr.mxu0 0.0
      %3645 = vmatpush1.msra.mxu0 %v3483
      %3646 = vmatprep.subr.mxu0 0.0
      %3647 = vmatpush1.msra.mxu0 %v3484
      %3648 = vmatprep.subr.mxu0 0.0
      %3649 = vmatpush1.msra.mxu0 %v3485
      %3650 = vmatprep.subr.mxu0 0.0
      %3651 = vmatpush1.msra.mxu0 %v3486
      %3652 = vmatprep.subr.mxu0 0.0
      %3653 = vmatpush1.msra.mxu0 %v3487
      %3654 = vmatprep.subr.mxu0 0.0
      %3655 = vmatpush1.msra.mxu0 %v3488
      %3656 = vmatprep.subr.mxu0 0.0
      %3657 = vmatpush1.msra.mxu0 %v3489
      %3658 = vmatprep.subr.mxu0 0.0
      %3659 = vmatpush1.msra.mxu0 %v3490
      %3660 = vmatprep.subr.mxu0 0.0
      %3661 = vmatpush1.msra.mxu0 %v3491
      %3662 = vmatprep.subr.mxu0 0.0
      %3663 = vmatpush1.msra.mxu0 %v3492
      %3664 = vmatprep.subr.mxu0 0.0
      %3665 = vmatpush1.msra.mxu0 %v3493
      %3666 = vmatprep.subr.mxu0 0.0
      %3667 = vmatpush1.msra.mxu0 %v3494
      %3668 = vmatprep.subr.mxu0 0.0
      %3669 = vmatpush1.msra.mxu0 %v3495
      %3670 = vmatprep.subr.mxu0 0.0
      %3671 = vmatpush1.msra.mxu0 %v3496
      %3672 = vmatprep.subr.mxu0 0.0
      %3673 = vmatpush1.msra.mxu0 %v3497
      %3674 = vmatprep.mubr.f32.mxu0 %v3178
      %3675 = vmatmul.mubr.f32.gmra.mrb[0].mxu0 %v3177
      %v3676 = vpop.f32.mrb[0].mxu0
      %v3677 = vadd.f32 0.0, %v3676
      %v3678 = vpop.f32.mrb[0].mxu0
      %3679 = vmatprep.mubr.f32.mxu0 %v3187
      %3680 = vmatmul.mubr.f32.gmra.mrb[0].mxu0 %v3186
      %v3681 = vpop.f32.mrb[0].mxu0
      %v3682 = vadd.f32 0.0, %v3681
      %v3683 = vpop.f32.mrb[0].mxu0
      %3684 = vmatprep.mubr.f32.mxu0 %v3196
      %3685 = vmatmul.mubr.f32.gmra.mrb[0].mxu0 %v3195
      %v3686 = vpop.f32.mrb[0].mxu0
      %v3687 = vadd.f32 0.0, %v3686
      %v3688 = vpop.f32.mrb[0].mxu0
      %3689 = vmatprep.mubr.f32.mxu0 %v3205
      %3690 = vmatmul.mubr.f32.gmra.mrb[0].mxu0 %v3204
      %v3691 = vpop.f32.mrb[0].mxu0
      %v3692 = vadd.f32 0.0, %v3691
      %v3693 = vpop.f32.mrb[0].mxu0
      %3694 = vmatprep.mubr.f32.mxu0 %v3214
      %3695 = vmatmul.mubr.f32.gmra.mrb[0].mxu0 %v3213
      %v3696 = vpop.f32.mrb[0].mxu0
      %v3697 = vadd.f32 0.0, %v3696
      %v3698 = vpop.f32.mrb[0].mxu0
      %3699 = vmatprep.mubr.f32.mxu0 %v3223
      %3700 = vmatmul.mubr.f32.gmra.mrb[0].mxu0 %v3222
      %v3701 = vpop.f32.mrb[0].mxu0
      %v3702 = vadd.f32 0.0, %v3701
      %v3703 = vpop.f32.mrb[0].mxu0
      %3704 = vmatprep.mubr.f32.mxu0 %v3232
      %3705 = vmatmul.mubr.f32.gmra.mrb[0].mxu0 %v3231
      %v3706 = vpop.f32.mrb[0].mxu0
      %v3707 = vadd.f32 0.0, %v3706
      %v3708 = vpop.f32.mrb[0].mxu0
      %3709 = vmatprep.mubr.f32.mxu0 %v3241
      %3710 = vmatmul.mubr.f32.gmra.mrb[0].mxu0 %v3240
      %v3711 = vpop.f32.mrb[0].mxu0
      %v3712 = vadd.f32 0.0, %v3711
      %v3713 = vpop.f32.mrb[0].mxu0
      %3714 = vmatprep.mubr.f32.mxu0 %v3250
      %3715 = vmatmul.mubr.f32.gmra.mrb[0].mxu0 %v3249
      %v3716 = vpop.f32.mrb[0].mxu0
      %v3717 = vadd.f32 0.0, %v3716
      %v3718 = vpop.f32.mrb[0].mxu0
      %3719 = vmatprep.mubr.f32.mxu0 %v3259
      %3720 = vmatmul.mubr.f32.gmra.mrb[0].mxu0 %v3258
      %v3721 = vpop.f32.mrb[0].mxu0
      %v3722 = vadd.f32 0.0, %v3721
      %v3723 = vpop.f32.mrb[0].mxu0
      %3724 = vmatprep.mubr.f32.mxu0 %v3268
      %3725 = vmatmul.mubr.f32.gmra.mrb[0].mxu0 %v3267
      %v3726 = vpop.f32.mrb[0].mxu0
      %v3727 = vadd.f32 0.0, %v3726
      %v3728 = vpop.f32.mrb[0].mxu0
      %3729 = vmatprep.mubr.f32.mxu0 %v3277
      %3730 = vmatmul.mubr.f32.gmra.mrb[0].mxu0 %v3276
      %v3731 = vpop.f32.mrb[0].mxu0
      %v3732 = vadd.f32 0.0, %v3731
      %v3733 = vpop.f32.mrb[0].mxu0
      %3734 = vmatprep.mubr.f32.mxu0 %v3286
      %3735 = vmatmul.mubr.f32.gmra.mrb[0].mxu0 %v3285
      %v3736 = vpop.f32.mrb[0].mxu0
      %v3737 = vadd.f32 0.0, %v3736
      %v3738 = vpop.f32.mrb[0].mxu0
      %3739 = vmatprep.mubr.f32.mxu0 %v3295
      %3740 = vmatmul.mubr.f32.gmra.mrb[0].mxu0 %v3294
      %v3741 = vpop.f32.mrb[0].mxu0
      %v3742 = vadd.f32 0.0, %v3741
      %v3743 = vpop.f32.mrb[0].mxu0
      %3744 = vmatprep.mubr.f32.mxu0 %v3304
      %3745 = vmatmul.mubr.f32.gmra.mrb[0].mxu0 %v3303
      %v3746 = vpop.f32.mrb[0].mxu0
      %v3747 = vadd.f32 0.0, %v3746
      %v3748 = vpop.f32.mrb[0].mxu0
      %3749 = vmatprep.mubr.f32.mxu0 %v3313
      %3750 = vmatmul.mubr.f32.gmra.mrb[0].mxu0 %v3312
      %v3751 = vpop.f32.mrb[0].mxu0
      %v3752 = vadd.f32 0.0, %v3751
      %v3753 = vpop.f32.mrb[0].mxu0
      %3754 = vmatprep.mubr.f32.mxu0 %v3322
      %3755 = vmatmul.mubr.f32.gmra.mrb[0].mxu0 %v3321
      %v3756 = vpop.f32.mrb[0].mxu0
      %v3757 = vadd.f32 0.0, %v3756
      %v3758 = vpop.f32.mrb[0].mxu0
      %3759 = vmatprep.mubr.f32.mxu0 %v3331
      %3760 = vmatmul.mubr.f32.gmra.mrb[0].mxu0 %v3330
      %v3761 = vpop.f32.mrb[0].mxu0
      %v3762 = vadd.f32 0.0, %v3761
      %v3763 = vpop.f32.mrb[0].mxu0
      %3764 = vmatprep.mubr.f32.mxu0 %v3340
      %3765 = vmatmul.mubr.f32.gmra.mrb[0].mxu0 %v3339
      %v3766 = vpop.f32.mrb[0].mxu0
      %v3767 = vadd.f32 0.0, %v3766
      %v3768 = vpop.f32.mrb[0].mxu0
      %3769 = vmatprep.mubr.f32.mxu0 %v3349
      %3770 = vmatmul.mubr.f32.gmra.mrb[0].mxu0 %v3348
      %v3771 = vpop.f32.mrb[0].mxu0
      %v3772 = vadd.f32 0.0, %v3771
      %v3773 = vpop.f32.mrb[0].mxu0
      %3774 = vmatprep.mubr.f32.mxu0 %v3358
      %3775 = vmatmul.mubr.f32.gmra.mrb[0].mxu0 %v3357
      %v3776 = vpop.f32.mrb[0].mxu0
      %v3777 = vadd.f32 0.0, %v3776
      %v3778 = vpop.f32.mrb[0].mxu0
      %3779 = vmatprep.mubr.f32.mxu0 %v3367
      %3780 = vmatmul.mubr.f32.gmra.mrb[0].mxu0 %v3366
      %v3781 = vpop.f32.mrb[0].mxu0
      %v3782 = vadd.f32 0.0, %v3781
      %v3783 = vpop.f32.mrb[0].mxu0
      %3784 = vmatprep.mubr.f32.mxu0 %v3376
      %3785 = vmatmul.mubr.f32.gmra.mrb[0].mxu0 %v3375
      %v3786 = vpop.f32.mrb[0].mxu0
      %v3787 = vadd.f32 0.0, %v3786
      %v3788 = vpop.f32.mrb[0].mxu0
      %3789 = vmatprep.mubr.f32.mxu0 %v3385
      %3790 = vmatmul.mubr.f32.gmra.mrb[0].mxu0 %v3384
      %v3791 = vpop.f32.mrb[0].mxu0
      %v3792 = vadd.f32 0.0, %v3791
      %v3793 = vpop.f32.mrb[0].mxu0
      %3794 = vmatprep.mubr.f32.mxu0 %v3394
      %3795 = vmatmul.mubr.f32.gmra.mrb[0].mxu0 %v3393
      %v3796 = vpop.f32.mrb[0].mxu0
      %v3797 = vadd.f32 0.0, %v3796
      %v3798 = vpop.f32.mrb[0].mxu0
      %3799 = vmatprep.mubr.f32.mxu0 %v3403
      %3800 = vmatmul.mubr.f32.gmra.mrb[0].mxu0 %v3402
      %v3801 = vpop.f32.mrb[0].mxu0
      %v3802 = vadd.f32 0.0, %v3801
      %v3803 = vpop.f32.mrb[0].mxu0
      %3804 = vmatprep.mubr.f32.mxu0 %v3412
      %3805 = vmatmul.mubr.f32.gmra.mrb[0].mxu0 %v3411
      %v3806 = vpop.f32.mrb[0].mxu0
      %v3807 = vadd.f32 0.0, %v3806
      %v3808 = vpop.f32.mrb[0].mxu0
      %3809 = vmatprep.mubr.f32.mxu0 %v3421
      %3810 = vmatmul.mubr.f32.gmra.mrb[0].mxu0 %v3420
      %v3811 = vpop.f32.mrb[0].mxu0
      %v3812 = vadd.f32 0.0, %v3811
      %v3813 = vpop.f32.mrb[0].mxu0
      %3814 = vmatprep.mubr.f32.mxu0 %v3430
      %3815 = vmatmul.mubr.f32.gmra.mrb[0].mxu0 %v3429
      %v3816 = vpop.f32.mrb[0].mxu0
      %v3817 = vadd.f32 0.0, %v3816
      %v3818 = vpop.f32.mrb[0].mxu0
      %3819 = vmatprep.mubr.f32.mxu0 %v3439
      %3820 = vmatmul.mubr.f32.gmra.mrb[0].mxu0 %v3438
      %v3821 = vpop.f32.mrb[0].mxu0
      %v3822 = vadd.f32 0.0, %v3821
      %v3823 = vpop.f32.mrb[0].mxu0
      %3824 = vmatprep.mubr.f32.mxu0 %v3448
      %3825 = vmatmul.mubr.f32.gmra.mrb[0].mxu0 %v3447
      %v3826 = vpop.f32.mrb[0].mxu0
      %v3827 = vadd.f32 0.0, %v3826
      %v3828 = vpop.f32.mrb[0].mxu0
      %3829 = vmatprep.mubr.f32.mxu0 %v3457
      %3830 = vmatmul.mubr.f32.gmra.mrb[0].mxu0 %v3456
      %v3831 = vpop.f32.mrb[0].mxu0
      %v3832 = vadd.f32 0.0, %v3831
      %v3833 = vpop.f32.mrb[0].mxu0
      %3834 = vdwg.mxu0
      %3835 = vmatprep.subr.mxu0 0.0
      %3836 = vmatpush1.msra.mxu0 %v3498
      %3837 = vmatprep.subr.mxu0 0.0
      %3838 = vmatpush1.msra.mxu0 %v3499
      %3839 = vmatprep.subr.mxu0 0.0
      %3840 = vmatpush1.msra.mxu0 %v3500
      %3841 = vmatprep.subr.mxu0 0.0
      %3842 = vmatpush1.msra.mxu0 %v3501
      %3843 = vmatprep.subr.mxu0 0.0
      %3844 = vmatpush1.msra.mxu0 %v3502
      %3845 = vmatprep.subr.mxu0 0.0
      %3846 = vmatpush1.msra.mxu0 %v3503
      %3847 = vmatprep.subr.mxu0 0.0
      %3848 = vmatpush1.msra.mxu0 %v3504
      %3849 = vmatprep.subr.mxu0 0.0
      %3850 = vmatpush1.msra.mxu0 %v3505
      %3851 = vmatprep.subr.mxu0 0.0
      %3852 = vmatpush1.msra.mxu0 %v3506
      %3853 = vmatprep.subr.mxu0 0.0
      %3854 = vmatpush1.msra.mxu0 %v3507
      %3855 = vmatprep.subr.mxu0 0.0
      %3856 = vmatpush1.msra.mxu0 %v3508
      %3857 = vmatprep.subr.mxu0 0.0
      %3858 = vmatpush1.msra.mxu0 %v3509
      %3859 = vmatprep.subr.mxu0 0.0
      %3860 = vmatpush1.msra.mxu0 %v3510
      %3861 = vmatprep.subr.mxu0 0.0
      %3862 = vmatpush1.msra.mxu0 %v3511
      %3863 = vmatprep.subr.mxu0 0.0
      %3864 = vmatpush1.msra.mxu0 %v3512
      %3865 = vmatprep.subr.mxu0 0.0
      %3866 = vmatpush1.msra.mxu0 %v3513
      %3867 = vmatprep.subr.mxu0 0.0
      %3868 = vmatpush1.msra.mxu0 %v3514
      %3869 = vmatprep.subr.mxu0 0.0
      %3870 = vmatpush1.msra.mxu0 %v3515
      %3871 = vmatprep.subr.mxu0 0.0
      %3872 = vmatpush1.msra.mxu0 %v3516
      %3873 = vmatprep.subr.mxu0 0.0
      %3874 = vmatpush1.msra.mxu0 %v3517
      %3875 = vmatprep.subr.mxu0 0.0
      %3876 = vmatpush1.msra.mxu0 %v3518
      %3877 = vmatprep.subr.mxu0 0.0
      %3878 = vmatpush1.msra.mxu0 %v3519
      %3879 = vmatprep.subr.mxu0 0.0
      %3880 = vmatpush1.msra.mxu0 %v3520
      %3881 = vmatprep.subr.mxu0 0.0
      %3882 = vmatpush1.msra.mxu0 %v3521
      %3883 = vmatprep.subr.mxu0 0.0
      %3884 = vmatpush1.msra.mxu0 %v3522
      %3885 = vmatprep.subr.mxu0 0.0
      %3886 = vmatpush1.msra.mxu0 %v3523
      %3887 = vmatprep.subr.mxu0 0.0
      %3888 = vmatpush1.msra.mxu0 %v3524
      %3889 = vmatprep.subr.mxu0 0.0
      %3890 = vmatpush1.msra.mxu0 %v3525
      %3891 = vmatprep.subr.mxu0 0.0
      %3892 = vmatpush1.msra.mxu0 %v3526
      %3893 = vmatprep.subr.mxu0 0.0
      %3894 = vmatpush1.msra.mxu0 %v3527
      %3895 = vmatprep.subr.mxu0 0.0
      %3896 = vmatpush1.msra.mxu0 %v3528
      %3897 = vmatprep.subr.mxu0 0.0
      %3898 = vmatpush1.msra.mxu0 %v3529
      %3899 = vmatprep.mubr.f32.mxu0 %v3180
      %3900 = vmatmul.mubr.f32.gmra.mrb[0].mxu0 %v3179
      %v3901 = vpop.f32.mrb[0].mxu0
      %v3902 = vadd.f32 %v3677, %v3901
      %v3903 = vpop.f32.mrb[0].mxu0
      %3904 = vmatprep.mubr.f32.mxu0 %v3189
      %3905 = vmatmul.mubr.f32.gmra.mrb[0].mxu0 %v3188
      %v3906 = vpop.f32.mrb[0].mxu0
      %v3907 = vadd.f32 %v3682, %v3906
      %v3908 = vpop.f32.mrb[0].mxu0
      %3909 = vmatprep.mubr.f32.mxu0 %v3198
      %3910 = vmatmul.mubr.f32.gmra.mrb[0].mxu0 %v3197
      %v3911 = vpop.f32.mrb[0].mxu0
      %v3912 = vadd.f32 %v3687, %v3911
      %v3913 = vpop.f32.mrb[0].mxu0
      %3914 = vmatprep.mubr.f32.mxu0 %v3207
      %3915 = vmatmul.mubr.f32.gmra.mrb[0].mxu0 %v3206
      %v3916 = vpop.f32.mrb[0].mxu0
      %v3917 = vadd.f32 %v3692, %v3916
      %v3918 = vpop.f32.mrb[0].mxu0
      %3919 = vmatprep.mubr.f32.mxu0 %v3216
      %3920 = vmatmul.mubr.f32.gmra.mrb[0].mxu0 %v3215
      %v3921 = vpop.f32.mrb[0].mxu0
      %v3922 = vadd.f32 %v3697, %v3921
      %v3923 = vpop.f32.mrb[0].mxu0
      %3924 = vmatprep.mubr.f32.mxu0 %v3225
      %3925 = vmatmul.mubr.f32.gmra.mrb[0].mxu0 %v3224
      %v3926 = vpop.f32.mrb[0].mxu0
      %v3927 = vadd.f32 %v3702, %v3926
      %v3928 = vpop.f32.mrb[0].mxu0
      %3929 = vmatprep.mubr.f32.mxu0 %v3234
      %3930 = vmatmul.mubr.f32.gmra.mrb[0].mxu0 %v3233
      %v3931 = vpop.f32.mrb[0].mxu0
      %v3932 = vadd.f32 %v3707, %v3931
      %v3933 = vpop.f32.mrb[0].mxu0
      %3934 = vmatprep.mubr.f32.mxu0 %v3243
      %3935 = vmatmul.mubr.f32.gmra.mrb[0].mxu0 %v3242
      %v3936 = vpop.f32.mrb[0].mxu0
      %v3937 = vadd.f32 %v3712, %v3936
      %v3938 = vpop.f32.mrb[0].mxu0
      %3939 = vmatprep.mubr.f32.mxu0 %v3252
      %3940 = vmatmul.mubr.f32.gmra.mrb[0].mxu0 %v3251
      %v3941 = vpop.f32.mrb[0].mxu0
      %v3942 = vadd.f32 %v3717, %v3941
      %v3943 = vpop.f32.mrb[0].mxu0
      %3944 = vmatprep.mubr.f32.mxu0 %v3261
      %3945 = vmatmul.mubr.f32.gmra.mrb[0].mxu0 %v3260
      %v3946 = vpop.f32.mrb[0].mxu0
      %v3947 = vadd.f32 %v3722, %v3946
      %v3948 = vpop.f32.mrb[0].mxu0
      %3949 = vmatprep.mubr.f32.mxu0 %v3270
      %3950 = vmatmul.mubr.f32.gmra.mrb[0].mxu0 %v3269
      %v3951 = vpop.f32.mrb[0].mxu0
      %v3952 = vadd.f32 %v3727, %v3951
      %v3953 = vpop.f32.mrb[0].mxu0
      %3954 = vmatprep.mubr.f32.mxu0 %v3279
      %3955 = vmatmul.mubr.f32.gmra.mrb[0].mxu0 %v3278
      %v3956 = vpop.f32.mrb[0].mxu0
      %v3957 = vadd.f32 %v3732, %v3956
      %v3958 = vpop.f32.mrb[0].mxu0
      %3959 = vmatprep.mubr.f32.mxu0 %v3288
      %3960 = vmatmul.mubr.f32.gmra.mrb[0].mxu0 %v3287
      %v3961 = vpop.f32.mrb[0].mxu0
      %v3962 = vadd.f32 %v3737, %v3961
      %v3963 = vpop.f32.mrb[0].mxu0
      %3964 = vmatprep.mubr.f32.mxu0 %v3297
      %3965 = vmatmul.mubr.f32.gmra.mrb[0].mxu0 %v3296
      %v3966 = vpop.f32.mrb[0].mxu0
      %v3967 = vadd.f32 %v3742, %v3966
      %v3968 = vpop.f32.mrb[0].mxu0
      %3969 = vmatprep.mubr.f32.mxu0 %v3306
      %3970 = vmatmul.mubr.f32.gmra.mrb[0].mxu0 %v3305
      %v3971 = vpop.f32.mrb[0].mxu0
      %v3972 = vadd.f32 %v3747, %v3971
      %v3973 = vpop.f32.mrb[0].mxu0
      %3974 = vmatprep.mubr.f32.mxu0 %v3315
      %3975 = vmatmul.mubr.f32.gmra.mrb[0].mxu0 %v3314
      %v3976 = vpop.f32.mrb[0].mxu0
      %v3977 = vadd.f32 %v3752, %v3976
      %v3978 = vpop.f32.mrb[0].mxu0
      %3979 = vmatprep.mubr.f32.mxu0 %v3324
      %3980 = vmatmul.mubr.f32.gmra.mrb[0].mxu0 %v3323
      %v3981 = vpop.f32.mrb[0].mxu0
      %v3982 = vadd.f32 %v3757, %v3981
      %v3983 = vpop.f32.mrb[0].mxu0
      %3984 = vmatprep.mubr.f32.mxu0 %v3333
      %3985 = vmatmul.mubr.f32.gmra.mrb[0].mxu0 %v3332
      %v3986 = vpop.f32.mrb[0].mxu0
      %v3987 = vadd.f32 %v3762, %v3986
      %v3988 = vpop.f32.mrb[0].mxu0
      %3989 = vmatprep.mubr.f32.mxu0 %v3342
      %3990 = vmatmul.mubr.f32.gmra.mrb[0].mxu0 %v3341
      %v3991 = vpop.f32.mrb[0].mxu0
      %v3992 = vadd.f32 %v3767, %v3991
      %v3993 = vpop.f32.mrb[0].mxu0
      %3994 = vmatprep.mubr.f32.mxu0 %v3351
      %3995 = vmatmul.mubr.f32.gmra.mrb[0].mxu0 %v3350
      %v3996 = vpop.f32.mrb[0].mxu0
      %v3997 = vadd.f32 %v3772, %v3996
      %v3998 = vpop.f32.mrb[0].mxu0
      %3999 = vmatprep.mubr.f32.mxu0 %v3360
      %4000 = vmatmul.mubr.f32.gmra.mrb[0].mxu0 %v3359
      %v4001 = vpop.f32.mrb[0].mxu0
      %v4002 = vadd.f32 %v3777, %v4001
      %v4003 = vpop.f32.mrb[0].mxu0
      %4004 = vmatprep.mubr.f32.mxu0 %v3369
      %4005 = vmatmul.mubr.f32.gmra.mrb[0].mxu0 %v3368
      %v4006 = vpop.f32.mrb[0].mxu0
      %v4007 = vadd.f32 %v3782, %v4006
      %v4008 = vpop.f32.mrb[0].mxu0
      %4009 = vmatprep.mubr.f32.mxu0 %v3378
      %4010 = vmatmul.mubr.f32.gmra.mrb[0].mxu0 %v3377
      %v4011 = vpop.f32.mrb[0].mxu0
      %v4012 = vadd.f32 %v3787, %v4011
      %v4013 = vpop.f32.mrb[0].mxu0
      %4014 = vmatprep.mubr.f32.mxu0 %v3387
      %4015 = vmatmul.mubr.f32.gmra.mrb[0].mxu0 %v3386
      %v4016 = vpop.f32.mrb[0].mxu0
      %v4017 = vadd.f32 %v3792, %v4016
      %v4018 = vpop.f32.mrb[0].mxu0
      %4019 = vmatprep.mubr.f32.mxu0 %v3396
      %4020 = vmatmul.mubr.f32.gmra.mrb[0].mxu0 %v3395
      %v4021 = vpop.f32.mrb[0].mxu0
      %v4022 = vadd.f32 %v3797, %v4021
      %v4023 = vpop.f32.mrb[0].mxu0
      %4024 = vmatprep.mubr.f32.mxu0 %v3405
      %4025 = vmatmul.mubr.f32.gmra.mrb[0].mxu0 %v3404
      %v4026 = vpop.f32.mrb[0].mxu0
      %v4027 = vadd.f32 %v3802, %v4026
      %v4028 = vpop.f32.mrb[0].mxu0
      %4029 = vmatprep.mubr.f32.mxu0 %v3414
      %4030 = vmatmul.mubr.f32.gmra.mrb[0].mxu0 %v3413
      %v4031 = vpop.f32.mrb[0].mxu0
      %v4032 = vadd.f32 %v3807, %v4031
      %v4033 = vpop.f32.mrb[0].mxu0
      %4034 = vmatprep.mubr.f32.mxu0 %v3423
      %4035 = vmatmul.mubr.f32.gmra.mrb[0].mxu0 %v3422
      %v4036 = vpop.f32.mrb[0].mxu0
      %v4037 = vadd.f32 %v3812, %v4036
      %v4038 = vpop.f32.mrb[0].mxu0
      %4039 = vmatprep.mubr.f32.mxu0 %v3432
      %4040 = vmatmul.mubr.f32.gmra.mrb[0].mxu0 %v3431
      %v4041 = vpop.f32.mrb[0].mxu0
      %v4042 = vadd.f32 %v3817, %v4041
      %v4043 = vpop.f32.mrb[0].mxu0
      %4044 = vmatprep.mubr.f32.mxu0 %v3441
      %4045 = vmatmul.mubr.f32.gmra.mrb[0].mxu0 %v3440
      %v4046 = vpop.f32.mrb[0].mxu0
      %v4047 = vadd.f32 %v3822, %v4046
      %v4048 = vpop.f32.mrb[0].mxu0
      %4049 = vmatprep.mubr.f32.mxu0 %v3450
      %4050 = vmatmul.mubr.f32.gmra.mrb[0].mxu0 %v3449
      %v4051 = vpop.f32.mrb[0].mxu0
      %v4052 = vadd.f32 %v3827, %v4051
      %v4053 = vpop.f32.mrb[0].mxu0
      %4054 = vmatprep.mubr.f32.mxu0 %v3459
      %4055 = vmatmul.mubr.f32.gmra.mrb[0].mxu0 %v3458
      %v4056 = vpop.f32.mrb[0].mxu0
      %v4057 = vadd.f32 %v3832, %v4056
      %v4058 = vpop.f32.mrb[0].mxu0
      %4059 = vdwg.mxu0
      %4060 = vmatprep.subr.mxu0 0.0
      %4061 = vmatpush1.msra.mxu0 %v3530
      %4062 = vmatprep.subr.mxu0 0.0
      %4063 = vmatpush1.msra.mxu0 %v3531
      %4064 = vmatprep.subr.mxu0 0.0
      %4065 = vmatpush1.msra.mxu0 %v3532
      %4066 = vmatprep.subr.mxu0 0.0
      %4067 = vmatpush1.msra.mxu0 %v3533
      %4068 = vmatprep.subr.mxu0 0.0
      %4069 = vmatpush1.msra.mxu0 %v3534
      %4070 = vmatprep.subr.mxu0 0.0
      %4071 = vmatpush1.msra.mxu0 %v3535
      %4072 = vmatprep.subr.mxu0 0.0
      %4073 = vmatpush1.msra.mxu0 %v3536
      %4074 = vmatprep.subr.mxu0 0.0
      %4075 = vmatpush1.msra.mxu0 %v3537
      %4076 = vmatprep.subr.mxu0 0.0
      %4077 = vmatpush1.msra.mxu0 %v3538
      %4078 = vmatprep.subr.mxu0 0.0
      %4079 = vmatpush1.msra.mxu0 %v3539
      %4080 = vmatprep.subr.mxu0 0.0
      %4081 = vmatpush1.msra.mxu0 %v3540
      %4082 = vmatprep.subr.mxu0 0.0
      %4083 = vmatpush1.msra.mxu0 %v3541
      %4084 = vmatprep.subr.mxu0 0.0
      %4085 = vmatpush1.msra.mxu0 %v3542
      %4086 = vmatprep.subr.mxu0 0.0
      %4087 = vmatpush1.msra.mxu0 %v3543
      %4088 = vmatprep.subr.mxu0 0.0
      %4089 = vmatpush1.msra.mxu0 %v3544
      %4090 = vmatprep.subr.mxu0 0.0
      %4091 = vmatpush1.msra.mxu0 %v3545
      %4092 = vmatprep.subr.mxu0 0.0
      %4093 = vmatpush1.msra.mxu0 %v3546
      %4094 = vmatprep.subr.mxu0 0.0
      %4095 = vmatpush1.msra.mxu0 %v3547
      %4096 = vmatprep.subr.mxu0 0.0
      %4097 = vmatpush1.msra.mxu0 %v3548
      %4098 = vmatprep.subr.mxu0 0.0
      %4099 = vmatpush1.msra.mxu0 %v3549
      %4100 = vmatprep.subr.mxu0 0.0
      %4101 = vmatpush1.msra.mxu0 %v3550
      %4102 = vmatprep.subr.mxu0 0.0
      %4103 = vmatpush1.msra.mxu0 %v3551
      %4104 = vmatprep.subr.mxu0 0.0
      %4105 = vmatpush1.msra.mxu0 %v3552
      %4106 = vmatprep.subr.mxu0 0.0
      %4107 = vmatpush1.msra.mxu0 %v3553
      %4108 = vmatprep.subr.mxu0 0.0
      %4109 = vmatpush1.msra.mxu0 %v3554
      %4110 = vmatprep.subr.mxu0 0.0
      %4111 = vmatpush1.msra.mxu0 %v3555
      %4112 = vmatprep.subr.mxu0 0.0
      %4113 = vmatpush1.msra.mxu0 %v3556
      %4114 = vmatprep.subr.mxu0 0.0
      %4115 = vmatpush1.msra.mxu0 %v3557
      %4116 = vmatprep.subr.mxu0 0.0
      %4117 = vmatpush1.msra.mxu0 %v3558
      %4118 = vmatprep.subr.mxu0 0.0
      %4119 = vmatpush1.msra.mxu0 %v3559
      %4120 = vmatprep.subr.mxu0 0.0
      %4121 = vmatpush1.msra.mxu0 %v3560
      %4122 = vmatprep.subr.mxu0 0.0
      %4123 = vmatpush1.msra.mxu0 %v3561
      %4124 = vmatprep.mubr.f32.mxu0 %v3182
      %4125 = vmatmul.mubr.f32.gmra.mrb[0].mxu0 %v3181
      %v4126 = vpop.f32.mrb[0].mxu0
      %v4127 = vadd.f32 %v3902, %v4126
      %v4128 = vpop.f32.mrb[0].mxu0
      %4129 = vmatprep.mubr.f32.mxu0 %v3191
      %4130 = vmatmul.mubr.f32.gmra.mrb[0].mxu0 %v3190
      %v4131 = vpop.f32.mrb[0].mxu0
      %v4132 = vadd.f32 %v3907, %v4131
      %v4133 = vpop.f32.mrb[0].mxu0
      %4134 = vmatprep.mubr.f32.mxu0 %v3200
      %4135 = vmatmul.mubr.f32.gmra.mrb[0].mxu0 %v3199
      %v4136 = vpop.f32.mrb[0].mxu0
      %v4137 = vadd.f32 %v3912, %v4136
      %v4138 = vpop.f32.mrb[0].mxu0
      %4139 = vmatprep.mubr.f32.mxu0 %v3209
      %4140 = vmatmul.mubr.f32.gmra.mrb[0].mxu0 %v3208
      %v4141 = vpop.f32.mrb[0].mxu0
      %v4142 = vadd.f32 %v3917, %v4141
      %v4143 = vpop.f32.mrb[0].mxu0
      %4144 = vmatprep.mubr.f32.mxu0 %v3218
      %4145 = vmatmul.mubr.f32.gmra.mrb[0].mxu0 %v3217
      %v4146 = vpop.f32.mrb[0].mxu0
      %v4147 = vadd.f32 %v3922, %v4146
      %v4148 = vpop.f32.mrb[0].mxu0
      %4149 = vmatprep.mubr.f32.mxu0 %v3227
      %4150 = vmatmul.mubr.f32.gmra.mrb[0].mxu0 %v3226
      %v4151 = vpop.f32.mrb[0].mxu0
      %v4152 = vadd.f32 %v3927, %v4151
      %v4153 = vpop.f32.mrb[0].mxu0
      %4154 = vmatprep.mubr.f32.mxu0 %v3236
      %4155 = vmatmul.mubr.f32.gmra.mrb[0].mxu0 %v3235
      %v4156 = vpop.f32.mrb[0].mxu0
      %v4157 = vadd.f32 %v3932, %v4156
      %v4158 = vpop.f32.mrb[0].mxu0
      %4159 = vmatprep.mubr.f32.mxu0 %v3245
      %4160 = vmatmul.mubr.f32.gmra.mrb[0].mxu0 %v3244
      %v4161 = vpop.f32.mrb[0].mxu0
      %v4162 = vadd.f32 %v3937, %v4161
      %v4163 = vpop.f32.mrb[0].mxu0
      %4164 = vmatprep.mubr.f32.mxu0 %v3254
      %4165 = vmatmul.mubr.f32.gmra.mrb[0].mxu0 %v3253
      %v4166 = vpop.f32.mrb[0].mxu0
      %v4167 = vadd.f32 %v3942, %v4166
      %v4168 = vpop.f32.mrb[0].mxu0
      %4169 = vmatprep.mubr.f32.mxu0 %v3263
      %4170 = vmatmul.mubr.f32.gmra.mrb[0].mxu0 %v3262
      %v4171 = vpop.f32.mrb[0].mxu0
      %v4172 = vadd.f32 %v3947, %v4171
      %v4173 = vpop.f32.mrb[0].mxu0
      %4174 = vmatprep.mubr.f32.mxu0 %v3272
      %4175 = vmatmul.mubr.f32.gmra.mrb[0].mxu0 %v3271
      %v4176 = vpop.f32.mrb[0].mxu0
      %v4177 = vadd.f32 %v3952, %v4176
      %v4178 = vpop.f32.mrb[0].mxu0
      %4179 = vmatprep.mubr.f32.mxu0 %v3281
      %4180 = vmatmul.mubr.f32.gmra.mrb[0].mxu0 %v3280
      %v4181 = vpop.f32.mrb[0].mxu0
      %v4182 = vadd.f32 %v3957, %v4181
      %v4183 = vpop.f32.mrb[0].mxu0
      %4184 = vmatprep.mubr.f32.mxu0 %v3290
      %4185 = vmatmul.mubr.f32.gmra.mrb[0].mxu0 %v3289
      %v4186 = vpop.f32.mrb[0].mxu0
      %v4187 = vadd.f32 %v3962, %v4186
      %v4188 = vpop.f32.mrb[0].mxu0
      %4189 = vmatprep.mubr.f32.mxu0 %v3299
      %4190 = vmatmul.mubr.f32.gmra.mrb[0].mxu0 %v3298
      %v4191 = vpop.f32.mrb[0].mxu0
      %v4192 = vadd.f32 %v3967, %v4191
      %v4193 = vpop.f32.mrb[0].mxu0
      %4194 = vmatprep.mubr.f32.mxu0 %v3308
      %4195 = vmatmul.mubr.f32.gmra.mrb[0].mxu0 %v3307
      %v4196 = vpop.f32.mrb[0].mxu0
      %v4197 = vadd.f32 %v3972, %v4196
      %v4198 = vpop.f32.mrb[0].mxu0
      %4199 = vmatprep.mubr.f32.mxu0 %v3317
      %4200 = vmatmul.mubr.f32.gmra.mrb[0].mxu0 %v3316
      %v4201 = vpop.f32.mrb[0].mxu0
      %v4202 = vadd.f32 %v3977, %v4201
      %v4203 = vpop.f32.mrb[0].mxu0
      %4204 = vmatprep.mubr.f32.mxu0 %v3326
      %4205 = vmatmul.mubr.f32.gmra.mrb[0].mxu0 %v3325
      %v4206 = vpop.f32.mrb[0].mxu0
      %v4207 = vadd.f32 %v3982, %v4206
      %v4208 = vpop.f32.mrb[0].mxu0
      %4209 = vmatprep.mubr.f32.mxu0 %v3335
      %4210 = vmatmul.mubr.f32.gmra.mrb[0].mxu0 %v3334
      %v4211 = vpop.f32.mrb[0].mxu0
      %v4212 = vadd.f32 %v3987, %v4211
      %v4213 = vpop.f32.mrb[0].mxu0
      %4214 = vmatprep.mubr.f32.mxu0 %v3344
      %4215 = vmatmul.mubr.f32.gmra.mrb[0].mxu0 %v3343
      %v4216 = vpop.f32.mrb[0].mxu0
      %v4217 = vadd.f32 %v3992, %v4216
      %v4218 = vpop.f32.mrb[0].mxu0
      %4219 = vmatprep.mubr.f32.mxu0 %v3353
      %4220 = vmatmul.mubr.f32.gmra.mrb[0].mxu0 %v3352
      %v4221 = vpop.f32.mrb[0].mxu0
      %v4222 = vadd.f32 %v3997, %v4221
      %v4223 = vpop.f32.mrb[0].mxu0
      %4224 = vmatprep.mubr.f32.mxu0 %v3362
      %4225 = vmatmul.mubr.f32.gmra.mrb[0].mxu0 %v3361
      %v4226 = vpop.f32.mrb[0].mxu0
      %v4227 = vadd.f32 %v4002, %v4226
      %v4228 = vpop.f32.mrb[0].mxu0
      %4229 = vmatprep.mubr.f32.mxu0 %v3371
      %4230 = vmatmul.mubr.f32.gmra.mrb[0].mxu0 %v3370
      %v4231 = vpop.f32.mrb[0].mxu0
      %v4232 = vadd.f32 %v4007, %v4231
      %v4233 = vpop.f32.mrb[0].mxu0
      %4234 = vmatprep.mubr.f32.mxu0 %v3380
      %4235 = vmatmul.mubr.f32.gmra.mrb[0].mxu0 %v3379
      %v4236 = vpop.f32.mrb[0].mxu0
      %v4237 = vadd.f32 %v4012, %v4236
      %v4238 = vpop.f32.mrb[0].mxu0
      %4239 = vmatprep.mubr.f32.mxu0 %v3389
      %4240 = vmatmul.mubr.f32.gmra.mrb[0].mxu0 %v3388
      %v4241 = vpop.f32.mrb[0].mxu0
      %v4242 = vadd.f32 %v4017, %v4241
      %v4243 = vpop.f32.mrb[0].mxu0
      %4244 = vmatprep.mubr.f32.mxu0 %v3398
      %4245 = vmatmul.mubr.f32.gmra.mrb[0].mxu0 %v3397
      %v4246 = vpop.f32.mrb[0].mxu0
      %v4247 = vadd.f32 %v4022, %v4246
      %v4248 = vpop.f32.mrb[0].mxu0
      %4249 = vmatprep.mubr.f32.mxu0 %v3407
      %4250 = vmatmul.mubr.f32.gmra.mrb[0].mxu0 %v3406
      %v4251 = vpop.f32.mrb[0].mxu0
      %v4252 = vadd.f32 %v4027, %v4251
      %v4253 = vpop.f32.mrb[0].mxu0
      %4254 = vmatprep.mubr.f32.mxu0 %v3416
      %4255 = vmatmul.mubr.f32.gmra.mrb[0].mxu0 %v3415
      %v4256 = vpop.f32.mrb[0].mxu0
      %v4257 = vadd.f32 %v4032, %v4256
      %v4258 = vpop.f32.mrb[0].mxu0
      %4259 = vmatprep.mubr.f32.mxu0 %v3425
      %4260 = vmatmul.mubr.f32.gmra.mrb[0].mxu0 %v3424
      %v4261 = vpop.f32.mrb[0].mxu0
      %v4262 = vadd.f32 %v4037, %v4261
      %v4263 = vpop.f32.mrb[0].mxu0
      %4264 = vmatprep.mubr.f32.mxu0 %v3434
      %4265 = vmatmul.mubr.f32.gmra.mrb[0].mxu0 %v3433
      %v4266 = vpop.f32.mrb[0].mxu0
      %v4267 = vadd.f32 %v4042, %v4266
      %v4268 = vpop.f32.mrb[0].mxu0
      %4269 = vmatprep.mubr.f32.mxu0 %v3443
      %4270 = vmatmul.mubr.f32.gmra.mrb[0].mxu0 %v3442
      %v4271 = vpop.f32.mrb[0].mxu0
      %v4272 = vadd.f32 %v4047, %v4271
      %v4273 = vpop.f32.mrb[0].mxu0
      %4274 = vmatprep.mubr.f32.mxu0 %v3452
      %4275 = vmatmul.mubr.f32.gmra.mrb[0].mxu0 %v3451
      %v4276 = vpop.f32.mrb[0].mxu0
      %v4277 = vadd.f32 %v4052, %v4276
      %v4278 = vpop.f32.mrb[0].mxu0
      %4279 = vmatprep.mubr.f32.mxu0 %v3461
      %4280 = vmatmul.mubr.f32.gmra.mrb[0].mxu0 %v3460
      %v4281 = vpop.f32.mrb[0].mxu0
      %v4282 = vadd.f32 %v4057, %v4281
      %v4283 = vpop.f32.mrb[0].mxu0
      %4284 = vdwg.mxu0
      %4285 = vmatprep.subr.mxu0 0.0
      %4286 = vmatpush1.msra.mxu0 %v3562
      %4287 = vmatprep.subr.mxu0 0.0
      %4288 = vmatpush1.msra.mxu0 %v3563
      %4289 = vmatprep.subr.mxu0 0.0
      %4290 = vmatpush1.msra.mxu0 %v3564
      %4291 = vmatprep.subr.mxu0 0.0
      %4292 = vmatpush1.msra.mxu0 %v3565
      %4293 = vmatprep.subr.mxu0 0.0
      %4294 = vmatpush1.msra.mxu0 %v3566
      %4295 = vmatprep.subr.mxu0 0.0
      %4296 = vmatpush1.msra.mxu0 %v3567
      %4297 = vmatprep.subr.mxu0 0.0
      %4298 = vmatpush1.msra.mxu0 %v3568
      %4299 = vmatprep.subr.mxu0 0.0
      %4300 = vmatpush1.msra.mxu0 %v3569
      %4301 = vmatprep.subr.mxu0 0.0
      %4302 = vmatpush1.msra.mxu0 %v3570
      %4303 = vmatprep.subr.mxu0 0.0
      %4304 = vmatpush1.msra.mxu0 %v3571
      %4305 = vmatprep.subr.mxu0 0.0
      %4306 = vmatpush1.msra.mxu0 %v3572
      %4307 = vmatprep.subr.mxu0 0.0
      %4308 = vmatpush1.msra.mxu0 %v3573
      %4309 = vmatprep.subr.mxu0 0.0
      %4310 = vmatpush1.msra.mxu0 %v3574
      %4311 = vmatprep.subr.mxu0 0.0
      %4312 = vmatpush1.msra.mxu0 %v3575
      %4313 = vmatprep.subr.mxu0 0.0
      %4314 = vmatpush1.msra.mxu0 %v3576
      %4315 = vmatprep.subr.mxu0 0.0
      %4316 = vmatpush1.msra.mxu0 %v3577
      %4317 = vmatprep.subr.mxu0 0.0
      %4318 = vmatpush1.msra.mxu0 %v3578
      %4319 = vmatprep.subr.mxu0 0.0
      %4320 = vmatpush1.msra.mxu0 %v3579
      %4321 = vmatprep.subr.mxu0 0.0
      %4322 = vmatpush1.msra.mxu0 %v3580
      %4323 = vmatprep.subr.mxu0 0.0
      %4324 = vmatpush1.msra.mxu0 %v3581
      %4325 = vmatprep.subr.mxu0 0.0
      %4326 = vmatpush1.msra.mxu0 %v3582
      %4327 = vmatprep.subr.mxu0 0.0
      %4328 = vmatpush1.msra.mxu0 %v3583
      %4329 = vmatprep.subr.mxu0 0.0
      %4330 = vmatpush1.msra.mxu0 %v3584
      %4331 = vmatprep.subr.mxu0 0.0
      %4332 = vmatpush1.msra.mxu0 %v3585
      %4333 = vmatprep.subr.mxu0 0.0
      %4334 = vmatpush1.msra.mxu0 %v3586
      %4335 = vmatprep.subr.mxu0 0.0
      %4336 = vmatpush1.msra.mxu0 %v3587
      %4337 = vmatprep.subr.mxu0 0.0
      %4338 = vmatpush1.msra.mxu0 %v3588
      %4339 = vmatprep.subr.mxu0 0.0
      %4340 = vmatpush1.msra.mxu0 %v3589
      %4341 = vmatprep.subr.mxu0 0.0
      %4342 = vmatpush1.msra.mxu0 %v3590
      %4343 = vmatprep.subr.mxu0 0.0
      %4344 = vmatpush1.msra.mxu0 %v3591
      %4345 = vmatprep.subr.mxu0 0.0
      %4346 = vmatpush1.msra.mxu0 %v3592
      %4347 = vmatprep.subr.mxu0 0.0
      %4348 = vmatpush1.msra.mxu0 %v3593
      %4349 = vmatprep.mubr.f32.mxu0 %v3184
      %4350 = vmatmul.mubr.f32.gmra.mrb[0].mxu0 %v3183
      %v4351 = vpop.f32.mrb[0].mxu0
      %v4352 = vadd.f32 %v4127, %v4351
      %v4353 = vpop.f32.mrb[0].mxu0
      %4354 = vmatprep.mubr.f32.mxu0 %v3193
      %4355 = vmatmul.mubr.f32.gmra.mrb[0].mxu0 %v3192
      %v4356 = vpop.f32.mrb[0].mxu0
      %v4357 = vadd.f32 %v4132, %v4356
      %v4358 = vpop.f32.mrb[0].mxu0
      %4359 = vmatprep.mubr.f32.mxu0 %v3202
      %4360 = vmatmul.mubr.f32.gmra.mrb[0].mxu0 %v3201
      %v4361 = vpop.f32.mrb[0].mxu0
      %v4362 = vadd.f32 %v4137, %v4361
      %v4363 = vpop.f32.mrb[0].mxu0
      %4364 = vmatprep.mubr.f32.mxu0 %v3211
      %4365 = vmatmul.mubr.f32.gmra.mrb[0].mxu0 %v3210
      %v4366 = vpop.f32.mrb[0].mxu0
      %v4367 = vadd.f32 %v4142, %v4366
      %v4368 = vpop.f32.mrb[0].mxu0
      %4369 = vmatprep.mubr.f32.mxu0 %v3220
      %4370 = vmatmul.mubr.f32.gmra.mrb[0].mxu0 %v3219
      %v4371 = vpop.f32.mrb[0].mxu0
      %v4372 = vadd.f32 %v4147, %v4371
      %v4373 = vpop.f32.mrb[0].mxu0
      %4374 = vmatprep.mubr.f32.mxu0 %v3229
      %4375 = vmatmul.mubr.f32.gmra.mrb[0].mxu0 %v3228
      %v4376 = vpop.f32.mrb[0].mxu0
      %v4377 = vadd.f32 %v4152, %v4376
      %v4378 = vpop.f32.mrb[0].mxu0
      %4379 = vmatprep.mubr.f32.mxu0 %v3238
      %4380 = vmatmul.mubr.f32.gmra.mrb[0].mxu0 %v3237
      %v4381 = vpop.f32.mrb[0].mxu0
      %v4382 = vadd.f32 %v4157, %v4381
      %v4383 = vpop.f32.mrb[0].mxu0
      %4384 = vmatprep.mubr.f32.mxu0 %v3247
      %4385 = vmatmul.mubr.f32.gmra.mrb[0].mxu0 %v3246
      %v4386 = vpop.f32.mrb[0].mxu0
      %v4387 = vadd.f32 %v4162, %v4386
      %v4388 = vpop.f32.mrb[0].mxu0
      %4389 = vmatprep.mubr.f32.mxu0 %v3256
      %4390 = vmatmul.mubr.f32.gmra.mrb[0].mxu0 %v3255
      %v4391 = vpop.f32.mrb[0].mxu0
      %v4392 = vadd.f32 %v4167, %v4391
      %v4393 = vpop.f32.mrb[0].mxu0
      %4394 = vmatprep.mubr.f32.mxu0 %v3265
      %4395 = vmatmul.mubr.f32.gmra.mrb[0].mxu0 %v3264
      %v4396 = vpop.f32.mrb[0].mxu0
      %v4397 = vadd.f32 %v4172, %v4396
      %v4398 = vpop.f32.mrb[0].mxu0
      %4399 = vmatprep.mubr.f32.mxu0 %v3274
      %4400 = vmatmul.mubr.f32.gmra.mrb[0].mxu0 %v3273
      %v4401 = vpop.f32.mrb[0].mxu0
      %v4402 = vadd.f32 %v4177, %v4401
      %v4403 = vpop.f32.mrb[0].mxu0
      %4404 = vmatprep.mubr.f32.mxu0 %v3283
      %4405 = vmatmul.mubr.f32.gmra.mrb[0].mxu0 %v3282
      %v4406 = vpop.f32.mrb[0].mxu0
      %v4407 = vadd.f32 %v4182, %v4406
      %v4408 = vpop.f32.mrb[0].mxu0
      %4409 = vmatprep.mubr.f32.mxu0 %v3292
      %4410 = vmatmul.mubr.f32.gmra.mrb[0].mxu0 %v3291
      %v4411 = vpop.f32.mrb[0].mxu0
      %v4412 = vadd.f32 %v4187, %v4411
      %v4413 = vpop.f32.mrb[0].mxu0
      %4414 = vmatprep.mubr.f32.mxu0 %v3301
      %4415 = vmatmul.mubr.f32.gmra.mrb[0].mxu0 %v3300
      %v4416 = vpop.f32.mrb[0].mxu0
      %v4417 = vadd.f32 %v4192, %v4416
      %v4418 = vpop.f32.mrb[0].mxu0
      %4419 = vmatprep.mubr.f32.mxu0 %v3310
      %4420 = vmatmul.mubr.f32.gmra.mrb[0].mxu0 %v3309
      %v4421 = vpop.f32.mrb[0].mxu0
      %v4422 = vadd.f32 %v4197, %v4421
      %v4423 = vpop.f32.mrb[0].mxu0
      %4424 = vmatprep.mubr.f32.mxu0 %v3319
      %4425 = vmatmul.mubr.f32.gmra.mrb[0].mxu0 %v3318
      %v4426 = vpop.f32.mrb[0].mxu0
      %v4427 = vadd.f32 %v4202, %v4426
      %v4428 = vpop.f32.mrb[0].mxu0
      %4429 = vmatprep.mubr.f32.mxu0 %v3328
      %4430 = vmatmul.mubr.f32.gmra.mrb[0].mxu0 %v3327
      %v4431 = vpop.f32.mrb[0].mxu0
      %v4432 = vadd.f32 %v4207, %v4431
      %v4433 = vpop.f32.mrb[0].mxu0
      %4434 = vmatprep.mubr.f32.mxu0 %v3337
      %4435 = vmatmul.mubr.f32.gmra.mrb[0].mxu0 %v3336
      %v4436 = vpop.f32.mrb[0].mxu0
      %v4437 = vadd.f32 %v4212, %v4436
      %v4438 = vpop.f32.mrb[0].mxu0
      %4439 = vmatprep.mubr.f32.mxu0 %v3346
      %4440 = vmatmul.mubr.f32.gmra.mrb[0].mxu0 %v3345
      %v4441 = vpop.f32.mrb[0].mxu0
      %v4442 = vadd.f32 %v4217, %v4441
      %v4443 = vpop.f32.mrb[0].mxu0
      %4444 = vmatprep.mubr.f32.mxu0 %v3355
      %4445 = vmatmul.mubr.f32.gmra.mrb[0].mxu0 %v3354
      %v4446 = vpop.f32.mrb[0].mxu0
      %v4447 = vadd.f32 %v4222, %v4446
      %v4448 = vpop.f32.mrb[0].mxu0
      %4449 = vmatprep.mubr.f32.mxu0 %v3364
      %4450 = vmatmul.mubr.f32.gmra.mrb[0].mxu0 %v3363
      %v4451 = vpop.f32.mrb[0].mxu0
      %v4452 = vadd.f32 %v4227, %v4451
      %v4453 = vpop.f32.mrb[0].mxu0
      %4454 = vmatprep.mubr.f32.mxu0 %v3373
      %4455 = vmatmul.mubr.f32.gmra.mrb[0].mxu0 %v3372
      %v4456 = vpop.f32.mrb[0].mxu0
      %v4457 = vadd.f32 %v4232, %v4456
      %v4458 = vpop.f32.mrb[0].mxu0
      %4459 = vmatprep.mubr.f32.mxu0 %v3382
      %4460 = vmatmul.mubr.f32.gmra.mrb[0].mxu0 %v3381
      %v4461 = vpop.f32.mrb[0].mxu0
      %v4462 = vadd.f32 %v4237, %v4461
      %v4463 = vpop.f32.mrb[0].mxu0
      %4464 = vmatprep.mubr.f32.mxu0 %v3391
      %4465 = vmatmul.mubr.f32.gmra.mrb[0].mxu0 %v3390
      %v4466 = vpop.f32.mrb[0].mxu0
      %v4467 = vadd.f32 %v4242, %v4466
      %v4468 = vpop.f32.mrb[0].mxu0
      %4469 = vmatprep.mubr.f32.mxu0 %v3400
      %4470 = vmatmul.mubr.f32.gmra.mrb[0].mxu0 %v3399
      %v4471 = vpop.f32.mrb[0].mxu0
      %v4472 = vadd.f32 %v4247, %v4471
      %v4473 = vpop.f32.mrb[0].mxu0
      %4474 = vmatprep.mubr.f32.mxu0 %v3409
      %4475 = vmatmul.mubr.f32.gmra.mrb[0].mxu0 %v3408
      %v4476 = vpop.f32.mrb[0].mxu0
      %v4477 = vadd.f32 %v4252, %v4476
      %v4478 = vpop.f32.mrb[0].mxu0
      %4479 = vmatprep.mubr.f32.mxu0 %v3418
      %4480 = vmatmul.mubr.f32.gmra.mrb[0].mxu0 %v3417
      %v4481 = vpop.f32.mrb[0].mxu0
      %v4482 = vadd.f32 %v4257, %v4481
      %v4483 = vpop.f32.mrb[0].mxu0
      %4484 = vmatprep.mubr.f32.mxu0 %v3427
      %4485 = vmatmul.mubr.f32.gmra.mrb[0].mxu0 %v3426
      %v4486 = vpop.f32.mrb[0].mxu0
      %v4487 = vadd.f32 %v4262, %v4486
      %v4488 = vpop.f32.mrb[0].mxu0
      %4489 = vmatprep.mubr.f32.mxu0 %v3436
      %4490 = vmatmul.mubr.f32.gmra.mrb[0].mxu0 %v3435
      %v4491 = vpop.f32.mrb[0].mxu0
      %v4492 = vadd.f32 %v4267, %v4491
      %v4493 = vpop.f32.mrb[0].mxu0
      %4494 = vmatprep.mubr.f32.mxu0 %v3445
      %4495 = vmatmul.mubr.f32.gmra.mrb[0].mxu0 %v3444
      %v4496 = vpop.f32.mrb[0].mxu0
      %v4497 = vadd.f32 %v4272, %v4496
      %v4498 = vpop.f32.mrb[0].mxu0
      %4499 = vmatprep.mubr.f32.mxu0 %v3454
      %4500 = vmatmul.mubr.f32.gmra.mrb[0].mxu0 %v3453
      %v4501 = vpop.f32.mrb[0].mxu0
      %v4502 = vadd.f32 %v4277, %v4501
      %v4503 = vpop.f32.mrb[0].mxu0
      %4504 = vmatprep.mubr.f32.mxu0 %v3463
      %4505 = vmatmul.mubr.f32.gmra.mrb[0].mxu0 %v3462
      %v4506 = vpop.f32.mrb[0].mxu0
      %v4507 = vadd.f32 %v4282, %v4506
      %v4508 = vpop.f32.mrb[0].mxu0
      %4509 = vdwg.mxu0
      %4510 = vmatprep.subr.mxu0 0.0
      %4511 = vmatpush1.msra.mxu0 %v3594
      %4512 = vmatprep.subr.mxu0 0.0
      %4513 = vmatpush1.msra.mxu0 %v3595
      %4514 = vmatprep.subr.mxu0 0.0
      %4515 = vmatpush1.msra.mxu0 %v3596
      %4516 = vmatprep.subr.mxu0 0.0
      %4517 = vmatpush1.msra.mxu0 %v3597
      %4518 = vmatprep.subr.mxu0 0.0
      %4519 = vmatpush1.msra.mxu0 %v3598
      %4520 = vmatprep.subr.mxu0 0.0
      %4521 = vmatpush1.msra.mxu0 %v3599
      %4522 = vmatprep.subr.mxu0 0.0
      %4523 = vmatpush1.msra.mxu0 %v3600
      %4524 = vmatprep.subr.mxu0 0.0
      %4525 = vmatpush1.msra.mxu0 %v3601
      %4526 = vmatprep.subr.mxu0 0.0
      %4527 = vmatpush1.msra.mxu0 %v3602
      %4528 = vmatprep.subr.mxu0 0.0
      %4529 = vmatpush1.msra.mxu0 %v3603
      %4530 = vmatprep.subr.mxu0 0.0
      %4531 = vmatpush1.msra.mxu0 %v3604
      %4532 = vmatprep.subr.mxu0 0.0
      %4533 = vmatpush1.msra.mxu0 %v3605
      %4534 = vmatprep.subr.mxu0 0.0
      %4535 = vmatpush1.msra.mxu0 %v3606
      %4536 = vmatprep.subr.mxu0 0.0
      %4537 = vmatpush1.msra.mxu0 %v3607
      %4538 = vmatprep.subr.mxu0 0.0
      %4539 = vmatpush1.msra.mxu0 %v3608
      %4540 = vmatprep.subr.mxu0 0.0
      %4541 = vmatpush1.msra.mxu0 %v3609
      %4542 = vmatprep.subr.mxu0 0.0
      %4543 = vmatpush1.msra.mxu0 0.0
      %4544 = vmatprep.subr.mxu0 0.0
      %4545 = vmatpush1.msra.mxu0 0.0
      %4546 = vmatprep.subr.mxu0 0.0
      %4547 = vmatpush1.msra.mxu0 0.0
      %4548 = vmatprep.subr.mxu0 0.0
      %4549 = vmatpush1.msra.mxu0 0.0
      %4550 = vmatprep.subr.mxu0 0.0
      %4551 = vmatpush1.msra.mxu0 0.0
      %4552 = vmatprep.subr.mxu0 0.0
      %4553 = vmatpush1.msra.mxu0 0.0
      %4554 = vmatprep.subr.mxu0 0.0
      %4555 = vmatpush1.msra.mxu0 0.0
      %4556 = vmatprep.subr.mxu0 0.0
      %4557 = vmatpush1.msra.mxu0 0.0
      %4558 = vmatprep.subr.mxu0 0.0
      %4559 = vmatpush1.msra.mxu0 0.0
      %4560 = vmatprep.subr.mxu0 0.0
      %4561 = vmatpush1.msra.mxu0 0.0
      %4562 = vmatprep.subr.mxu0 0.0
      %4563 = vmatpush1.msra.mxu0 0.0
      %4564 = vmatprep.subr.mxu0 0.0
      %4565 = vmatpush1.msra.mxu0 0.0
      %4566 = vmatprep.subr.mxu0 0.0
      %4567 = vmatpush1.msra.mxu0 0.0
      %4568 = vmatprep.subr.mxu0 0.0
      %4569 = vmatpush1.msra.mxu0 0.0
      %4570 = vmatprep.subr.mxu0 0.0
      %4571 = vmatpush1.msra.mxu0 0.0
      %4572 = vmatprep.subr.mxu0 0.0
      %4573 = vmatpush1.msra.mxu0 0.0
      %4574 = vmatprep.mubr.f32.mxu0 0.0
      %4575 = vmatmul.mubr.f32.gmra.mrb[0].mxu0 %v3185
      %v4576 = vpop.f32.mrb[0].mxu0
      %v4577 = vadd.f32 %v4352, %v4576
      %v4578 = vpop.f32.mrb[0].mxu0
      %4579 = vmatprep.mubr.f32.mxu0 0.0
      %4580 = vmatmul.mubr.f32.gmra.mrb[0].mxu0 %v3194
      %v4581 = vpop.f32.mrb[0].mxu0
      %v4582 = vadd.f32 %v4357, %v4581
      %v4583 = vpop.f32.mrb[0].mxu0
      %4584 = vmatprep.mubr.f32.mxu0 0.0
      %4585 = vmatmul.mubr.f32.gmra.mrb[0].mxu0 %v3203
      %v4586 = vpop.f32.mrb[0].mxu0
      %v4587 = vadd.f32 %v4362, %v4586
      %v4588 = vpop.f32.mrb[0].mxu0
      %4589 = vmatprep.mubr.f32.mxu0 0.0
      %4590 = vmatmul.mubr.f32.gmra.mrb[0].mxu0 %v3212
      %v4591 = vpop.f32.mrb[0].mxu0
      %v4592 = vadd.f32 %v4367, %v4591
      %v4593 = vpop.f32.mrb[0].mxu0
      %4594 = vmatprep.mubr.f32.mxu0 0.0
      %4595 = vmatmul.mubr.f32.gmra.mrb[0].mxu0 %v3221
      %v4596 = vpop.f32.mrb[0].mxu0
      %v4597 = vadd.f32 %v4372, %v4596
      %v4598 = vpop.f32.mrb[0].mxu0
      %4599 = vmatprep.mubr.f32.mxu0 0.0
      %4600 = vmatmul.mubr.f32.gmra.mrb[0].mxu0 %v3230
      %v4601 = vpop.f32.mrb[0].mxu0
      %v4602 = vadd.f32 %v4377, %v4601
      %v4603 = vpop.f32.mrb[0].mxu0
      %4604 = vmatprep.mubr.f32.mxu0 0.0
      %4605 = vmatmul.mubr.f32.gmra.mrb[0].mxu0 %v3239
      %v4606 = vpop.f32.mrb[0].mxu0
      %v4607 = vadd.f32 %v4382, %v4606
      %v4608 = vpop.f32.mrb[0].mxu0
      %4609 = vmatprep.mubr.f32.mxu0 0.0
      %4610 = vmatmul.mubr.f32.gmra.mrb[0].mxu0 %v3248
      %v4611 = vpop.f32.mrb[0].mxu0
      %v4612 = vadd.f32 %v4387, %v4611
      %v4613 = vpop.f32.mrb[0].mxu0
      %4614 = vmatprep.mubr.f32.mxu0 0.0
      %4615 = vmatmul.mubr.f32.gmra.mrb[0].mxu0 %v3257
      %v4616 = vpop.f32.mrb[0].mxu0
      %v4617 = vadd.f32 %v4392, %v4616
      %v4618 = vpop.f32.mrb[0].mxu0
      %4619 = vmatprep.mubr.f32.mxu0 0.0
      %4620 = vmatmul.mubr.f32.gmra.mrb[0].mxu0 %v3266
      %v4621 = vpop.f32.mrb[0].mxu0
      %v4622 = vadd.f32 %v4397, %v4621
      %v4623 = vpop.f32.mrb[0].mxu0
      %4624 = vmatprep.mubr.f32.mxu0 0.0
      %4625 = vmatmul.mubr.f32.gmra.mrb[0].mxu0 %v3275
      %v4626 = vpop.f32.mrb[0].mxu0
      %v4627 = vadd.f32 %v4402, %v4626
      %v4628 = vpop.f32.mrb[0].mxu0
      %4629 = vmatprep.mubr.f32.mxu0 0.0
      %4630 = vmatmul.mubr.f32.gmra.mrb[0].mxu0 %v3284
      %v4631 = vpop.f32.mrb[0].mxu0
      %v4632 = vadd.f32 %v4407, %v4631
      %v4633 = vpop.f32.mrb[0].mxu0
      %4634 = vmatprep.mubr.f32.mxu0 0.0
      %4635 = vmatmul.mubr.f32.gmra.mrb[0].mxu0 %v3293
      %v4636 = vpop.f32.mrb[0].mxu0
      %v4637 = vadd.f32 %v4412, %v4636
      %v4638 = vpop.f32.mrb[0].mxu0
      %4639 = vmatprep.mubr.f32.mxu0 0.0
      %4640 = vmatmul.mubr.f32.gmra.mrb[0].mxu0 %v3302
      %v4641 = vpop.f32.mrb[0].mxu0
      %v4642 = vadd.f32 %v4417, %v4641
      %v4643 = vpop.f32.mrb[0].mxu0
      %4644 = vmatprep.mubr.f32.mxu0 0.0
      %4645 = vmatmul.mubr.f32.gmra.mrb[0].mxu0 %v3311
      %v4646 = vpop.f32.mrb[0].mxu0
      %v4647 = vadd.f32 %v4422, %v4646
      %v4648 = vpop.f32.mrb[0].mxu0
      %4649 = vmatprep.mubr.f32.mxu0 0.0
      %4650 = vmatmul.mubr.f32.gmra.mrb[0].mxu0 %v3320
      %v4651 = vpop.f32.mrb[0].mxu0
      %v4652 = vadd.f32 %v4427, %v4651
      %v4653 = vpop.f32.mrb[0].mxu0
      %4654 = vmatprep.mubr.f32.mxu0 0.0
      %4655 = vmatmul.mubr.f32.gmra.mrb[0].mxu0 %v3329
      %v4656 = vpop.f32.mrb[0].mxu0
      %v4657 = vadd.f32 %v4432, %v4656
      %v4658 = vpop.f32.mrb[0].mxu0
      %4659 = vmatprep.mubr.f32.mxu0 0.0
      %4660 = vmatmul.mubr.f32.gmra.mrb[0].mxu0 %v3338
      %v4661 = vpop.f32.mrb[0].mxu0
      %v4662 = vadd.f32 %v4437, %v4661
      %v4663 = vpop.f32.mrb[0].mxu0
      %4664 = vmatprep.mubr.f32.mxu0 0.0
      %4665 = vmatmul.mubr.f32.gmra.mrb[0].mxu0 %v3347
      %v4666 = vpop.f32.mrb[0].mxu0
      %v4667 = vadd.f32 %v4442, %v4666
      %v4668 = vpop.f32.mrb[0].mxu0
      %4669 = vmatprep.mubr.f32.mxu0 0.0
      %4670 = vmatmul.mubr.f32.gmra.mrb[0].mxu0 %v3356
      %v4671 = vpop.f32.mrb[0].mxu0
      %v4672 = vadd.f32 %v4447, %v4671
      %v4673 = vpop.f32.mrb[0].mxu0
      %4674 = vmatprep.mubr.f32.mxu0 0.0
      %4675 = vmatmul.mubr.f32.gmra.mrb[0].mxu0 %v3365
      %v4676 = vpop.f32.mrb[0].mxu0
      %v4677 = vadd.f32 %v4452, %v4676
      %v4678 = vpop.f32.mrb[0].mxu0
      %4679 = vmatprep.mubr.f32.mxu0 0.0
      %4680 = vmatmul.mubr.f32.gmra.mrb[0].mxu0 %v3374
      %v4681 = vpop.f32.mrb[0].mxu0
      %v4682 = vadd.f32 %v4457, %v4681
      %v4683 = vpop.f32.mrb[0].mxu0
      %4684 = vmatprep.mubr.f32.mxu0 0.0
      %4685 = vmatmul.mubr.f32.gmra.mrb[0].mxu0 %v3383
      %v4686 = vpop.f32.mrb[0].mxu0
      %v4687 = vadd.f32 %v4462, %v4686
      %v4688 = vpop.f32.mrb[0].mxu0
      %4689 = vmatprep.mubr.f32.mxu0 0.0
      %4690 = vmatmul.mubr.f32.gmra.mrb[0].mxu0 %v3392
      %v4691 = vpop.f32.mrb[0].mxu0
      %v4692 = vadd.f32 %v4467, %v4691
      %v4693 = vpop.f32.mrb[0].mxu0
      %4694 = vmatprep.mubr.f32.mxu0 0.0
      %4695 = vmatmul.mubr.f32.gmra.mrb[0].mxu0 %v3401
      %v4696 = vpop.f32.mrb[0].mxu0
      %v4697 = vadd.f32 %v4472, %v4696
      %v4698 = vpop.f32.mrb[0].mxu0
      %4699 = vmatprep.mubr.f32.mxu0 0.0
      %4700 = vmatmul.mubr.f32.gmra.mrb[0].mxu0 %v3410
      %v4701 = vpop.f32.mrb[0].mxu0
      %v4702 = vadd.f32 %v4477, %v4701
      %v4703 = vpop.f32.mrb[0].mxu0
      %4704 = vmatprep.mubr.f32.mxu0 0.0
      %4705 = vmatmul.mubr.f32.gmra.mrb[0].mxu0 %v3419
      %v4706 = vpop.f32.mrb[0].mxu0
      %v4707 = vadd.f32 %v4482, %v4706
      %v4708 = vpop.f32.mrb[0].mxu0
      %4709 = vmatprep.mubr.f32.mxu0 0.0
      %4710 = vmatmul.mubr.f32.gmra.mrb[0].mxu0 %v3428
      %v4711 = vpop.f32.mrb[0].mxu0
      %v4712 = vadd.f32 %v4487, %v4711
      %v4713 = vpop.f32.mrb[0].mxu0
      %4714 = vmatprep.mubr.f32.mxu0 0.0
      %4715 = vmatmul.mubr.f32.gmra.mrb[0].mxu0 %v3437
      %v4716 = vpop.f32.mrb[0].mxu0
      %v4717 = vadd.f32 %v4492, %v4716
      %v4718 = vpop.f32.mrb[0].mxu0
      %4719 = vmatprep.mubr.f32.mxu0 0.0
      %4720 = vmatmul.mubr.f32.gmra.mrb[0].mxu0 %v3446
      %v4721 = vpop.f32.mrb[0].mxu0
      %v4722 = vadd.f32 %v4497, %v4721
      %v4723 = vpop.f32.mrb[0].mxu0
      %4724 = vmatprep.mubr.f32.mxu0 0.0
      %4725 = vmatmul.mubr.f32.gmra.mrb[0].mxu0 %v3455
      %v4726 = vpop.f32.mrb[0].mxu0
      %v4727 = vadd.f32 %v4502, %v4726
      %v4728 = vpop.f32.mrb[0].mxu0
      %4729 = vmatprep.mubr.f32.mxu0 0.0
      %4730 = vmatmul.mubr.f32.gmra.mrb[0].mxu0 %v3464
      %v4731 = vpop.f32.mrb[0].mxu0
      %v4732 = vadd.f32 %v4507, %v4731
      %v4733 = vpop.f32.mrb[0].mxu0
      %4734 = vdwg.mxu0
      %s4735 = scalar_lea.vmem %s2, 1
      %v4736 = vld [vmem:[%s4735] sm:$0x1]
      %v4738 = vlaneseq
      %v4739 = vshrl.u32 %v4738, 7
      %v4740 = vsub.s32 0, %v4739
      %v4741 = vrot.slane %v4736, %v4740
      %v4743 = vmul.f32 %v4577, %v4741
      %v4744 = vmul.f32 %v4582, %v4741
      %v4745 = vmul.f32 %v4587, %v4741
      %v4746 = vmul.f32 %v4592, %v4741
      %v4747 = vmul.f32 %v4597, %v4741
      %v4748 = vmul.f32 %v4602, %v4741
      %v4749 = vmul.f32 %v4607, %v4741
      %v4750 = vmul.f32 %v4612, %v4741
      %v4751 = vmul.f32 %v4617, %v4741
      %v4752 = vmul.f32 %v4622, %v4741
      %v4753 = vmul.f32 %v4627, %v4741
      %v4754 = vmul.f32 %v4632, %v4741
      %v4755 = vmul.f32 %v4637, %v4741
      %v4756 = vmul.f32 %v4642, %v4741
      %v4757 = vmul.f32 %v4647, %v4741
      %v4758 = vmul.f32 %v4652, %v4741
      %v4759 = vmul.f32 %v4657, %v4741
      %v4760 = vmul.f32 %v4662, %v4741
      %v4761 = vmul.f32 %v4667, %v4741
      %v4762 = vmul.f32 %v4672, %v4741
      %v4763 = vmul.f32 %v4677, %v4741
      %v4764 = vmul.f32 %v4682, %v4741
      %v4765 = vmul.f32 %v4687, %v4741
      %v4766 = vmul.f32 %v4692, %v4741
      %v4767 = vmul.f32 %v4697, %v4741
      %v4768 = vmul.f32 %v4702, %v4741
      %v4769 = vmul.f32 %v4707, %v4741
      %v4770 = vmul.f32 %v4712, %v4741
      %v4771 = vmul.f32 %v4717, %v4741
      %v4772 = vmul.f32 %v4722, %v4741
      %v4773 = vmul.f32 %v4727, %v4741
      %v4774 = vmul.f32 %v4732, %v4741
      %s4775 = scalar_lea.vmem %s3, 1
      %v4776 = vld [vmem:[%s4775] sm:$0x1]
      %v4778 = vlaneseq
      %v4779 = vshrl.u32 %v4778, 7
      %v4780 = vsub.s32 0, %v4779
      %v4781 = vrot.slane %v4776, %v4780
      %v4783 = vadd.f32 %v4743, %v4781
      %v4784 = vadd.f32 %v4744, %v4781
      %v4785 = vadd.f32 %v4745, %v4781
      %v4786 = vadd.f32 %v4746, %v4781
      %v4787 = vadd.f32 %v4747, %v4781
      %v4788 = vadd.f32 %v4748, %v4781
      %v4789 = vadd.f32 %v4749, %v4781
      %v4790 = vadd.f32 %v4750, %v4781
      %v4791 = vadd.f32 %v4751, %v4781
      %v4792 = vadd.f32 %v4752, %v4781
      %v4793 = vadd.f32 %v4753, %v4781
      %v4794 = vadd.f32 %v4754, %v4781
      %v4795 = vadd.f32 %v4755, %v4781
      %v4796 = vadd.f32 %v4756, %v4781
      %v4797 = vadd.f32 %v4757, %v4781
      %v4798 = vadd.f32 %v4758, %v4781
      %v4799 = vadd.f32 %v4759, %v4781
      %v4800 = vadd.f32 %v4760, %v4781
      %v4801 = vadd.f32 %v4761, %v4781
      %v4802 = vadd.f32 %v4762, %v4781
      %v4803 = vadd.f32 %v4763, %v4781
      %v4804 = vadd.f32 %v4764, %v4781
      %v4805 = vadd.f32 %v4765, %v4781
      %v4806 = vadd.f32 %v4766, %v4781
      %v4807 = vadd.f32 %v4767, %v4781
      %v4808 = vadd.f32 %v4768, %v4781
      %v4809 = vadd.f32 %v4769, %v4781
      %v4810 = vadd.f32 %v4770, %v4781
      %v4811 = vadd.f32 %v4771, %v4781
      %v4812 = vadd.f32 %v4772, %v4781
      %v4813 = vadd.f32 %v4773, %v4781
      %v4814 = vadd.f32 %v4774, %v4781
      %v4815 = vmax.f32 %v4783, 0.0
      %v4816 = vmax.f32 %v4784, 0.0
      %v4817 = vmax.f32 %v4785, 0.0
      %v4818 = vmax.f32 %v4786, 0.0
      %v4819 = vmax.f32 %v4787, 0.0
      %v4820 = vmax.f32 %v4788, 0.0
      %v4821 = vmax.f32 %v4789, 0.0
      %v4822 = vmax.f32 %v4790, 0.0
      %v4823 = vmax.f32 %v4791, 0.0
      %v4824 = vmax.f32 %v4792, 0.0
      %v4825 = vmax.f32 %v4793, 0.0
      %v4826 = vmax.f32 %v4794, 0.0
      %v4827 = vmax.f32 %v4795, 0.0
      %v4828 = vmax.f32 %v4796, 0.0
      %v4829 = vmax.f32 %v4797, 0.0
      %v4830 = vmax.f32 %v4798, 0.0
      %v4831 = vmax.f32 %v4799, 0.0
      %v4832 = vmax.f32 %v4800, 0.0
      %v4833 = vmax.f32 %v4801, 0.0
      %v4834 = vmax.f32 %v4802, 0.0
      %v4835 = vmax.f32 %v4803, 0.0
      %v4836 = vmax.f32 %v4804, 0.0
      %v4837 = vmax.f32 %v4805, 0.0
      %v4838 = vmax.f32 %v4806, 0.0
      %v4839 = vmax.f32 %v4807, 0.0
      %v4840 = vmax.f32 %v4808, 0.0
      %v4841 = vmax.f32 %v4809, 0.0
      %v4842 = vmax.f32 %v4810, 0.0
      %v4843 = vmax.f32 %v4811, 0.0
      %v4844 = vmax.f32 %v4812, 0.0
      %v4845 = vmax.f32 %v4813, 0.0
      %v4846 = vmax.f32 %v4814, 0.0
      %4847 = vst [vmem:[%s2567 + $0x8] sm:$0xff] %v4815
      %4848 = vst [vmem:[%s2567 + $0x10] sm:$0xff] %v4816
      %4849 = vst [vmem:[%s2567 + $0x28] sm:$0xff] %v4817
      %4850 = vst [vmem:[%s2567 + $0x30] sm:$0xff] %v4818
      %4851 = vst [vmem:[%s2567 + $0x48] sm:$0xff] %v4819
      %4852 = vst [vmem:[%s2567 + $0x50] sm:$0xff] %v4820
      %4853 = vst [vmem:[%s2567 + $0x68] sm:$0xff] %v4821
      %4854 = vst [vmem:[%s2567 + $0x70] sm:$0xff] %v4822
      %4855 = vst [vmem:[%s2567 + $0x88] sm:$0xff] %v4823
      %4856 = vst [vmem:[%s2567 + $0x90] sm:$0xff] %v4824
      %4857 = vst [vmem:[%s2567 + $0xa8] sm:$0xff] %v4825
      %4858 = vst [vmem:[%s2567 + $0xb0] sm:$0xff] %v4826
      %4859 = vst [vmem:[%s2567 + $0xc8] sm:$0xff] %v4827
      %4860 = vst [vmem:[%s2567 + $0xd0] sm:$0xff] %v4828
      %4861 = vst [vmem:[%s2567 + $0xe8] sm:$0xff] %v4829
      %4862 = vst [vmem:[%s2567 + $0xf0] sm:$0xff] %v4830
      %4863 = vst [vmem:[%s2567 + $0x108] sm:$0xff] %v4831
      %4864 = vst [vmem:[%s2567 + $0x110] sm:$0xff] %v4832
      %4865 = vst [vmem:[%s2567 + $0x128] sm:$0xff] %v4833
      %4866 = vst [vmem:[%s2567 + $0x130] sm:$0xff] %v4834
      %4867 = vst [vmem:[%s2567 + $0x148] sm:$0xff] %v4835
      %4868 = vst [vmem:[%s2567 + $0x150] sm:$0xff] %v4836
      %4869 = vst [vmem:[%s2567 + $0x168] sm:$0xff] %v4837
      %4870 = vst [vmem:[%s2567 + $0x170] sm:$0xff] %v4838
      %4871 = vst [vmem:[%s2567 + $0x188] sm:$0xff] %v4839
      %4872 = vst [vmem:[%s2567 + $0x190] sm:$0xff] %v4840
      %4873 = vst [vmem:[%s2567 + $0x1a8] sm:$0xff] %v4841
      %4874 = vst [vmem:[%s2567 + $0x1b0] sm:$0xff] %v4842
      %4875 = vst [vmem:[%s2567 + $0x1c8] sm:$0xff] %v4843
      %4876 = vst [vmem:[%s2567 + $0x1d0] sm:$0xff] %v4844
      %4877 = vst [vmem:[%s2567 + $0x1e8] sm:$0xff] %v4845
      %4878 = vst [vmem:[%s2567 + $0x1f0] sm:$0xff] %v4846
      %v4879 = vld [vmem:[#allocation3 + $0x7] sm:$0xff]
      %v4880 = vld [vmem:[#allocation3 + $0xf] sm:$0xff]
      %v4881 = vld [vmem:[#allocation3 + $0x27] sm:$0xff]
      %v4882 = vld [vmem:[#allocation3 + $0x2f] sm:$0xff]
      %v4883 = vld [vmem:[#allocation3 + $0x47] sm:$0xff]
      %v4884 = vld [vmem:[#allocation3 + $0x4f] sm:$0xff]
      %v4885 = vld [vmem:[#allocation3 + $0x67] sm:$0xff]
      %v4886 = vld [vmem:[#allocation3 + $0x6f] sm:$0xff]
      %v4887 = vld [vmem:[#allocation3 + $0x87] sm:$0xff]
      %v4888 = vld [vmem:[#allocation3 + $0x8f] sm:$0xff]
      %v4889 = vld [vmem:[#allocation3 + $0xa7] sm:$0xff]
      %v4890 = vld [vmem:[#allocation3 + $0xaf] sm:$0xff]
      %v4891 = vld [vmem:[#allocation3 + $0xc7] sm:$0xff]
      %v4892 = vld [vmem:[#allocation3 + $0xcf] sm:$0xff]
      %v4893 = vld [vmem:[#allocation3 + $0xe7] sm:$0xff]
      %v4894 = vld [vmem:[#allocation3 + $0xef] sm:$0xff]
      %v4895 = vld [vmem:[#allocation3 + $0x107] sm:$0xff]
      %v4896 = vld [vmem:[#allocation3 + $0x10f] sm:$0xff]
      %v4897 = vld [vmem:[#allocation3 + $0x127] sm:$0xff]
      %v4898 = vld [vmem:[#allocation3 + $0x12f] sm:$0xff]
      %v4899 = vld [vmem:[#allocation3 + $0x147] sm:$0xff]
      %v4900 = vld [vmem:[#allocation3 + $0x14f] sm:$0xff]
      %v4901 = vld [vmem:[#allocation3 + $0x167] sm:$0xff]
      %v4902 = vld [vmem:[#allocation3 + $0x16f] sm:$0xff]
      %v4903 = vld [vmem:[#allocation3 + $0x187] sm:$0xff]
      %v4904 = vld [vmem:[#allocation3 + $0x18f] sm:$0xff]
      %v4905 = vld [vmem:[#allocation3 + $0x1a7] sm:$0xff]
      %v4906 = vld [vmem:[#allocation3 + $0x1af] sm:$0xff]
      %v4907 = vld [vmem:[#allocation3 + $0x1c7] sm:$0xff]
      %v4908 = vld [vmem:[#allocation3 + $0x1cf] sm:$0xff]
      %v4909 = vld [vmem:[#allocation3 + $0x1e7] sm:$0xff]
      %v4910 = vld [vmem:[#allocation3 + $0x1ef] sm:$0xff]
      %4911 = vst [vmem:[#allocation2] sm:$0xff] %v4879
      %4912 = vst [vmem:[#allocation2 + $0x48] sm:$0xff] %v4880
      %4913 = vst [vmem:[#allocation2 + $0x90] sm:$0xff] %v4881
      %4914 = vst [vmem:[#allocation2 + $0xd8] sm:$0xff] %v4882
      %4915 = vst [vmem:[#allocation2 + $0x120] sm:$0xff] %v4883
      %4916 = vst [vmem:[#allocation2 + $0x168] sm:$0xff] %v4884
      %4917 = vst [vmem:[#allocation2 + $0x1b0] sm:$0xff] %v4885
      %4918 = vst [vmem:[#allocation2 + $0x1f8] sm:$0xff] %v4886
      %4919 = vst [vmem:[#allocation2 + $0x240] sm:$0xff] %v4887
      %4920 = vst [vmem:[#allocation2 + $0x288] sm:$0xff] %v4888
      %4921 = vst [vmem:[#allocation2 + $0x2d0] sm:$0xff] %v4889
      %4922 = vst [vmem:[#allocation2 + $0x318] sm:$0xff] %v4890
      %4923 = vst [vmem:[#allocation2 + $0x360] sm:$0xff] %v4891
      %4924 = vst [vmem:[#allocation2 + $0x3a8] sm:$0xff] %v4892
      %4925 = vst [vmem:[#allocation2 + $0x3f0] sm:$0xff] %v4893
      %4926 = vst [vmem:[#allocation2 + $0x438] sm:$0xff] %v4894
      %4927 = vst [vmem:[#allocation2 + $0x480] sm:$0xff] %v4895
      %4928 = vst [vmem:[#allocation2 + $0x4c8] sm:$0xff] %v4896
      %4929 = vst [vmem:[#allocation2 + $0x510] sm:$0xff] %v4897
      %4930 = vst [vmem:[#allocation2 + $0x558] sm:$0xff] %v4898
      %4931 = vst [vmem:[#allocation2 + $0x5a0] sm:$0xff] %v4899
      %4932 = vst [vmem:[#allocation2 + $0x5e8] sm:$0xff] %v4900
      %4933 = vst [vmem:[#allocation2 + $0x630] sm:$0xff] %v4901
      %4934 = vst [vmem:[#allocation2 + $0x678] sm:$0xff] %v4902
      %4935 = vst [vmem:[#allocation2 + $0x6c0] sm:$0xff] %v4903
      %4936 = vst [vmem:[#allocation2 + $0x708] sm:$0xff] %v4904
      %4937 = vst [vmem:[#allocation2 + $0x750] sm:$0xff] %v4905
      %4938 = vst [vmem:[#allocation2 + $0x798] sm:$0xff] %v4906
      %4939 = vst [vmem:[#allocation2 + $0x7e0] sm:$0xff] %v4907
      %4940 = vst [vmem:[#allocation2 + $0x828] sm:$0xff] %v4908
      %4941 = vst [vmem:[#allocation2 + $0x870] sm:$0xff] %v4909
      %4942 = vst [vmem:[#allocation2 + $0x8b8] sm:$0xff] %v4910
      %v4943 = vld [vmem:[#allocation3 + $0x8] sm:$0xff]
      %v4944 = vld [vmem:[#allocation3 + $0x10] sm:$0xff]
      %v4945 = vld [vmem:[#allocation3 + $0x28] sm:$0xff]
      %v4946 = vld [vmem:[#allocation3 + $0x30] sm:$0xff]
      %v4947 = vld [vmem:[#allocation3 + $0x48] sm:$0xff]
      %v4948 = vld [vmem:[#allocation3 + $0x50] sm:$0xff]
      %v4949 = vld [vmem:[#allocation3 + $0x68] sm:$0xff]
      %v4950 = vld [vmem:[#allocation3 + $0x70] sm:$0xff]
      %v4951 = vld [vmem:[#allocation3 + $0x88] sm:$0xff]
      %v4952 = vld [vmem:[#allocation3 + $0x90] sm:$0xff]
      %v4953 = vld [vmem:[#allocation3 + $0xa8] sm:$0xff]
      %v4954 = vld [vmem:[#allocation3 + $0xb0] sm:$0xff]
      %v4955 = vld [vmem:[#allocation3 + $0xc8] sm:$0xff]
      %v4956 = vld [vmem:[#allocation3 + $0xd0] sm:$0xff]
      %v4957 = vld [vmem:[#allocation3 + $0xe8] sm:$0xff]
      %v4958 = vld [vmem:[#allocation3 + $0xf0] sm:$0xff]
      %v4959 = vld [vmem:[#allocation3 + $0x108] sm:$0xff]
      %v4960 = vld [vmem:[#allocation3 + $0x110] sm:$0xff]
      %v4961 = vld [vmem:[#allocation3 + $0x128] sm:$0xff]
      %v4962 = vld [vmem:[#allocation3 + $0x130] sm:$0xff]
      %v4963 = vld [vmem:[#allocation3 + $0x148] sm:$0xff]
      %v4964 = vld [vmem:[#allocation3 + $0x150] sm:$0xff]
      %v4965 = vld [vmem:[#allocation3 + $0x168] sm:$0xff]
      %v4966 = vld [vmem:[#allocation3 + $0x170] sm:$0xff]
      %v4967 = vld [vmem:[#allocation3 + $0x188] sm:$0xff]
      %v4968 = vld [vmem:[#allocation3 + $0x190] sm:$0xff]
      %v4969 = vld [vmem:[#allocation3 + $0x1a8] sm:$0xff]
      %v4970 = vld [vmem:[#allocation3 + $0x1b0] sm:$0xff]
      %v4971 = vld [vmem:[#allocation3 + $0x1c8] sm:$0xff]
      %v4972 = vld [vmem:[#allocation3 + $0x1d0] sm:$0xff]
      %v4973 = vld [vmem:[#allocation3 + $0x1e8] sm:$0xff]
      %v4974 = vld [vmem:[#allocation3 + $0x1f0] sm:$0xff]
      %4975 = vst [vmem:[#allocation2 + $0x8] sm:$0xff] %v4943
      %4976 = vst [vmem:[#allocation2 + $0x50] sm:$0xff] %v4944
      %4977 = vst [vmem:[#allocation2 + $0x98] sm:$0xff] %v4945
      %4978 = vst [vmem:[#allocation2 + $0xe0] sm:$0xff] %v4946
      %4979 = vst [vmem:[#allocation2 + $0x128] sm:$0xff] %v4947
      %4980 = vst [vmem:[#allocation2 + $0x170] sm:$0xff] %v4948
      %4981 = vst [vmem:[#allocation2 + $0x1b8] sm:$0xff] %v4949
      %4982 = vst [vmem:[#allocation2 + $0x200] sm:$0xff] %v4950
      %4983 = vst [vmem:[#allocation2 + $0x248] sm:$0xff] %v4951
      %4984 = vst [vmem:[#allocation2 + $0x290] sm:$0xff] %v4952
      %4985 = vst [vmem:[#allocation2 + $0x2d8] sm:$0xff] %v4953
      %4986 = vst [vmem:[#allocation2 + $0x320] sm:$0xff] %v4954
      %4987 = vst [vmem:[#allocation2 + $0x368] sm:$0xff] %v4955
      %4988 = vst [vmem:[#allocation2 + $0x3b0] sm:$0xff] %v4956
      %4989 = vst [vmem:[#allocation2 + $0x3f8] sm:$0xff] %v4957
      %4990 = vst [vmem:[#allocation2 + $0x440] sm:$0xff] %v4958
      %4991 = vst [vmem:[#allocation2 + $0x488] sm:$0xff] %v4959
      %4992 = vst [vmem:[#allocation2 + $0x4d0] sm:$0xff] %v4960
      %4993 = vst [vmem:[#allocation2 + $0x518] sm:$0xff] %v4961
      %4994 = vst [vmem:[#allocation2 + $0x560] sm:$0xff] %v4962
      %4995 = vst [vmem:[#allocation2 + $0x5a8] sm:$0xff] %v4963
      %4996 = vst [vmem:[#allocation2 + $0x5f0] sm:$0xff] %v4964
      %4997 = vst [vmem:[#allocation2 + $0x638] sm:$0xff] %v4965
      %4998 = vst [vmem:[#allocation2 + $0x680] sm:$0xff] %v4966
      %4999 = vst [vmem:[#allocation2 + $0x6c8] sm:$0xff] %v4967
      %5000 = vst [vmem:[#allocation2 + $0x710] sm:$0xff] %v4968
      %5001 = vst [vmem:[#allocation2 + $0x758] sm:$0xff] %v4969
      %5002 = vst [vmem:[#allocation2 + $0x7a0] sm:$0xff] %v4970
      %5003 = vst [vmem:[#allocation2 + $0x7e8] sm:$0xff] %v4971
      %5004 = vst [vmem:[#allocation2 + $0x830] sm:$0xff] %v4972
      %5005 = vst [vmem:[#allocation2 + $0x878] sm:$0xff] %v4973
      %5006 = vst [vmem:[#allocation2 + $0x8c0] sm:$0xff] %v4974
      %v5007 = vld [vmem:[#allocation3 + $0x9] sm:$0xff]
      %v5008 = vld [vmem:[#allocation3 + $0x11] sm:$0xff]
      %v5009 = vld [vmem:[#allocation3 + $0x29] sm:$0xff]
      %v5010 = vld [vmem:[#allocation3 + $0x31] sm:$0xff]
      %v5011 = vld [vmem:[#allocation3 + $0x49] sm:$0xff]
      %v5012 = vld [vmem:[#allocation3 + $0x51] sm:$0xff]
      %v5013 = vld [vmem:[#allocation3 + $0x69] sm:$0xff]
      %v5014 = vld [vmem:[#allocation3 + $0x71] sm:$0xff]
      %v5015 = vld [vmem:[#allocation3 + $0x89] sm:$0xff]
      %v5016 = vld [vmem:[#allocation3 + $0x91] sm:$0xff]
      %v5017 = vld [vmem:[#allocation3 + $0xa9] sm:$0xff]
      %v5018 = vld [vmem:[#allocation3 + $0xb1] sm:$0xff]
      %v5019 = vld [vmem:[#allocation3 + $0xc9] sm:$0xff]
      %v5020 = vld [vmem:[#allocation3 + $0xd1] sm:$0xff]
      %v5021 = vld [vmem:[#allocation3 + $0xe9] sm:$0xff]
      %v5022 = vld [vmem:[#allocation3 + $0xf1] sm:$0xff]
      %v5023 = vld [vmem:[#allocation3 + $0x109] sm:$0xff]
      %v5024 = vld [vmem:[#allocation3 + $0x111] sm:$0xff]
      %v5025 = vld [vmem:[#allocation3 + $0x129] sm:$0xff]
      %v5026 = vld [vmem:[#allocation3 + $0x131] sm:$0xff]
      %v5027 = vld [vmem:[#allocation3 + $0x149] sm:$0xff]
      %v5028 = vld [vmem:[#allocation3 + $0x151] sm:$0xff]
      %v5029 = vld [vmem:[#allocation3 + $0x169] sm:$0xff]
      %v5030 = vld [vmem:[#allocation3 + $0x171] sm:$0xff]
      %v5031 = vld [vmem:[#allocation3 + $0x189] sm:$0xff]
      %v5032 = vld [vmem:[#allocation3 + $0x191] sm:$0xff]
      %v5033 = vld [vmem:[#allocation3 + $0x1a9] sm:$0xff]
      %v5034 = vld [vmem:[#allocation3 + $0x1b1] sm:$0xff]
      %v5035 = vld [vmem:[#allocation3 + $0x1c9] sm:$0xff]
      %v5036 = vld [vmem:[#allocation3 + $0x1d1] sm:$0xff]
      %v5037 = vld [vmem:[#allocation3 + $0x1e9] sm:$0xff]
      %v5038 = vld [vmem:[#allocation3 + $0x1f1] sm:$0xff]
      %5039 = vst [vmem:[#allocation2 + $0x10] sm:$0xff] %v5007
      %5040 = vst [vmem:[#allocation2 + $0x58] sm:$0xff] %v5008
      %5041 = vst [vmem:[#allocation2 + $0xa0] sm:$0xff] %v5009
      %5042 = vst [vmem:[#allocation2 + $0xe8] sm:$0xff] %v5010
      %5043 = vst [vmem:[#allocation2 + $0x130] sm:$0xff] %v5011
      %5044 = vst [vmem:[#allocation2 + $0x178] sm:$0xff] %v5012
      %5045 = vst [vmem:[#allocation2 + $0x1c0] sm:$0xff] %v5013
      %5046 = vst [vmem:[#allocation2 + $0x208] sm:$0xff] %v5014
      %5047 = vst [vmem:[#allocation2 + $0x250] sm:$0xff] %v5015
      %5048 = vst [vmem:[#allocation2 + $0x298] sm:$0xff] %v5016
      %5049 = vst [vmem:[#allocation2 + $0x2e0] sm:$0xff] %v5017
      %5050 = vst [vmem:[#allocation2 + $0x328] sm:$0xff] %v5018
      %5051 = vst [vmem:[#allocation2 + $0x370] sm:$0xff] %v5019
      %5052 = vst [vmem:[#allocation2 + $0x3b8] sm:$0xff] %v5020
      %5053 = vst [vmem:[#allocation2 + $0x400] sm:$0xff] %v5021
      %5054 = vst [vmem:[#allocation2 + $0x448] sm:$0xff] %v5022
      %5055 = vst [vmem:[#allocation2 + $0x490] sm:$0xff] %v5023
      %5056 = vst [vmem:[#allocation2 + $0x4d8] sm:$0xff] %v5024
      %5057 = vst [vmem:[#allocation2 + $0x520] sm:$0xff] %v5025
      %5058 = vst [vmem:[#allocation2 + $0x568] sm:$0xff] %v5026
      %5059 = vst [vmem:[#allocation2 + $0x5b0] sm:$0xff] %v5027
      %5060 = vst [vmem:[#allocation2 + $0x5f8] sm:$0xff] %v5028
      %5061 = vst [vmem:[#allocation2 + $0x640] sm:$0xff] %v5029
      %5062 = vst [vmem:[#allocation2 + $0x688] sm:$0xff] %v5030
      %5063 = vst [vmem:[#allocation2 + $0x6d0] sm:$0xff] %v5031
      %5064 = vst [vmem:[#allocation2 + $0x718] sm:$0xff] %v5032
      %5065 = vst [vmem:[#allocation2 + $0x760] sm:$0xff] %v5033
      %5066 = vst [vmem:[#allocation2 + $0x7a8] sm:$0xff] %v5034
      %5067 = vst [vmem:[#allocation2 + $0x7f0] sm:$0xff] %v5035
      %5068 = vst [vmem:[#allocation2 + $0x838] sm:$0xff] %v5036
      %5069 = vst [vmem:[#allocation2 + $0x880] sm:$0xff] %v5037
      %5070 = vst [vmem:[#allocation2 + $0x8c8] sm:$0xff] %v5038
      %v5071 = vld [vmem:[%s2567 + $0x7] sm:$0xff]
      %v5072 = vld [vmem:[%s2567 + $0xf] sm:$0xff]
      %v5073 = vld [vmem:[%s2567 + $0x27] sm:$0xff]
      %v5074 = vld [vmem:[%s2567 + $0x2f] sm:$0xff]
      %v5075 = vld [vmem:[%s2567 + $0x47] sm:$0xff]
      %v5076 = vld [vmem:[%s2567 + $0x4f] sm:$0xff]
      %v5077 = vld [vmem:[%s2567 + $0x67] sm:$0xff]
      %v5078 = vld [vmem:[%s2567 + $0x6f] sm:$0xff]
      %v5079 = vld [vmem:[%s2567 + $0x87] sm:$0xff]
      %v5080 = vld [vmem:[%s2567 + $0x8f] sm:$0xff]
      %v5081 = vld [vmem:[%s2567 + $0xa7] sm:$0xff]
      %v5082 = vld [vmem:[%s2567 + $0xaf] sm:$0xff]
      %v5083 = vld [vmem:[%s2567 + $0xc7] sm:$0xff]
      %v5084 = vld [vmem:[%s2567 + $0xcf] sm:$0xff]
      %v5085 = vld [vmem:[%s2567 + $0xe7] sm:$0xff]
      %v5086 = vld [vmem:[%s2567 + $0xef] sm:$0xff]
      %v5087 = vld [vmem:[%s2567 + $0x107] sm:$0xff]
      %v5088 = vld [vmem:[%s2567 + $0x10f] sm:$0xff]
      %v5089 = vld [vmem:[%s2567 + $0x127] sm:$0xff]
      %v5090 = vld [vmem:[%s2567 + $0x12f] sm:$0xff]
      %v5091 = vld [vmem:[%s2567 + $0x147] sm:$0xff]
      %v5092 = vld [vmem:[%s2567 + $0x14f] sm:$0xff]
      %v5093 = vld [vmem:[%s2567 + $0x167] sm:$0xff]
      %v5094 = vld [vmem:[%s2567 + $0x16f] sm:$0xff]
      %v5095 = vld [vmem:[%s2567 + $0x187] sm:$0xff]
      %v5096 = vld [vmem:[%s2567 + $0x18f] sm:$0xff]
      %v5097 = vld [vmem:[%s2567 + $0x1a7] sm:$0xff]
      %v5098 = vld [vmem:[%s2567 + $0x1af] sm:$0xff]
      %v5099 = vld [vmem:[%s2567 + $0x1c7] sm:$0xff]
      %v5100 = vld [vmem:[%s2567 + $0x1cf] sm:$0xff]
      %v5101 = vld [vmem:[%s2567 + $0x1e7] sm:$0xff]
      %v5102 = vld [vmem:[%s2567 + $0x1ef] sm:$0xff]
      %5103 = vst [vmem:[#allocation2 + $0x18] sm:$0xff] %v5071
      %5104 = vst [vmem:[#allocation2 + $0x60] sm:$0xff] %v5072
      %5105 = vst [vmem:[#allocation2 + $0xa8] sm:$0xff] %v5073
      %5106 = vst [vmem:[#allocation2 + $0xf0] sm:$0xff] %v5074
      %5107 = vst [vmem:[#allocation2 + $0x138] sm:$0xff] %v5075
      %5108 = vst [vmem:[#allocation2 + $0x180] sm:$0xff] %v5076
      %5109 = vst [vmem:[#allocation2 + $0x1c8] sm:$0xff] %v5077
      %5110 = vst [vmem:[#allocation2 + $0x210] sm:$0xff] %v5078
      %5111 = vst [vmem:[#allocation2 + $0x258] sm:$0xff] %v5079
      %5112 = vst [vmem:[#allocation2 + $0x2a0] sm:$0xff] %v5080
      %5113 = vst [vmem:[#allocation2 + $0x2e8] sm:$0xff] %v5081
      %5114 = vst [vmem:[#allocation2 + $0x330] sm:$0xff] %v5082
      %5115 = vst [vmem:[#allocation2 + $0x378] sm:$0xff] %v5083
      %5116 = vst [vmem:[#allocation2 + $0x3c0] sm:$0xff] %v5084
      %5117 = vst [vmem:[#allocation2 + $0x408] sm:$0xff] %v5085
      %5118 = vst [vmem:[#allocation2 + $0x450] sm:$0xff] %v5086
      %5119 = vst [vmem:[#allocation2 + $0x498] sm:$0xff] %v5087
      %5120 = vst [vmem:[#allocation2 + $0x4e0] sm:$0xff] %v5088
      %5121 = vst [vmem:[#allocation2 + $0x528] sm:$0xff] %v5089
      %5122 = vst [vmem:[#allocation2 + $0x570] sm:$0xff] %v5090
      %5123 = vst [vmem:[#allocation2 + $0x5b8] sm:$0xff] %v5091
      %5124 = vst [vmem:[#allocation2 + $0x600] sm:$0xff] %v5092
      %5125 = vst [vmem:[#allocation2 + $0x648] sm:$0xff] %v5093
      %5126 = vst [vmem:[#allocation2 + $0x690] sm:$0xff] %v5094
      %5127 = vst [vmem:[#allocation2 + $0x6d8] sm:$0xff] %v5095
      %5128 = vst [vmem:[#allocation2 + $0x720] sm:$0xff] %v5096
      %5129 = vst [vmem:[#allocation2 + $0x768] sm:$0xff] %v5097
      %5130 = vst [vmem:[#allocation2 + $0x7b0] sm:$0xff] %v5098
      %5131 = vst [vmem:[#allocation2 + $0x7f8] sm:$0xff] %v5099
      %5132 = vst [vmem:[#allocation2 + $0x840] sm:$0xff] %v5100
      %5133 = vst [vmem:[#allocation2 + $0x888] sm:$0xff] %v5101
      %5134 = vst [vmem:[#allocation2 + $0x8d0] sm:$0xff] %v5102
      %v5135 = vld [vmem:[%s2567 + $0x8] sm:$0xff]
      %v5136 = vld [vmem:[%s2567 + $0x10] sm:$0xff]
      %v5137 = vld [vmem:[%s2567 + $0x28] sm:$0xff]
      %v5138 = vld [vmem:[%s2567 + $0x30] sm:$0xff]
      %v5139 = vld [vmem:[%s2567 + $0x48] sm:$0xff]
      %v5140 = vld [vmem:[%s2567 + $0x50] sm:$0xff]
      %v5141 = vld [vmem:[%s2567 + $0x68] sm:$0xff]
      %v5142 = vld [vmem:[%s2567 + $0x70] sm:$0xff]
      %v5143 = vld [vmem:[%s2567 + $0x88] sm:$0xff]
      %v5144 = vld [vmem:[%s2567 + $0x90] sm:$0xff]
      %v5145 = vld [vmem:[%s2567 + $0xa8] sm:$0xff]
      %v5146 = vld [vmem:[%s2567 + $0xb0] sm:$0xff]
      %v5147 = vld [vmem:[%s2567 + $0xc8] sm:$0xff]
      %v5148 = vld [vmem:[%s2567 + $0xd0] sm:$0xff]
      %v5149 = vld [vmem:[%s2567 + $0xe8] sm:$0xff]
      %v5150 = vld [vmem:[%s2567 + $0xf0] sm:$0xff]
      %v5151 = vld [vmem:[%s2567 + $0x108] sm:$0xff]
      %v5152 = vld [vmem:[%s2567 + $0x110] sm:$0xff]
      %v5153 = vld [vmem:[%s2567 + $0x128] sm:$0xff]
      %v5154 = vld [vmem:[%s2567 + $0x130] sm:$0xff]
      %v5155 = vld [vmem:[%s2567 + $0x148] sm:$0xff]
      %v5156 = vld [vmem:[%s2567 + $0x150] sm:$0xff]
      %v5157 = vld [vmem:[%s2567 + $0x168] sm:$0xff]
      %v5158 = vld [vmem:[%s2567 + $0x170] sm:$0xff]
      %v5159 = vld [vmem:[%s2567 + $0x188] sm:$0xff]
      %v5160 = vld [vmem:[%s2567 + $0x190] sm:$0xff]
      %v5161 = vld [vmem:[%s2567 + $0x1a8] sm:$0xff]
      %v5162 = vld [vmem:[%s2567 + $0x1b0] sm:$0xff]
      %v5163 = vld [vmem:[%s2567 + $0x1c8] sm:$0xff]
      %v5164 = vld [vmem:[%s2567 + $0x1d0] sm:$0xff]
      %v5165 = vld [vmem:[%s2567 + $0x1e8] sm:$0xff]
      %v5166 = vld [vmem:[%s2567 + $0x1f0] sm:$0xff]
      %5167 = vst [vmem:[#allocation2 + $0x20] sm:$0xff] %v5135
      %5168 = vst [vmem:[#allocation2 + $0x68] sm:$0xff] %v5136
      %5169 = vst [vmem:[#allocation2 + $0xb0] sm:$0xff] %v5137
      %5170 = vst [vmem:[#allocation2 + $0xf8] sm:$0xff] %v5138
      %5171 = vst [vmem:[#allocation2 + $0x140] sm:$0xff] %v5139
      %5172 = vst [vmem:[#allocation2 + $0x188] sm:$0xff] %v5140
      %5173 = vst [vmem:[#allocation2 + $0x1d0] sm:$0xff] %v5141
      %5174 = vst [vmem:[#allocation2 + $0x218] sm:$0xff] %v5142
      %5175 = vst [vmem:[#allocation2 + $0x260] sm:$0xff] %v5143
      %5176 = vst [vmem:[#allocation2 + $0x2a8] sm:$0xff] %v5144
      %5177 = vst [vmem:[#allocation2 + $0x2f0] sm:$0xff] %v5145
      %5178 = vst [vmem:[#allocation2 + $0x338] sm:$0xff] %v5146
      %5179 = vst [vmem:[#allocation2 + $0x380] sm:$0xff] %v5147
      %5180 = vst [vmem:[#allocation2 + $0x3c8] sm:$0xff] %v5148
      %5181 = vst [vmem:[#allocation2 + $0x410] sm:$0xff] %v5149
      %5182 = vst [vmem:[#allocation2 + $0x458] sm:$0xff] %v5150
      %5183 = vst [vmem:[#allocation2 + $0x4a0] sm:$0xff] %v5151
      %5184 = vst [vmem:[#allocation2 + $0x4e8] sm:$0xff] %v5152
      %5185 = vst [vmem:[#allocation2 + $0x530] sm:$0xff] %v5153
      %5186 = vst [vmem:[#allocation2 + $0x578] sm:$0xff] %v5154
      %5187 = vst [vmem:[#allocation2 + $0x5c0] sm:$0xff] %v5155
      %5188 = vst [vmem:[#allocation2 + $0x608] sm:$0xff] %v5156
      %5189 = vst [vmem:[#allocation2 + $0x650] sm:$0xff] %v5157
      %5190 = vst [vmem:[#allocation2 + $0x698] sm:$0xff] %v5158
      %5191 = vst [vmem:[#allocation2 + $0x6e0] sm:$0xff] %v5159
      %5192 = vst [vmem:[#allocation2 + $0x728] sm:$0xff] %v5160
      %5193 = vst [vmem:[#allocation2 + $0x770] sm:$0xff] %v5161
      %5194 = vst [vmem:[#allocation2 + $0x7b8] sm:$0xff] %v5162
      %5195 = vst [vmem:[#allocation2 + $0x800] sm:$0xff] %v5163
      %5196 = vst [vmem:[#allocation2 + $0x848] sm:$0xff] %v5164
      %5197 = vst [vmem:[#allocation2 + $0x890] sm:$0xff] %v5165
      %5198 = vst [vmem:[#allocation2 + $0x8d8] sm:$0xff] %v5166
      %v5199 = vld [vmem:[%s2567 + $0x9] sm:$0xff]
      %v5200 = vld [vmem:[%s2567 + $0x11] sm:$0xff]
      %v5201 = vld [vmem:[%s2567 + $0x29] sm:$0xff]
      %v5202 = vld [vmem:[%s2567 + $0x31] sm:$0xff]
      %v5203 = vld [vmem:[%s2567 + $0x49] sm:$0xff]
      %v5204 = vld [vmem:[%s2567 + $0x51] sm:$0xff]
      %v5205 = vld [vmem:[%s2567 + $0x69] sm:$0xff]
      %v5206 = vld [vmem:[%s2567 + $0x71] sm:$0xff]
      %v5207 = vld [vmem:[%s2567 + $0x89] sm:$0xff]
      %v5208 = vld [vmem:[%s2567 + $0x91] sm:$0xff]
      %v5209 = vld [vmem:[%s2567 + $0xa9] sm:$0xff]
      %v5210 = vld [vmem:[%s2567 + $0xb1] sm:$0xff]
      %v5211 = vld [vmem:[%s2567 + $0xc9] sm:$0xff]
      %v5212 = vld [vmem:[%s2567 + $0xd1] sm:$0xff]
      %v5213 = vld [vmem:[%s2567 + $0xe9] sm:$0xff]
      %v5214 = vld [vmem:[%s2567 + $0xf1] sm:$0xff]
      %v5215 = vld [vmem:[%s2567 + $0x109] sm:$0xff]
      %v5216 = vld [vmem:[%s2567 + $0x111] sm:$0xff]
      %v5217 = vld [vmem:[%s2567 + $0x129] sm:$0xff]
      %v5218 = vld [vmem:[%s2567 + $0x131] sm:$0xff]
      %v5219 = vld [vmem:[%s2567 + $0x149] sm:$0xff]
      %v5220 = vld [vmem:[%s2567 + $0x151] sm:$0xff]
      %v5221 = vld [vmem:[%s2567 + $0x169] sm:$0xff]
      %v5222 = vld [vmem:[%s2567 + $0x171] sm:$0xff]
      %v5223 = vld [vmem:[%s2567 + $0x189] sm:$0xff]
      %v5224 = vld [vmem:[%s2567 + $0x191] sm:$0xff]
      %v5225 = vld [vmem:[%s2567 + $0x1a9] sm:$0xff]
      %v5226 = vld [vmem:[%s2567 + $0x1b1] sm:$0xff]
      %v5227 = vld [vmem:[%s2567 + $0x1c9] sm:$0xff]
      %v5228 = vld [vmem:[%s2567 + $0x1d1] sm:$0xff]
      %v5229 = vld [vmem:[%s2567 + $0x1e9] sm:$0xff]
      %v5230 = vld [vmem:[%s2567 + $0x1f1] sm:$0xff]
      %5231 = vst [vmem:[#allocation2 + $0x28] sm:$0xff] %v5199
      %5232 = vst [vmem:[#allocation2 + $0x70] sm:$0xff] %v5200
      %5233 = vst [vmem:[#allocation2 + $0xb8] sm:$0xff] %v5201
      %5234 = vst [vmem:[#allocation2 + $0x100] sm:$0xff] %v5202
      %5235 = vst [vmem:[#allocation2 + $0x148] sm:$0xff] %v5203
      %5236 = vst [vmem:[#allocation2 + $0x190] sm:$0xff] %v5204
      %5237 = vst [vmem:[#allocation2 + $0x1d8] sm:$0xff] %v5205
      %5238 = vst [vmem:[#allocation2 + $0x220] sm:$0xff] %v5206
      %5239 = vst [vmem:[#allocation2 + $0x268] sm:$0xff] %v5207
      %5240 = vst [vmem:[#allocation2 + $0x2b0] sm:$0xff] %v5208
      %5241 = vst [vmem:[#allocation2 + $0x2f8] sm:$0xff] %v5209
      %5242 = vst [vmem:[#allocation2 + $0x340] sm:$0xff] %v5210
      %5243 = vst [vmem:[#allocation2 + $0x388] sm:$0xff] %v5211
      %5244 = vst [vmem:[#allocation2 + $0x3d0] sm:$0xff] %v5212
      %5245 = vst [vmem:[#allocation2 + $0x418] sm:$0xff] %v5213
      %5246 = vst [vmem:[#allocation2 + $0x460] sm:$0xff] %v5214
      %5247 = vst [vmem:[#allocation2 + $0x4a8] sm:$0xff] %v5215
      %5248 = vst [vmem:[#allocation2 + $0x4f0] sm:$0xff] %v5216
      %5249 = vst [vmem:[#allocation2 + $0x538] sm:$0xff] %v5217
      %5250 = vst [vmem:[#allocation2 + $0x580] sm:$0xff] %v5218
      %5251 = vst [vmem:[#allocation2 + $0x5c8] sm:$0xff] %v5219
      %5252 = vst [vmem:[#allocation2 + $0x610] sm:$0xff] %v5220
      %5253 = vst [vmem:[#allocation2 + $0x658] sm:$0xff] %v5221
      %5254 = vst [vmem:[#allocation2 + $0x6a0] sm:$0xff] %v5222
      %5255 = vst [vmem:[#allocation2 + $0x6e8] sm:$0xff] %v5223
      %5256 = vst [vmem:[#allocation2 + $0x730] sm:$0xff] %v5224
      %5257 = vst [vmem:[#allocation2 + $0x778] sm:$0xff] %v5225
      %5258 = vst [vmem:[#allocation2 + $0x7c0] sm:$0xff] %v5226
      %5259 = vst [vmem:[#allocation2 + $0x808] sm:$0xff] %v5227
      %5260 = vst [vmem:[#allocation2 + $0x850] sm:$0xff] %v5228
      %5261 = vst [vmem:[#allocation2 + $0x898] sm:$0xff] %v5229
      %5262 = vst [vmem:[#allocation2 + $0x8e0] sm:$0xff] %v5230
      %v5263 = vld [vmem:[%s2984 + $0x7] sm:$0xff]
      %v5264 = vld [vmem:[%s2984 + $0xf] sm:$0xff]
      %v5265 = vld [vmem:[%s2984 + $0x27] sm:$0xff]
      %v5266 = vld [vmem:[%s2984 + $0x2f] sm:$0xff]
      %v5267 = vld [vmem:[%s2984 + $0x47] sm:$0xff]
      %v5268 = vld [vmem:[%s2984 + $0x4f] sm:$0xff]
      %v5269 = vld [vmem:[%s2984 + $0x67] sm:$0xff]
      %v5270 = vld [vmem:[%s2984 + $0x6f] sm:$0xff]
      %v5271 = vld [vmem:[%s2984 + $0x87] sm:$0xff]
      %v5272 = vld [vmem:[%s2984 + $0x8f] sm:$0xff]
      %v5273 = vld [vmem:[%s2984 + $0xa7] sm:$0xff]
      %v5274 = vld [vmem:[%s2984 + $0xaf] sm:$0xff]
      %v5275 = vld [vmem:[%s2984 + $0xc7] sm:$0xff]
      %v5276 = vld [vmem:[%s2984 + $0xcf] sm:$0xff]
      %v5277 = vld [vmem:[%s2984 + $0xe7] sm:$0xff]
      %v5278 = vld [vmem:[%s2984 + $0xef] sm:$0xff]
      %v5279 = vld [vmem:[%s2984 + $0x107] sm:$0xff]
      %v5280 = vld [vmem:[%s2984 + $0x10f] sm:$0xff]
      %v5281 = vld [vmem:[%s2984 + $0x127] sm:$0xff]
      %v5282 = vld [vmem:[%s2984 + $0x12f] sm:$0xff]
      %v5283 = vld [vmem:[%s2984 + $0x147] sm:$0xff]
      %v5284 = vld [vmem:[%s2984 + $0x14f] sm:$0xff]
      %v5285 = vld [vmem:[%s2984 + $0x167] sm:$0xff]
      %v5286 = vld [vmem:[%s2984 + $0x16f] sm:$0xff]
      %v5287 = vld [vmem:[%s2984 + $0x187] sm:$0xff]
      %v5288 = vld [vmem:[%s2984 + $0x18f] sm:$0xff]
      %v5289 = vld [vmem:[%s2984 + $0x1a7] sm:$0xff]
      %v5290 = vld [vmem:[%s2984 + $0x1af] sm:$0xff]
      %v5291 = vld [vmem:[%s2984 + $0x1c7] sm:$0xff]
      %v5292 = vld [vmem:[%s2984 + $0x1cf] sm:$0xff]
      %v5293 = vld [vmem:[%s2984 + $0x1e7] sm:$0xff]
      %v5294 = vld [vmem:[%s2984 + $0x1ef] sm:$0xff]
      %5295 = vst [vmem:[#allocation2 + $0x30] sm:$0xff] %v5263
      %5296 = vst [vmem:[#allocation2 + $0x78] sm:$0xff] %v5264
      %5297 = vst [vmem:[#allocation2 + $0xc0] sm:$0xff] %v5265
      %5298 = vst [vmem:[#allocation2 + $0x108] sm:$0xff] %v5266
      %5299 = vst [vmem:[#allocation2 + $0x150] sm:$0xff] %v5267
      %5300 = vst [vmem:[#allocation2 + $0x198] sm:$0xff] %v5268
      %5301 = vst [vmem:[#allocation2 + $0x1e0] sm:$0xff] %v5269
      %5302 = vst [vmem:[#allocation2 + $0x228] sm:$0xff] %v5270
      %5303 = vst [vmem:[#allocation2 + $0x270] sm:$0xff] %v5271
      %5304 = vst [vmem:[#allocation2 + $0x2b8] sm:$0xff] %v5272
      %5305 = vst [vmem:[#allocation2 + $0x300] sm:$0xff] %v5273
      %5306 = vst [vmem:[#allocation2 + $0x348] sm:$0xff] %v5274
      %5307 = vst [vmem:[#allocation2 + $0x390] sm:$0xff] %v5275
      %5308 = vst [vmem:[#allocation2 + $0x3d8] sm:$0xff] %v5276
      %5309 = vst [vmem:[#allocation2 + $0x420] sm:$0xff] %v5277
      %5310 = vst [vmem:[#allocation2 + $0x468] sm:$0xff] %v5278
      %5311 = vst [vmem:[#allocation2 + $0x4b0] sm:$0xff] %v5279
      %5312 = vst [vmem:[#allocation2 + $0x4f8] sm:$0xff] %v5280
      %5313 = vst [vmem:[#allocation2 + $0x540] sm:$0xff] %v5281
      %5314 = vst [vmem:[#allocation2 + $0x588] sm:$0xff] %v5282
      %5315 = vst [vmem:[#allocation2 + $0x5d0] sm:$0xff] %v5283
      %5316 = vst [vmem:[#allocation2 + $0x618] sm:$0xff] %v5284
      %5317 = vst [vmem:[#allocation2 + $0x660] sm:$0xff] %v5285
      %5318 = vst [vmem:[#allocation2 + $0x6a8] sm:$0xff] %v5286
      %5319 = vst [vmem:[#allocation2 + $0x6f0] sm:$0xff] %v5287
      %5320 = vst [vmem:[#allocation2 + $0x738] sm:$0xff] %v5288
      %5321 = vst [vmem:[#allocation2 + $0x780] sm:$0xff] %v5289
      %5322 = vst [vmem:[#allocation2 + $0x7c8] sm:$0xff] %v5290
      %5323 = vst [vmem:[#allocation2 + $0x810] sm:$0xff] %v5291
      %5324 = vst [vmem:[#allocation2 + $0x858] sm:$0xff] %v5292
      %5325 = vst [vmem:[#allocation2 + $0x8a0] sm:$0xff] %v5293
      %5326 = vst [vmem:[#allocation2 + $0x8e8] sm:$0xff] %v5294
      %v5327 = vld [vmem:[%s2984 + $0x8] sm:$0xff]
      %v5328 = vld [vmem:[%s2984 + $0x10] sm:$0xff]
      %v5329 = vld [vmem:[%s2984 + $0x28] sm:$0xff]
      %v5330 = vld [vmem:[%s2984 + $0x30] sm:$0xff]
      %v5331 = vld [vmem:[%s2984 + $0x48] sm:$0xff]
      %v5332 = vld [vmem:[%s2984 + $0x50] sm:$0xff]
      %v5333 = vld [vmem:[%s2984 + $0x68] sm:$0xff]
      %v5334 = vld [vmem:[%s2984 + $0x70] sm:$0xff]
      %v5335 = vld [vmem:[%s2984 + $0x88] sm:$0xff]
      %v5336 = vld [vmem:[%s2984 + $0x90] sm:$0xff]
      %v5337 = vld [vmem:[%s2984 + $0xa8] sm:$0xff]
      %v5338 = vld [vmem:[%s2984 + $0xb0] sm:$0xff]
      %v5339 = vld [vmem:[%s2984 + $0xc8] sm:$0xff]
      %v5340 = vld [vmem:[%s2984 + $0xd0] sm:$0xff]
      %v5341 = vld [vmem:[%s2984 + $0xe8] sm:$0xff]
      %v5342 = vld [vmem:[%s2984 + $0xf0] sm:$0xff]
      %v5343 = vld [vmem:[%s2984 + $0x108] sm:$0xff]
      %v5344 = vld [vmem:[%s2984 + $0x110] sm:$0xff]
      %v5345 = vld [vmem:[%s2984 + $0x128] sm:$0xff]
      %v5346 = vld [vmem:[%s2984 + $0x130] sm:$0xff]
      %v5347 = vld [vmem:[%s2984 + $0x148] sm:$0xff]
      %v5348 = vld [vmem:[%s2984 + $0x150] sm:$0xff]
      %v5349 = vld [vmem:[%s2984 + $0x168] sm:$0xff]
      %v5350 = vld [vmem:[%s2984 + $0x170] sm:$0xff]
      %v5351 = vld [vmem:[%s2984 + $0x188] sm:$0xff]
      %v5352 = vld [vmem:[%s2984 + $0x190] sm:$0xff]
      %v5353 = vld [vmem:[%s2984 + $0x1a8] sm:$0xff]
      %v5354 = vld [vmem:[%s2984 + $0x1b0] sm:$0xff]
      %v5355 = vld [vmem:[%s2984 + $0x1c8] sm:$0xff]
      %v5356 = vld [vmem:[%s2984 + $0x1d0] sm:$0xff]
      %v5357 = vld [vmem:[%s2984 + $0x1e8] sm:$0xff]
      %v5358 = vld [vmem:[%s2984 + $0x1f0] sm:$0xff]
      %5359 = vst [vmem:[#allocation2 + $0x38] sm:$0xff] %v5327
      %5360 = vst [vmem:[#allocation2 + $0x80] sm:$0xff] %v5328
      %5361 = vst [vmem:[#allocation2 + $0xc8] sm:$0xff] %v5329
      %5362 = vst [vmem:[#allocation2 + $0x110] sm:$0xff] %v5330
      %5363 = vst [vmem:[#allocation2 + $0x158] sm:$0xff] %v5331
      %5364 = vst [vmem:[#allocation2 + $0x1a0] sm:$0xff] %v5332
      %5365 = vst [vmem:[#allocation2 + $0x1e8] sm:$0xff] %v5333
      %5366 = vst [vmem:[#allocation2 + $0x230] sm:$0xff] %v5334
      %5367 = vst [vmem:[#allocation2 + $0x278] sm:$0xff] %v5335
      %5368 = vst [vmem:[#allocation2 + $0x2c0] sm:$0xff] %v5336
      %5369 = vst [vmem:[#allocation2 + $0x308] sm:$0xff] %v5337
      %5370 = vst [vmem:[#allocation2 + $0x350] sm:$0xff] %v5338
      %5371 = vst [vmem:[#allocation2 + $0x398] sm:$0xff] %v5339
      %5372 = vst [vmem:[#allocation2 + $0x3e0] sm:$0xff] %v5340
      %5373 = vst [vmem:[#allocation2 + $0x428] sm:$0xff] %v5341
      %5374 = vst [vmem:[#allocation2 + $0x470] sm:$0xff] %v5342
      %5375 = vst [vmem:[#allocation2 + $0x4b8] sm:$0xff] %v5343
      %5376 = vst [vmem:[#allocation2 + $0x500] sm:$0xff] %v5344
      %5377 = vst [vmem:[#allocation2 + $0x548] sm:$0xff] %v5345
      %5378 = vst [vmem:[#allocation2 + $0x590] sm:$0xff] %v5346
      %5379 = vst [vmem:[#allocation2 + $0x5d8] sm:$0xff] %v5347
      %5380 = vst [vmem:[#allocation2 + $0x620] sm:$0xff] %v5348
      %5381 = vst [vmem:[#allocation2 + $0x668] sm:$0xff] %v5349
      %5382 = vst [vmem:[#allocation2 + $0x6b0] sm:$0xff] %v5350
      %5383 = vst [vmem:[#allocation2 + $0x6f8] sm:$0xff] %v5351
      %5384 = vst [vmem:[#allocation2 + $0x740] sm:$0xff] %v5352
      %5385 = vst [vmem:[#allocation2 + $0x788] sm:$0xff] %v5353
      %5386 = vst [vmem:[#allocation2 + $0x7d0] sm:$0xff] %v5354
      %5387 = vst [vmem:[#allocation2 + $0x818] sm:$0xff] %v5355
      %5388 = vst [vmem:[#allocation2 + $0x860] sm:$0xff] %v5356
      %5389 = vst [vmem:[#allocation2 + $0x8a8] sm:$0xff] %v5357
      %5390 = vst [vmem:[#allocation2 + $0x8f0] sm:$0xff] %v5358
      %v5391 = vld [vmem:[%s2984 + $0x9] sm:$0xff]
      %v5392 = vld [vmem:[%s2984 + $0x11] sm:$0xff]
      %v5393 = vld [vmem:[%s2984 + $0x29] sm:$0xff]
      %v5394 = vld [vmem:[%s2984 + $0x31] sm:$0xff]
      %v5395 = vld [vmem:[%s2984 + $0x49] sm:$0xff]
      %v5396 = vld [vmem:[%s2984 + $0x51] sm:$0xff]
      %v5397 = vld [vmem:[%s2984 + $0x69] sm:$0xff]
      %v5398 = vld [vmem:[%s2984 + $0x71] sm:$0xff]
      %v5399 = vld [vmem:[%s2984 + $0x89] sm:$0xff]
      %v5400 = vld [vmem:[%s2984 + $0x91] sm:$0xff]
      %v5401 = vld [vmem:[%s2984 + $0xa9] sm:$0xff]
      %v5402 = vld [vmem:[%s2984 + $0xb1] sm:$0xff]
      %v5403 = vld [vmem:[%s2984 + $0xc9] sm:$0xff]
      %v5404 = vld [vmem:[%s2984 + $0xd1] sm:$0xff]
      %v5405 = vld [vmem:[%s2984 + $0xe9] sm:$0xff]
      %v5406 = vld [vmem:[%s2984 + $0xf1] sm:$0xff]
      %v5407 = vld [vmem:[%s2984 + $0x109] sm:$0xff]
      %v5408 = vld [vmem:[%s2984 + $0x111] sm:$0xff]
      %v5409 = vld [vmem:[%s2984 + $0x129] sm:$0xff]
      %v5410 = vld [vmem:[%s2984 + $0x131] sm:$0xff]
      %v5411 = vld [vmem:[%s2984 + $0x149] sm:$0xff]
      %v5412 = vld [vmem:[%s2984 + $0x151] sm:$0xff]
      %v5413 = vld [vmem:[%s2984 + $0x169] sm:$0xff]
      %v5414 = vld [vmem:[%s2984 + $0x171] sm:$0xff]
      %v5415 = vld [vmem:[%s2984 + $0x189] sm:$0xff]
      %v5416 = vld [vmem:[%s2984 + $0x191] sm:$0xff]
      %v5417 = vld [vmem:[%s2984 + $0x1a9] sm:$0xff]
      %v5418 = vld [vmem:[%s2984 + $0x1b1] sm:$0xff]
      %v5419 = vld [vmem:[%s2984 + $0x1c9] sm:$0xff]
      %v5420 = vld [vmem:[%s2984 + $0x1d1] sm:$0xff]
      %v5421 = vld [vmem:[%s2984 + $0x1e9] sm:$0xff]
      %v5422 = vld [vmem:[%s2984 + $0x1f1] sm:$0xff]
      %5423 = vst [vmem:[#allocation2 + $0x40] sm:$0xff] %v5391
      %5424 = vst [vmem:[#allocation2 + $0x88] sm:$0xff] %v5392
      %5425 = vst [vmem:[#allocation2 + $0xd0] sm:$0xff] %v5393
      %5426 = vst [vmem:[#allocation2 + $0x118] sm:$0xff] %v5394
      %5427 = vst [vmem:[#allocation2 + $0x160] sm:$0xff] %v5395
      %5428 = vst [vmem:[#allocation2 + $0x1a8] sm:$0xff] %v5396
      %5429 = vst [vmem:[#allocation2 + $0x1f0] sm:$0xff] %v5397
      %5430 = vst [vmem:[#allocation2 + $0x238] sm:$0xff] %v5398
      %5431 = vst [vmem:[#allocation2 + $0x280] sm:$0xff] %v5399
      %5432 = vst [vmem:[#allocation2 + $0x2c8] sm:$0xff] %v5400
      %5433 = vst [vmem:[#allocation2 + $0x310] sm:$0xff] %v5401
      %5434 = vst [vmem:[#allocation2 + $0x358] sm:$0xff] %v5402
      %5435 = vst [vmem:[#allocation2 + $0x3a0] sm:$0xff] %v5403
      %5436 = vst [vmem:[#allocation2 + $0x3e8] sm:$0xff] %v5404
      %5437 = vst [vmem:[#allocation2 + $0x430] sm:$0xff] %v5405
      %5438 = vst [vmem:[#allocation2 + $0x478] sm:$0xff] %v5406
      %5439 = vst [vmem:[#allocation2 + $0x4c0] sm:$0xff] %v5407
      %5440 = vst [vmem:[#allocation2 + $0x508] sm:$0xff] %v5408
      %5441 = vst [vmem:[#allocation2 + $0x550] sm:$0xff] %v5409
      %5442 = vst [vmem:[#allocation2 + $0x598] sm:$0xff] %v5410
      %5443 = vst [vmem:[#allocation2 + $0x5e0] sm:$0xff] %v5411
      %5444 = vst [vmem:[#allocation2 + $0x628] sm:$0xff] %v5412
      %5445 = vst [vmem:[#allocation2 + $0x670] sm:$0xff] %v5413
      %5446 = vst [vmem:[#allocation2 + $0x6b8] sm:$0xff] %v5414
      %5447 = vst [vmem:[#allocation2 + $0x700] sm:$0xff] %v5415
      %5448 = vst [vmem:[#allocation2 + $0x748] sm:$0xff] %v5416
      %5449 = vst [vmem:[#allocation2 + $0x790] sm:$0xff] %v5417
      %5450 = vst [vmem:[#allocation2 + $0x7d8] sm:$0xff] %v5418
      %5451 = vst [vmem:[#allocation2 + $0x820] sm:$0xff] %v5419
      %5452 = vst [vmem:[#allocation2 + $0x868] sm:$0xff] %v5420
      %5453 = vst [vmem:[#allocation2 + $0x8b0] sm:$0xff] %v5421
      %5454 = vst [vmem:[#allocation2 + $0x8f8] sm:$0xff] %v5422
      %v5455 = vld [vmem:[#allocation2] sm:$0xff]
      %v5456 = vld [vmem:[#allocation2 + $0x8] sm:$0xff]
      %v5457 = vld [vmem:[#allocation2 + $0x10] sm:$0xff]
      %v5458 = vld [vmem:[#allocation2 + $0x18] sm:$0xff]
      %v5459 = vld [vmem:[#allocation2 + $0x20] sm:$0xff]
      %v5460 = vld [vmem:[#allocation2 + $0x28] sm:$0xff]
      %v5461 = vld [vmem:[#allocation2 + $0x30] sm:$0xff]
      %v5462 = vld [vmem:[#allocation2 + $0x38] sm:$0xff]
      %v5463 = vld [vmem:[#allocation2 + $0x40] sm:$0xff]
      %v5464 = vld [vmem:[#allocation2 + $0x48] sm:$0xff]
      %v5465 = vld [vmem:[#allocation2 + $0x50] sm:$0xff]
      %v5466 = vld [vmem:[#allocation2 + $0x58] sm:$0xff]
      %v5467 = vld [vmem:[#allocation2 + $0x60] sm:$0xff]
      %v5468 = vld [vmem:[#allocation2 + $0x68] sm:$0xff]
      %v5469 = vld [vmem:[#allocation2 + $0x70] sm:$0xff]
      %v5470 = vld [vmem:[#allocation2 + $0x78] sm:$0xff]
      %v5471 = vld [vmem:[#allocation2 + $0x80] sm:$0xff]
      %v5472 = vld [vmem:[#allocation2 + $0x88] sm:$0xff]
      %v5473 = vld [vmem:[#allocation2 + $0x90] sm:$0xff]
      %v5474 = vld [vmem:[#allocation2 + $0x98] sm:$0xff]
      %v5475 = vld [vmem:[#allocation2 + $0xa0] sm:$0xff]
      %v5476 = vld [vmem:[#allocation2 + $0xa8] sm:$0xff]
      %v5477 = vld [vmem:[#allocation2 + $0xb0] sm:$0xff]
      %v5478 = vld [vmem:[#allocation2 + $0xb8] sm:$0xff]
      %v5479 = vld [vmem:[#allocation2 + $0xc0] sm:$0xff]
      %v5480 = vld [vmem:[#allocation2 + $0xc8] sm:$0xff]
      %v5481 = vld [vmem:[#allocation2 + $0xd0] sm:$0xff]
      %v5482 = vld [vmem:[#allocation2 + $0xd8] sm:$0xff]
      %v5483 = vld [vmem:[#allocation2 + $0xe0] sm:$0xff]
      %v5484 = vld [vmem:[#allocation2 + $0xe8] sm:$0xff]
      %v5485 = vld [vmem:[#allocation2 + $0xf0] sm:$0xff]
      %v5486 = vld [vmem:[#allocation2 + $0xf8] sm:$0xff]
      %v5487 = vld [vmem:[#allocation2 + $0x100] sm:$0xff]
      %v5488 = vld [vmem:[#allocation2 + $0x108] sm:$0xff]
      %v5489 = vld [vmem:[#allocation2 + $0x110] sm:$0xff]
      %v5490 = vld [vmem:[#allocation2 + $0x118] sm:$0xff]
      %v5491 = vld [vmem:[#allocation2 + $0x120] sm:$0xff]
      %v5492 = vld [vmem:[#allocation2 + $0x128] sm:$0xff]
      %v5493 = vld [vmem:[#allocation2 + $0x130] sm:$0xff]
      %v5494 = vld [vmem:[#allocation2 + $0x138] sm:$0xff]
      %v5495 = vld [vmem:[#allocation2 + $0x140] sm:$0xff]
      %v5496 = vld [vmem:[#allocation2 + $0x148] sm:$0xff]
      %v5497 = vld [vmem:[#allocation2 + $0x150] sm:$0xff]
      %v5498 = vld [vmem:[#allocation2 + $0x158] sm:$0xff]
      %v5499 = vld [vmem:[#allocation2 + $0x160] sm:$0xff]
      %v5500 = vld [vmem:[#allocation2 + $0x168] sm:$0xff]
      %v5501 = vld [vmem:[#allocation2 + $0x170] sm:$0xff]
      %v5502 = vld [vmem:[#allocation2 + $0x178] sm:$0xff]
      %v5503 = vld [vmem:[#allocation2 + $0x180] sm:$0xff]
      %v5504 = vld [vmem:[#allocation2 + $0x188] sm:$0xff]
      %v5505 = vld [vmem:[#allocation2 + $0x190] sm:$0xff]
      %v5506 = vld [vmem:[#allocation2 + $0x198] sm:$0xff]
      %v5507 = vld [vmem:[#allocation2 + $0x1a0] sm:$0xff]
      %v5508 = vld [vmem:[#allocation2 + $0x1a8] sm:$0xff]
      %v5509 = vld [vmem:[#allocation2 + $0x1b0] sm:$0xff]
      %v5510 = vld [vmem:[#allocation2 + $0x1b8] sm:$0xff]
      %v5511 = vld [vmem:[#allocation2 + $0x1c0] sm:$0xff]
      %v5512 = vld [vmem:[#allocation2 + $0x1c8] sm:$0xff]
      %v5513 = vld [vmem:[#allocation2 + $0x1d0] sm:$0xff]
      %v5514 = vld [vmem:[#allocation2 + $0x1d8] sm:$0xff]
      %v5515 = vld [vmem:[#allocation2 + $0x1e0] sm:$0xff]
      %v5516 = vld [vmem:[#allocation2 + $0x1e8] sm:$0xff]
      %v5517 = vld [vmem:[#allocation2 + $0x1f0] sm:$0xff]
      %v5518 = vld [vmem:[#allocation2 + $0x1f8] sm:$0xff]
      %v5519 = vld [vmem:[#allocation2 + $0x200] sm:$0xff]
      %v5520 = vld [vmem:[#allocation2 + $0x208] sm:$0xff]
      %v5521 = vld [vmem:[#allocation2 + $0x210] sm:$0xff]
      %v5522 = vld [vmem:[#allocation2 + $0x218] sm:$0xff]
      %v5523 = vld [vmem:[#allocation2 + $0x220] sm:$0xff]
      %v5524 = vld [vmem:[#allocation2 + $0x228] sm:$0xff]
      %v5525 = vld [vmem:[#allocation2 + $0x230] sm:$0xff]
      %v5526 = vld [vmem:[#allocation2 + $0x238] sm:$0xff]
      %v5527 = vld [vmem:[#allocation2 + $0x240] sm:$0xff]
      %v5528 = vld [vmem:[#allocation2 + $0x248] sm:$0xff]
      %v5529 = vld [vmem:[#allocation2 + $0x250] sm:$0xff]
      %v5530 = vld [vmem:[#allocation2 + $0x258] sm:$0xff]
      %v5531 = vld [vmem:[#allocation2 + $0x260] sm:$0xff]
      %v5532 = vld [vmem:[#allocation2 + $0x268] sm:$0xff]
      %v5533 = vld [vmem:[#allocation2 + $0x270] sm:$0xff]
      %v5534 = vld [vmem:[#allocation2 + $0x278] sm:$0xff]
      %v5535 = vld [vmem:[#allocation2 + $0x280] sm:$0xff]
      %v5536 = vld [vmem:[#allocation2 + $0x288] sm:$0xff]
      %v5537 = vld [vmem:[#allocation2 + $0x290] sm:$0xff]
      %v5538 = vld [vmem:[#allocation2 + $0x298] sm:$0xff]
      %v5539 = vld [vmem:[#allocation2 + $0x2a0] sm:$0xff]
      %v5540 = vld [vmem:[#allocation2 + $0x2a8] sm:$0xff]
      %v5541 = vld [vmem:[#allocation2 + $0x2b0] sm:$0xff]
      %v5542 = vld [vmem:[#allocation2 + $0x2b8] sm:$0xff]
      %v5543 = vld [vmem:[#allocation2 + $0x2c0] sm:$0xff]
      %v5544 = vld [vmem:[#allocation2 + $0x2c8] sm:$0xff]
      %v5545 = vld [vmem:[#allocation2 + $0x2d0] sm:$0xff]
      %v5546 = vld [vmem:[#allocation2 + $0x2d8] sm:$0xff]
      %v5547 = vld [vmem:[#allocation2 + $0x2e0] sm:$0xff]
      %v5548 = vld [vmem:[#allocation2 + $0x2e8] sm:$0xff]
      %v5549 = vld [vmem:[#allocation2 + $0x2f0] sm:$0xff]
      %v5550 = vld [vmem:[#allocation2 + $0x2f8] sm:$0xff]
      %v5551 = vld [vmem:[#allocation2 + $0x300] sm:$0xff]
      %v5552 = vld [vmem:[#allocation2 + $0x308] sm:$0xff]
      %v5553 = vld [vmem:[#allocation2 + $0x310] sm:$0xff]
      %v5554 = vld [vmem:[#allocation2 + $0x318] sm:$0xff]
      %v5555 = vld [vmem:[#allocation2 + $0x320] sm:$0xff]
      %v5556 = vld [vmem:[#allocation2 + $0x328] sm:$0xff]
      %v5557 = vld [vmem:[#allocation2 + $0x330] sm:$0xff]
      %v5558 = vld [vmem:[#allocation2 + $0x338] sm:$0xff]
      %v5559 = vld [vmem:[#allocation2 + $0x340] sm:$0xff]
      %v5560 = vld [vmem:[#allocation2 + $0x348] sm:$0xff]
      %v5561 = vld [vmem:[#allocation2 + $0x350] sm:$0xff]
      %v5562 = vld [vmem:[#allocation2 + $0x358] sm:$0xff]
      %v5563 = vld [vmem:[#allocation2 + $0x360] sm:$0xff]
      %v5564 = vld [vmem:[#allocation2 + $0x368] sm:$0xff]
      %v5565 = vld [vmem:[#allocation2 + $0x370] sm:$0xff]
      %v5566 = vld [vmem:[#allocation2 + $0x378] sm:$0xff]
      %v5567 = vld [vmem:[#allocation2 + $0x380] sm:$0xff]
      %v5568 = vld [vmem:[#allocation2 + $0x388] sm:$0xff]
      %v5569 = vld [vmem:[#allocation2 + $0x390] sm:$0xff]
      %v5570 = vld [vmem:[#allocation2 + $0x398] sm:$0xff]
      %v5571 = vld [vmem:[#allocation2 + $0x3a0] sm:$0xff]
      %v5572 = vld [vmem:[#allocation2 + $0x3a8] sm:$0xff]
      %v5573 = vld [vmem:[#allocation2 + $0x3b0] sm:$0xff]
      %v5574 = vld [vmem:[#allocation2 + $0x3b8] sm:$0xff]
      %v5575 = vld [vmem:[#allocation2 + $0x3c0] sm:$0xff]
      %v5576 = vld [vmem:[#allocation2 + $0x3c8] sm:$0xff]
      %v5577 = vld [vmem:[#allocation2 + $0x3d0] sm:$0xff]
      %v5578 = vld [vmem:[#allocation2 + $0x3d8] sm:$0xff]
      %v5579 = vld [vmem:[#allocation2 + $0x3e0] sm:$0xff]
      %v5580 = vld [vmem:[#allocation2 + $0x3e8] sm:$0xff]
      %v5581 = vld [vmem:[#allocation2 + $0x3f0] sm:$0xff]
      %v5582 = vld [vmem:[#allocation2 + $0x3f8] sm:$0xff]
      %v5583 = vld [vmem:[#allocation2 + $0x400] sm:$0xff]
      %v5584 = vld [vmem:[#allocation2 + $0x408] sm:$0xff]
      %v5585 = vld [vmem:[#allocation2 + $0x410] sm:$0xff]
      %v5586 = vld [vmem:[#allocation2 + $0x418] sm:$0xff]
      %v5587 = vld [vmem:[#allocation2 + $0x420] sm:$0xff]
      %v5588 = vld [vmem:[#allocation2 + $0x428] sm:$0xff]
      %v5589 = vld [vmem:[#allocation2 + $0x430] sm:$0xff]
      %v5590 = vld [vmem:[#allocation2 + $0x438] sm:$0xff]
      %v5591 = vld [vmem:[#allocation2 + $0x440] sm:$0xff]
      %v5592 = vld [vmem:[#allocation2 + $0x448] sm:$0xff]
      %v5593 = vld [vmem:[#allocation2 + $0x450] sm:$0xff]
      %v5594 = vld [vmem:[#allocation2 + $0x458] sm:$0xff]
      %v5595 = vld [vmem:[#allocation2 + $0x460] sm:$0xff]
      %v5596 = vld [vmem:[#allocation2 + $0x468] sm:$0xff]
      %v5597 = vld [vmem:[#allocation2 + $0x470] sm:$0xff]
      %v5598 = vld [vmem:[#allocation2 + $0x478] sm:$0xff]
      %v5599 = vld [vmem:[#allocation2 + $0x480] sm:$0xff]
      %v5600 = vld [vmem:[#allocation2 + $0x488] sm:$0xff]
      %v5601 = vld [vmem:[#allocation2 + $0x490] sm:$0xff]
      %v5602 = vld [vmem:[#allocation2 + $0x498] sm:$0xff]
      %v5603 = vld [vmem:[#allocation2 + $0x4a0] sm:$0xff]
      %v5604 = vld [vmem:[#allocation2 + $0x4a8] sm:$0xff]
      %v5605 = vld [vmem:[#allocation2 + $0x4b0] sm:$0xff]
      %v5606 = vld [vmem:[#allocation2 + $0x4b8] sm:$0xff]
      %v5607 = vld [vmem:[#allocation2 + $0x4c0] sm:$0xff]
      %v5608 = vld [vmem:[#allocation2 + $0x4c8] sm:$0xff]
      %v5609 = vld [vmem:[#allocation2 + $0x4d0] sm:$0xff]
      %v5610 = vld [vmem:[#allocation2 + $0x4d8] sm:$0xff]
      %v5611 = vld [vmem:[#allocation2 + $0x4e0] sm:$0xff]
      %v5612 = vld [vmem:[#allocation2 + $0x4e8] sm:$0xff]
      %v5613 = vld [vmem:[#allocation2 + $0x4f0] sm:$0xff]
      %v5614 = vld [vmem:[#allocation2 + $0x4f8] sm:$0xff]
      %v5615 = vld [vmem:[#allocation2 + $0x500] sm:$0xff]
      %v5616 = vld [vmem:[#allocation2 + $0x508] sm:$0xff]
      %v5617 = vld [vmem:[#allocation2 + $0x510] sm:$0xff]
      %v5618 = vld [vmem:[#allocation2 + $0x518] sm:$0xff]
      %v5619 = vld [vmem:[#allocation2 + $0x520] sm:$0xff]
      %v5620 = vld [vmem:[#allocation2 + $0x528] sm:$0xff]
      %v5621 = vld [vmem:[#allocation2 + $0x530] sm:$0xff]
      %v5622 = vld [vmem:[#allocation2 + $0x538] sm:$0xff]
      %v5623 = vld [vmem:[#allocation2 + $0x540] sm:$0xff]
      %v5624 = vld [vmem:[#allocation2 + $0x548] sm:$0xff]
      %v5625 = vld [vmem:[#allocation2 + $0x550] sm:$0xff]
      %v5626 = vld [vmem:[#allocation2 + $0x558] sm:$0xff]
      %v5627 = vld [vmem:[#allocation2 + $0x560] sm:$0xff]
      %v5628 = vld [vmem:[#allocation2 + $0x568] sm:$0xff]
      %v5629 = vld [vmem:[#allocation2 + $0x570] sm:$0xff]
      %v5630 = vld [vmem:[#allocation2 + $0x578] sm:$0xff]
      %v5631 = vld [vmem:[#allocation2 + $0x580] sm:$0xff]
      %v5632 = vld [vmem:[#allocation2 + $0x588] sm:$0xff]
      %v5633 = vld [vmem:[#allocation2 + $0x590] sm:$0xff]
      %v5634 = vld [vmem:[#allocation2 + $0x598] sm:$0xff]
      %v5635 = vld [vmem:[#allocation2 + $0x5a0] sm:$0xff]
      %v5636 = vld [vmem:[#allocation2 + $0x5a8] sm:$0xff]
      %v5637 = vld [vmem:[#allocation2 + $0x5b0] sm:$0xff]
      %v5638 = vld [vmem:[#allocation2 + $0x5b8] sm:$0xff]
      %v5639 = vld [vmem:[#allocation2 + $0x5c0] sm:$0xff]
      %v5640 = vld [vmem:[#allocation2 + $0x5c8] sm:$0xff]
      %v5641 = vld [vmem:[#allocation2 + $0x5d0] sm:$0xff]
      %v5642 = vld [vmem:[#allocation2 + $0x5d8] sm:$0xff]
      %v5643 = vld [vmem:[#allocation2 + $0x5e0] sm:$0xff]
      %v5644 = vld [vmem:[#allocation2 + $0x5e8] sm:$0xff]
      %v5645 = vld [vmem:[#allocation2 + $0x5f0] sm:$0xff]
      %v5646 = vld [vmem:[#allocation2 + $0x5f8] sm:$0xff]
      %v5647 = vld [vmem:[#allocation2 + $0x600] sm:$0xff]
      %v5648 = vld [vmem:[#allocation2 + $0x608] sm:$0xff]
      %v5649 = vld [vmem:[#allocation2 + $0x610] sm:$0xff]
      %v5650 = vld [vmem:[#allocation2 + $0x618] sm:$0xff]
      %v5651 = vld [vmem:[#allocation2 + $0x620] sm:$0xff]
      %v5652 = vld [vmem:[#allocation2 + $0x628] sm:$0xff]
      %v5653 = vld [vmem:[#allocation2 + $0x630] sm:$0xff]
      %v5654 = vld [vmem:[#allocation2 + $0x638] sm:$0xff]
      %v5655 = vld [vmem:[#allocation2 + $0x640] sm:$0xff]
      %v5656 = vld [vmem:[#allocation2 + $0x648] sm:$0xff]
      %v5657 = vld [vmem:[#allocation2 + $0x650] sm:$0xff]
      %v5658 = vld [vmem:[#allocation2 + $0x658] sm:$0xff]
      %v5659 = vld [vmem:[#allocation2 + $0x660] sm:$0xff]
      %v5660 = vld [vmem:[#allocation2 + $0x668] sm:$0xff]
      %v5661 = vld [vmem:[#allocation2 + $0x670] sm:$0xff]
      %v5662 = vld [vmem:[#allocation2 + $0x678] sm:$0xff]
      %v5663 = vld [vmem:[#allocation2 + $0x680] sm:$0xff]
      %v5664 = vld [vmem:[#allocation2 + $0x688] sm:$0xff]
      %v5665 = vld [vmem:[#allocation2 + $0x690] sm:$0xff]
      %v5666 = vld [vmem:[#allocation2 + $0x698] sm:$0xff]
      %v5667 = vld [vmem:[#allocation2 + $0x6a0] sm:$0xff]
      %v5668 = vld [vmem:[#allocation2 + $0x6a8] sm:$0xff]
      %v5669 = vld [vmem:[#allocation2 + $0x6b0] sm:$0xff]
      %v5670 = vld [vmem:[#allocation2 + $0x6b8] sm:$0xff]
      %v5671 = vld [vmem:[#allocation2 + $0x6c0] sm:$0xff]
      %v5672 = vld [vmem:[#allocation2 + $0x6c8] sm:$0xff]
      %v5673 = vld [vmem:[#allocation2 + $0x6d0] sm:$0xff]
      %v5674 = vld [vmem:[#allocation2 + $0x6d8] sm:$0xff]
      %v5675 = vld [vmem:[#allocation2 + $0x6e0] sm:$0xff]
      %v5676 = vld [vmem:[#allocation2 + $0x6e8] sm:$0xff]
      %v5677 = vld [vmem:[#allocation2 + $0x6f0] sm:$0xff]
      %v5678 = vld [vmem:[#allocation2 + $0x6f8] sm:$0xff]
      %v5679 = vld [vmem:[#allocation2 + $0x700] sm:$0xff]
      %v5680 = vld [vmem:[#allocation2 + $0x708] sm:$0xff]
      %v5681 = vld [vmem:[#allocation2 + $0x710] sm:$0xff]
      %v5682 = vld [vmem:[#allocation2 + $0x718] sm:$0xff]
      %v5683 = vld [vmem:[#allocation2 + $0x720] sm:$0xff]
      %v5684 = vld [vmem:[#allocation2 + $0x728] sm:$0xff]
      %v5685 = vld [vmem:[#allocation2 + $0x730] sm:$0xff]
      %v5686 = vld [vmem:[#allocation2 + $0x738] sm:$0xff]
      %v5687 = vld [vmem:[#allocation2 + $0x740] sm:$0xff]
      %v5688 = vld [vmem:[#allocation2 + $0x748] sm:$0xff]
      %v5689 = vld [vmem:[#allocation2 + $0x750] sm:$0xff]
      %v5690 = vld [vmem:[#allocation2 + $0x758] sm:$0xff]
      %v5691 = vld [vmem:[#allocation2 + $0x760] sm:$0xff]
      %v5692 = vld [vmem:[#allocation2 + $0x768] sm:$0xff]
      %v5693 = vld [vmem:[#allocation2 + $0x770] sm:$0xff]
      %v5694 = vld [vmem:[#allocation2 + $0x778] sm:$0xff]
      %v5695 = vld [vmem:[#allocation2 + $0x780] sm:$0xff]
      %v5696 = vld [vmem:[#allocation2 + $0x788] sm:$0xff]
      %v5697 = vld [vmem:[#allocation2 + $0x790] sm:$0xff]
      %v5698 = vld [vmem:[#allocation2 + $0x798] sm:$0xff]
      %v5699 = vld [vmem:[#allocation2 + $0x7a0] sm:$0xff]
      %v5700 = vld [vmem:[#allocation2 + $0x7a8] sm:$0xff]
      %v5701 = vld [vmem:[#allocation2 + $0x7b0] sm:$0xff]
      %v5702 = vld [vmem:[#allocation2 + $0x7b8] sm:$0xff]
      %v5703 = vld [vmem:[#allocation2 + $0x7c0] sm:$0xff]
      %v5704 = vld [vmem:[#allocation2 + $0x7c8] sm:$0xff]
      %v5705 = vld [vmem:[#allocation2 + $0x7d0] sm:$0xff]
      %v5706 = vld [vmem:[#allocation2 + $0x7d8] sm:$0xff]
      %v5707 = vld [vmem:[#allocation2 + $0x7e0] sm:$0xff]
      %v5708 = vld [vmem:[#allocation2 + $0x7e8] sm:$0xff]
      %v5709 = vld [vmem:[#allocation2 + $0x7f0] sm:$0xff]
      %v5710 = vld [vmem:[#allocation2 + $0x7f8] sm:$0xff]
      %v5711 = vld [vmem:[#allocation2 + $0x800] sm:$0xff]
      %v5712 = vld [vmem:[#allocation2 + $0x808] sm:$0xff]
      %v5713 = vld [vmem:[#allocation2 + $0x810] sm:$0xff]
      %v5714 = vld [vmem:[#allocation2 + $0x818] sm:$0xff]
      %v5715 = vld [vmem:[#allocation2 + $0x820] sm:$0xff]
      %v5716 = vld [vmem:[#allocation2 + $0x828] sm:$0xff]
      %v5717 = vld [vmem:[#allocation2 + $0x830] sm:$0xff]
      %v5718 = vld [vmem:[#allocation2 + $0x838] sm:$0xff]
      %v5719 = vld [vmem:[#allocation2 + $0x840] sm:$0xff]
      %v5720 = vld [vmem:[#allocation2 + $0x848] sm:$0xff]
      %v5721 = vld [vmem:[#allocation2 + $0x850] sm:$0xff]
      %v5722 = vld [vmem:[#allocation2 + $0x858] sm:$0xff]
      %v5723 = vld [vmem:[#allocation2 + $0x860] sm:$0xff]
      %v5724 = vld [vmem:[#allocation2 + $0x868] sm:$0xff]
      %v5725 = vld [vmem:[#allocation2 + $0x870] sm:$0xff]
      %v5726 = vld [vmem:[#allocation2 + $0x878] sm:$0xff]
      %v5727 = vld [vmem:[#allocation2 + $0x880] sm:$0xff]
      %v5728 = vld [vmem:[#allocation2 + $0x888] sm:$0xff]
      %v5729 = vld [vmem:[#allocation2 + $0x890] sm:$0xff]
      %v5730 = vld [vmem:[#allocation2 + $0x898] sm:$0xff]
      %v5731 = vld [vmem:[#allocation2 + $0x8a0] sm:$0xff]
      %v5732 = vld [vmem:[#allocation2 + $0x8a8] sm:$0xff]
      %v5733 = vld [vmem:[#allocation2 + $0x8b0] sm:$0xff]
      %v5734 = vld [vmem:[#allocation2 + $0x8b8] sm:$0xff]
      %v5735 = vld [vmem:[#allocation2 + $0x8c0] sm:$0xff]
      %v5736 = vld [vmem:[#allocation2 + $0x8c8] sm:$0xff]
      %v5737 = vld [vmem:[#allocation2 + $0x8d0] sm:$0xff]
      %v5738 = vld [vmem:[#allocation2 + $0x8d8] sm:$0xff]
      %v5739 = vld [vmem:[#allocation2 + $0x8e0] sm:$0xff]
      %v5740 = vld [vmem:[#allocation2 + $0x8e8] sm:$0xff]
      %v5741 = vld [vmem:[#allocation2 + $0x8f0] sm:$0xff]
      %v5742 = vld [vmem:[#allocation2 + $0x8f8] sm:$0xff]
      %s5743 = scalar_lea.vmem %s1, 2304
      %v5744 = vld [vmem:[%s5743] sm:$0xff]
      %v5745 = vld [vmem:[%s5743 + $0x8] sm:$0xff]
      %v5746 = vld [vmem:[%s5743 + $0x10] sm:$0xff]
      %v5747 = vld [vmem:[%s5743 + $0x18] sm:$0xff]
      %v5748 = vld [vmem:[%s5743 + $0x20] sm:$0xff]
      %v5749 = vld [vmem:[%s5743 + $0x28] sm:$0xff]
      %v5750 = vld [vmem:[%s5743 + $0x30] sm:$0xff]
      %v5751 = vld [vmem:[%s5743 + $0x38] sm:$0xff]
      %v5752 = vld [vmem:[%s5743 + $0x40] sm:$0xff]
      %v5753 = vld [vmem:[%s5743 + $0x48] sm:$0xff]
      %v5754 = vld [vmem:[%s5743 + $0x50] sm:$0xff]
      %v5755 = vld [vmem:[%s5743 + $0x58] sm:$0xff]
      %v5756 = vld [vmem:[%s5743 + $0x60] sm:$0xff]
      %v5757 = vld [vmem:[%s5743 + $0x68] sm:$0xff]
      %v5758 = vld [vmem:[%s5743 + $0x70] sm:$0xff]
      %v5759 = vld [vmem:[%s5743 + $0x78] sm:$0xff]
      %v5760 = vld [vmem:[%s5743 + $0x80] sm:$0xff]
      %v5761 = vld [vmem:[%s5743 + $0x88] sm:$0xff]
      %v5762 = vld [vmem:[%s5743 + $0x90] sm:$0xff]
      %v5763 = vld [vmem:[%s5743 + $0x98] sm:$0xff]
      %v5764 = vld [vmem:[%s5743 + $0xa0] sm:$0xff]
      %v5765 = vld [vmem:[%s5743 + $0xa8] sm:$0xff]
      %v5766 = vld [vmem:[%s5743 + $0xb0] sm:$0xff]
      %v5767 = vld [vmem:[%s5743 + $0xb8] sm:$0xff]
      %v5768 = vld [vmem:[%s5743 + $0xc0] sm:$0xff]
      %v5769 = vld [vmem:[%s5743 + $0xc8] sm:$0xff]
      %v5770 = vld [vmem:[%s5743 + $0xd0] sm:$0xff]
      %v5771 = vld [vmem:[%s5743 + $0xd8] sm:$0xff]
      %v5772 = vld [vmem:[%s5743 + $0xe0] sm:$0xff]
      %v5773 = vld [vmem:[%s5743 + $0xe8] sm:$0xff]
      %v5774 = vld [vmem:[%s5743 + $0xf0] sm:$0xff]
      %v5775 = vld [vmem:[%s5743 + $0xf8] sm:$0xff]
      %v5776 = vld [vmem:[%s5743 + $0x100] sm:$0xff]
      %v5777 = vld [vmem:[%s5743 + $0x108] sm:$0xff]
      %v5778 = vld [vmem:[%s5743 + $0x110] sm:$0xff]
      %v5779 = vld [vmem:[%s5743 + $0x118] sm:$0xff]
      %v5780 = vld [vmem:[%s5743 + $0x120] sm:$0xff]
      %v5781 = vld [vmem:[%s5743 + $0x128] sm:$0xff]
      %v5782 = vld [vmem:[%s5743 + $0x130] sm:$0xff]
      %v5783 = vld [vmem:[%s5743 + $0x138] sm:$0xff]
      %v5784 = vld [vmem:[%s5743 + $0x140] sm:$0xff]
      %v5785 = vld [vmem:[%s5743 + $0x148] sm:$0xff]
      %v5786 = vld [vmem:[%s5743 + $0x150] sm:$0xff]
      %v5787 = vld [vmem:[%s5743 + $0x158] sm:$0xff]
      %v5788 = vld [vmem:[%s5743 + $0x160] sm:$0xff]
      %v5789 = vld [vmem:[%s5743 + $0x168] sm:$0xff]
      %v5790 = vld [vmem:[%s5743 + $0x170] sm:$0xff]
      %v5791 = vld [vmem:[%s5743 + $0x178] sm:$0xff]
      %v5792 = vld [vmem:[%s5743 + $0x180] sm:$0xff]
      %v5793 = vld [vmem:[%s5743 + $0x188] sm:$0xff]
      %v5794 = vld [vmem:[%s5743 + $0x190] sm:$0xff]
      %v5795 = vld [vmem:[%s5743 + $0x198] sm:$0xff]
      %v5796 = vld [vmem:[%s5743 + $0x1a0] sm:$0xff]
      %v5797 = vld [vmem:[%s5743 + $0x1a8] sm:$0xff]
      %v5798 = vld [vmem:[%s5743 + $0x1b0] sm:$0xff]
      %v5799 = vld [vmem:[%s5743 + $0x1b8] sm:$0xff]
      %v5800 = vld [vmem:[%s5743 + $0x1c0] sm:$0xff]
      %v5801 = vld [vmem:[%s5743 + $0x1c8] sm:$0xff]
      %v5802 = vld [vmem:[%s5743 + $0x1d0] sm:$0xff]
      %v5803 = vld [vmem:[%s5743 + $0x1d8] sm:$0xff]
      %v5804 = vld [vmem:[%s5743 + $0x1e0] sm:$0xff]
      %v5805 = vld [vmem:[%s5743 + $0x1e8] sm:$0xff]
      %v5806 = vld [vmem:[%s5743 + $0x1f0] sm:$0xff]
      %v5807 = vld [vmem:[%s5743 + $0x1f8] sm:$0xff]
      %v5808 = vld [vmem:[%s5743 + $0x200] sm:$0xff]
      %v5809 = vld [vmem:[%s5743 + $0x208] sm:$0xff]
      %v5810 = vld [vmem:[%s5743 + $0x210] sm:$0xff]
      %v5811 = vld [vmem:[%s5743 + $0x218] sm:$0xff]
      %v5812 = vld [vmem:[%s5743 + $0x220] sm:$0xff]
      %v5813 = vld [vmem:[%s5743 + $0x228] sm:$0xff]
      %v5814 = vld [vmem:[%s5743 + $0x230] sm:$0xff]
      %v5815 = vld [vmem:[%s5743 + $0x238] sm:$0xff]
      %v5816 = vld [vmem:[%s5743 + $0x240] sm:$0xff]
      %v5817 = vld [vmem:[%s5743 + $0x248] sm:$0xff]
      %v5818 = vld [vmem:[%s5743 + $0x250] sm:$0xff]
      %v5819 = vld [vmem:[%s5743 + $0x258] sm:$0xff]
      %v5820 = vld [vmem:[%s5743 + $0x260] sm:$0xff]
      %v5821 = vld [vmem:[%s5743 + $0x268] sm:$0xff]
      %v5822 = vld [vmem:[%s5743 + $0x270] sm:$0xff]
      %v5823 = vld [vmem:[%s5743 + $0x278] sm:$0xff]
      %v5824 = vld [vmem:[%s5743 + $0x280] sm:$0xff]
      %v5825 = vld [vmem:[%s5743 + $0x288] sm:$0xff]
      %v5826 = vld [vmem:[%s5743 + $0x290] sm:$0xff]
      %v5827 = vld [vmem:[%s5743 + $0x298] sm:$0xff]
      %v5828 = vld [vmem:[%s5743 + $0x2a0] sm:$0xff]
      %v5829 = vld [vmem:[%s5743 + $0x2a8] sm:$0xff]
      %v5830 = vld [vmem:[%s5743 + $0x2b0] sm:$0xff]
      %v5831 = vld [vmem:[%s5743 + $0x2b8] sm:$0xff]
      %v5832 = vld [vmem:[%s5743 + $0x2c0] sm:$0xff]
      %v5833 = vld [vmem:[%s5743 + $0x2c8] sm:$0xff]
      %v5834 = vld [vmem:[%s5743 + $0x2d0] sm:$0xff]
      %v5835 = vld [vmem:[%s5743 + $0x2d8] sm:$0xff]
      %v5836 = vld [vmem:[%s5743 + $0x2e0] sm:$0xff]
      %v5837 = vld [vmem:[%s5743 + $0x2e8] sm:$0xff]
      %v5838 = vld [vmem:[%s5743 + $0x2f0] sm:$0xff]
      %v5839 = vld [vmem:[%s5743 + $0x2f8] sm:$0xff]
      %v5840 = vld [vmem:[%s5743 + $0x300] sm:$0xff]
      %v5841 = vld [vmem:[%s5743 + $0x308] sm:$0xff]
      %v5842 = vld [vmem:[%s5743 + $0x310] sm:$0xff]
      %v5843 = vld [vmem:[%s5743 + $0x318] sm:$0xff]
      %v5844 = vld [vmem:[%s5743 + $0x320] sm:$0xff]
      %v5845 = vld [vmem:[%s5743 + $0x328] sm:$0xff]
      %v5846 = vld [vmem:[%s5743 + $0x330] sm:$0xff]
      %v5847 = vld [vmem:[%s5743 + $0x338] sm:$0xff]
      %v5848 = vld [vmem:[%s5743 + $0x340] sm:$0xff]
      %v5849 = vld [vmem:[%s5743 + $0x348] sm:$0xff]
      %v5850 = vld [vmem:[%s5743 + $0x350] sm:$0xff]
      %v5851 = vld [vmem:[%s5743 + $0x358] sm:$0xff]
      %v5852 = vld [vmem:[%s5743 + $0x360] sm:$0xff]
      %v5853 = vld [vmem:[%s5743 + $0x368] sm:$0xff]
      %v5854 = vld [vmem:[%s5743 + $0x370] sm:$0xff]
      %v5855 = vld [vmem:[%s5743 + $0x378] sm:$0xff]
      %v5856 = vld [vmem:[%s5743 + $0x380] sm:$0xff]
      %v5857 = vld [vmem:[%s5743 + $0x388] sm:$0xff]
      %v5858 = vld [vmem:[%s5743 + $0x390] sm:$0xff]
      %v5859 = vld [vmem:[%s5743 + $0x398] sm:$0xff]
      %v5860 = vld [vmem:[%s5743 + $0x3a0] sm:$0xff]
      %v5861 = vld [vmem:[%s5743 + $0x3a8] sm:$0xff]
      %v5862 = vld [vmem:[%s5743 + $0x3b0] sm:$0xff]
      %v5863 = vld [vmem:[%s5743 + $0x3b8] sm:$0xff]
      %v5864 = vld [vmem:[%s5743 + $0x3c0] sm:$0xff]
      %v5865 = vld [vmem:[%s5743 + $0x3c8] sm:$0xff]
      %v5866 = vld [vmem:[%s5743 + $0x3d0] sm:$0xff]
      %v5867 = vld [vmem:[%s5743 + $0x3d8] sm:$0xff]
      %v5868 = vld [vmem:[%s5743 + $0x3e0] sm:$0xff]
      %v5869 = vld [vmem:[%s5743 + $0x3e8] sm:$0xff]
      %v5870 = vld [vmem:[%s5743 + $0x3f0] sm:$0xff]
      %v5871 = vld [vmem:[%s5743 + $0x3f8] sm:$0xff]
      %v5872 = vld [vmem:[%s5743 + $0x400] sm:$0xff]
      %v5873 = vld [vmem:[%s5743 + $0x408] sm:$0xff]
      %v5874 = vld [vmem:[%s5743 + $0x410] sm:$0xff]
      %v5875 = vld [vmem:[%s5743 + $0x418] sm:$0xff]
      %v5876 = vld [vmem:[%s5743 + $0x420] sm:$0xff]
      %v5877 = vld [vmem:[%s5743 + $0x428] sm:$0xff]
      %v5878 = vld [vmem:[%s5743 + $0x430] sm:$0xff]
      %v5879 = vld [vmem:[%s5743 + $0x438] sm:$0xff]
      %v5880 = vld [vmem:[%s5743 + $0x440] sm:$0xff]
      %v5881 = vld [vmem:[%s5743 + $0x448] sm:$0xff]
      %v5882 = vld [vmem:[%s5743 + $0x450] sm:$0xff]
      %v5883 = vld [vmem:[%s5743 + $0x458] sm:$0xff]
      %v5884 = vld [vmem:[%s5743 + $0x460] sm:$0xff]
      %v5885 = vld [vmem:[%s5743 + $0x468] sm:$0xff]
      %v5886 = vld [vmem:[%s5743 + $0x470] sm:$0xff]
      %v5887 = vld [vmem:[%s5743 + $0x478] sm:$0xff]
      %5888 = vmatprep.subr.mxu0 0.0
      %5889 = vmatpush1.msra.mxu0 %v5744
      %5890 = vmatprep.subr.mxu0 0.0
      %5891 = vmatpush1.msra.mxu0 %v5745
      %5892 = vmatprep.subr.mxu0 0.0
      %5893 = vmatpush1.msra.mxu0 %v5746
      %5894 = vmatprep.subr.mxu0 0.0
      %5895 = vmatpush1.msra.mxu0 %v5747
      %5896 = vmatprep.subr.mxu0 0.0
      %5897 = vmatpush1.msra.mxu0 %v5748
      %5898 = vmatprep.subr.mxu0 0.0
      %5899 = vmatpush1.msra.mxu0 %v5749
      %5900 = vmatprep.subr.mxu0 0.0
      %5901 = vmatpush1.msra.mxu0 %v5750
      %5902 = vmatprep.subr.mxu0 0.0
      %5903 = vmatpush1.msra.mxu0 %v5751
      %5904 = vmatprep.subr.mxu0 0.0
      %5905 = vmatpush1.msra.mxu0 %v5752
      %5906 = vmatprep.subr.mxu0 0.0
      %5907 = vmatpush1.msra.mxu0 %v5753
      %5908 = vmatprep.subr.mxu0 0.0
      %5909 = vmatpush1.msra.mxu0 %v5754
      %5910 = vmatprep.subr.mxu0 0.0
      %5911 = vmatpush1.msra.mxu0 %v5755
      %5912 = vmatprep.subr.mxu0 0.0
      %5913 = vmatpush1.msra.mxu0 %v5756
      %5914 = vmatprep.subr.mxu0 0.0
      %5915 = vmatpush1.msra.mxu0 %v5757
      %5916 = vmatprep.subr.mxu0 0.0
      %5917 = vmatpush1.msra.mxu0 %v5758
      %5918 = vmatprep.subr.mxu0 0.0
      %5919 = vmatpush1.msra.mxu0 %v5759
      %5920 = vmatprep.subr.mxu0 0.0
      %5921 = vmatpush1.msra.mxu0 %v5760
      %5922 = vmatprep.subr.mxu0 0.0
      %5923 = vmatpush1.msra.mxu0 %v5761
      %5924 = vmatprep.subr.mxu0 0.0
      %5925 = vmatpush1.msra.mxu0 %v5762
      %5926 = vmatprep.subr.mxu0 0.0
      %5927 = vmatpush1.msra.mxu0 %v5763
      %5928 = vmatprep.subr.mxu0 0.0
      %5929 = vmatpush1.msra.mxu0 %v5764
      %5930 = vmatprep.subr.mxu0 0.0
      %5931 = vmatpush1.msra.mxu0 %v5765
      %5932 = vmatprep.subr.mxu0 0.0
      %5933 = vmatpush1.msra.mxu0 %v5766
      %5934 = vmatprep.subr.mxu0 0.0
      %5935 = vmatpush1.msra.mxu0 %v5767
      %5936 = vmatprep.subr.mxu0 0.0
      %5937 = vmatpush1.msra.mxu0 %v5768
      %5938 = vmatprep.subr.mxu0 0.0
      %5939 = vmatpush1.msra.mxu0 %v5769
      %5940 = vmatprep.subr.mxu0 0.0
      %5941 = vmatpush1.msra.mxu0 %v5770
      %5942 = vmatprep.subr.mxu0 0.0
      %5943 = vmatpush1.msra.mxu0 %v5771
      %5944 = vmatprep.subr.mxu0 0.0
      %5945 = vmatpush1.msra.mxu0 %v5772
      %5946 = vmatprep.subr.mxu0 0.0
      %5947 = vmatpush1.msra.mxu0 %v5773
      %5948 = vmatprep.subr.mxu0 0.0
      %5949 = vmatpush1.msra.mxu0 %v5774
      %5950 = vmatprep.subr.mxu0 0.0
      %5951 = vmatpush1.msra.mxu0 %v5775
      %5952 = vmatprep.mubr.f32.mxu0 %v5456
      %5953 = vmatmul.mubr.f32.gmra.mrb[0].mxu0 %v5455
      %v5954 = vpop.f32.mrb[0].mxu0
      %v5955 = vadd.f32 0.0, %v5954
      %v5956 = vpop.f32.mrb[0].mxu0
      %5957 = vmatprep.mubr.f32.mxu0 %v5465
      %5958 = vmatmul.mubr.f32.gmra.mrb[0].mxu0 %v5464
      %v5959 = vpop.f32.mrb[0].mxu0
      %v5960 = vadd.f32 0.0, %v5959
      %v5961 = vpop.f32.mrb[0].mxu0
      %5962 = vmatprep.mubr.f32.mxu0 %v5474
      %5963 = vmatmul.mubr.f32.gmra.mrb[0].mxu0 %v5473
      %v5964 = vpop.f32.mrb[0].mxu0
      %v5965 = vadd.f32 0.0, %v5964
      %v5966 = vpop.f32.mrb[0].mxu0
      %5967 = vmatprep.mubr.f32.mxu0 %v5483
      %5968 = vmatmul.mubr.f32.gmra.mrb[0].mxu0 %v5482
      %v5969 = vpop.f32.mrb[0].mxu0
      %v5970 = vadd.f32 0.0, %v5969
      %v5971 = vpop.f32.mrb[0].mxu0
      %5972 = vmatprep.mubr.f32.mxu0 %v5492
      %5973 = vmatmul.mubr.f32.gmra.mrb[0].mxu0 %v5491
      %v5974 = vpop.f32.mrb[0].mxu0
      %v5975 = vadd.f32 0.0, %v5974
      %v5976 = vpop.f32.mrb[0].mxu0
      %5977 = vmatprep.mubr.f32.mxu0 %v5501
      %5978 = vmatmul.mubr.f32.gmra.mrb[0].mxu0 %v5500
      %v5979 = vpop.f32.mrb[0].mxu0
      %v5980 = vadd.f32 0.0, %v5979
      %v5981 = vpop.f32.mrb[0].mxu0
      %5982 = vmatprep.mubr.f32.mxu0 %v5510
      %5983 = vmatmul.mubr.f32.gmra.mrb[0].mxu0 %v5509
      %v5984 = vpop.f32.mrb[0].mxu0
      %v5985 = vadd.f32 0.0, %v5984
      %v5986 = vpop.f32.mrb[0].mxu0
      %5987 = vmatprep.mubr.f32.mxu0 %v5519
      %5988 = vmatmul.mubr.f32.gmra.mrb[0].mxu0 %v5518
      %v5989 = vpop.f32.mrb[0].mxu0
      %v5990 = vadd.f32 0.0, %v5989
      %v5991 = vpop.f32.mrb[0].mxu0
      %5992 = vmatprep.mubr.f32.mxu0 %v5528
      %5993 = vmatmul.mubr.f32.gmra.mrb[0].mxu0 %v5527
      %v5994 = vpop.f32.mrb[0].mxu0
      %v5995 = vadd.f32 0.0, %v5994
      %v5996 = vpop.f32.mrb[0].mxu0
      %5997 = vmatprep.mubr.f32.mxu0 %v5537
      %5998 = vmatmul.mubr.f32.gmra.mrb[0].mxu0 %v5536
      %v5999 = vpop.f32.mrb[0].mxu0
      %v6000 = vadd.f32 0.0, %v5999
      %v6001 = vpop.f32.mrb[0].mxu0
      %6002 = vmatprep.mubr.f32.mxu0 %v5546
      %6003 = vmatmul.mubr.f32.gmra.mrb[0].mxu0 %v5545
      %v6004 = vpop.f32.mrb[0].mxu0
      %v6005 = vadd.f32 0.0, %v6004
      %v6006 = vpop.f32.mrb[0].mxu0
      %6007 = vmatprep.mubr.f32.mxu0 %v5555
      %6008 = vmatmul.mubr.f32.gmra.mrb[0].mxu0 %v5554
      %v6009 = vpop.f32.mrb[0].mxu0
      %v6010 = vadd.f32 0.0, %v6009
      %v6011 = vpop.f32.mrb[0].mxu0
      %6012 = vmatprep.mubr.f32.mxu0 %v5564
      %6013 = vmatmul.mubr.f32.gmra.mrb[0].mxu0 %v5563
      %v6014 = vpop.f32.mrb[0].mxu0
      %v6015 = vadd.f32 0.0, %v6014
      %v6016 = vpop.f32.mrb[0].mxu0
      %6017 = vmatprep.mubr.f32.mxu0 %v5573
      %6018 = vmatmul.mubr.f32.gmra.mrb[0].mxu0 %v5572
      %v6019 = vpop.f32.mrb[0].mxu0
      %v6020 = vadd.f32 0.0, %v6019
      %v6021 = vpop.f32.mrb[0].mxu0
      %6022 = vmatprep.mubr.f32.mxu0 %v5582
      %6023 = vmatmul.mubr.f32.gmra.mrb[0].mxu0 %v5581
      %v6024 = vpop.f32.mrb[0].mxu0
      %v6025 = vadd.f32 0.0, %v6024
      %v6026 = vpop.f32.mrb[0].mxu0
      %6027 = vmatprep.mubr.f32.mxu0 %v5591
      %6028 = vmatmul.mubr.f32.gmra.mrb[0].mxu0 %v5590
      %v6029 = vpop.f32.mrb[0].mxu0
      %v6030 = vadd.f32 0.0, %v6029
      %v6031 = vpop.f32.mrb[0].mxu0
      %6032 = vmatprep.mubr.f32.mxu0 %v5600
      %6033 = vmatmul.mubr.f32.gmra.mrb[0].mxu0 %v5599
      %v6034 = vpop.f32.mrb[0].mxu0
      %v6035 = vadd.f32 0.0, %v6034
      %v6036 = vpop.f32.mrb[0].mxu0
      %6037 = vmatprep.mubr.f32.mxu0 %v5609
      %6038 = vmatmul.mubr.f32.gmra.mrb[0].mxu0 %v5608
      %v6039 = vpop.f32.mrb[0].mxu0
      %v6040 = vadd.f32 0.0, %v6039
      %v6041 = vpop.f32.mrb[0].mxu0
      %6042 = vmatprep.mubr.f32.mxu0 %v5618
      %6043 = vmatmul.mubr.f32.gmra.mrb[0].mxu0 %v5617
      %v6044 = vpop.f32.mrb[0].mxu0
      %v6045 = vadd.f32 0.0, %v6044
      %v6046 = vpop.f32.mrb[0].mxu0
      %6047 = vmatprep.mubr.f32.mxu0 %v5627
      %6048 = vmatmul.mubr.f32.gmra.mrb[0].mxu0 %v5626
      %v6049 = vpop.f32.mrb[0].mxu0
      %v6050 = vadd.f32 0.0, %v6049
      %v6051 = vpop.f32.mrb[0].mxu0
      %6052 = vmatprep.mubr.f32.mxu0 %v5636
      %6053 = vmatmul.mubr.f32.gmra.mrb[0].mxu0 %v5635
      %v6054 = vpop.f32.mrb[0].mxu0
      %v6055 = vadd.f32 0.0, %v6054
      %v6056 = vpop.f32.mrb[0].mxu0
      %6057 = vmatprep.mubr.f32.mxu0 %v5645
      %6058 = vmatmul.mubr.f32.gmra.mrb[0].mxu0 %v5644
      %v6059 = vpop.f32.mrb[0].mxu0
      %v6060 = vadd.f32 0.0, %v6059
      %v6061 = vpop.f32.mrb[0].mxu0
      %6062 = vmatprep.mubr.f32.mxu0 %v5654
      %6063 = vmatmul.mubr.f32.gmra.mrb[0].mxu0 %v5653
      %v6064 = vpop.f32.mrb[0].mxu0
      %v6065 = vadd.f32 0.0, %v6064
      %v6066 = vpop.f32.mrb[0].mxu0
      %6067 = vmatprep.mubr.f32.mxu0 %v5663
      %6068 = vmatmul.mubr.f32.gmra.mrb[0].mxu0 %v5662
      %v6069 = vpop.f32.mrb[0].mxu0
      %v6070 = vadd.f32 0.0, %v6069
      %v6071 = vpop.f32.mrb[0].mxu0
      %6072 = vmatprep.mubr.f32.mxu0 %v5672
      %6073 = vmatmul.mubr.f32.gmra.mrb[0].mxu0 %v5671
      %v6074 = vpop.f32.mrb[0].mxu0
      %v6075 = vadd.f32 0.0, %v6074
      %v6076 = vpop.f32.mrb[0].mxu0
      %6077 = vmatprep.mubr.f32.mxu0 %v5681
      %6078 = vmatmul.mubr.f32.gmra.mrb[0].mxu0 %v5680
      %v6079 = vpop.f32.mrb[0].mxu0
      %v6080 = vadd.f32 0.0, %v6079
      %v6081 = vpop.f32.mrb[0].mxu0
      %6082 = vmatprep.mubr.f32.mxu0 %v5690
      %6083 = vmatmul.mubr.f32.gmra.mrb[0].mxu0 %v5689
      %v6084 = vpop.f32.mrb[0].mxu0
      %v6085 = vadd.f32 0.0, %v6084
      %v6086 = vpop.f32.mrb[0].mxu0
      %6087 = vmatprep.mubr.f32.mxu0 %v5699
      %6088 = vmatmul.mubr.f32.gmra.mrb[0].mxu0 %v5698
      %v6089 = vpop.f32.mrb[0].mxu0
      %v6090 = vadd.f32 0.0, %v6089
      %v6091 = vpop.f32.mrb[0].mxu0
      %6092 = vmatprep.mubr.f32.mxu0 %v5708
      %6093 = vmatmul.mubr.f32.gmra.mrb[0].mxu0 %v5707
      %v6094 = vpop.f32.mrb[0].mxu0
      %v6095 = vadd.f32 0.0, %v6094
      %v6096 = vpop.f32.mrb[0].mxu0
      %6097 = vmatprep.mubr.f32.mxu0 %v5717
      %6098 = vmatmul.mubr.f32.gmra.mrb[0].mxu0 %v5716
      %v6099 = vpop.f32.mrb[0].mxu0
      %v6100 = vadd.f32 0.0, %v6099
      %v6101 = vpop.f32.mrb[0].mxu0
      %6102 = vmatprep.mubr.f32.mxu0 %v5726
      %6103 = vmatmul.mubr.f32.gmra.mrb[0].mxu0 %v5725
      %v6104 = vpop.f32.mrb[0].mxu0
      %v6105 = vadd.f32 0.0, %v6104
      %v6106 = vpop.f32.mrb[0].mxu0
      %6107 = vmatprep.mubr.f32.mxu0 %v5735
      %6108 = vmatmul.mubr.f32.gmra.mrb[0].mxu0 %v5734
      %v6109 = vpop.f32.mrb[0].mxu0
      %v6110 = vadd.f32 0.0, %v6109
      %v6111 = vpop.f32.mrb[0].mxu0
      %6112 = vdwg.mxu0
      %6113 = vmatprep.subr.mxu0 0.0
      %6114 = vmatpush1.msra.mxu0 %v5776
      %6115 = vmatprep.subr.mxu0 0.0
      %6116 = vmatpush1.msra.mxu0 %v5777
      %6117 = vmatprep.subr.mxu0 0.0
      %6118 = vmatpush1.msra.mxu0 %v5778
      %6119 = vmatprep.subr.mxu0 0.0
      %6120 = vmatpush1.msra.mxu0 %v5779
      %6121 = vmatprep.subr.mxu0 0.0
      %6122 = vmatpush1.msra.mxu0 %v5780
      %6123 = vmatprep.subr.mxu0 0.0
      %6124 = vmatpush1.msra.mxu0 %v5781
      %6125 = vmatprep.subr.mxu0 0.0
      %6126 = vmatpush1.msra.mxu0 %v5782
      %6127 = vmatprep.subr.mxu0 0.0
      %6128 = vmatpush1.msra.mxu0 %v5783
      %6129 = vmatprep.subr.mxu0 0.0
      %6130 = vmatpush1.msra.mxu0 %v5784
      %6131 = vmatprep.subr.mxu0 0.0
      %6132 = vmatpush1.msra.mxu0 %v5785
      %6133 = vmatprep.subr.mxu0 0.0
      %6134 = vmatpush1.msra.mxu0 %v5786
      %6135 = vmatprep.subr.mxu0 0.0
      %6136 = vmatpush1.msra.mxu0 %v5787
      %6137 = vmatprep.subr.mxu0 0.0
      %6138 = vmatpush1.msra.mxu0 %v5788
      %6139 = vmatprep.subr.mxu0 0.0
      %6140 = vmatpush1.msra.mxu0 %v5789
      %6141 = vmatprep.subr.mxu0 0.0
      %6142 = vmatpush1.msra.mxu0 %v5790
      %6143 = vmatprep.subr.mxu0 0.0
      %6144 = vmatpush1.msra.mxu0 %v5791
      %6145 = vmatprep.subr.mxu0 0.0
      %6146 = vmatpush1.msra.mxu0 %v5792
      %6147 = vmatprep.subr.mxu0 0.0
      %6148 = vmatpush1.msra.mxu0 %v5793
      %6149 = vmatprep.subr.mxu0 0.0
      %6150 = vmatpush1.msra.mxu0 %v5794
      %6151 = vmatprep.subr.mxu0 0.0
      %6152 = vmatpush1.msra.mxu0 %v5795
      %6153 = vmatprep.subr.mxu0 0.0
      %6154 = vmatpush1.msra.mxu0 %v5796
      %6155 = vmatprep.subr.mxu0 0.0
      %6156 = vmatpush1.msra.mxu0 %v5797
      %6157 = vmatprep.subr.mxu0 0.0
      %6158 = vmatpush1.msra.mxu0 %v5798
      %6159 = vmatprep.subr.mxu0 0.0
      %6160 = vmatpush1.msra.mxu0 %v5799
      %6161 = vmatprep.subr.mxu0 0.0
      %6162 = vmatpush1.msra.mxu0 %v5800
      %6163 = vmatprep.subr.mxu0 0.0
      %6164 = vmatpush1.msra.mxu0 %v5801
      %6165 = vmatprep.subr.mxu0 0.0
      %6166 = vmatpush1.msra.mxu0 %v5802
      %6167 = vmatprep.subr.mxu0 0.0
      %6168 = vmatpush1.msra.mxu0 %v5803
      %6169 = vmatprep.subr.mxu0 0.0
      %6170 = vmatpush1.msra.mxu0 %v5804
      %6171 = vmatprep.subr.mxu0 0.0
      %6172 = vmatpush1.msra.mxu0 %v5805
      %6173 = vmatprep.subr.mxu0 0.0
      %6174 = vmatpush1.msra.mxu0 %v5806
      %6175 = vmatprep.subr.mxu0 0.0
      %6176 = vmatpush1.msra.mxu0 %v5807
      %6177 = vmatprep.mubr.f32.mxu0 %v5458
      %6178 = vmatmul.mubr.f32.gmra.mrb[0].mxu0 %v5457
      %v6179 = vpop.f32.mrb[0].mxu0
      %v6180 = vadd.f32 %v5955, %v6179
      %v6181 = vpop.f32.mrb[0].mxu0
      %6182 = vmatprep.mubr.f32.mxu0 %v5467
      %6183 = vmatmul.mubr.f32.gmra.mrb[0].mxu0 %v5466
      %v6184 = vpop.f32.mrb[0].mxu0
      %v6185 = vadd.f32 %v5960, %v6184
      %v6186 = vpop.f32.mrb[0].mxu0
      %6187 = vmatprep.mubr.f32.mxu0 %v5476
      %6188 = vmatmul.mubr.f32.gmra.mrb[0].mxu0 %v5475
      %v6189 = vpop.f32.mrb[0].mxu0
      %v6190 = vadd.f32 %v5965, %v6189
      %v6191 = vpop.f32.mrb[0].mxu0
      %6192 = vmatprep.mubr.f32.mxu0 %v5485
      %6193 = vmatmul.mubr.f32.gmra.mrb[0].mxu0 %v5484
      %v6194 = vpop.f32.mrb[0].mxu0
      %v6195 = vadd.f32 %v5970, %v6194
      %v6196 = vpop.f32.mrb[0].mxu0
      %6197 = vmatprep.mubr.f32.mxu0 %v5494
      %6198 = vmatmul.mubr.f32.gmra.mrb[0].mxu0 %v5493
      %v6199 = vpop.f32.mrb[0].mxu0
      %v6200 = vadd.f32 %v5975, %v6199
      %v6201 = vpop.f32.mrb[0].mxu0
      %6202 = vmatprep.mubr.f32.mxu0 %v5503
      %6203 = vmatmul.mubr.f32.gmra.mrb[0].mxu0 %v5502
      %v6204 = vpop.f32.mrb[0].mxu0
      %v6205 = vadd.f32 %v5980, %v6204
      %v6206 = vpop.f32.mrb[0].mxu0
      %6207 = vmatprep.mubr.f32.mxu0 %v5512
      %6208 = vmatmul.mubr.f32.gmra.mrb[0].mxu0 %v5511
      %v6209 = vpop.f32.mrb[0].mxu0
      %v6210 = vadd.f32 %v5985, %v6209
      %v6211 = vpop.f32.mrb[0].mxu0
      %6212 = vmatprep.mubr.f32.mxu0 %v5521
      %6213 = vmatmul.mubr.f32.gmra.mrb[0].mxu0 %v5520
      %v6214 = vpop.f32.mrb[0].mxu0
      %v6215 = vadd.f32 %v5990, %v6214
      %v6216 = vpop.f32.mrb[0].mxu0
      %6217 = vmatprep.mubr.f32.mxu0 %v5530
      %6218 = vmatmul.mubr.f32.gmra.mrb[0].mxu0 %v5529
      %v6219 = vpop.f32.mrb[0].mxu0
      %v6220 = vadd.f32 %v5995, %v6219
      %v6221 = vpop.f32.mrb[0].mxu0
      %6222 = vmatprep.mubr.f32.mxu0 %v5539
      %6223 = vmatmul.mubr.f32.gmra.mrb[0].mxu0 %v5538
      %v6224 = vpop.f32.mrb[0].mxu0
      %v6225 = vadd.f32 %v6000, %v6224
      %v6226 = vpop.f32.mrb[0].mxu0
      %6227 = vmatprep.mubr.f32.mxu0 %v5548
      %6228 = vmatmul.mubr.f32.gmra.mrb[0].mxu0 %v5547
      %v6229 = vpop.f32.mrb[0].mxu0
      %v6230 = vadd.f32 %v6005, %v6229
      %v6231 = vpop.f32.mrb[0].mxu0
      %6232 = vmatprep.mubr.f32.mxu0 %v5557
      %6233 = vmatmul.mubr.f32.gmra.mrb[0].mxu0 %v5556
      %v6234 = vpop.f32.mrb[0].mxu0
      %v6235 = vadd.f32 %v6010, %v6234
      %v6236 = vpop.f32.mrb[0].mxu0
      %6237 = vmatprep.mubr.f32.mxu0 %v5566
      %6238 = vmatmul.mubr.f32.gmra.mrb[0].mxu0 %v5565
      %v6239 = vpop.f32.mrb[0].mxu0
      %v6240 = vadd.f32 %v6015, %v6239
      %v6241 = vpop.f32.mrb[0].mxu0
      %6242 = vmatprep.mubr.f32.mxu0 %v5575
      %6243 = vmatmul.mubr.f32.gmra.mrb[0].mxu0 %v5574
      %v6244 = vpop.f32.mrb[0].mxu0
      %v6245 = vadd.f32 %v6020, %v6244
      %v6246 = vpop.f32.mrb[0].mxu0
      %6247 = vmatprep.mubr.f32.mxu0 %v5584
      %6248 = vmatmul.mubr.f32.gmra.mrb[0].mxu0 %v5583
      %v6249 = vpop.f32.mrb[0].mxu0
      %v6250 = vadd.f32 %v6025, %v6249
      %v6251 = vpop.f32.mrb[0].mxu0
      %6252 = vmatprep.mubr.f32.mxu0 %v5593
      %6253 = vmatmul.mubr.f32.gmra.mrb[0].mxu0 %v5592
      %v6254 = vpop.f32.mrb[0].mxu0
      %v6255 = vadd.f32 %v6030, %v6254
      %v6256 = vpop.f32.mrb[0].mxu0
      %6257 = vmatprep.mubr.f32.mxu0 %v5602
      %6258 = vmatmul.mubr.f32.gmra.mrb[0].mxu0 %v5601
      %v6259 = vpop.f32.mrb[0].mxu0
      %v6260 = vadd.f32 %v6035, %v6259
      %v6261 = vpop.f32.mrb[0].mxu0
      %6262 = vmatprep.mubr.f32.mxu0 %v5611
      %6263 = vmatmul.mubr.f32.gmra.mrb[0].mxu0 %v5610
      %v6264 = vpop.f32.mrb[0].mxu0
      %v6265 = vadd.f32 %v6040, %v6264
      %v6266 = vpop.f32.mrb[0].mxu0
      %6267 = vmatprep.mubr.f32.mxu0 %v5620
      %6268 = vmatmul.mubr.f32.gmra.mrb[0].mxu0 %v5619
      %v6269 = vpop.f32.mrb[0].mxu0
      %v6270 = vadd.f32 %v6045, %v6269
      %v6271 = vpop.f32.mrb[0].mxu0
      %6272 = vmatprep.mubr.f32.mxu0 %v5629
      %6273 = vmatmul.mubr.f32.gmra.mrb[0].mxu0 %v5628
      %v6274 = vpop.f32.mrb[0].mxu0
      %v6275 = vadd.f32 %v6050, %v6274
      %v6276 = vpop.f32.mrb[0].mxu0
      %6277 = vmatprep.mubr.f32.mxu0 %v5638
      %6278 = vmatmul.mubr.f32.gmra.mrb[0].mxu0 %v5637
      %v6279 = vpop.f32.mrb[0].mxu0
      %v6280 = vadd.f32 %v6055, %v6279
      %v6281 = vpop.f32.mrb[0].mxu0
      %6282 = vmatprep.mubr.f32.mxu0 %v5647
      %6283 = vmatmul.mubr.f32.gmra.mrb[0].mxu0 %v5646
      %v6284 = vpop.f32.mrb[0].mxu0
      %v6285 = vadd.f32 %v6060, %v6284
      %v6286 = vpop.f32.mrb[0].mxu0
      %6287 = vmatprep.mubr.f32.mxu0 %v5656
      %6288 = vmatmul.mubr.f32.gmra.mrb[0].mxu0 %v5655
      %v6289 = vpop.f32.mrb[0].mxu0
      %v6290 = vadd.f32 %v6065, %v6289
      %v6291 = vpop.f32.mrb[0].mxu0
      %6292 = vmatprep.mubr.f32.mxu0 %v5665
      %6293 = vmatmul.mubr.f32.gmra.mrb[0].mxu0 %v5664
      %v6294 = vpop.f32.mrb[0].mxu0
      %v6295 = vadd.f32 %v6070, %v6294
      %v6296 = vpop.f32.mrb[0].mxu0
      %6297 = vmatprep.mubr.f32.mxu0 %v5674
      %6298 = vmatmul.mubr.f32.gmra.mrb[0].mxu0 %v5673
      %v6299 = vpop.f32.mrb[0].mxu0
      %v6300 = vadd.f32 %v6075, %v6299
      %v6301 = vpop.f32.mrb[0].mxu0
      %6302 = vmatprep.mubr.f32.mxu0 %v5683
      %6303 = vmatmul.mubr.f32.gmra.mrb[0].mxu0 %v5682
      %v6304 = vpop.f32.mrb[0].mxu0
      %v6305 = vadd.f32 %v6080, %v6304
      %v6306 = vpop.f32.mrb[0].mxu0
      %6307 = vmatprep.mubr.f32.mxu0 %v5692
      %6308 = vmatmul.mubr.f32.gmra.mrb[0].mxu0 %v5691
      %v6309 = vpop.f32.mrb[0].mxu0
      %v6310 = vadd.f32 %v6085, %v6309
      %v6311 = vpop.f32.mrb[0].mxu0
      %6312 = vmatprep.mubr.f32.mxu0 %v5701
      %6313 = vmatmul.mubr.f32.gmra.mrb[0].mxu0 %v5700
      %v6314 = vpop.f32.mrb[0].mxu0
      %v6315 = vadd.f32 %v6090, %v6314
      %v6316 = vpop.f32.mrb[0].mxu0
      %6317 = vmatprep.mubr.f32.mxu0 %v5710
      %6318 = vmatmul.mubr.f32.gmra.mrb[0].mxu0 %v5709
      %v6319 = vpop.f32.mrb[0].mxu0
      %v6320 = vadd.f32 %v6095, %v6319
      %v6321 = vpop.f32.mrb[0].mxu0
      %6322 = vmatprep.mubr.f32.mxu0 %v5719
      %6323 = vmatmul.mubr.f32.gmra.mrb[0].mxu0 %v5718
      %v6324 = vpop.f32.mrb[0].mxu0
      %v6325 = vadd.f32 %v6100, %v6324
      %v6326 = vpop.f32.mrb[0].mxu0
      %6327 = vmatprep.mubr.f32.mxu0 %v5728
      %6328 = vmatmul.mubr.f32.gmra.mrb[0].mxu0 %v5727
      %v6329 = vpop.f32.mrb[0].mxu0
      %v6330 = vadd.f32 %v6105, %v6329
      %v6331 = vpop.f32.mrb[0].mxu0
      %6332 = vmatprep.mubr.f32.mxu0 %v5737
      %6333 = vmatmul.mubr.f32.gmra.mrb[0].mxu0 %v5736
      %v6334 = vpop.f32.mrb[0].mxu0
      %v6335 = vadd.f32 %v6110, %v6334
      %v6336 = vpop.f32.mrb[0].mxu0
      %6337 = vdwg.mxu0
      %6338 = vmatprep.subr.mxu0 0.0
      %6339 = vmatpush1.msra.mxu0 %v5808
      %6340 = vmatprep.subr.mxu0 0.0
      %6341 = vmatpush1.msra.mxu0 %v5809
      %6342 = vmatprep.subr.mxu0 0.0
      %6343 = vmatpush1.msra.mxu0 %v5810
      %6344 = vmatprep.subr.mxu0 0.0
      %6345 = vmatpush1.msra.mxu0 %v5811
      %6346 = vmatprep.subr.mxu0 0.0
      %6347 = vmatpush1.msra.mxu0 %v5812
      %6348 = vmatprep.subr.mxu0 0.0
      %6349 = vmatpush1.msra.mxu0 %v5813
      %6350 = vmatprep.subr.mxu0 0.0
      %6351 = vmatpush1.msra.mxu0 %v5814
      %6352 = vmatprep.subr.mxu0 0.0
      %6353 = vmatpush1.msra.mxu0 %v5815
      %6354 = vmatprep.subr.mxu0 0.0
      %6355 = vmatpush1.msra.mxu0 %v5816
      %6356 = vmatprep.subr.mxu0 0.0
      %6357 = vmatpush1.msra.mxu0 %v5817
      %6358 = vmatprep.subr.mxu0 0.0
      %6359 = vmatpush1.msra.mxu0 %v5818
      %6360 = vmatprep.subr.mxu0 0.0
      %6361 = vmatpush1.msra.mxu0 %v5819
      %6362 = vmatprep.subr.mxu0 0.0
      %6363 = vmatpush1.msra.mxu0 %v5820
      %6364 = vmatprep.subr.mxu0 0.0
      %6365 = vmatpush1.msra.mxu0 %v5821
      %6366 = vmatprep.subr.mxu0 0.0
      %6367 = vmatpush1.msra.mxu0 %v5822
      %6368 = vmatprep.subr.mxu0 0.0
      %6369 = vmatpush1.msra.mxu0 %v5823
      %6370 = vmatprep.subr.mxu0 0.0
      %6371 = vmatpush1.msra.mxu0 %v5824
      %6372 = vmatprep.subr.mxu0 0.0
      %6373 = vmatpush1.msra.mxu0 %v5825
      %6374 = vmatprep.subr.mxu0 0.0
      %6375 = vmatpush1.msra.mxu0 %v5826
      %6376 = vmatprep.subr.mxu0 0.0
      %6377 = vmatpush1.msra.mxu0 %v5827
      %6378 = vmatprep.subr.mxu0 0.0
      %6379 = vmatpush1.msra.mxu0 %v5828
      %6380 = vmatprep.subr.mxu0 0.0
      %6381 = vmatpush1.msra.mxu0 %v5829
      %6382 = vmatprep.subr.mxu0 0.0
      %6383 = vmatpush1.msra.mxu0 %v5830
      %6384 = vmatprep.subr.mxu0 0.0
      %6385 = vmatpush1.msra.mxu0 %v5831
      %6386 = vmatprep.subr.mxu0 0.0
      %6387 = vmatpush1.msra.mxu0 %v5832
      %6388 = vmatprep.subr.mxu0 0.0
      %6389 = vmatpush1.msra.mxu0 %v5833
      %6390 = vmatprep.subr.mxu0 0.0
      %6391 = vmatpush1.msra.mxu0 %v5834
      %6392 = vmatprep.subr.mxu0 0.0
      %6393 = vmatpush1.msra.mxu0 %v5835
      %6394 = vmatprep.subr.mxu0 0.0
      %6395 = vmatpush1.msra.mxu0 %v5836
      %6396 = vmatprep.subr.mxu0 0.0
      %6397 = vmatpush1.msra.mxu0 %v5837
      %6398 = vmatprep.subr.mxu0 0.0
      %6399 = vmatpush1.msra.mxu0 %v5838
      %6400 = vmatprep.subr.mxu0 0.0
      %6401 = vmatpush1.msra.mxu0 %v5839
      %6402 = vmatprep.mubr.f32.mxu0 %v5460
      %6403 = vmatmul.mubr.f32.gmra.mrb[0].mxu0 %v5459
      %v6404 = vpop.f32.mrb[0].mxu0
      %v6405 = vadd.f32 %v6180, %v6404
      %v6406 = vpop.f32.mrb[0].mxu0
      %6407 = vmatprep.mubr.f32.mxu0 %v5469
      %6408 = vmatmul.mubr.f32.gmra.mrb[0].mxu0 %v5468
      %v6409 = vpop.f32.mrb[0].mxu0
      %v6410 = vadd.f32 %v6185, %v6409
      %v6411 = vpop.f32.mrb[0].mxu0
      %6412 = vmatprep.mubr.f32.mxu0 %v5478
      %6413 = vmatmul.mubr.f32.gmra.mrb[0].mxu0 %v5477
      %v6414 = vpop.f32.mrb[0].mxu0
      %v6415 = vadd.f32 %v6190, %v6414
      %v6416 = vpop.f32.mrb[0].mxu0
      %6417 = vmatprep.mubr.f32.mxu0 %v5487
      %6418 = vmatmul.mubr.f32.gmra.mrb[0].mxu0 %v5486
      %v6419 = vpop.f32.mrb[0].mxu0
      %v6420 = vadd.f32 %v6195, %v6419
      %v6421 = vpop.f32.mrb[0].mxu0
      %6422 = vmatprep.mubr.f32.mxu0 %v5496
      %6423 = vmatmul.mubr.f32.gmra.mrb[0].mxu0 %v5495
      %v6424 = vpop.f32.mrb[0].mxu0
      %v6425 = vadd.f32 %v6200, %v6424
      %v6426 = vpop.f32.mrb[0].mxu0
      %6427 = vmatprep.mubr.f32.mxu0 %v5505
      %6428 = vmatmul.mubr.f32.gmra.mrb[0].mxu0 %v5504
      %v6429 = vpop.f32.mrb[0].mxu0
      %v6430 = vadd.f32 %v6205, %v6429
      %v6431 = vpop.f32.mrb[0].mxu0
      %6432 = vmatprep.mubr.f32.mxu0 %v5514
      %6433 = vmatmul.mubr.f32.gmra.mrb[0].mxu0 %v5513
      %v6434 = vpop.f32.mrb[0].mxu0
      %v6435 = vadd.f32 %v6210, %v6434
      %v6436 = vpop.f32.mrb[0].mxu0
      %6437 = vmatprep.mubr.f32.mxu0 %v5523
      %6438 = vmatmul.mubr.f32.gmra.mrb[0].mxu0 %v5522
      %v6439 = vpop.f32.mrb[0].mxu0
      %v6440 = vadd.f32 %v6215, %v6439
      %v6441 = vpop.f32.mrb[0].mxu0
      %6442 = vmatprep.mubr.f32.mxu0 %v5532
      %6443 = vmatmul.mubr.f32.gmra.mrb[0].mxu0 %v5531
      %v6444 = vpop.f32.mrb[0].mxu0
      %v6445 = vadd.f32 %v6220, %v6444
      %v6446 = vpop.f32.mrb[0].mxu0
      %6447 = vmatprep.mubr.f32.mxu0 %v5541
      %6448 = vmatmul.mubr.f32.gmra.mrb[0].mxu0 %v5540
      %v6449 = vpop.f32.mrb[0].mxu0
      %v6450 = vadd.f32 %v6225, %v6449
      %v6451 = vpop.f32.mrb[0].mxu0
      %6452 = vmatprep.mubr.f32.mxu0 %v5550
      %6453 = vmatmul.mubr.f32.gmra.mrb[0].mxu0 %v5549
      %v6454 = vpop.f32.mrb[0].mxu0
      %v6455 = vadd.f32 %v6230, %v6454
      %v6456 = vpop.f32.mrb[0].mxu0
      %6457 = vmatprep.mubr.f32.mxu0 %v5559
      %6458 = vmatmul.mubr.f32.gmra.mrb[0].mxu0 %v5558
      %v6459 = vpop.f32.mrb[0].mxu0
      %v6460 = vadd.f32 %v6235, %v6459
      %v6461 = vpop.f32.mrb[0].mxu0
      %6462 = vmatprep.mubr.f32.mxu0 %v5568
      %6463 = vmatmul.mubr.f32.gmra.mrb[0].mxu0 %v5567
      %v6464 = vpop.f32.mrb[0].mxu0
      %v6465 = vadd.f32 %v6240, %v6464
      %v6466 = vpop.f32.mrb[0].mxu0
      %6467 = vmatprep.mubr.f32.mxu0 %v5577
      %6468 = vmatmul.mubr.f32.gmra.mrb[0].mxu0 %v5576
      %v6469 = vpop.f32.mrb[0].mxu0
      %v6470 = vadd.f32 %v6245, %v6469
      %v6471 = vpop.f32.mrb[0].mxu0
      %6472 = vmatprep.mubr.f32.mxu0 %v5586
      %6473 = vmatmul.mubr.f32.gmra.mrb[0].mxu0 %v5585
      %v6474 = vpop.f32.mrb[0].mxu0
      %v6475 = vadd.f32 %v6250, %v6474
      %v6476 = vpop.f32.mrb[0].mxu0
      %6477 = vmatprep.mubr.f32.mxu0 %v5595
      %6478 = vmatmul.mubr.f32.gmra.mrb[0].mxu0 %v5594
      %v6479 = vpop.f32.mrb[0].mxu0
      %v6480 = vadd.f32 %v6255, %v6479
      %v6481 = vpop.f32.mrb[0].mxu0
      %6482 = vmatprep.mubr.f32.mxu0 %v5604
      %6483 = vmatmul.mubr.f32.gmra.mrb[0].mxu0 %v5603
      %v6484 = vpop.f32.mrb[0].mxu0
      %v6485 = vadd.f32 %v6260, %v6484
      %v6486 = vpop.f32.mrb[0].mxu0
      %6487 = vmatprep.mubr.f32.mxu0 %v5613
      %6488 = vmatmul.mubr.f32.gmra.mrb[0].mxu0 %v5612
      %v6489 = vpop.f32.mrb[0].mxu0
      %v6490 = vadd.f32 %v6265, %v6489
      %v6491 = vpop.f32.mrb[0].mxu0
      %6492 = vmatprep.mubr.f32.mxu0 %v5622
      %6493 = vmatmul.mubr.f32.gmra.mrb[0].mxu0 %v5621
      %v6494 = vpop.f32.mrb[0].mxu0
      %v6495 = vadd.f32 %v6270, %v6494
      %v6496 = vpop.f32.mrb[0].mxu0
      %6497 = vmatprep.mubr.f32.mxu0 %v5631
      %6498 = vmatmul.mubr.f32.gmra.mrb[0].mxu0 %v5630
      %v6499 = vpop.f32.mrb[0].mxu0
      %v6500 = vadd.f32 %v6275, %v6499
      %v6501 = vpop.f32.mrb[0].mxu0
      %6502 = vmatprep.mubr.f32.mxu0 %v5640
      %6503 = vmatmul.mubr.f32.gmra.mrb[0].mxu0 %v5639
      %v6504 = vpop.f32.mrb[0].mxu0
      %v6505 = vadd.f32 %v6280, %v6504
      %v6506 = vpop.f32.mrb[0].mxu0
      %6507 = vmatprep.mubr.f32.mxu0 %v5649
      %6508 = vmatmul.mubr.f32.gmra.mrb[0].mxu0 %v5648
      %v6509 = vpop.f32.mrb[0].mxu0
      %v6510 = vadd.f32 %v6285, %v6509
      %v6511 = vpop.f32.mrb[0].mxu0
      %6512 = vmatprep.mubr.f32.mxu0 %v5658
      %6513 = vmatmul.mubr.f32.gmra.mrb[0].mxu0 %v5657
      %v6514 = vpop.f32.mrb[0].mxu0
      %v6515 = vadd.f32 %v6290, %v6514
      %v6516 = vpop.f32.mrb[0].mxu0
      %6517 = vmatprep.mubr.f32.mxu0 %v5667
      %6518 = vmatmul.mubr.f32.gmra.mrb[0].mxu0 %v5666
      %v6519 = vpop.f32.mrb[0].mxu0
      %v6520 = vadd.f32 %v6295, %v6519
      %v6521 = vpop.f32.mrb[0].mxu0
      %6522 = vmatprep.mubr.f32.mxu0 %v5676
      %6523 = vmatmul.mubr.f32.gmra.mrb[0].mxu0 %v5675
      %v6524 = vpop.f32.mrb[0].mxu0
      %v6525 = vadd.f32 %v6300, %v6524
      %v6526 = vpop.f32.mrb[0].mxu0
      %6527 = vmatprep.mubr.f32.mxu0 %v5685
      %6528 = vmatmul.mubr.f32.gmra.mrb[0].mxu0 %v5684
      %v6529 = vpop.f32.mrb[0].mxu0
      %v6530 = vadd.f32 %v6305, %v6529
      %v6531 = vpop.f32.mrb[0].mxu0
      %6532 = vmatprep.mubr.f32.mxu0 %v5694
      %6533 = vmatmul.mubr.f32.gmra.mrb[0].mxu0 %v5693
      %v6534 = vpop.f32.mrb[0].mxu0
      %v6535 = vadd.f32 %v6310, %v6534
      %v6536 = vpop.f32.mrb[0].mxu0
      %6537 = vmatprep.mubr.f32.mxu0 %v5703
      %6538 = vmatmul.mubr.f32.gmra.mrb[0].mxu0 %v5702
      %v6539 = vpop.f32.mrb[0].mxu0
      %v6540 = vadd.f32 %v6315, %v6539
      %v6541 = vpop.f32.mrb[0].mxu0
      %6542 = vmatprep.mubr.f32.mxu0 %v5712
      %6543 = vmatmul.mubr.f32.gmra.mrb[0].mxu0 %v5711
      %v6544 = vpop.f32.mrb[0].mxu0
      %v6545 = vadd.f32 %v6320, %v6544
      %v6546 = vpop.f32.mrb[0].mxu0
      %6547 = vmatprep.mubr.f32.mxu0 %v5721
      %6548 = vmatmul.mubr.f32.gmra.mrb[0].mxu0 %v5720
      %v6549 = vpop.f32.mrb[0].mxu0
      %v6550 = vadd.f32 %v6325, %v6549
      %v6551 = vpop.f32.mrb[0].mxu0
      %6552 = vmatprep.mubr.f32.mxu0 %v5730
      %6553 = vmatmul.mubr.f32.gmra.mrb[0].mxu0 %v5729
      %v6554 = vpop.f32.mrb[0].mxu0
      %v6555 = vadd.f32 %v6330, %v6554
      %v6556 = vpop.f32.mrb[0].mxu0
      %6557 = vmatprep.mubr.f32.mxu0 %v5739
      %6558 = vmatmul.mubr.f32.gmra.mrb[0].mxu0 %v5738
      %v6559 = vpop.f32.mrb[0].mxu0
      %v6560 = vadd.f32 %v6335, %v6559
      %v6561 = vpop.f32.mrb[0].mxu0
      %6562 = vdwg.mxu0
      %6563 = vmatprep.subr.mxu0 0.0
      %6564 = vmatpush1.msra.mxu0 %v5840
      %6565 = vmatprep.subr.mxu0 0.0
      %6566 = vmatpush1.msra.mxu0 %v5841
      %6567 = vmatprep.subr.mxu0 0.0
      %6568 = vmatpush1.msra.mxu0 %v5842
      %6569 = vmatprep.subr.mxu0 0.0
      %6570 = vmatpush1.msra.mxu0 %v5843
      %6571 = vmatprep.subr.mxu0 0.0
      %6572 = vmatpush1.msra.mxu0 %v5844
      %6573 = vmatprep.subr.mxu0 0.0
      %6574 = vmatpush1.msra.mxu0 %v5845
      %6575 = vmatprep.subr.mxu0 0.0
      %6576 = vmatpush1.msra.mxu0 %v5846
      %6577 = vmatprep.subr.mxu0 0.0
      %6578 = vmatpush1.msra.mxu0 %v5847
      %6579 = vmatprep.subr.mxu0 0.0
      %6580 = vmatpush1.msra.mxu0 %v5848
      %6581 = vmatprep.subr.mxu0 0.0
      %6582 = vmatpush1.msra.mxu0 %v5849
      %6583 = vmatprep.subr.mxu0 0.0
      %6584 = vmatpush1.msra.mxu0 %v5850
      %6585 = vmatprep.subr.mxu0 0.0
      %6586 = vmatpush1.msra.mxu0 %v5851
      %6587 = vmatprep.subr.mxu0 0.0
      %6588 = vmatpush1.msra.mxu0 %v5852
      %6589 = vmatprep.subr.mxu0 0.0
      %6590 = vmatpush1.msra.mxu0 %v5853
      %6591 = vmatprep.subr.mxu0 0.0
      %6592 = vmatpush1.msra.mxu0 %v5854
      %6593 = vmatprep.subr.mxu0 0.0
      %6594 = vmatpush1.msra.mxu0 %v5855
      %6595 = vmatprep.subr.mxu0 0.0
      %6596 = vmatpush1.msra.mxu0 %v5856
      %6597 = vmatprep.subr.mxu0 0.0
      %6598 = vmatpush1.msra.mxu0 %v5857
      %6599 = vmatprep.subr.mxu0 0.0
      %6600 = vmatpush1.msra.mxu0 %v5858
      %6601 = vmatprep.subr.mxu0 0.0
      %6602 = vmatpush1.msra.mxu0 %v5859
      %6603 = vmatprep.subr.mxu0 0.0
      %6604 = vmatpush1.msra.mxu0 %v5860
      %6605 = vmatprep.subr.mxu0 0.0
      %6606 = vmatpush1.msra.mxu0 %v5861
      %6607 = vmatprep.subr.mxu0 0.0
      %6608 = vmatpush1.msra.mxu0 %v5862
      %6609 = vmatprep.subr.mxu0 0.0
      %6610 = vmatpush1.msra.mxu0 %v5863
      %6611 = vmatprep.subr.mxu0 0.0
      %6612 = vmatpush1.msra.mxu0 %v5864
      %6613 = vmatprep.subr.mxu0 0.0
      %6614 = vmatpush1.msra.mxu0 %v5865
      %6615 = vmatprep.subr.mxu0 0.0
      %6616 = vmatpush1.msra.mxu0 %v5866
      %6617 = vmatprep.subr.mxu0 0.0
      %6618 = vmatpush1.msra.mxu0 %v5867
      %6619 = vmatprep.subr.mxu0 0.0
      %6620 = vmatpush1.msra.mxu0 %v5868
      %6621 = vmatprep.subr.mxu0 0.0
      %6622 = vmatpush1.msra.mxu0 %v5869
      %6623 = vmatprep.subr.mxu0 0.0
      %6624 = vmatpush1.msra.mxu0 %v5870
      %6625 = vmatprep.subr.mxu0 0.0
      %6626 = vmatpush1.msra.mxu0 %v5871
      %6627 = vmatprep.mubr.f32.mxu0 %v5462
      %6628 = vmatmul.mubr.f32.gmra.mrb[0].mxu0 %v5461
      %v6629 = vpop.f32.mrb[0].mxu0
      %v6630 = vadd.f32 %v6405, %v6629
      %v6631 = vpop.f32.mrb[0].mxu0
      %6632 = vmatprep.mubr.f32.mxu0 %v5471
      %6633 = vmatmul.mubr.f32.gmra.mrb[0].mxu0 %v5470
      %v6634 = vpop.f32.mrb[0].mxu0
      %v6635 = vadd.f32 %v6410, %v6634
      %v6636 = vpop.f32.mrb[0].mxu0
      %6637 = vmatprep.mubr.f32.mxu0 %v5480
      %6638 = vmatmul.mubr.f32.gmra.mrb[0].mxu0 %v5479
      %v6639 = vpop.f32.mrb[0].mxu0
      %v6640 = vadd.f32 %v6415, %v6639
      %v6641 = vpop.f32.mrb[0].mxu0
      %6642 = vmatprep.mubr.f32.mxu0 %v5489
      %6643 = vmatmul.mubr.f32.gmra.mrb[0].mxu0 %v5488
      %v6644 = vpop.f32.mrb[0].mxu0
      %v6645 = vadd.f32 %v6420, %v6644
      %v6646 = vpop.f32.mrb[0].mxu0
      %6647 = vmatprep.mubr.f32.mxu0 %v5498
      %6648 = vmatmul.mubr.f32.gmra.mrb[0].mxu0 %v5497
      %v6649 = vpop.f32.mrb[0].mxu0
      %v6650 = vadd.f32 %v6425, %v6649
      %v6651 = vpop.f32.mrb[0].mxu0
      %6652 = vmatprep.mubr.f32.mxu0 %v5507
      %6653 = vmatmul.mubr.f32.gmra.mrb[0].mxu0 %v5506
      %v6654 = vpop.f32.mrb[0].mxu0
      %v6655 = vadd.f32 %v6430, %v6654
      %v6656 = vpop.f32.mrb[0].mxu0
      %6657 = vmatprep.mubr.f32.mxu0 %v5516
      %6658 = vmatmul.mubr.f32.gmra.mrb[0].mxu0 %v5515
      %v6659 = vpop.f32.mrb[0].mxu0
      %v6660 = vadd.f32 %v6435, %v6659
      %v6661 = vpop.f32.mrb[0].mxu0
      %6662 = vmatprep.mubr.f32.mxu0 %v5525
      %6663 = vmatmul.mubr.f32.gmra.mrb[0].mxu0 %v5524
      %v6664 = vpop.f32.mrb[0].mxu0
      %v6665 = vadd.f32 %v6440, %v6664
      %v6666 = vpop.f32.mrb[0].mxu0
      %6667 = vmatprep.mubr.f32.mxu0 %v5534
      %6668 = vmatmul.mubr.f32.gmra.mrb[0].mxu0 %v5533
      %v6669 = vpop.f32.mrb[0].mxu0
      %v6670 = vadd.f32 %v6445, %v6669
      %v6671 = vpop.f32.mrb[0].mxu0
      %6672 = vmatprep.mubr.f32.mxu0 %v5543
      %6673 = vmatmul.mubr.f32.gmra.mrb[0].mxu0 %v5542
      %v6674 = vpop.f32.mrb[0].mxu0
      %v6675 = vadd.f32 %v6450, %v6674
      %v6676 = vpop.f32.mrb[0].mxu0
      %6677 = vmatprep.mubr.f32.mxu0 %v5552
      %6678 = vmatmul.mubr.f32.gmra.mrb[0].mxu0 %v5551
      %v6679 = vpop.f32.mrb[0].mxu0
      %v6680 = vadd.f32 %v6455, %v6679
      %v6681 = vpop.f32.mrb[0].mxu0
      %6682 = vmatprep.mubr.f32.mxu0 %v5561
      %6683 = vmatmul.mubr.f32.gmra.mrb[0].mxu0 %v5560
      %v6684 = vpop.f32.mrb[0].mxu0
      %v6685 = vadd.f32 %v6460, %v6684
      %v6686 = vpop.f32.mrb[0].mxu0
      %6687 = vmatprep.mubr.f32.mxu0 %v5570
      %6688 = vmatmul.mubr.f32.gmra.mrb[0].mxu0 %v5569
      %v6689 = vpop.f32.mrb[0].mxu0
      %v6690 = vadd.f32 %v6465, %v6689
      %v6691 = vpop.f32.mrb[0].mxu0
      %6692 = vmatprep.mubr.f32.mxu0 %v5579
      %6693 = vmatmul.mubr.f32.gmra.mrb[0].mxu0 %v5578
      %v6694 = vpop.f32.mrb[0].mxu0
      %v6695 = vadd.f32 %v6470, %v6694
      %v6696 = vpop.f32.mrb[0].mxu0
      %6697 = vmatprep.mubr.f32.mxu0 %v5588
      %6698 = vmatmul.mubr.f32.gmra.mrb[0].mxu0 %v5587
      %v6699 = vpop.f32.mrb[0].mxu0
      %v6700 = vadd.f32 %v6475, %v6699
      %v6701 = vpop.f32.mrb[0].mxu0
      %6702 = vmatprep.mubr.f32.mxu0 %v5597
      %6703 = vmatmul.mubr.f32.gmra.mrb[0].mxu0 %v5596
      %v6704 = vpop.f32.mrb[0].mxu0
      %v6705 = vadd.f32 %v6480, %v6704
      %v6706 = vpop.f32.mrb[0].mxu0
      %6707 = vmatprep.mubr.f32.mxu0 %v5606
      %6708 = vmatmul.mubr.f32.gmra.mrb[0].mxu0 %v5605
      %v6709 = vpop.f32.mrb[0].mxu0
      %v6710 = vadd.f32 %v6485, %v6709
      %v6711 = vpop.f32.mrb[0].mxu0
      %6712 = vmatprep.mubr.f32.mxu0 %v5615
      %6713 = vmatmul.mubr.f32.gmra.mrb[0].mxu0 %v5614
      %v6714 = vpop.f32.mrb[0].mxu0
      %v6715 = vadd.f32 %v6490, %v6714
      %v6716 = vpop.f32.mrb[0].mxu0
      %6717 = vmatprep.mubr.f32.mxu0 %v5624
      %6718 = vmatmul.mubr.f32.gmra.mrb[0].mxu0 %v5623
      %v6719 = vpop.f32.mrb[0].mxu0
      %v6720 = vadd.f32 %v6495, %v6719
      %v6721 = vpop.f32.mrb[0].mxu0
      %6722 = vmatprep.mubr.f32.mxu0 %v5633
      %6723 = vmatmul.mubr.f32.gmra.mrb[0].mxu0 %v5632
      %v6724 = vpop.f32.mrb[0].mxu0
      %v6725 = vadd.f32 %v6500, %v6724
      %v6726 = vpop.f32.mrb[0].mxu0
      %6727 = vmatprep.mubr.f32.mxu0 %v5642
      %6728 = vmatmul.mubr.f32.gmra.mrb[0].mxu0 %v5641
      %v6729 = vpop.f32.mrb[0].mxu0
      %v6730 = vadd.f32 %v6505, %v6729
      %v6731 = vpop.f32.mrb[0].mxu0
      %6732 = vmatprep.mubr.f32.mxu0 %v5651
      %6733 = vmatmul.mubr.f32.gmra.mrb[0].mxu0 %v5650
      %v6734 = vpop.f32.mrb[0].mxu0
      %v6735 = vadd.f32 %v6510, %v6734
      %v6736 = vpop.f32.mrb[0].mxu0
      %6737 = vmatprep.mubr.f32.mxu0 %v5660
      %6738 = vmatmul.mubr.f32.gmra.mrb[0].mxu0 %v5659
      %v6739 = vpop.f32.mrb[0].mxu0
      %v6740 = vadd.f32 %v6515, %v6739
      %v6741 = vpop.f32.mrb[0].mxu0
      %6742 = vmatprep.mubr.f32.mxu0 %v5669
      %6743 = vmatmul.mubr.f32.gmra.mrb[0].mxu0 %v5668
      %v6744 = vpop.f32.mrb[0].mxu0
      %v6745 = vadd.f32 %v6520, %v6744
      %v6746 = vpop.f32.mrb[0].mxu0
      %6747 = vmatprep.mubr.f32.mxu0 %v5678
      %6748 = vmatmul.mubr.f32.gmra.mrb[0].mxu0 %v5677
      %v6749 = vpop.f32.mrb[0].mxu0
      %v6750 = vadd.f32 %v6525, %v6749
      %v6751 = vpop.f32.mrb[0].mxu0
      %6752 = vmatprep.mubr.f32.mxu0 %v5687
      %6753 = vmatmul.mubr.f32.gmra.mrb[0].mxu0 %v5686
      %v6754 = vpop.f32.mrb[0].mxu0
      %v6755 = vadd.f32 %v6530, %v6754
      %v6756 = vpop.f32.mrb[0].mxu0
      %6757 = vmatprep.mubr.f32.mxu0 %v5696
      %6758 = vmatmul.mubr.f32.gmra.mrb[0].mxu0 %v5695
      %v6759 = vpop.f32.mrb[0].mxu0
      %v6760 = vadd.f32 %v6535, %v6759
      %v6761 = vpop.f32.mrb[0].mxu0
      %6762 = vmatprep.mubr.f32.mxu0 %v5705
      %6763 = vmatmul.mubr.f32.gmra.mrb[0].mxu0 %v5704
      %v6764 = vpop.f32.mrb[0].mxu0
      %v6765 = vadd.f32 %v6540, %v6764
      %v6766 = vpop.f32.mrb[0].mxu0
      %6767 = vmatprep.mubr.f32.mxu0 %v5714
      %6768 = vmatmul.mubr.f32.gmra.mrb[0].mxu0 %v5713
      %v6769 = vpop.f32.mrb[0].mxu0
      %v6770 = vadd.f32 %v6545, %v6769
      %v6771 = vpop.f32.mrb[0].mxu0
      %6772 = vmatprep.mubr.f32.mxu0 %v5723
      %6773 = vmatmul.mubr.f32.gmra.mrb[0].mxu0 %v5722
      %v6774 = vpop.f32.mrb[0].mxu0
      %v6775 = vadd.f32 %v6550, %v6774
      %v6776 = vpop.f32.mrb[0].mxu0
      %6777 = vmatprep.mubr.f32.mxu0 %v5732
      %6778 = vmatmul.mubr.f32.gmra.mrb[0].mxu0 %v5731
      %v6779 = vpop.f32.mrb[0].mxu0
      %v6780 = vadd.f32 %v6555, %v6779
      %v6781 = vpop.f32.mrb[0].mxu0
      %6782 = vmatprep.mubr.f32.mxu0 %v5741
      %6783 = vmatmul.mubr.f32.gmra.mrb[0].mxu0 %v5740
      %v6784 = vpop.f32.mrb[0].mxu0
      %v6785 = vadd.f32 %v6560, %v6784
      %v6786 = vpop.f32.mrb[0].mxu0
      %6787 = vdwg.mxu0
      %6788 = vmatprep.subr.mxu0 0.0
      %6789 = vmatpush1.msra.mxu0 %v5872
      %6790 = vmatprep.subr.mxu0 0.0
      %6791 = vmatpush1.msra.mxu0 %v5873
      %6792 = vmatprep.subr.mxu0 0.0
      %6793 = vmatpush1.msra.mxu0 %v5874
      %6794 = vmatprep.subr.mxu0 0.0
      %6795 = vmatpush1.msra.mxu0 %v5875
      %6796 = vmatprep.subr.mxu0 0.0
      %6797 = vmatpush1.msra.mxu0 %v5876
      %6798 = vmatprep.subr.mxu0 0.0
      %6799 = vmatpush1.msra.mxu0 %v5877
      %6800 = vmatprep.subr.mxu0 0.0
      %6801 = vmatpush1.msra.mxu0 %v5878
      %6802 = vmatprep.subr.mxu0 0.0
      %6803 = vmatpush1.msra.mxu0 %v5879
      %6804 = vmatprep.subr.mxu0 0.0
      %6805 = vmatpush1.msra.mxu0 %v5880
      %6806 = vmatprep.subr.mxu0 0.0
      %6807 = vmatpush1.msra.mxu0 %v5881
      %6808 = vmatprep.subr.mxu0 0.0
      %6809 = vmatpush1.msra.mxu0 %v5882
      %6810 = vmatprep.subr.mxu0 0.0
      %6811 = vmatpush1.msra.mxu0 %v5883
      %6812 = vmatprep.subr.mxu0 0.0
      %6813 = vmatpush1.msra.mxu0 %v5884
      %6814 = vmatprep.subr.mxu0 0.0
      %6815 = vmatpush1.msra.mxu0 %v5885
      %6816 = vmatprep.subr.mxu0 0.0
      %6817 = vmatpush1.msra.mxu0 %v5886
      %6818 = vmatprep.subr.mxu0 0.0
      %6819 = vmatpush1.msra.mxu0 %v5887
      %6820 = vmatprep.subr.mxu0 0.0
      %6821 = vmatpush1.msra.mxu0 0.0
      %6822 = vmatprep.subr.mxu0 0.0
      %6823 = vmatpush1.msra.mxu0 0.0
      %6824 = vmatprep.subr.mxu0 0.0
      %6825 = vmatpush1.msra.mxu0 0.0
      %6826 = vmatprep.subr.mxu0 0.0
      %6827 = vmatpush1.msra.mxu0 0.0
      %6828 = vmatprep.subr.mxu0 0.0
      %6829 = vmatpush1.msra.mxu0 0.0
      %6830 = vmatprep.subr.mxu0 0.0
      %6831 = vmatpush1.msra.mxu0 0.0
      %6832 = vmatprep.subr.mxu0 0.0
      %6833 = vmatpush1.msra.mxu0 0.0
      %6834 = vmatprep.subr.mxu0 0.0
      %6835 = vmatpush1.msra.mxu0 0.0
      %6836 = vmatprep.subr.mxu0 0.0
      %6837 = vmatpush1.msra.mxu0 0.0
      %6838 = vmatprep.subr.mxu0 0.0
      %6839 = vmatpush1.msra.mxu0 0.0
      %6840 = vmatprep.subr.mxu0 0.0
      %6841 = vmatpush1.msra.mxu0 0.0
      %6842 = vmatprep.subr.mxu0 0.0
      %6843 = vmatpush1.msra.mxu0 0.0
      %6844 = vmatprep.subr.mxu0 0.0
      %6845 = vmatpush1.msra.mxu0 0.0
      %6846 = vmatprep.subr.mxu0 0.0
      %6847 = vmatpush1.msra.mxu0 0.0
      %6848 = vmatprep.subr.mxu0 0.0
      %6849 = vmatpush1.msra.mxu0 0.0
      %6850 = vmatprep.subr.mxu0 0.0
      %6851 = vmatpush1.msra.mxu0 0.0
      %6852 = vmatprep.mubr.f32.mxu0 0.0
      %6853 = vmatmul.mubr.f32.gmra.mrb[0].mxu0 %v5463
      %v6854 = vpop.f32.mrb[0].mxu0
      %v6855 = vadd.f32 %v6630, %v6854
      %v6856 = vpop.f32.mrb[0].mxu0
      %6857 = vmatprep.mubr.f32.mxu0 0.0
      %6858 = vmatmul.mubr.f32.gmra.mrb[0].mxu0 %v5472
      %v6859 = vpop.f32.mrb[0].mxu0
      %v6860 = vadd.f32 %v6635, %v6859
      %v6861 = vpop.f32.mrb[0].mxu0
      %6862 = vmatprep.mubr.f32.mxu0 0.0
      %6863 = vmatmul.mubr.f32.gmra.mrb[0].mxu0 %v5481
      %v6864 = vpop.f32.mrb[0].mxu0
      %v6865 = vadd.f32 %v6640, %v6864
      %v6866 = vpop.f32.mrb[0].mxu0
      %6867 = vmatprep.mubr.f32.mxu0 0.0
      %6868 = vmatmul.mubr.f32.gmra.mrb[0].mxu0 %v5490
      %v6869 = vpop.f32.mrb[0].mxu0
      %v6870 = vadd.f32 %v6645, %v6869
      %v6871 = vpop.f32.mrb[0].mxu0
      %6872 = vmatprep.mubr.f32.mxu0 0.0
      %6873 = vmatmul.mubr.f32.gmra.mrb[0].mxu0 %v5499
      %v6874 = vpop.f32.mrb[0].mxu0
      %v6875 = vadd.f32 %v6650, %v6874
      %v6876 = vpop.f32.mrb[0].mxu0
      %6877 = vmatprep.mubr.f32.mxu0 0.0
      %6878 = vmatmul.mubr.f32.gmra.mrb[0].mxu0 %v5508
      %v6879 = vpop.f32.mrb[0].mxu0
      %v6880 = vadd.f32 %v6655, %v6879
      %v6881 = vpop.f32.mrb[0].mxu0
      %6882 = vmatprep.mubr.f32.mxu0 0.0
      %6883 = vmatmul.mubr.f32.gmra.mrb[0].mxu0 %v5517
      %v6884 = vpop.f32.mrb[0].mxu0
      %v6885 = vadd.f32 %v6660, %v6884
      %v6886 = vpop.f32.mrb[0].mxu0
      %6887 = vmatprep.mubr.f32.mxu0 0.0
      %6888 = vmatmul.mubr.f32.gmra.mrb[0].mxu0 %v5526
      %v6889 = vpop.f32.mrb[0].mxu0
      %v6890 = vadd.f32 %v6665, %v6889
      %v6891 = vpop.f32.mrb[0].mxu0
      %6892 = vmatprep.mubr.f32.mxu0 0.0
      %6893 = vmatmul.mubr.f32.gmra.mrb[0].mxu0 %v5535
      %v6894 = vpop.f32.mrb[0].mxu0
      %v6895 = vadd.f32 %v6670, %v6894
      %v6896 = vpop.f32.mrb[0].mxu0
      %6897 = vmatprep.mubr.f32.mxu0 0.0
      %6898 = vmatmul.mubr.f32.gmra.mrb[0].mxu0 %v5544
      %v6899 = vpop.f32.mrb[0].mxu0
      %v6900 = vadd.f32 %v6675, %v6899
      %v6901 = vpop.f32.mrb[0].mxu0
      %6902 = vmatprep.mubr.f32.mxu0 0.0
      %6903 = vmatmul.mubr.f32.gmra.mrb[0].mxu0 %v5553
      %v6904 = vpop.f32.mrb[0].mxu0
      %v6905 = vadd.f32 %v6680, %v6904
      %v6906 = vpop.f32.mrb[0].mxu0
      %6907 = vmatprep.mubr.f32.mxu0 0.0
      %6908 = vmatmul.mubr.f32.gmra.mrb[0].mxu0 %v5562
      %v6909 = vpop.f32.mrb[0].mxu0
      %v6910 = vadd.f32 %v6685, %v6909
      %v6911 = vpop.f32.mrb[0].mxu0
      %6912 = vmatprep.mubr.f32.mxu0 0.0
      %6913 = vmatmul.mubr.f32.gmra.mrb[0].mxu0 %v5571
      %v6914 = vpop.f32.mrb[0].mxu0
      %v6915 = vadd.f32 %v6690, %v6914
      %v6916 = vpop.f32.mrb[0].mxu0
      %6917 = vmatprep.mubr.f32.mxu0 0.0
      %6918 = vmatmul.mubr.f32.gmra.mrb[0].mxu0 %v5580
      %v6919 = vpop.f32.mrb[0].mxu0
      %v6920 = vadd.f32 %v6695, %v6919
      %v6921 = vpop.f32.mrb[0].mxu0
      %6922 = vmatprep.mubr.f32.mxu0 0.0
      %6923 = vmatmul.mubr.f32.gmra.mrb[0].mxu0 %v5589
      %v6924 = vpop.f32.mrb[0].mxu0
      %v6925 = vadd.f32 %v6700, %v6924
      %v6926 = vpop.f32.mrb[0].mxu0
      %6927 = vmatprep.mubr.f32.mxu0 0.0
      %6928 = vmatmul.mubr.f32.gmra.mrb[0].mxu0 %v5598
      %v6929 = vpop.f32.mrb[0].mxu0
      %v6930 = vadd.f32 %v6705, %v6929
      %v6931 = vpop.f32.mrb[0].mxu0
      %6932 = vmatprep.mubr.f32.mxu0 0.0
      %6933 = vmatmul.mubr.f32.gmra.mrb[0].mxu0 %v5607
      %v6934 = vpop.f32.mrb[0].mxu0
      %v6935 = vadd.f32 %v6710, %v6934
      %v6936 = vpop.f32.mrb[0].mxu0
      %6937 = vmatprep.mubr.f32.mxu0 0.0
      %6938 = vmatmul.mubr.f32.gmra.mrb[0].mxu0 %v5616
      %v6939 = vpop.f32.mrb[0].mxu0
      %v6940 = vadd.f32 %v6715, %v6939
      %v6941 = vpop.f32.mrb[0].mxu0
      %6942 = vmatprep.mubr.f32.mxu0 0.0
      %6943 = vmatmul.mubr.f32.gmra.mrb[0].mxu0 %v5625
      %v6944 = vpop.f32.mrb[0].mxu0
      %v6945 = vadd.f32 %v6720, %v6944
      %v6946 = vpop.f32.mrb[0].mxu0
      %6947 = vmatprep.mubr.f32.mxu0 0.0
      %6948 = vmatmul.mubr.f32.gmra.mrb[0].mxu0 %v5634
      %v6949 = vpop.f32.mrb[0].mxu0
      %v6950 = vadd.f32 %v6725, %v6949
      %v6951 = vpop.f32.mrb[0].mxu0
      %6952 = vmatprep.mubr.f32.mxu0 0.0
      %6953 = vmatmul.mubr.f32.gmra.mrb[0].mxu0 %v5643
      %v6954 = vpop.f32.mrb[0].mxu0
      %v6955 = vadd.f32 %v6730, %v6954
      %v6956 = vpop.f32.mrb[0].mxu0
      %6957 = vmatprep.mubr.f32.mxu0 0.0
      %6958 = vmatmul.mubr.f32.gmra.mrb[0].mxu0 %v5652
      %v6959 = vpop.f32.mrb[0].mxu0
      %v6960 = vadd.f32 %v6735, %v6959
      %v6961 = vpop.f32.mrb[0].mxu0
      %6962 = vmatprep.mubr.f32.mxu0 0.0
      %6963 = vmatmul.mubr.f32.gmra.mrb[0].mxu0 %v5661
      %v6964 = vpop.f32.mrb[0].mxu0
      %v6965 = vadd.f32 %v6740, %v6964
      %v6966 = vpop.f32.mrb[0].mxu0
      %6967 = vmatprep.mubr.f32.mxu0 0.0
      %6968 = vmatmul.mubr.f32.gmra.mrb[0].mxu0 %v5670
      %v6969 = vpop.f32.mrb[0].mxu0
      %v6970 = vadd.f32 %v6745, %v6969
      %v6971 = vpop.f32.mrb[0].mxu0
      %6972 = vmatprep.mubr.f32.mxu0 0.0
      %6973 = vmatmul.mubr.f32.gmra.mrb[0].mxu0 %v5679
      %v6974 = vpop.f32.mrb[0].mxu0
      %v6975 = vadd.f32 %v6750, %v6974
      %v6976 = vpop.f32.mrb[0].mxu0
      %6977 = vmatprep.mubr.f32.mxu0 0.0
      %6978 = vmatmul.mubr.f32.gmra.mrb[0].mxu0 %v5688
      %v6979 = vpop.f32.mrb[0].mxu0
      %v6980 = vadd.f32 %v6755, %v6979
      %v6981 = vpop.f32.mrb[0].mxu0
      %6982 = vmatprep.mubr.f32.mxu0 0.0
      %6983 = vmatmul.mubr.f32.gmra.mrb[0].mxu0 %v5697
      %v6984 = vpop.f32.mrb[0].mxu0
      %v6985 = vadd.f32 %v6760, %v6984
      %v6986 = vpop.f32.mrb[0].mxu0
      %6987 = vmatprep.mubr.f32.mxu0 0.0
      %6988 = vmatmul.mubr.f32.gmra.mrb[0].mxu0 %v5706
      %v6989 = vpop.f32.mrb[0].mxu0
      %v6990 = vadd.f32 %v6765, %v6989
      %v6991 = vpop.f32.mrb[0].mxu0
      %6992 = vmatprep.mubr.f32.mxu0 0.0
      %6993 = vmatmul.mubr.f32.gmra.mrb[0].mxu0 %v5715
      %v6994 = vpop.f32.mrb[0].mxu0
      %v6995 = vadd.f32 %v6770, %v6994
      %v6996 = vpop.f32.mrb[0].mxu0
      %6997 = vmatprep.mubr.f32.mxu0 0.0
      %6998 = vmatmul.mubr.f32.gmra.mrb[0].mxu0 %v5724
      %v6999 = vpop.f32.mrb[0].mxu0
      %v7000 = vadd.f32 %v6775, %v6999
      %v7001 = vpop.f32.mrb[0].mxu0
      %7002 = vmatprep.mubr.f32.mxu0 0.0
      %7003 = vmatmul.mubr.f32.gmra.mrb[0].mxu0 %v5733
      %v7004 = vpop.f32.mrb[0].mxu0
      %v7005 = vadd.f32 %v6780, %v7004
      %v7006 = vpop.f32.mrb[0].mxu0
      %7007 = vmatprep.mubr.f32.mxu0 0.0
      %7008 = vmatmul.mubr.f32.gmra.mrb[0].mxu0 %v5742
      %v7009 = vpop.f32.mrb[0].mxu0
      %v7010 = vadd.f32 %v6785, %v7009
      %v7011 = vpop.f32.mrb[0].mxu0
      %7012 = vdwg.mxu0
      %s7013 = scalar_lea.vmem %s2, 2
      %v7014 = vld [vmem:[%s7013] sm:$0x1]
      %v7016 = vlaneseq
      %v7017 = vshrl.u32 %v7016, 7
      %v7018 = vsub.s32 0, %v7017
      %v7019 = vrot.slane %v7014, %v7018
      %v7021 = vmul.f32 %v6855, %v7019
      %v7022 = vmul.f32 %v6860, %v7019
      %v7023 = vmul.f32 %v6865, %v7019
      %v7024 = vmul.f32 %v6870, %v7019
      %v7025 = vmul.f32 %v6875, %v7019
      %v7026 = vmul.f32 %v6880, %v7019
      %v7027 = vmul.f32 %v6885, %v7019
      %v7028 = vmul.f32 %v6890, %v7019
      %v7029 = vmul.f32 %v6895, %v7019
      %v7030 = vmul.f32 %v6900, %v7019
      %v7031 = vmul.f32 %v6905, %v7019
      %v7032 = vmul.f32 %v6910, %v7019
      %v7033 = vmul.f32 %v6915, %v7019
      %v7034 = vmul.f32 %v6920, %v7019
      %v7035 = vmul.f32 %v6925, %v7019
      %v7036 = vmul.f32 %v6930, %v7019
      %v7037 = vmul.f32 %v6935, %v7019
      %v7038 = vmul.f32 %v6940, %v7019
      %v7039 = vmul.f32 %v6945, %v7019
      %v7040 = vmul.f32 %v6950, %v7019
      %v7041 = vmul.f32 %v6955, %v7019
      %v7042 = vmul.f32 %v6960, %v7019
      %v7043 = vmul.f32 %v6965, %v7019
      %v7044 = vmul.f32 %v6970, %v7019
      %v7045 = vmul.f32 %v6975, %v7019
      %v7046 = vmul.f32 %v6980, %v7019
      %v7047 = vmul.f32 %v6985, %v7019
      %v7048 = vmul.f32 %v6990, %v7019
      %v7049 = vmul.f32 %v6995, %v7019
      %v7050 = vmul.f32 %v7000, %v7019
      %v7051 = vmul.f32 %v7005, %v7019
      %v7052 = vmul.f32 %v7010, %v7019
      %s7053 = scalar_lea.vmem %s3, 2
      %v7054 = vld [vmem:[%s7053] sm:$0x1]
      %v7056 = vlaneseq
      %v7057 = vshrl.u32 %v7056, 7
      %v7058 = vsub.s32 0, %v7057
      %v7059 = vrot.slane %v7054, %v7058
      %v7061 = vadd.f32 %v7021, %v7059
      %v7062 = vadd.f32 %v7022, %v7059
      %v7063 = vadd.f32 %v7023, %v7059
      %v7064 = vadd.f32 %v7024, %v7059
      %v7065 = vadd.f32 %v7025, %v7059
      %v7066 = vadd.f32 %v7026, %v7059
      %v7067 = vadd.f32 %v7027, %v7059
      %v7068 = vadd.f32 %v7028, %v7059
      %v7069 = vadd.f32 %v7029, %v7059
      %v7070 = vadd.f32 %v7030, %v7059
      %v7071 = vadd.f32 %v7031, %v7059
      %v7072 = vadd.f32 %v7032, %v7059
      %v7073 = vadd.f32 %v7033, %v7059
      %v7074 = vadd.f32 %v7034, %v7059
      %v7075 = vadd.f32 %v7035, %v7059
      %v7076 = vadd.f32 %v7036, %v7059
      %v7077 = vadd.f32 %v7037, %v7059
      %v7078 = vadd.f32 %v7038, %v7059
      %v7079 = vadd.f32 %v7039, %v7059
      %v7080 = vadd.f32 %v7040, %v7059
      %v7081 = vadd.f32 %v7041, %v7059
      %v7082 = vadd.f32 %v7042, %v7059
      %v7083 = vadd.f32 %v7043, %v7059
      %v7084 = vadd.f32 %v7044, %v7059
      %v7085 = vadd.f32 %v7045, %v7059
      %v7086 = vadd.f32 %v7046, %v7059
      %v7087 = vadd.f32 %v7047, %v7059
      %v7088 = vadd.f32 %v7048, %v7059
      %v7089 = vadd.f32 %v7049, %v7059
      %v7090 = vadd.f32 %v7050, %v7059
      %v7091 = vadd.f32 %v7051, %v7059
      %v7092 = vadd.f32 %v7052, %v7059
      %v7093 = vmax.f32 %v7061, 0.0
      %v7094 = vmax.f32 %v7062, 0.0
      %v7095 = vmax.f32 %v7063, 0.0
      %v7096 = vmax.f32 %v7064, 0.0
      %v7097 = vmax.f32 %v7065, 0.0
      %v7098 = vmax.f32 %v7066, 0.0
      %v7099 = vmax.f32 %v7067, 0.0
      %v7100 = vmax.f32 %v7068, 0.0
      %v7101 = vmax.f32 %v7069, 0.0
      %v7102 = vmax.f32 %v7070, 0.0
      %v7103 = vmax.f32 %v7071, 0.0
      %v7104 = vmax.f32 %v7072, 0.0
      %v7105 = vmax.f32 %v7073, 0.0
      %v7106 = vmax.f32 %v7074, 0.0
      %v7107 = vmax.f32 %v7075, 0.0
      %v7108 = vmax.f32 %v7076, 0.0
      %v7109 = vmax.f32 %v7077, 0.0
      %v7110 = vmax.f32 %v7078, 0.0
      %v7111 = vmax.f32 %v7079, 0.0
      %v7112 = vmax.f32 %v7080, 0.0
      %v7113 = vmax.f32 %v7081, 0.0
      %v7114 = vmax.f32 %v7082, 0.0
      %v7115 = vmax.f32 %v7083, 0.0
      %v7116 = vmax.f32 %v7084, 0.0
      %v7117 = vmax.f32 %v7085, 0.0
      %v7118 = vmax.f32 %v7086, 0.0
      %v7119 = vmax.f32 %v7087, 0.0
      %v7120 = vmax.f32 %v7088, 0.0
      %v7121 = vmax.f32 %v7089, 0.0
      %v7122 = vmax.f32 %v7090, 0.0
      %v7123 = vmax.f32 %v7091, 0.0
      %v7124 = vmax.f32 %v7092, 0.0
      %v7125 = vadd.f32 %v7093, %v7094
      %v7126 = vadd.f32 %v7125, %v7095
      %v7127 = vadd.f32 %v7126, %v7096
      %v7128 = vadd.f32 %v7127, %v7097
      %v7129 = vadd.f32 %v7128, %v7098
      %v7130 = vadd.f32 %v7129, %v7099
      %v7131 = vadd.f32 %v7130, %v7100
      %v7132 = vadd.f32 %v7131, %v7101
      %v7133 = vadd.f32 %v7132, %v7102
      %v7134 = vadd.f32 %v7133, %v7103
      %v7135 = vadd.f32 %v7134, %v7104
      %v7136 = vadd.f32 %v7135, %v7105
      %v7137 = vadd.f32 %v7136, %v7106
      %v7138 = vadd.f32 %v7137, %v7107
      %v7139 = vadd.f32 %v7138, %v7108
      %v7140 = vadd.f32 %v7139, %v7109
      %v7141 = vadd.f32 %v7140, %v7110
      %v7142 = vadd.f32 %v7141, %v7111
      %v7143 = vadd.f32 %v7142, %v7112
      %v7144 = vadd.f32 %v7143, %v7113
      %v7145 = vadd.f32 %v7144, %v7114
      %v7146 = vadd.f32 %v7145, %v7115
      %v7147 = vadd.f32 %v7146, %v7116
      %v7148 = vadd.f32 %v7147, %v7117
      %v7149 = vadd.f32 %v7148, %v7118
      %v7150 = vadd.f32 %v7149, %v7119
      %v7151 = vadd.f32 %v7150, %v7120
      %v7152 = vadd.f32 %v7151, %v7121
      %v7153 = vadd.f32 %v7152, %v7122
      %v7154 = vadd.f32 %v7153, %v7123
      %v7155 = vadd.f32 %v7154, %v7124
      %v7156 = vrot.slane %v7155, 4
      %v7157 = vadd.f32 %v7155, %v7156
      %v7158 = vrot.slane %v7157, 2
      %v7159 = vadd.f32 %v7157, %v7158
      %v7160 = vrot.slane %v7159, 1
      %v7161 = vadd.f32 %v7159, %v7160
      %v7162 = vmul.f32 %v7161, 0.00390625
      %v7163 = vld [vmem:[%s4] sm:$0x1]
      %v7164 = vmul.f32 %v7162, %v7163
      %vm7165 = vcmask 1040384
      %v7166 = vsel %vm7165, %v7164, 0.0
      %7167 = vadd.xlane.f32.xlu0 %v7166
      %v7168 = vpop.xlane.xlu0 %7167
      %v7169 = vld [vmem:[#allocation4] sm:$0x1]
      %v7170 = vadd.f32 %v7168, %v7169
      %vm7171 = vcmask 0
      %7172 = vst.msk [vmem:[%s249] sm:$0x1] %vm7171, %v7170
      %p7173 = scmp.lt.s32.totalorder %s19, 1
      %s7174 = scalar_select %p7173, %s19, 1
      %s7175 = scalar_lea.vmem %s6, %s7174
      // Predicated region
      $region45: #{dcgan_discriminator_forward.1} parent=43 // pred_check
        %p7176 = pneg %p168
      $region46: #{dcgan_discriminator_forward.1} parent=43 // pred_check_branch
        %7178 = sbr.rel (%p7176) target = $region48
      $region47: #{dcgan_discriminator_forward.1} parent=43 // pred_region
        _
      $region48: #{dcgan_discriminator_forward.1} parent=43 // pred_fallthru
        _
    $region44: #{dcgan_discriminator_forward.1} parent=5 // pred_fallthru
      _
    %p7179 = scmp.le.s32.totalorder 2, %s14
    // Predicated region
    $region49: #{dcgan_discriminator_forward.1} parent=5 // pred_check
      %p7180 = pneg %p7179
    $region50: #{dcgan_discriminator_forward.1} parent=5 // pred_check_branch
      %7182 = sbr.rel (%p7180) target = $region52
    $region51: #{dcgan_discriminator_forward.1} parent=5 // pred_region
      %s7183 = ssub.s32 %s14, 2
      // Predicated region
      $region53: #{dcgan_discriminator_forward.1} parent=51 // pred_check
        %p7184 = pneg %p174
      $region54: #{dcgan_discriminator_forward.1} parent=51 // pred_check_branch
        %7186 = sbr.rel (%p7184) target = $region56
      $region55: #{dcgan_discriminator_forward.1} parent=51 // pred_region
        %p7187 = scmp.lt.s32.totalorder %s20, 1
        %s7188 = scalar_select %p7187, %s20, 1
        %s7189 = scalar_lea.vmem %s6, %s7188
      $region56: #{dcgan_discriminator_forward.1} parent=51 // pred_fallthru
        _
    $region52: #{dcgan_discriminator_forward.1} parent=5 // pred_fallthru
      _
  $region6: #{dcgan_discriminator_forward.1} parent=0 // loop_footer
    %s18 = sadd.s32 1, %s14
  $region7: #{dcgan_discriminator_forward.1} parent=0 // loop_footer_branch
    %13 = sbr.rel target = $region3
  $region8: #{dcgan_discriminator_forward.1} parent=0 // loop_exit
    _

</llo_original>
